<compile_context>
chip_gen: v7x
topology: tpu7x:2x2x1
jax: 0.10.0
libtpu: 0.0.40
codegen_flags: <defaults>
</compile_context>

<pallas_src>
import jax
import jax.numpy as jnp
from jax import lax
from jax.experimental import pallas as pl
from jax.experimental.pallas import tpu as pltpu


def _sigmoid(v):
    # exp goes to the EUP; exact divide (approx reciprocal on the main path
    # was an accuracy risk once BatchNorm re-normalizes the result).
    return 1.0 / (1.0 + jnp.exp(-v))


def _bn_rows(h, gamma, beta, eps):
    # Training-mode BatchNorm over axis 0 (per-channel biased stats), two-pass
    # variance: var = E[(x - mean)^2] -- avoids the catastrophic cancellation
    # of the single-pass E[x^2] - E[x]^2 form for large-mean activations.
    mean = jnp.mean(h, axis=0, keepdims=True)
    d = h - mean
    var = jnp.mean(d * d, axis=0, keepdims=True)
    return d * lax.rsqrt(var + eps) * gamma + beta


def make_mbconv_kernel(N, H, W, Cin, Cmid, Cse, Cout, K, stride, pad,
                       use_residual, eps=1e-5):
    Hout = (H + 2 * pad - K) // stride + 1
    Wout = (W + 2 * pad - K) // stride + 1
    NP = N * Hout * Wout
    # Store channel-major (Cout, NP) only when the row-major store would be
    # lane-starved (Cout not a multiple of 128); otherwise skip the XLU
    # transpose entirely.
    channel_major_out = (Cout % 128 != 0)
    if use_residual:
        assert stride == 1 and Cin == Cout, \
            "residual path requires stride == 1 and Cin == Cout"

    def kernel(x_ref, w_exp_ref, g1_ref, b1_ref,
               w_conv_ref, g2_ref, b2_ref,
               w_se1_ref, bse1_ref, gse_ref, bse_ref,
               w_se2_ref, bse2_ref,
               w_proj_ref, g3_ref, b3_ref,
               out_ref, y_acc):
        # x arrives bf16 (or f32 when the residual needs it).
        xf = x_ref[...].reshape(N * H * W, Cin)

        # ---- expansion 1x1 conv (bias=False): bf16 MXU / f32 acc, BN, SiLU --
        h = jnp.dot(xf.astype(jnp.bfloat16), w_exp_ref[...],
                    preferred_element_type=jnp.float32)
        h = _bn_rows(h, g1_ref[...], b1_ref[...], eps)
        h = h * _sigmoid(h)                               # SiLU, f32

        # ---- KxK conv (stride, padding=K//2, bias=False) -------------------
        # K*K shifted-window matmuls accumulating into the persistent VMEM
        # scratch y_acc (Ref accumulator, no traced carry).  The padded
        # activation scratch only lives inside this scope; run_scoped releases
        # its VMEM before the SE / projection phase.
        def conv_scope(pad_ref):
            # Zero only the padding ring, then write the interior once.
            if pad > 0:
                zrow = jnp.zeros((N, pad, W + 2 * pad, Cmid), jnp.float32)
                pad_ref[:, 0:pad, :, :] = zrow
                pad_ref[:, pad + H:, :, :] = zrow
                zcol = jnp.zeros((N, H + 2 * pad, pad, Cmid), jnp.float32)
                pad_ref[:, :, 0:pad, :] = zcol
                pad_ref[:, :, pad + W:, :] = zcol
            pad_ref[:, pad:pad + H, pad:pad + W, :] = h.reshape(N, H, W, Cmid)

            ap = pad_ref[...]                             # (N, H+2p, W+2p, Cmid)
            for dy in range(K):
                for dx in range(K):
                    t = dy * K + dx
                    patch = ap[:,
                               dy:dy + (Hout - 1) * stride + 1:stride,
                               dx:dx + (Wout - 1) * stride + 1:stride,
                               :].reshape(NP, Cmid)
                    contrib = jnp.dot(patch.astype(jnp.bfloat16),
                                      w_conv_ref[t],      # (Cmid, Cout) bf16
                                      preferred_element_type=jnp.float32)
                    if t == 0:
                        y_acc[...] = contrib
                    else:
                        y_acc[...] += contrib

        pl.run_scoped(
            conv_scope,
            pltpu.VMEM((N, H + 2 * pad, W + 2 * pad, Cmid), jnp.float32))

        # BN2: normalize the conv output in place (reuse the accumulator).
        y_acc[...] = _bn_rows(y_acc[...], g2_ref[...], b2_ref[...], eps)

        # ---- Squeeze-and-Excitation (tiny tensors; keep f32 exact) ----------
        yb = y_acc[...].reshape(N, Hout * Wout, Cout)
        pooled = jnp.mean(yb, axis=1)                     # AdaptiveAvgPool2d(1)
        s = jnp.dot(pooled, w_se1_ref[...],
                    preferred_element_type=jnp.float32) + bse1_ref[...]
        s = _bn_rows(s, gse_ref[...], bse_ref[...], eps)  # BN over batch axis
        s = s * _sigmoid(s)                               # SiLU
        s = jnp.dot(s, w_se2_ref[...],
                    preferred_element_type=jnp.float32) + bse2_ref[...]
        gate = _sigmoid(s)                                # (N, Cout)
        yg = yb * gate[:, None, :]                        # x * se.expand_as(x)

        # ---- projection 1x1 conv (bias=False): bf16 MXU, BN (+ residual) ----
        z = jnp.dot(yg.reshape(NP, Cout).astype(jnp.bfloat16), w_proj_ref[...],
                    preferred_element_type=jnp.float32)
        z = _bn_rows(z, g3_ref[...], b3_ref[...], eps)
        if use_residual:                                  # static python bool
            z = z + xf.astype(jnp.float32)

        if channel_major_out:
            out_ref[...] = z.T                            # lane-dense (Cout, NP)
        else:
            out_ref[...] = z                              # already lane-dense

    return kernel, Hout, Wout, channel_major_out


def init_params(key, in_channels, out_channels, expansion_factor, kernel_size,
                se_ratio=0.25):
    mid = in_channels * expansion_factor
    assert mid == out_channels, (
        "MBConvBlock.forward only type-checks when mid_channels == out_channels")
    se_ch = max(1, int(mid * se_ratio))
    keys = jax.random.split(key, 7)

    def rnd(k, shape, scale=0.1):
        return scale * jax.random.normal(k, shape, jnp.float32)

    return dict(
        # block: Conv2d(in, mid, 1) weight laid out as (Cin, Cmid)
        w_exp=rnd(keys[0], (in_channels, mid)),
        g1=jnp.ones((1, mid), jnp.float32), b1=jnp.zeros((1, mid), jnp.float32),
        # block: Conv2d(mid, out, K) weight laid out as (K*K, Cmid, Cout)
        w_conv=rnd(keys[1], (kernel_size * kernel_size, mid, out_channels)),
        g2=jnp.ones((1, out_channels), jnp.float32),
        b2=jnp.zeros((1, out_channels), jnp.float32),
        # SE
        w_se1=rnd(keys[2], (mid, se_ch)), bse1=rnd(keys[3], (1, se_ch)),
        gse=jnp.ones((1, se_ch), jnp.float32), bse=jnp.zeros((1, se_ch), jnp.float32),
        w_se2=rnd(keys[4], (se_ch, out_channels)), bse2=rnd(keys[5], (1, out_channels)),
        # proj: Conv2d(mid, out, 1) -> (Cmid(=Cout), Cout)
        w_proj=rnd(keys[6], (out_channels, out_channels)),
        g3=jnp.ones((1, out_channels), jnp.float32),
        b3=jnp.zeros((1, out_channels), jnp.float32),
    )


def mbconv_pallas(x_nchw, params, *, kernel_size, stride, use_residual):
    N, Cin, H, W = x_nchw.shape
    Cmid = params["w_exp"].shape[1]
    Cout = params["w_proj"].shape[1]
    Cse = params["w_se1"].shape[1]
    K = kernel_size
    pad = K // 2

    kernel, Hout, Wout, channel_major = make_mbconv_kernel(
        N, H, W, Cin, Cmid, Cse, Cout, K, stride, pad, use_residual)
    NP = N * Hout * Wout

    # Cast the (largest) activation input once in the wrapper: halves its
    # HBM->VMEM DMA and removes an in-kernel full-slab cast.  Keep f32 only
    # when the residual add needs the exact input values.
    x_dtype = jnp.float32 if use_residual else jnp.bfloat16
    x_nhwc = jnp.transpose(x_nchw, (0, 2, 3, 1)).astype(x_dtype)

    # Big-matmul weights as bf16 MXU operands; affine/SE params stay f32.
    w_exp_bf = params["w_exp"].astype(jnp.bfloat16)
    w_conv_bf = params["w_conv"].astype(jnp.bfloat16)      # (K*K, Cmid, Cout)
    w_proj_bf = params["w_proj"].astype(jnp.bfloat16)

    inputs = [
        x_nhwc,
        w_exp_bf, params["g1"], params["b1"],
        w_conv_bf, params["g2"], params["b2"],
        params["w_se1"], params["bse1"], params["gse"], params["bse"],
        params["w_se2"], params["bse2"],
        w_proj_bf, params["g3"], params["b3"],
    ]

    # Per-generation VMEM budget: 3/4 of physical VMEM (v7x 64 MiB -> 48 MiB,
    # v5e/v6e 128 MiB -> 96 MiB), capped at 100 MiB.
    try:
        vmem_cap = int(pltpu.get_tpu_info().vmem_capacity_bytes)
    except Exception:
        vmem_cap = 64 * 1024 * 1024
    vmem_limit = min(vmem_cap * 3 // 4, 100 * 1024 * 1024)

    # Advisory cost estimate so XLA schedules around the custom call sensibly.
    flops = 2 * (N * H * W * Cin * Cmid
                 + NP * K * K * Cmid * Cout
                 + NP * Cout * Cout
                 + N * (Cmid * Cse + Cse * Cout))
    transcendentals = N * H * W * Cmid + 2 * N * (Cse + Cout)
    out_bytes = 4 * NP * Cout
    bytes_accessed = out_bytes + sum(int(a.size) * a.dtype.itemsize for a in inputs)
    ce = pl.CostEstimate(flops=int(flops), transcendentals=int(transcendentals),
                         bytes_accessed=int(bytes_accessed))

    out_shape = (Cout, NP) if channel_major else (NP, Cout)
    vmem_spec = pl.BlockSpec(memory_space=pltpu.MemorySpace.VMEM)

    # Grid-less call: single invocation, every input single-buffered in VMEM
    # (grid=(1,) would double-buffer grid-invariant inputs for no benefit).
    out_flat = pl.pallas_call(
        kernel,
        out_shape=jax.ShapeDtypeStruct(out_shape, jnp.float32),
        in_specs=[vmem_spec] * len(inputs),
        out_specs=vmem_spec,
        scratch_shapes=[pltpu.VMEM((NP, Cout), jnp.float32)],   # conv acc / y
        compiler_params=pltpu.CompilerParams(vmem_limit_bytes=vmem_limit),
        cost_estimate=ce,
    )(*inputs)

    if channel_major:
        # (Cout, N*Hout*Wout) -> (Cout, N, Hout, Wout) -> NCHW.
        out = out_flat.reshape(Cout, N, Hout, Wout)
        return jnp.transpose(out, (1, 0, 2, 3))
    # (N*Hout*Wout, Cout) -> NHWC -> NCHW.
    out = out_flat.reshape(N, Hout, Wout, Cout)
    return jnp.transpose(out, (0, 3, 1, 2))


def mbconv_reference(x_nchw, params, *, kernel_size, stride, use_residual, eps=1e-5):
    """Pure-JAX f32 reference (same math via lax.conv) for validation."""
    x = jnp.transpose(x_nchw, (0, 2, 3, 1)).astype(jnp.float32)  # NHWC
    K, pad = kernel_size, kernel_size // 2

    def bn(h, g, b):
        axes = (0, 1, 2) if h.ndim == 4 else (0,)
        mean = jnp.mean(h, axis=axes, keepdims=True)
        var = jnp.mean((h - mean) ** 2, axis=axes, keepdims=True)
        return (h - mean) / jnp.sqrt(var + eps) * g + b

    silu = lambda v: v * jax.nn.sigmoid(v)

    h = jnp.einsum("nhwi,io->nhwo", x, params["w_exp"])
    h = silu(bn(h, params["g1"], params["b1"]))
    w = params["w_conv"].reshape(K, K, h.shape[-1], -1)          # HWIO
    y = lax.conv_general_dilated(h, w, (stride, stride),
                                 [(pad, pad), (pad, pad)],
                                 dimension_numbers=("NHWC", "HWIO", "NHWC"))
    y = bn(y, params["g2"], params["b2"])
    pooled = jnp.mean(y, axis=(1, 2))
    s = pooled @ params["w_se1"] + params["bse1"]
    s = silu(bn(s, params["gse"], params["bse"]))
    s = s @ params["w_se2"] + params["bse2"]
    yg = y * jax.nn.sigmoid(s)[:, None, None, :]
    z = jnp.einsum("nhwi,io->nhwo", yg, params["w_proj"])
    z = bn(z, params["g3"], params["b3"])
    if use_residual:
        z = z + x
    return jnp.transpose(z, (0, 3, 1, 2))


if __name__ == "__main__":
    # MBConvBlock(in=4, out=8, expansion=2, k=3, stride=1, se_ratio=0.25)
    in_channels, out_channels, expansion_factor = 4, 8, 2
    kernel_size, stride, se_ratio = 3, 1, 0.25
    N, H, W = 2, 16, 16
    use_residual = (stride == 1 and in_channels == out_channels)  # False here

    key = jax.random.PRNGKey(0)
    kx, kp = jax.random.split(key)
    x = jax.random.normal(kx, (N, in_channels, H, W), jnp.float32)
    params = init_params(kp, in_channels, out_channels, expansion_factor,
                         kernel_size, se_ratio)

    out = mbconv_pallas(x, params, kernel_size=kernel_size, stride=stride,
                        use_residual=use_residual)
    out = jax.block_until_ready(out)

    ref = mbconv_reference(x, params, kernel_size=kernel_size, stride=stride,
                           use_residual=use_residual)
    assert out.shape == ref.shape == (N, out_channels, H, W)
    err = float(jnp.max(jnp.abs(out - ref)))
    # bf16 MXU operands vs a pure-f32 reference; BatchNorm re-normalization
    # amplifies relative rounding error (typical max-abs err here is ~1e-2).
    assert jnp.allclose(out, ref, rtol=1e-1, atol=1e-1), f"max abs err {err}"
    print("KERNEL_OK")
</pallas_src>

<mosaic_0001>
module attributes {stable_mosaic.version = 11 : i64} {
  func.func @kernel(%arg0: memref<2x16x16x4xbf16, #tpu.memory_space<vmem>>, %arg1: memref<4x8xbf16, #tpu.memory_space<vmem>>, %arg2: memref<1x8xf32, #tpu.memory_space<vmem>>, %arg3: memref<1x8xf32, #tpu.memory_space<vmem>>, %arg4: memref<9x8x8xbf16, #tpu.memory_space<vmem>>, %arg5: memref<1x8xf32, #tpu.memory_space<vmem>>, %arg6: memref<1x8xf32, #tpu.memory_space<vmem>>, %arg7: memref<8x2xf32, #tpu.memory_space<vmem>>, %arg8: memref<1x2xf32, #tpu.memory_space<vmem>>, %arg9: memref<1x2xf32, #tpu.memory_space<vmem>>, %arg10: memref<1x2xf32, #tpu.memory_space<vmem>>, %arg11: memref<2x8xf32, #tpu.memory_space<vmem>>, %arg12: memref<1x8xf32, #tpu.memory_space<vmem>>, %arg13: memref<8x8xbf16, #tpu.memory_space<vmem>>, %arg14: memref<1x8xf32, #tpu.memory_space<vmem>>, %arg15: memref<1x8xf32, #tpu.memory_space<vmem>>, %arg16: memref<8x512xf32, #tpu.memory_space<vmem>>, %arg17: memref<512x8xf32, #tpu.memory_space<vmem>>) attributes {dimension_semantics = [], scalar_prefetch = 0 : i64, scratch_operands = 1 : i64, tpu.core_type = #tpu.core_type<tc>} {
    %c0 = arith.constant 0 : index
    %c0_0 = arith.constant 0 : index
    %c0_1 = arith.constant 0 : index
    %c0_2 = arith.constant 0 : index
    %0 = vector.load %arg0[%c0, %c0_0, %c0_1, %c0_2] : memref<2x16x16x4xbf16, #tpu.memory_space<vmem>>, vector<2x16x16x4xbf16>
    %1 = vector.shape_cast %0 : vector<2x16x16x4xbf16> to vector<512x4xbf16>
    %c0_3 = arith.constant 0 : index
    %c0_4 = arith.constant 0 : index
    %2 = vector.load %arg1[%c0_3, %c0_4] : memref<4x8xbf16, #tpu.memory_space<vmem>>, vector<4x8xbf16>
    %cst = arith.constant dense<0.000000e+00> : vector<512x8xf32>
    %3 = tpu.matmul %1, %2, %cst {dimension_numbers = #tpu.dot_dimension_numbers<[1], [0], [0], [1], [0, 0, 1, 1], [], []>} : vector<512x4xbf16>, vector<4x8xbf16>, vector<512x8xf32> -> vector<512x8xf32>
    %c0_5 = arith.constant 0 : index
    %c0_6 = arith.constant 0 : index
    %4 = vector.load %arg2[%c0_5, %c0_6] : memref<1x8xf32, #tpu.memory_space<vmem>>, vector<1x8xf32>
    %c0_7 = arith.constant 0 : index
    %c0_8 = arith.constant 0 : index
    %5 = vector.load %arg3[%c0_7, %c0_8] : memref<1x8xf32, #tpu.memory_space<vmem>>, vector<1x8xf32>
    %cst_9 = arith.constant dense<0.000000e+00> : vector<8xf32>
    %6 = vector.multi_reduction <add>, %3, %cst_9 [0] : vector<512x8xf32> to vector<8xf32>
    %7 = vector.shape_cast %6 : vector<8xf32> to vector<1x8xf32>
    %cst_10 = arith.constant 5.120000e+02 : f32
    %8 = vector.broadcast %cst_10 : f32 to vector<1x8xf32>
    %9 = arith.divf %7, %8 : vector<1x8xf32>
    %10 = vector.broadcast %9 : vector<1x8xf32> to vector<512x8xf32>
    %11 = arith.subf %3, %10 : vector<512x8xf32>
    %12 = arith.mulf %11, %11 : vector<512x8xf32>
    %cst_11 = arith.constant dense<0.000000e+00> : vector<8xf32>
    %13 = vector.multi_reduction <add>, %12, %cst_11 [0] : vector<512x8xf32> to vector<8xf32>
    %14 = vector.shape_cast %13 : vector<8xf32> to vector<1x8xf32>
    %cst_12 = arith.constant 5.120000e+02 : f32
    %15 = vector.broadcast %cst_12 : f32 to vector<1x8xf32>
    %16 = arith.divf %14, %15 : vector<1x8xf32>
    %cst_13 = arith.constant 9.99999974E-6 : f32
    %17 = vector.broadcast %cst_13 : f32 to vector<1x8xf32>
    %18 = arith.addf %16, %17 : vector<1x8xf32>
    %19 = math.rsqrt %18 : vector<1x8xf32>
    %20 = vector.broadcast %19 : vector<1x8xf32> to vector<512x8xf32>
    %21 = arith.mulf %11, %20 : vector<512x8xf32>
    %22 = vector.broadcast %4 : vector<1x8xf32> to vector<512x8xf32>
    %23 = arith.mulf %21, %22 : vector<512x8xf32>
    %24 = vector.broadcast %5 : vector<1x8xf32> to vector<512x8xf32>
    %25 = arith.addf %23, %24 : vector<512x8xf32>
    %cst_14 = arith.constant 0.000000e+00 : f32
    %26 = vector.broadcast %cst_14 : f32 to vector<512x8xf32>
    %27 = arith.subf %26, %25 : vector<512x8xf32>
    %28 = math.exp %27 : vector<512x8xf32>
    %cst_15 = arith.constant 1.000000e+00 : f32
    %29 = vector.broadcast %cst_15 : f32 to vector<512x8xf32>
    %30 = arith.addf %29, %28 : vector<512x8xf32>
    %cst_16 = arith.constant 1.000000e+00 : f32
    %31 = vector.broadcast %cst_16 : f32 to vector<512x8xf32>
    %32 = arith.divf %31, %30 : vector<512x8xf32>
    %33 = arith.mulf %25, %32 : vector<512x8xf32>
    "tpu.region"() ({
      %alloca = memref.alloca() : memref<2x18x18x8xf32, #tpu.memory_space<vmem>>
      %cst_73 = arith.constant 0.000000e+00 : f32
      %141 = vector.broadcast %cst_73 : f32 to vector<2x1x18x8xf32>
      %c0_74 = arith.constant 0 : index
      %c0_75 = arith.constant 0 : index
      %c0_76 = arith.constant 0 : index
      %c0_77 = arith.constant 0 : index
      %142 = vector.load %alloca[%c0_74, %c0_75, %c0_76, %c0_77] : memref<2x18x18x8xf32, #tpu.memory_space<vmem>>, vector<2x1x18x8xf32>
      tpu.vector_store %alloca[%c0_74, %c0_75, %c0_76, %c0_77], %141 {strides = array<i32>} : memref<2x18x18x8xf32, #tpu.memory_space<vmem>>, vector<2x1x18x8xf32>,
      %c0_78 = arith.constant 0 : index
      %c17 = arith.constant 17 : index
      %c0_79 = arith.constant 0 : index
      %c0_80 = arith.constant 0 : index
      %143 = vector.load %alloca[%c0_78, %c17, %c0_79, %c0_80] : memref<2x18x18x8xf32, #tpu.memory_space<vmem>>, vector<2x1x18x8xf32>
      tpu.vector_store %alloca[%c0_78, %c17, %c0_79, %c0_80], %141 {strides = array<i32>} : memref<2x18x18x8xf32, #tpu.memory_space<vmem>>, vector<2x1x18x8xf32>,
      %cst_81 = arith.constant 0.000000e+00 : f32
      %144 = vector.broadcast %cst_81 : f32 to vector<2x18x1x8xf32>
      %c0_82 = arith.constant 0 : index
      %c0_83 = arith.constant 0 : index
      %c0_84 = arith.constant 0 : index
      %c0_85 = arith.constant 0 : index
      %145 = vector.load %alloca[%c0_82, %c0_83, %c0_84, %c0_85] : memref<2x18x18x8xf32, #tpu.memory_space<vmem>>, vector<2x18x1x8xf32>
      tpu.vector_store %alloca[%c0_82, %c0_83, %c0_84, %c0_85], %144 {strides = array<i32>} : memref<2x18x18x8xf32, #tpu.memory_space<vmem>>, vector<2x18x1x8xf32>,
      %c0_86 = arith.constant 0 : index
      %c0_87 = arith.constant 0 : index
      %c17_88 = arith.constant 17 : index
      %c0_89 = arith.constant 0 : index
      %146 = vector.load %alloca[%c0_86, %c0_87, %c17_88, %c0_89] : memref<2x18x18x8xf32, #tpu.memory_space<vmem>>, vector<2x18x1x8xf32>
      tpu.vector_store %alloca[%c0_86, %c0_87, %c17_88, %c0_89], %144 {strides = array<i32>} : memref<2x18x18x8xf32, #tpu.memory_space<vmem>>, vector<2x18x1x8xf32>,
      %147 = vector.shape_cast %33 : vector<512x8xf32> to vector<2x16x16x8xf32>
      %c0_90 = arith.constant 0 : index
      %c1 = arith.constant 1 : index
      %c1_91 = arith.constant 1 : index
      %c0_92 = arith.constant 0 : index
      %148 = vector.load %alloca[%c0_90, %c1, %c1_91, %c0_92] : memref<2x18x18x8xf32, #tpu.memory_space<vmem>>, vector<2x16x16x8xf32>
      tpu.vector_store %alloca[%c0_90, %c1, %c1_91, %c0_92], %147 {strides = array<i32>} : memref<2x18x18x8xf32, #tpu.memory_space<vmem>>, vector<2x16x16x8xf32>,
      %c0_93 = arith.constant 0 : index
      %c0_94 = arith.constant 0 : index
      %c0_95 = arith.constant 0 : index
      %c0_96 = arith.constant 0 : index
      %149 = vector.load %alloca[%c0_93, %c0_94, %c0_95, %c0_96] : memref<2x18x18x8xf32, #tpu.memory_space<vmem>>, vector<2x18x18x8xf32>
      %150 = vector.extract_strided_slice %149 {offsets = [0, 0, 0, 0], sizes = [2, 16, 16, 8], strides = [1, 1, 1, 1]} : vector<2x18x18x8xf32> to vector<2x16x16x8xf32>
      %151 = vector.shape_cast %150 : vector<2x16x16x8xf32> to vector<512x8xf32>
      %152 = arith.truncf %151 : vector<512x8xf32> to vector<512x8xbf16>
      %c0_97 = arith.constant 0 : index
      %c0_98 = arith.constant 0 : index
      %c0_99 = arith.constant 0 : index
      %153 = vector.load %arg4[%c0_97, %c0_98, %c0_99] : memref<9x8x8xbf16, #tpu.memory_space<vmem>>, vector<1x8x8xbf16>
      %154 = vector.shape_cast %153 : vector<1x8x8xbf16> to vector<8x8xbf16>
      %cst_100 = arith.constant dense<0.000000e+00> : vector<512x8xf32>
      %155 = tpu.matmul %152, %154, %cst_100 {dimension_numbers = #tpu.dot_dimension_numbers<[1], [0], [0], [1], [0, 0, 1, 1], [], []>} : vector<512x8xbf16>, vector<8x8xbf16>, vector<512x8xf32> -> vector<512x8xf32>
      %c0_101 = arith.constant 0 : index
      %c0_102 = arith.constant 0 : index
      %156 = vector.load %arg17[%c0_101, %c0_102] : memref<512x8xf32, #tpu.memory_space<vmem>>, vector<512x8xf32>
      tpu.vector_store %arg17[%c0_101, %c0_102], %155 {strides = array<i32>} : memref<512x8xf32, #tpu.memory_space<vmem>>, vector<512x8xf32>,
      %157 = vector.extract_strided_slice %149 {offsets = [0, 0, 1, 0], sizes = [2, 16, 16, 8], strides = [1, 1, 1, 1]} : vector<2x18x18x8xf32> to vector<2x16x16x8xf32>
      %158 = vector.shape_cast %157 : vector<2x16x16x8xf32> to vector<512x8xf32>
      %159 = arith.truncf %158 : vector<512x8xf32> to vector<512x8xbf16>
      %c1_103 = arith.constant 1 : index
      %c0_104 = arith.constant 0 : index
      %c0_105 = arith.constant 0 : index
      %160 = vector.load %arg4[%c1_103, %c0_104, %c0_105] : memref<9x8x8xbf16, #tpu.memory_space<vmem>>, vector<1x8x8xbf16>
      %161 = vector.shape_cast %160 : vector<1x8x8xbf16> to vector<8x8xbf16>
      %cst_106 = arith.constant dense<0.000000e+00> : vector<512x8xf32>
      %162 = tpu.matmul %159, %161, %cst_106 {dimension_numbers = #tpu.dot_dimension_numbers<[1], [0], [0], [1], [0, 0, 1, 1], [], []>} : vector<512x8xbf16>, vector<8x8xbf16>, vector<512x8xf32> -> vector<512x8xf32>
      %c0_107 = arith.constant 0 : index
      %c0_108 = arith.constant 0 : index
      %163 = vector.load %arg17[%c0_107, %c0_108] : memref<512x8xf32, #tpu.memory_space<vmem>>, vector<512x8xf32>
      %164 = arith.addf %163, %162 : vector<512x8xf32>
      %c0_109 = arith.constant 0 : index
      %c0_110 = arith.constant 0 : index
      %165 = vector.load %arg17[%c0_109, %c0_110] : memref<512x8xf32, #tpu.memory_space<vmem>>, vector<512x8xf32>
      tpu.vector_store %arg17[%c0_109, %c0_110], %164 {strides = array<i32>} : memref<512x8xf32, #tpu.memory_space<vmem>>, vector<512x8xf32>,
      %166 = vector.extract_strided_slice %149 {offsets = [0, 0, 2, 0], sizes = [2, 16, 16, 8], strides = [1, 1, 1, 1]} : vector<2x18x18x8xf32> to vector<2x16x16x8xf32>
      %167 = vector.shape_cast %166 : vector<2x16x16x8xf32> to vector<512x8xf32>
      %168 = arith.truncf %167 : vector<512x8xf32> to vector<512x8xbf16>
      %c2 = arith.constant 2 : index
      %c0_111 = arith.constant 0 : index
      %c0_112 = arith.constant 0 : index
      %169 = vector.load %arg4[%c2, %c0_111, %c0_112] : memref<9x8x8xbf16, #tpu.memory_space<vmem>>, vector<1x8x8xbf16>
      %170 = vector.shape_cast %169 : vector<1x8x8xbf16> to vector<8x8xbf16>
      %cst_113 = arith.constant dense<0.000000e+00> : vector<512x8xf32>
      %171 = tpu.matmul %168, %170, %cst_113 {dimension_numbers = #tpu.dot_dimension_numbers<[1], [0], [0], [1], [0, 0, 1, 1], [], []>} : vector<512x8xbf16>, vector<8x8xbf16>, vector<512x8xf32> -> vector<512x8xf32>
      %c0_114 = arith.constant 0 : index
      %c0_115 = arith.constant 0 : index
      %172 = vector.load %arg17[%c0_114, %c0_115] : memref<512x8xf32, #tpu.memory_space<vmem>>, vector<512x8xf32>
      %173 = arith.addf %172, %171 : vector<512x8xf32>
      %c0_116 = arith.constant 0 : index
      %c0_117 = arith.constant 0 : index
      %174 = vector.load %arg17[%c0_116, %c0_117] : memref<512x8xf32, #tpu.memory_space<vmem>>, vector<512x8xf32>
      tpu.vector_store %arg17[%c0_116, %c0_117], %173 {strides = array<i32>} : memref<512x8xf32, #tpu.memory_space<vmem>>, vector<512x8xf32>,
      %175 = vector.extract_strided_slice %149 {offsets = [0, 1, 0, 0], sizes = [2, 16, 16, 8], strides = [1, 1, 1, 1]} : vector<2x18x18x8xf32> to vector<2x16x16x8xf32>
      %176 = vector.shape_cast %175 : vector<2x16x16x8xf32> to vector<512x8xf32>
      %177 = arith.truncf %176 : vector<512x8xf32> to vector<512x8xbf16>
      %c3 = arith.constant 3 : index
      %c0_118 = arith.constant 0 : index
      %c0_119 = arith.constant 0 : index
      %178 = vector.load %arg4[%c3, %c0_118, %c0_119] : memref<9x8x8xbf16, #tpu.memory_space<vmem>>, vector<1x8x8xbf16>
      %179 = vector.shape_cast %178 : vector<1x8x8xbf16> to vector<8x8xbf16>
      %cst_120 = arith.constant dense<0.000000e+00> : vector<512x8xf32>
      %180 = tpu.matmul %177, %179, %cst_120 {dimension_numbers = #tpu.dot_dimension_numbers<[1], [0], [0], [1], [0, 0, 1, 1], [], []>} : vector<512x8xbf16>, vector<8x8xbf16>, vector<512x8xf32> -> vector<512x8xf32>
      %c0_121 = arith.constant 0 : index
      %c0_122 = arith.constant 0 : index
      %181 = vector.load %arg17[%c0_121, %c0_122] : memref<512x8xf32, #tpu.memory_space<vmem>>, vector<512x8xf32>
      %182 = arith.addf %181, %180 : vector<512x8xf32>
      %c0_123 = arith.constant 0 : index
      %c0_124 = arith.constant 0 : index
      %183 = vector.load %arg17[%c0_123, %c0_124] : memref<512x8xf32, #tpu.memory_space<vmem>>, vector<512x8xf32>
      tpu.vector_store %arg17[%c0_123, %c0_124], %182 {strides = array<i32>} : memref<512x8xf32, #tpu.memory_space<vmem>>, vector<512x8xf32>,
      %184 = vector.extract_strided_slice %149 {offsets = [0, 1, 1, 0], sizes = [2, 16, 16, 8], strides = [1, 1, 1, 1]} : vector<2x18x18x8xf32> to vector<2x16x16x8xf32>
      %185 = vector.shape_cast %184 : vector<2x16x16x8xf32> to vector<512x8xf32>
      %186 = arith.truncf %185 : vector<512x8xf32> to vector<512x8xbf16>
      %c4 = arith.constant 4 : index
      %c0_125 = arith.constant 0 : index
      %c0_126 = arith.constant 0 : index
      %187 = vector.load %arg4[%c4, %c0_125, %c0_126] : memref<9x8x8xbf16, #tpu.memory_space<vmem>>, vector<1x8x8xbf16>
      %188 = vector.shape_cast %187 : vector<1x8x8xbf16> to vector<8x8xbf16>
      %cst_127 = arith.constant dense<0.000000e+00> : vector<512x8xf32>
      %189 = tpu.matmul %186, %188, %cst_127 {dimension_numbers = #tpu.dot_dimension_numbers<[1], [0], [0], [1], [0, 0, 1, 1], [], []>} : vector<512x8xbf16>, vector<8x8xbf16>, vector<512x8xf32> -> vector<512x8xf32>
      %c0_128 = arith.constant 0 : index
      %c0_129 = arith.constant 0 : index
      %190 = vector.load %arg17[%c0_128, %c0_129] : memref<512x8xf32, #tpu.memory_space<vmem>>, vector<512x8xf32>
      %191 = arith.addf %190, %189 : vector<512x8xf32>
      %c0_130 = arith.constant 0 : index
      %c0_131 = arith.constant 0 : index
      %192 = vector.load %arg17[%c0_130, %c0_131] : memref<512x8xf32, #tpu.memory_space<vmem>>, vector<512x8xf32>
      tpu.vector_store %arg17[%c0_130, %c0_131], %191 {strides = array<i32>} : memref<512x8xf32, #tpu.memory_space<vmem>>, vector<512x8xf32>,
      %193 = vector.extract_strided_slice %149 {offsets = [0, 1, 2, 0], sizes = [2, 16, 16, 8], strides = [1, 1, 1, 1]} : vector<2x18x18x8xf32> to vector<2x16x16x8xf32>
      %194 = vector.shape_cast %193 : vector<2x16x16x8xf32> to vector<512x8xf32>
      %195 = arith.truncf %194 : vector<512x8xf32> to vector<512x8xbf16>
      %c5 = arith.constant 5 : index
      %c0_132 = arith.constant 0 : index
      %c0_133 = arith.constant 0 : index
      %196 = vector.load %arg4[%c5, %c0_132, %c0_133] : memref<9x8x8xbf16, #tpu.memory_space<vmem>>, vector<1x8x8xbf16>
      %197 = vector.shape_cast %196 : vector<1x8x8xbf16> to vector<8x8xbf16>
      %cst_134 = arith.constant dense<0.000000e+00> : vector<512x8xf32>
      %198 = tpu.matmul %195, %197, %cst_134 {dimension_numbers = #tpu.dot_dimension_numbers<[1], [0], [0], [1], [0, 0, 1, 1], [], []>} : vector<512x8xbf16>, vector<8x8xbf16>, vector<512x8xf32> -> vector<512x8xf32>
      %c0_135 = arith.constant 0 : index
      %c0_136 = arith.constant 0 : index
      %199 = vector.load %arg17[%c0_135, %c0_136] : memref<512x8xf32, #tpu.memory_space<vmem>>, vector<512x8xf32>
      %200 = arith.addf %199, %198 : vector<512x8xf32>
      %c0_137 = arith.constant 0 : index
      %c0_138 = arith.constant 0 : index
      %201 = vector.load %arg17[%c0_137, %c0_138] : memref<512x8xf32, #tpu.memory_space<vmem>>, vector<512x8xf32>
      tpu.vector_store %arg17[%c0_137, %c0_138], %200 {strides = array<i32>} : memref<512x8xf32, #tpu.memory_space<vmem>>, vector<512x8xf32>,
      %202 = vector.extract_strided_slice %149 {offsets = [0, 2, 0, 0], sizes = [2, 16, 16, 8], strides = [1, 1, 1, 1]} : vector<2x18x18x8xf32> to vector<2x16x16x8xf32>
      %203 = vector.shape_cast %202 : vector<2x16x16x8xf32> to vector<512x8xf32>
      %204 = arith.truncf %203 : vector<512x8xf32> to vector<512x8xbf16>
      %c6 = arith.constant 6 : index
      %c0_139 = arith.constant 0 : index
      %c0_140 = arith.constant 0 : index
      %205 = vector.load %arg4[%c6, %c0_139, %c0_140] : memref<9x8x8xbf16, #tpu.memory_space<vmem>>, vector<1x8x8xbf16>
      %206 = vector.shape_cast %205 : vector<1x8x8xbf16> to vector<8x8xbf16>
      %cst_141 = arith.constant dense<0.000000e+00> : vector<512x8xf32>
      %207 = tpu.matmul %204, %206, %cst_141 {dimension_numbers = #tpu.dot_dimension_numbers<[1], [0], [0], [1], [0, 0, 1, 1], [], []>} : vector<512x8xbf16>, vector<8x8xbf16>, vector<512x8xf32> -> vector<512x8xf32>
      %c0_142 = arith.constant 0 : index
      %c0_143 = arith.constant 0 : index
      %208 = vector.load %arg17[%c0_142, %c0_143] : memref<512x8xf32, #tpu.memory_space<vmem>>, vector<512x8xf32>
      %209 = arith.addf %208, %207 : vector<512x8xf32>
      %c0_144 = arith.constant 0 : index
      %c0_145 = arith.constant 0 : index
      %210 = vector.load %arg17[%c0_144, %c0_145] : memref<512x8xf32, #tpu.memory_space<vmem>>, vector<512x8xf32>
      tpu.vector_store %arg17[%c0_144, %c0_145], %209 {strides = array<i32>} : memref<512x8xf32, #tpu.memory_space<vmem>>, vector<512x8xf32>,
      %211 = vector.extract_strided_slice %149 {offsets = [0, 2, 1, 0], sizes = [2, 16, 16, 8], strides = [1, 1, 1, 1]} : vector<2x18x18x8xf32> to vector<2x16x16x8xf32>
      %212 = vector.shape_cast %211 : vector<2x16x16x8xf32> to vector<512x8xf32>
      %213 = arith.truncf %212 : vector<512x8xf32> to vector<512x8xbf16>
      %c7 = arith.constant 7 : index
      %c0_146 = arith.constant 0 : index
      %c0_147 = arith.constant 0 : index
      %214 = vector.load %arg4[%c7, %c0_146, %c0_147] : memref<9x8x8xbf16, #tpu.memory_space<vmem>>, vector<1x8x8xbf16>
      %215 = vector.shape_cast %214 : vector<1x8x8xbf16> to vector<8x8xbf16>
      %cst_148 = arith.constant dense<0.000000e+00> : vector<512x8xf32>
      %216 = tpu.matmul %213, %215, %cst_148 {dimension_numbers = #tpu.dot_dimension_numbers<[1], [0], [0], [1], [0, 0, 1, 1], [], []>} : vector<512x8xbf16>, vector<8x8xbf16>, vector<512x8xf32> -> vector<512x8xf32>
      %c0_149 = arith.constant 0 : index
      %c0_150 = arith.constant 0 : index
      %217 = vector.load %arg17[%c0_149, %c0_150] : memref<512x8xf32, #tpu.memory_space<vmem>>, vector<512x8xf32>
      %218 = arith.addf %217, %216 : vector<512x8xf32>
      %c0_151 = arith.constant 0 : index
      %c0_152 = arith.constant 0 : index
      %219 = vector.load %arg17[%c0_151, %c0_152] : memref<512x8xf32, #tpu.memory_space<vmem>>, vector<512x8xf32>
      tpu.vector_store %arg17[%c0_151, %c0_152], %218 {strides = array<i32>} : memref<512x8xf32, #tpu.memory_space<vmem>>, vector<512x8xf32>,
      %220 = vector.extract_strided_slice %149 {offsets = [0, 2, 2, 0], sizes = [2, 16, 16, 8], strides = [1, 1, 1, 1]} : vector<2x18x18x8xf32> to vector<2x16x16x8xf32>
      %221 = vector.shape_cast %220 : vector<2x16x16x8xf32> to vector<512x8xf32>
      %222 = arith.truncf %221 : vector<512x8xf32> to vector<512x8xbf16>
      %c8 = arith.constant 8 : index
      %c0_153 = arith.constant 0 : index
      %c0_154 = arith.constant 0 : index
      %223 = vector.load %arg4[%c8, %c0_153, %c0_154] : memref<9x8x8xbf16, #tpu.memory_space<vmem>>, vector<1x8x8xbf16>
      %224 = vector.shape_cast %223 : vector<1x8x8xbf16> to vector<8x8xbf16>
      %cst_155 = arith.constant dense<0.000000e+00> : vector<512x8xf32>
      %225 = tpu.matmul %222, %224, %cst_155 {dimension_numbers = #tpu.dot_dimension_numbers<[1], [0], [0], [1], [0, 0, 1, 1], [], []>} : vector<512x8xbf16>, vector<8x8xbf16>, vector<512x8xf32> -> vector<512x8xf32>
      %c0_156 = arith.constant 0 : index
      %c0_157 = arith.constant 0 : index
      %226 = vector.load %arg17[%c0_156, %c0_157] : memref<512x8xf32, #tpu.memory_space<vmem>>, vector<512x8xf32>
      %227 = arith.addf %226, %225 : vector<512x8xf32>
      %c0_158 = arith.constant 0 : index
      %c0_159 = arith.constant 0 : index
      %228 = vector.load %arg17[%c0_158, %c0_159] : memref<512x8xf32, #tpu.memory_space<vmem>>, vector<512x8xf32>
      tpu.vector_store %arg17[%c0_158, %c0_159], %227 {strides = array<i32>} : memref<512x8xf32, #tpu.memory_space<vmem>>, vector<512x8xf32>,
      tpu.yield
    }) : () -> ()
    %c0_17 = arith.constant 0 : index
    %c0_18 = arith.constant 0 : index
    %34 = vector.load %arg17[%c0_17, %c0_18] : memref<512x8xf32, #tpu.memory_space<vmem>>, vector<512x8xf32>
    %c0_19 = arith.constant 0 : index
    %c0_20 = arith.constant 0 : index
    %35 = vector.load %arg5[%c0_19, %c0_20] : memref<1x8xf32, #tpu.memory_space<vmem>>, vector<1x8xf32>
    %c0_21 = arith.constant 0 : index
    %c0_22 = arith.constant 0 : index
    %36 = vector.load %arg6[%c0_21, %c0_22] : memref<1x8xf32, #tpu.memory_space<vmem>>, vector<1x8xf32>
    %cst_23 = arith.constant dense<0.000000e+00> : vector<8xf32>
    %37 = vector.multi_reduction <add>, %34, %cst_23 [0] : vector<512x8xf32> to vector<8xf32>
    %38 = vector.shape_cast %37 : vector<8xf32> to vector<1x8xf32>
    %cst_24 = arith.constant 5.120000e+02 : f32
    %39 = vector.broadcast %cst_24 : f32 to vector<1x8xf32>
    %40 = arith.divf %38, %39 : vector<1x8xf32>
    %41 = vector.broadcast %40 : vector<1x8xf32> to vector<512x8xf32>
    %42 = arith.subf %34, %41 : vector<512x8xf32>
    %43 = arith.mulf %42, %42 : vector<512x8xf32>
    %cst_25 = arith.constant dense<0.000000e+00> : vector<8xf32>
    %44 = vector.multi_reduction <add>, %43, %cst_25 [0] : vector<512x8xf32> to vector<8xf32>
    %45 = vector.shape_cast %44 : vector<8xf32> to vector<1x8xf32>
    %cst_26 = arith.constant 5.120000e+02 : f32
    %46 = vector.broadcast %cst_26 : f32 to vector<1x8xf32>
    %47 = arith.divf %45, %46 : vector<1x8xf32>
    %cst_27 = arith.constant 9.99999974E-6 : f32
    %48 = vector.broadcast %cst_27 : f32 to vector<1x8xf32>
    %49 = arith.addf %47, %48 : vector<1x8xf32>
    %50 = math.rsqrt %49 : vector<1x8xf32>
    %51 = vector.broadcast %50 : vector<1x8xf32> to vector<512x8xf32>
    %52 = arith.mulf %42, %51 : vector<512x8xf32>
    %53 = vector.broadcast %35 : vector<1x8xf32> to vector<512x8xf32>
    %54 = arith.mulf %52, %53 : vector<512x8xf32>
    %55 = vector.broadcast %36 : vector<1x8xf32> to vector<512x8xf32>
    %56 = arith.addf %54, %55 : vector<512x8xf32>
    %c0_28 = arith.constant 0 : index
    %c0_29 = arith.constant 0 : index
    %57 = vector.load %arg17[%c0_28, %c0_29] : memref<512x8xf32, #tpu.memory_space<vmem>>, vector<512x8xf32>
    tpu.vector_store %arg17[%c0_28, %c0_29], %56 {strides = array<i32>} : memref<512x8xf32, #tpu.memory_space<vmem>>, vector<512x8xf32>,
    %c0_30 = arith.constant 0 : index
    %c0_31 = arith.constant 0 : index
    %58 = vector.load %arg17[%c0_30, %c0_31] : memref<512x8xf32, #tpu.memory_space<vmem>>, vector<512x8xf32>
    %59 = vector.shape_cast %58 : vector<512x8xf32> to vector<2x256x8xf32>
    %cst_32 = arith.constant dense<0.000000e+00> : vector<2x8xf32>
    %60 = vector.multi_reduction <add>, %59, %cst_32 [1] : vector<2x256x8xf32> to vector<2x8xf32>
    %cst_33 = arith.constant 2.560000e+02 : f32
    %61 = vector.broadcast %cst_33 : f32 to vector<2x8xf32>
    %62 = arith.divf %60, %61 : vector<2x8xf32>
    %c0_34 = arith.constant 0 : index
    %c0_35 = arith.constant 0 : index
    %63 = vector.load %arg7[%c0_34, %c0_35] : memref<8x2xf32, #tpu.memory_space<vmem>>, vector<8x2xf32>
    %cst_36 = arith.constant dense<0.000000e+00> : vector<2x2xf32>
    %64 = tpu.matmul %62, %63, %cst_36 {dimension_numbers = #tpu.dot_dimension_numbers<[1], [0], [0], [1], [0, 0, 1, 1], [], []>} : vector<2x8xf32>, vector<8x2xf32>, vector<2x2xf32> -> vector<2x2xf32>
    %c0_37 = arith.constant 0 : index
    %c0_38 = arith.constant 0 : index
    %65 = vector.load %arg8[%c0_37, %c0_38] : memref<1x2xf32, #tpu.memory_space<vmem>>, vector<1x2xf32>
    %66 = vector.broadcast %65 : vector<1x2xf32> to vector<2x2xf32>
    %67 = arith.addf %64, %66 : vector<2x2xf32>
    %c0_39 = arith.constant 0 : index
    %c0_40 = arith.constant 0 : index
    %68 = vector.load %arg9[%c0_39, %c0_40] : memref<1x2xf32, #tpu.memory_space<vmem>>, vector<1x2xf32>
    %c0_41 = arith.constant 0 : index
    %c0_42 = arith.constant 0 : index
    %69 = vector.load %arg10[%c0_41, %c0_42] : memref<1x2xf32, #tpu.memory_space<vmem>>, vector<1x2xf32>
    %cst_43 = arith.constant dense<0.000000e+00> : vector<2xf32>
    %70 = vector.multi_reduction <add>, %67, %cst_43 [0] : vector<2x2xf32> to vector<2xf32>
    %71 = vector.shape_cast %70 : vector<2xf32> to vector<1x2xf32>
    %cst_44 = arith.constant 2.000000e+00 : f32
    %72 = vector.broadcast %cst_44 : f32 to vector<1x2xf32>
    %73 = arith.divf %71, %72 : vector<1x2xf32>
    %74 = vector.broadcast %73 : vector<1x2xf32> to vector<2x2xf32>
    %75 = arith.subf %67, %74 : vector<2x2xf32>
    %76 = arith.mulf %75, %75 : vector<2x2xf32>
    %cst_45 = arith.constant dense<0.000000e+00> : vector<2xf32>
    %77 = vector.multi_reduction <add>, %76, %cst_45 [0] : vector<2x2xf32> to vector<2xf32>
    %78 = vector.shape_cast %77 : vector<2xf32> to vector<1x2xf32>
    %cst_46 = arith.constant 2.000000e+00 : f32
    %79 = vector.broadcast %cst_46 : f32 to vector<1x2xf32>
    %80 = arith.divf %78, %79 : vector<1x2xf32>
    %cst_47 = arith.constant 9.99999974E-6 : f32
    %81 = vector.broadcast %cst_47 : f32 to vector<1x2xf32>
    %82 = arith.addf %80, %81 : vector<1x2xf32>
    %83 = math.rsqrt %82 : vector<1x2xf32>
    %84 = vector.broadcast %83 : vector<1x2xf32> to vector<2x2xf32>
    %85 = arith.mulf %75, %84 : vector<2x2xf32>
    %86 = vector.broadcast %68 : vector<1x2xf32> to vector<2x2xf32>
    %87 = arith.mulf %85, %86 : vector<2x2xf32>
    %88 = vector.broadcast %69 : vector<1x2xf32> to vector<2x2xf32>
    %89 = arith.addf %87, %88 : vector<2x2xf32>
    %cst_48 = arith.constant 0.000000e+00 : f32
    %90 = vector.broadcast %cst_48 : f32 to vector<2x2xf32>
    %91 = arith.subf %90, %89 : vector<2x2xf32>
    %92 = math.exp %91 : vector<2x2xf32>
    %cst_49 = arith.constant 1.000000e+00 : f32
    %93 = vector.broadcast %cst_49 : f32 to vector<2x2xf32>
    %94 = arith.addf %93, %92 : vector<2x2xf32>
    %cst_50 = arith.constant 1.000000e+00 : f32
    %95 = vector.broadcast %cst_50 : f32 to vector<2x2xf32>
    %96 = arith.divf %95, %94 : vector<2x2xf32>
    %97 = arith.mulf %89, %96 : vector<2x2xf32>
    %c0_51 = arith.constant 0 : index
    %c0_52 = arith.constant 0 : index
    %98 = vector.load %arg11[%c0_51, %c0_52] : memref<2x8xf32, #tpu.memory_space<vmem>>, vector<2x8xf32>
    %cst_53 = arith.constant dense<0.000000e+00> : vector<2x8xf32>
    %99 = tpu.matmul %97, %98, %cst_53 {dimension_numbers = #tpu.dot_dimension_numbers<[1], [0], [0], [1], [0, 0, 1, 1], [], []>} : vector<2x2xf32>, vector<2x8xf32>, vector<2x8xf32> -> vector<2x8xf32>
    %c0_54 = arith.constant 0 : index
    %c0_55 = arith.constant 0 : index
    %100 = vector.load %arg12[%c0_54, %c0_55] : memref<1x8xf32, #tpu.memory_space<vmem>>, vector<1x8xf32>
    %101 = vector.broadcast %100 : vector<1x8xf32> to vector<2x8xf32>
    %102 = arith.addf %99, %101 : vector<2x8xf32>
    %cst_56 = arith.constant 0.000000e+00 : f32
    %103 = vector.broadcast %cst_56 : f32 to vector<2x8xf32>
    %104 = arith.subf %103, %102 : vector<2x8xf32>
    %105 = math.exp %104 : vector<2x8xf32>
    %cst_57 = arith.constant 1.000000e+00 : f32
    %106 = vector.broadcast %cst_57 : f32 to vector<2x8xf32>
    %107 = arith.addf %106, %105 : vector<2x8xf32>
    %cst_58 = arith.constant 1.000000e+00 : f32
    %108 = vector.broadcast %cst_58 : f32 to vector<2x8xf32>
    %109 = arith.divf %108, %107 : vector<2x8xf32>
    %110 = vector.shape_cast %109 : vector<2x8xf32> to vector<2x1x8xf32>
    %111 = vector.broadcast %110 : vector<2x1x8xf32> to vector<2x256x8xf32>
    %112 = arith.mulf %59, %111 : vector<2x256x8xf32>
    %113 = vector.shape_cast %112 : vector<2x256x8xf32> to vector<512x8xf32>
    %114 = arith.truncf %113 : vector<512x8xf32> to vector<512x8xbf16>
    %c0_59 = arith.constant 0 : index
    %c0_60 = arith.constant 0 : index
    %115 = vector.load %arg13[%c0_59, %c0_60] : memref<8x8xbf16, #tpu.memory_space<vmem>>, vector<8x8xbf16>
    %cst_61 = arith.constant dense<0.000000e+00> : vector<512x8xf32>
    %116 = tpu.matmul %114, %115, %cst_61 {dimension_numbers = #tpu.dot_dimension_numbers<[1], [0], [0], [1], [0, 0, 1, 1], [], []>} : vector<512x8xbf16>, vector<8x8xbf16>, vector<512x8xf32> -> vector<512x8xf32>
    %c0_62 = arith.constant 0 : index
    %c0_63 = arith.constant 0 : index
    %117 = vector.load %arg14[%c0_62, %c0_63] : memref<1x8xf32, #tpu.memory_space<vmem>>, vector<1x8xf32>
    %c0_64 = arith.constant 0 : index
    %c0_65 = arith.constant 0 : index
    %118 = vector.load %arg15[%c0_64, %c0_65] : memref<1x8xf32, #tpu.memory_space<vmem>>, vector<1x8xf32>
    %cst_66 = arith.constant dense<0.000000e+00> : vector<8xf32>
    %119 = vector.multi_reduction <add>, %116, %cst_66 [0] : vector<512x8xf32> to vector<8xf32>
    %120 = vector.shape_cast %119 : vector<8xf32> to vector<1x8xf32>
    %cst_67 = arith.constant 5.120000e+02 : f32
    %121 = vector.broadcast %cst_67 : f32 to vector<1x8xf32>
    %122 = arith.divf %120, %121 : vector<1x8xf32>
    %123 = vector.broadcast %122 : vector<1x8xf32> to vector<512x8xf32>
    %124 = arith.subf %116, %123 : vector<512x8xf32>
    %125 = arith.mulf %124, %124 : vector<512x8xf32>
    %cst_68 = arith.constant dense<0.000000e+00> : vector<8xf32>
    %126 = vector.multi_reduction <add>, %125, %cst_68 [0] : vector<512x8xf32> to vector<8xf32>
    %127 = vector.shape_cast %126 : vector<8xf32> to vector<1x8xf32>
    %cst_69 = arith.constant 5.120000e+02 : f32
    %128 = vector.broadcast %cst_69 : f32 to vector<1x8xf32>
    %129 = arith.divf %127, %128 : vector<1x8xf32>
    %cst_70 = arith.constant 9.99999974E-6 : f32
    %130 = vector.broadcast %cst_70 : f32 to vector<1x8xf32>
    %131 = arith.addf %129, %130 : vector<1x8xf32>
    %132 = math.rsqrt %131 : vector<1x8xf32>
    %133 = vector.broadcast %132 : vector<1x8xf32> to vector<512x8xf32>
    %134 = arith.mulf %124, %133 : vector<512x8xf32>
    %135 = vector.broadcast %117 : vector<1x8xf32> to vector<512x8xf32>
    %136 = arith.mulf %134, %135 : vector<512x8xf32>
    %137 = vector.broadcast %118 : vector<1x8xf32> to vector<512x8xf32>
    %138 = arith.addf %136, %137 : vector<512x8xf32>
    %139 = tpu.transpose %138, [1, 0] : vector<512x8xf32> -> vector<8x512xf32>
    %c0_71 = arith.constant 0 : index
    %c0_72 = arith.constant 0 : index
    %140 = vector.load %arg16[%c0_71, %c0_72] : memref<8x512xf32, #tpu.memory_space<vmem>>, vector<8x512xf32>
    tpu.vector_store %arg16[%c0_71, %c0_72], %139 {strides = array<i32>} : memref<8x512xf32, #tpu.memory_space<vmem>>, vector<8x512xf32>,
    return
  }
}

</mosaic_0001>

<llo_original>
// kernel: tpu_custom_call.1
$region0: #{tpu_custom_call.1}
  #allocation0 [shape = 'u32[]', space=smem, size = 0x4, offset = 0x4, fixed_abs, tag = 'smem constant byte address 0x4 - core index']
  #allocation1 [shape = 'u32[144,128]{1,0:T(1,128)}', space=vmem, size = 0x12000, scoped, tag = 'internal scratch']
  #allocation2 [shape = 'f32[512,8]{1,0:T(8,128)}', space=vmem, size = 0x40000, scoped, tag = 'scratch operand']
  %s0 = inlined_call_operand.vmem [shape: bf16[2,16,16,4], index: 0, kind: input, shape index: {}]
  %s1 = inlined_call_operand.vmem [shape: bf16[4,8], index: 1, kind: input, shape index: {}]
  %s2 = inlined_call_operand.vmem [shape: f32[1,8], index: 2, kind: input, shape index: {}]
  %s3 = inlined_call_operand.vmem [shape: f32[1,8], index: 3, kind: input, shape index: {}]
  %s4 = inlined_call_operand.vmem [shape: bf16[9,8,8], index: 4, kind: input, shape index: {}]
  %s5 = inlined_call_operand.vmem [shape: f32[1,8], index: 5, kind: input, shape index: {}]
  %s6 = inlined_call_operand.vmem [shape: f32[1,8], index: 6, kind: input, shape index: {}]
  %s7 = inlined_call_operand.vmem [shape: f32[8,2], index: 7, kind: input, shape index: {}]
  %s8 = inlined_call_operand.vmem [shape: f32[1,2], index: 8, kind: input, shape index: {}]
  %s9 = inlined_call_operand.vmem [shape: f32[1,2], index: 9, kind: input, shape index: {}]
  %s10 = inlined_call_operand.vmem [shape: f32[1,2], index: 10, kind: input, shape index: {}]
  %s11 = inlined_call_operand.vmem [shape: f32[2,8], index: 11, kind: input, shape index: {}]
  %s12 = inlined_call_operand.vmem [shape: f32[1,8], index: 12, kind: input, shape index: {}]
  %s13 = inlined_call_operand.vmem [shape: bf16[8,8], index: 13, kind: input, shape index: {}]
  %s14 = inlined_call_operand.vmem [shape: f32[1,8], index: 14, kind: input, shape index: {}]
  %s15 = inlined_call_operand.vmem [shape: f32[1,8], index: 15, kind: input, shape index: {}]
  %s16 = inlined_call_operand.hbm [shape: f32[8,512], index: 16, kind: output, shape index: {}]
  %s17 = sld [smem:[#allocation0]]
  $region75: #{tpu_custom_call.1} parent=0
    _
  %s19 = ssub.s32 1, %s17
  %s20 = scalar_select 0, %s19, %s17
  $region1: #{tpu_custom_call.1} parent=0
    #allocation3 [shape = 'u8[16384]{0}', space=vmem, size = 0x4000, scoped, tag = 'output window, operand 0, single buffered']
    #allocation4 [shape = 's32[1]{0}', space=sflag, size = 0x4, scoped, tag = 'scoped memory for tpu_custom_call.1']
    %21 = vsyncpa [#allocation4], 0
    // Predicated region
    $region2: #{tpu_custom_call.1} parent=1 // pred_check
      _
    $region3: #{tpu_custom_call.1} parent=1 // pred_check_branch
      %23 = sbr.rel (0) target = $region5
    $region4: #{tpu_custom_call.1} parent=1 // pred_region
      _
    $region5: #{tpu_custom_call.1} parent=1 // pred_fallthru
      _
    // Predicated region
    $region6: #{tpu_custom_call.1} parent=1 // pred_check
      _
    $region7: #{tpu_custom_call.1} parent=1 // pred_check_branch
      %25 = sbr.rel (0) target = $region9
    $region8: #{tpu_custom_call.1} parent=1 // pred_region
      _
    $region9: #{tpu_custom_call.1} parent=1 // pred_fallthru
      _
    // Predicated region
    $region10: #{tpu_custom_call.1} parent=1 // pred_check
      _
    $region11: #{tpu_custom_call.1} parent=1 // pred_check_branch
      %27 = sbr.rel (0) target = $region13
    $region12: #{tpu_custom_call.1} parent=1 // pred_region
      _
    $region13: #{tpu_custom_call.1} parent=1 // pred_fallthru
      _
    // Predicated region
    $region14: #{tpu_custom_call.1} parent=1 // pred_check
      _
    $region15: #{tpu_custom_call.1} parent=1 // pred_check_branch
      %29 = sbr.rel (0) target = $region17
    $region16: #{tpu_custom_call.1} parent=1 // pred_region
      _
    $region17: #{tpu_custom_call.1} parent=1 // pred_fallthru
      _
    // Predicated region
    $region18: #{tpu_custom_call.1} parent=1 // pred_check
      _
    $region19: #{tpu_custom_call.1} parent=1 // pred_check_branch
      %31 = sbr.rel (0) target = $region21
    $region20: #{tpu_custom_call.1} parent=1 // pred_region
      _
    $region21: #{tpu_custom_call.1} parent=1 // pred_fallthru
      _
    // Predicated region
    $region22: #{tpu_custom_call.1} parent=1 // pred_check
      _
    $region23: #{tpu_custom_call.1} parent=1 // pred_check_branch
      %33 = sbr.rel (0) target = $region25
    $region24: #{tpu_custom_call.1} parent=1 // pred_region
      _
    $region25: #{tpu_custom_call.1} parent=1 // pred_fallthru
      _
    // Predicated region
    $region26: #{tpu_custom_call.1} parent=1 // pred_check
      _
    $region27: #{tpu_custom_call.1} parent=1 // pred_check_branch
      %35 = sbr.rel (0) target = $region29
    $region28: #{tpu_custom_call.1} parent=1 // pred_region
      _
    $region29: #{tpu_custom_call.1} parent=1 // pred_fallthru
      _
    // Predicated region
    $region30: #{tpu_custom_call.1} parent=1 // pred_check
      _
    $region31: #{tpu_custom_call.1} parent=1 // pred_check_branch
      %37 = sbr.rel (0) target = $region33
    $region32: #{tpu_custom_call.1} parent=1 // pred_region
      _
    $region33: #{tpu_custom_call.1} parent=1 // pred_fallthru
      _
    // Predicated region
    $region34: #{tpu_custom_call.1} parent=1 // pred_check
      _
    $region35: #{tpu_custom_call.1} parent=1 // pred_check_branch
      %39 = sbr.rel (0) target = $region37
    $region36: #{tpu_custom_call.1} parent=1 // pred_region
      _
    $region37: #{tpu_custom_call.1} parent=1 // pred_fallthru
      _
    // Predicated region
    $region38: #{tpu_custom_call.1} parent=1 // pred_check
      _
    $region39: #{tpu_custom_call.1} parent=1 // pred_check_branch
      %41 = sbr.rel (0) target = $region41
    $region40: #{tpu_custom_call.1} parent=1 // pred_region
      _
    $region41: #{tpu_custom_call.1} parent=1 // pred_fallthru
      _
    // Predicated region
    $region42: #{tpu_custom_call.1} parent=1 // pred_check
      _
    $region43: #{tpu_custom_call.1} parent=1 // pred_check_branch
      %43 = sbr.rel (0) target = $region45
    $region44: #{tpu_custom_call.1} parent=1 // pred_region
      _
    $region45: #{tpu_custom_call.1} parent=1 // pred_fallthru
      _
    // Predicated region
    $region46: #{tpu_custom_call.1} parent=1 // pred_check
      _
    $region47: #{tpu_custom_call.1} parent=1 // pred_check_branch
      %45 = sbr.rel (0) target = $region49
    $region48: #{tpu_custom_call.1} parent=1 // pred_region
      _
    $region49: #{tpu_custom_call.1} parent=1 // pred_fallthru
      _
    // Predicated region
    $region50: #{tpu_custom_call.1} parent=1 // pred_check
      _
    $region51: #{tpu_custom_call.1} parent=1 // pred_check_branch
      %47 = sbr.rel (0) target = $region53
    $region52: #{tpu_custom_call.1} parent=1 // pred_region
      _
    $region53: #{tpu_custom_call.1} parent=1 // pred_fallthru
      _
    // Predicated region
    $region54: #{tpu_custom_call.1} parent=1 // pred_check
      _
    $region55: #{tpu_custom_call.1} parent=1 // pred_check_branch
      %49 = sbr.rel (0) target = $region57
    $region56: #{tpu_custom_call.1} parent=1 // pred_region
      _
    $region57: #{tpu_custom_call.1} parent=1 // pred_fallthru
      _
    // Predicated region
    $region58: #{tpu_custom_call.1} parent=1 // pred_check
      _
    $region59: #{tpu_custom_call.1} parent=1 // pred_check_branch
      %51 = sbr.rel (0) target = $region61
    $region60: #{tpu_custom_call.1} parent=1 // pred_region
      _
    $region61: #{tpu_custom_call.1} parent=1 // pred_fallthru
      _
    // Predicated region
    $region62: #{tpu_custom_call.1} parent=1 // pred_check
      _
    $region63: #{tpu_custom_call.1} parent=1 // pred_check_branch
      %53 = sbr.rel (0) target = $region65
    $region64: #{tpu_custom_call.1} parent=1 // pred_region
      _
    $region65: #{tpu_custom_call.1} parent=1 // pred_fallthru
      _
    %v55 = vld [vmem:[%s0] sm:$0xf]
    %v56 = vld [vmem:[%s0 + $0x4] sm:$0xf]
    %v57 = vld [vmem:[%s0 + $0x8] sm:$0xf]
    %v58 = vld [vmem:[%s0 + $0xc] sm:$0xf]
    %v59 = vld [vmem:[%s0 + $0x10] sm:$0xf]
    %v60 = vld [vmem:[%s0 + $0x14] sm:$0xf]
    %v61 = vld [vmem:[%s0 + $0x18] sm:$0xf]
    %v62 = vld [vmem:[%s0 + $0x1c] sm:$0xf]
    %v63 = vld [vmem:[%s0 + $0x20] sm:$0xf]
    %v64 = vld [vmem:[%s0 + $0x24] sm:$0xf]
    %v65 = vld [vmem:[%s0 + $0x28] sm:$0xf]
    %v66 = vld [vmem:[%s0 + $0x2c] sm:$0xf]
    %v67 = vld [vmem:[%s0 + $0x30] sm:$0xf]
    %v68 = vld [vmem:[%s0 + $0x34] sm:$0xf]
    %v69 = vld [vmem:[%s0 + $0x38] sm:$0xf]
    %v70 = vld [vmem:[%s0 + $0x3c] sm:$0xf]
    %v71 = vld [vmem:[%s0 + $0x40] sm:$0xf]
    %v72 = vld [vmem:[%s0 + $0x44] sm:$0xf]
    %v73 = vld [vmem:[%s0 + $0x48] sm:$0xf]
    %v74 = vld [vmem:[%s0 + $0x4c] sm:$0xf]
    %v75 = vld [vmem:[%s0 + $0x50] sm:$0xf]
    %v76 = vld [vmem:[%s0 + $0x54] sm:$0xf]
    %v77 = vld [vmem:[%s0 + $0x58] sm:$0xf]
    %v78 = vld [vmem:[%s0 + $0x5c] sm:$0xf]
    %v79 = vld [vmem:[%s0 + $0x60] sm:$0xf]
    %v80 = vld [vmem:[%s0 + $0x64] sm:$0xf]
    %v81 = vld [vmem:[%s0 + $0x68] sm:$0xf]
    %v82 = vld [vmem:[%s0 + $0x6c] sm:$0xf]
    %v83 = vld [vmem:[%s0 + $0x70] sm:$0xf]
    %v84 = vld [vmem:[%s0 + $0x74] sm:$0xf]
    %v85 = vld [vmem:[%s0 + $0x78] sm:$0xf]
    %v86 = vld [vmem:[%s0 + $0x7c] sm:$0xf]
    %v87 = vld [vmem:[%s0 + $0x80] sm:$0xf]
    %v88 = vld [vmem:[%s0 + $0x84] sm:$0xf]
    %v89 = vld [vmem:[%s0 + $0x88] sm:$0xf]
    %v90 = vld [vmem:[%s0 + $0x8c] sm:$0xf]
    %v91 = vld [vmem:[%s0 + $0x90] sm:$0xf]
    %v92 = vld [vmem:[%s0 + $0x94] sm:$0xf]
    %v93 = vld [vmem:[%s0 + $0x98] sm:$0xf]
    %v94 = vld [vmem:[%s0 + $0x9c] sm:$0xf]
    %v95 = vld [vmem:[%s0 + $0xa0] sm:$0xf]
    %v96 = vld [vmem:[%s0 + $0xa4] sm:$0xf]
    %v97 = vld [vmem:[%s0 + $0xa8] sm:$0xf]
    %v98 = vld [vmem:[%s0 + $0xac] sm:$0xf]
    %v99 = vld [vmem:[%s0 + $0xb0] sm:$0xf]
    %v100 = vld [vmem:[%s0 + $0xb4] sm:$0xf]
    %v101 = vld [vmem:[%s0 + $0xb8] sm:$0xf]
    %v102 = vld [vmem:[%s0 + $0xbc] sm:$0xf]
    %v103 = vld [vmem:[%s0 + $0xc0] sm:$0xf]
    %v104 = vld [vmem:[%s0 + $0xc4] sm:$0xf]
    %v105 = vld [vmem:[%s0 + $0xc8] sm:$0xf]
    %v106 = vld [vmem:[%s0 + $0xcc] sm:$0xf]
    %v107 = vld [vmem:[%s0 + $0xd0] sm:$0xf]
    %v108 = vld [vmem:[%s0 + $0xd4] sm:$0xf]
    %v109 = vld [vmem:[%s0 + $0xd8] sm:$0xf]
    %v110 = vld [vmem:[%s0 + $0xdc] sm:$0xf]
    %v111 = vld [vmem:[%s0 + $0xe0] sm:$0xf]
    %v112 = vld [vmem:[%s0 + $0xe4] sm:$0xf]
    %v113 = vld [vmem:[%s0 + $0xe8] sm:$0xf]
    %v114 = vld [vmem:[%s0 + $0xec] sm:$0xf]
    %v115 = vld [vmem:[%s0 + $0xf0] sm:$0xf]
    %v116 = vld [vmem:[%s0 + $0xf4] sm:$0xf]
    %v117 = vld [vmem:[%s0 + $0xf8] sm:$0xf]
    %v118 = vld [vmem:[%s0 + $0xfc] sm:$0xf]
    %v119 = vld [vmem:[%s1] sm:$0x3]
    %v184 = vunpack.c.l.b16 %v55
    %v185 = vunpack.c.l.b16 %v56
    %v186 = vunpack.c.l.b16 %v57
    %v187 = vunpack.c.l.b16 %v58
    %v188 = vunpack.c.l.b16 %v59
    %v189 = vunpack.c.l.b16 %v60
    %v190 = vunpack.c.l.b16 %v61
    %v191 = vunpack.c.l.b16 %v62
    %v192 = vunpack.c.l.b16 %v63
    %v193 = vunpack.c.l.b16 %v64
    %v194 = vunpack.c.l.b16 %v65
    %v195 = vunpack.c.l.b16 %v66
    %v196 = vunpack.c.l.b16 %v67
    %v197 = vunpack.c.l.b16 %v68
    %v198 = vunpack.c.l.b16 %v69
    %v199 = vunpack.c.l.b16 %v70
    %v200 = vunpack.c.l.b16 %v71
    %v201 = vunpack.c.l.b16 %v72
    %v202 = vunpack.c.l.b16 %v73
    %v203 = vunpack.c.l.b16 %v74
    %v204 = vunpack.c.l.b16 %v75
    %v205 = vunpack.c.l.b16 %v76
    %v206 = vunpack.c.l.b16 %v77
    %v207 = vunpack.c.l.b16 %v78
    %v208 = vunpack.c.l.b16 %v79
    %v209 = vunpack.c.l.b16 %v80
    %v210 = vunpack.c.l.b16 %v81
    %v211 = vunpack.c.l.b16 %v82
    %v212 = vunpack.c.l.b16 %v83
    %v213 = vunpack.c.l.b16 %v84
    %v214 = vunpack.c.l.b16 %v85
    %v215 = vunpack.c.l.b16 %v86
    %v216 = vunpack.c.l.b16 %v87
    %v217 = vunpack.c.l.b16 %v88
    %v218 = vunpack.c.l.b16 %v89
    %v219 = vunpack.c.l.b16 %v90
    %v220 = vunpack.c.l.b16 %v91
    %v221 = vunpack.c.l.b16 %v92
    %v222 = vunpack.c.l.b16 %v93
    %v223 = vunpack.c.l.b16 %v94
    %v224 = vunpack.c.l.b16 %v95
    %v225 = vunpack.c.l.b16 %v96
    %v226 = vunpack.c.l.b16 %v97
    %v227 = vunpack.c.l.b16 %v98
    %v228 = vunpack.c.l.b16 %v99
    %v229 = vunpack.c.l.b16 %v100
    %v230 = vunpack.c.l.b16 %v101
    %v231 = vunpack.c.l.b16 %v102
    %v232 = vunpack.c.l.b16 %v103
    %v233 = vunpack.c.l.b16 %v104
    %v234 = vunpack.c.l.b16 %v105
    %v235 = vunpack.c.l.b16 %v106
    %v236 = vunpack.c.l.b16 %v107
    %v237 = vunpack.c.l.b16 %v108
    %v238 = vunpack.c.l.b16 %v109
    %v239 = vunpack.c.l.b16 %v110
    %v240 = vunpack.c.l.b16 %v111
    %v241 = vunpack.c.l.b16 %v112
    %v242 = vunpack.c.l.b16 %v113
    %v243 = vunpack.c.l.b16 %v114
    %v244 = vunpack.c.l.b16 %v115
    %v245 = vunpack.c.l.b16 %v116
    %v246 = vunpack.c.l.b16 %v117
    %v247 = vunpack.c.l.b16 %v118
    %v248 = vpack.c.b16 %v185, %v184
    %v249 = vpack.c.b16 %v187, %v186
    %v250 = vpack.c.b16 %v189, %v188
    %v251 = vpack.c.b16 %v191, %v190
    %v252 = vpack.c.b16 %v193, %v192
    %v253 = vpack.c.b16 %v195, %v194
    %v254 = vpack.c.b16 %v197, %v196
    %v255 = vpack.c.b16 %v199, %v198
    %v256 = vpack.c.b16 %v201, %v200
    %v257 = vpack.c.b16 %v203, %v202
    %v258 = vpack.c.b16 %v205, %v204
    %v259 = vpack.c.b16 %v207, %v206
    %v260 = vpack.c.b16 %v209, %v208
    %v261 = vpack.c.b16 %v211, %v210
    %v262 = vpack.c.b16 %v213, %v212
    %v263 = vpack.c.b16 %v215, %v214
    %v264 = vpack.c.b16 %v217, %v216
    %v265 = vpack.c.b16 %v219, %v218
    %v266 = vpack.c.b16 %v221, %v220
    %v267 = vpack.c.b16 %v223, %v222
    %v268 = vpack.c.b16 %v225, %v224
    %v269 = vpack.c.b16 %v227, %v226
    %v270 = vpack.c.b16 %v229, %v228
    %v271 = vpack.c.b16 %v231, %v230
    %v272 = vpack.c.b16 %v233, %v232
    %v273 = vpack.c.b16 %v235, %v234
    %v274 = vpack.c.b16 %v237, %v236
    %v275 = vpack.c.b16 %v239, %v238
    %v276 = vpack.c.b16 %v241, %v240
    %v277 = vpack.c.b16 %v243, %v242
    %v278 = vpack.c.b16 %v245, %v244
    %v279 = vpack.c.b16 %v247, %v246
    %vm280 = vcmask 31744
    %v282 = vsel %vm280, %v248, 0
    %v285 = vsel %vm280, %v249, 0
    %v288 = vsel %vm280, %v250, 0
    %v291 = vsel %vm280, %v251, 0
    %v294 = vsel %vm280, %v252, 0
    %v297 = vsel %vm280, %v253, 0
    %v300 = vsel %vm280, %v254, 0
    %v303 = vsel %vm280, %v255, 0
    %v306 = vsel %vm280, %v256, 0
    %v309 = vsel %vm280, %v257, 0
    %v312 = vsel %vm280, %v258, 0
    %v315 = vsel %vm280, %v259, 0
    %v318 = vsel %vm280, %v260, 0
    %v321 = vsel %vm280, %v261, 0
    %v324 = vsel %vm280, %v262, 0
    %v327 = vsel %vm280, %v263, 0
    %v330 = vsel %vm280, %v264, 0
    %v333 = vsel %vm280, %v265, 0
    %v336 = vsel %vm280, %v266, 0
    %v339 = vsel %vm280, %v267, 0
    %v342 = vsel %vm280, %v268, 0
    %v345 = vsel %vm280, %v269, 0
    %v348 = vsel %vm280, %v270, 0
    %v351 = vsel %vm280, %v271, 0
    %v354 = vsel %vm280, %v272, 0
    %v357 = vsel %vm280, %v273, 0
    %v360 = vsel %vm280, %v274, 0
    %v363 = vsel %vm280, %v275, 0
    %v366 = vsel %vm280, %v276, 0
    %v369 = vsel %vm280, %v277, 0
    %v372 = vsel %vm280, %v278, 0
    %v375 = vsel %vm280, %v279, 0
    %vm377 = vcmask 1041408
    %v379 = vsel %vm377, %v119, 0
    %381 = vmatprep.subr.bf16.mxu0 0
    %382 = vmatpush1.bf16.msra.mxu0 %v379
    %383 = vmatprep.subr.bf16.mxu0 0
    %384 = vmatpush1.bf16.msra.mxu0 0
    %385 = vmatprep.subr.bf16.mxu0 0
    %386 = vmatpush1.bf16.msra.mxu0 0
    %387 = vmatprep.subr.bf16.mxu0 0
    %388 = vmatpush1.bf16.msra.mxu0 0
    %389 = vmatprep.subr.bf16.mxu0 0
    %390 = vmatpush1.bf16.msra.mxu0 0
    %391 = vmatprep.subr.bf16.mxu0 0
    %392 = vmatpush1.bf16.msra.mxu0 0
    %393 = vmatprep.subr.bf16.mxu0 0
    %394 = vmatpush1.bf16.msra.mxu0 0
    %395 = vmatprep.subr.bf16.mxu0 0
    %396 = vmatpush1.bf16.msra.mxu0 0
    %397 = vmatprep.subr.bf16.mxu0 0
    %398 = vmatpush1.bf16.msra.mxu0 0
    %399 = vmatprep.subr.bf16.mxu0 0
    %400 = vmatpush1.bf16.msra.mxu0 0
    %401 = vmatprep.subr.bf16.mxu0 0
    %402 = vmatpush1.bf16.msra.mxu0 0
    %403 = vmatprep.subr.bf16.mxu0 0
    %404 = vmatpush1.bf16.msra.mxu0 0
    %405 = vmatprep.subr.bf16.mxu0 0
    %406 = vmatpush1.bf16.msra.mxu0 0
    %407 = vmatprep.subr.bf16.mxu0 0
    %408 = vmatpush1.bf16.msra.mxu0 0
    %409 = vmatprep.subr.bf16.mxu0 0
    %410 = vmatpush1.bf16.msra.mxu0 0
    %411 = vmatprep.subr.bf16.mxu0 0
    %412 = vmatpush1.bf16.msra.mxu0 0
    %413 = vmatprep.mubr.bf16.mxu0 0
    %414 = vmatmul.mubr.bf16.gmra.mrb[0].mxu0 %v282
    %v415 = vpop.f32.mrb[0].mxu0
    %v416 = vadd.f32 0.0, %v415
    %v417 = vpop.f32.mrb[0].mxu0
    %v418 = vpop.f32.mrb[0].mxu0
    %v419 = vadd.f32 0.0, %v418
    %v420 = vpop.f32.mrb[0].mxu0
    %421 = vmatprep.mubr.bf16.mxu0 0
    %422 = vmatmul.mubr.bf16.gmra.mrb[0].mxu0 %v285
    %v423 = vpop.f32.mrb[0].mxu0
    %v424 = vadd.f32 0.0, %v423
    %v425 = vpop.f32.mrb[0].mxu0
    %v426 = vpop.f32.mrb[0].mxu0
    %v427 = vadd.f32 0.0, %v426
    %v428 = vpop.f32.mrb[0].mxu0
    %429 = vmatprep.mubr.bf16.mxu0 0
    %430 = vmatmul.mubr.bf16.gmra.mrb[0].mxu0 %v288
    %v431 = vpop.f32.mrb[0].mxu0
    %v432 = vadd.f32 0.0, %v431
    %v433 = vpop.f32.mrb[0].mxu0
    %v434 = vpop.f32.mrb[0].mxu0
    %v435 = vadd.f32 0.0, %v434
    %v436 = vpop.f32.mrb[0].mxu0
    %437 = vmatprep.mubr.bf16.mxu0 0
    %438 = vmatmul.mubr.bf16.gmra.mrb[0].mxu0 %v291
    %v439 = vpop.f32.mrb[0].mxu0
    %v440 = vadd.f32 0.0, %v439
    %v441 = vpop.f32.mrb[0].mxu0
    %v442 = vpop.f32.mrb[0].mxu0
    %v443 = vadd.f32 0.0, %v442
    %v444 = vpop.f32.mrb[0].mxu0
    %445 = vmatprep.mubr.bf16.mxu0 0
    %446 = vmatmul.mubr.bf16.gmra.mrb[0].mxu0 %v294
    %v447 = vpop.f32.mrb[0].mxu0
    %v448 = vadd.f32 0.0, %v447
    %v449 = vpop.f32.mrb[0].mxu0
    %v450 = vpop.f32.mrb[0].mxu0
    %v451 = vadd.f32 0.0, %v450
    %v452 = vpop.f32.mrb[0].mxu0
    %453 = vmatprep.mubr.bf16.mxu0 0
    %454 = vmatmul.mubr.bf16.gmra.mrb[0].mxu0 %v297
    %v455 = vpop.f32.mrb[0].mxu0
    %v456 = vadd.f32 0.0, %v455
    %v457 = vpop.f32.mrb[0].mxu0
    %v458 = vpop.f32.mrb[0].mxu0
    %v459 = vadd.f32 0.0, %v458
    %v460 = vpop.f32.mrb[0].mxu0
    %461 = vmatprep.mubr.bf16.mxu0 0
    %462 = vmatmul.mubr.bf16.gmra.mrb[0].mxu0 %v300
    %v463 = vpop.f32.mrb[0].mxu0
    %v464 = vadd.f32 0.0, %v463
    %v465 = vpop.f32.mrb[0].mxu0
    %v466 = vpop.f32.mrb[0].mxu0
    %v467 = vadd.f32 0.0, %v466
    %v468 = vpop.f32.mrb[0].mxu0
    %469 = vmatprep.mubr.bf16.mxu0 0
    %470 = vmatmul.mubr.bf16.gmra.mrb[0].mxu0 %v303
    %v471 = vpop.f32.mrb[0].mxu0
    %v472 = vadd.f32 0.0, %v471
    %v473 = vpop.f32.mrb[0].mxu0
    %v474 = vpop.f32.mrb[0].mxu0
    %v475 = vadd.f32 0.0, %v474
    %v476 = vpop.f32.mrb[0].mxu0
    %477 = vmatprep.mubr.bf16.mxu0 0
    %478 = vmatmul.mubr.bf16.gmra.mrb[0].mxu0 %v306
    %v479 = vpop.f32.mrb[0].mxu0
    %v480 = vadd.f32 0.0, %v479
    %v481 = vpop.f32.mrb[0].mxu0
    %v482 = vpop.f32.mrb[0].mxu0
    %v483 = vadd.f32 0.0, %v482
    %v484 = vpop.f32.mrb[0].mxu0
    %485 = vmatprep.mubr.bf16.mxu0 0
    %486 = vmatmul.mubr.bf16.gmra.mrb[0].mxu0 %v309
    %v487 = vpop.f32.mrb[0].mxu0
    %v488 = vadd.f32 0.0, %v487
    %v489 = vpop.f32.mrb[0].mxu0
    %v490 = vpop.f32.mrb[0].mxu0
    %v491 = vadd.f32 0.0, %v490
    %v492 = vpop.f32.mrb[0].mxu0
    %493 = vmatprep.mubr.bf16.mxu0 0
    %494 = vmatmul.mubr.bf16.gmra.mrb[0].mxu0 %v312
    %v495 = vpop.f32.mrb[0].mxu0
    %v496 = vadd.f32 0.0, %v495
    %v497 = vpop.f32.mrb[0].mxu0
    %v498 = vpop.f32.mrb[0].mxu0
    %v499 = vadd.f32 0.0, %v498
    %v500 = vpop.f32.mrb[0].mxu0
    %501 = vmatprep.mubr.bf16.mxu0 0
    %502 = vmatmul.mubr.bf16.gmra.mrb[0].mxu0 %v315
    %v503 = vpop.f32.mrb[0].mxu0
    %v504 = vadd.f32 0.0, %v503
    %v505 = vpop.f32.mrb[0].mxu0
    %v506 = vpop.f32.mrb[0].mxu0
    %v507 = vadd.f32 0.0, %v506
    %v508 = vpop.f32.mrb[0].mxu0
    %509 = vmatprep.mubr.bf16.mxu0 0
    %510 = vmatmul.mubr.bf16.gmra.mrb[0].mxu0 %v318
    %v511 = vpop.f32.mrb[0].mxu0
    %v512 = vadd.f32 0.0, %v511
    %v513 = vpop.f32.mrb[0].mxu0
    %v514 = vpop.f32.mrb[0].mxu0
    %v515 = vadd.f32 0.0, %v514
    %v516 = vpop.f32.mrb[0].mxu0
    %517 = vmatprep.mubr.bf16.mxu0 0
    %518 = vmatmul.mubr.bf16.gmra.mrb[0].mxu0 %v321
    %v519 = vpop.f32.mrb[0].mxu0
    %v520 = vadd.f32 0.0, %v519
    %v521 = vpop.f32.mrb[0].mxu0
    %v522 = vpop.f32.mrb[0].mxu0
    %v523 = vadd.f32 0.0, %v522
    %v524 = vpop.f32.mrb[0].mxu0
    %525 = vmatprep.mubr.bf16.mxu0 0
    %526 = vmatmul.mubr.bf16.gmra.mrb[0].mxu0 %v324
    %v527 = vpop.f32.mrb[0].mxu0
    %v528 = vadd.f32 0.0, %v527
    %v529 = vpop.f32.mrb[0].mxu0
    %v530 = vpop.f32.mrb[0].mxu0
    %v531 = vadd.f32 0.0, %v530
    %v532 = vpop.f32.mrb[0].mxu0
    %533 = vmatprep.mubr.bf16.mxu0 0
    %534 = vmatmul.mubr.bf16.gmra.mrb[0].mxu0 %v327
    %v535 = vpop.f32.mrb[0].mxu0
    %v536 = vadd.f32 0.0, %v535
    %v537 = vpop.f32.mrb[0].mxu0
    %v538 = vpop.f32.mrb[0].mxu0
    %v539 = vadd.f32 0.0, %v538
    %v540 = vpop.f32.mrb[0].mxu0
    %541 = vmatprep.mubr.bf16.mxu0 0
    %542 = vmatmul.mubr.bf16.gmra.mrb[0].mxu0 %v330
    %v543 = vpop.f32.mrb[0].mxu0
    %v544 = vadd.f32 0.0, %v543
    %v545 = vpop.f32.mrb[0].mxu0
    %v546 = vpop.f32.mrb[0].mxu0
    %v547 = vadd.f32 0.0, %v546
    %v548 = vpop.f32.mrb[0].mxu0
    %549 = vmatprep.mubr.bf16.mxu0 0
    %550 = vmatmul.mubr.bf16.gmra.mrb[0].mxu0 %v333
    %v551 = vpop.f32.mrb[0].mxu0
    %v552 = vadd.f32 0.0, %v551
    %v553 = vpop.f32.mrb[0].mxu0
    %v554 = vpop.f32.mrb[0].mxu0
    %v555 = vadd.f32 0.0, %v554
    %v556 = vpop.f32.mrb[0].mxu0
    %557 = vmatprep.mubr.bf16.mxu0 0
    %558 = vmatmul.mubr.bf16.gmra.mrb[0].mxu0 %v336
    %v559 = vpop.f32.mrb[0].mxu0
    %v560 = vadd.f32 0.0, %v559
    %v561 = vpop.f32.mrb[0].mxu0
    %v562 = vpop.f32.mrb[0].mxu0
    %v563 = vadd.f32 0.0, %v562
    %v564 = vpop.f32.mrb[0].mxu0
    %565 = vmatprep.mubr.bf16.mxu0 0
    %566 = vmatmul.mubr.bf16.gmra.mrb[0].mxu0 %v339
    %v567 = vpop.f32.mrb[0].mxu0
    %v568 = vadd.f32 0.0, %v567
    %v569 = vpop.f32.mrb[0].mxu0
    %v570 = vpop.f32.mrb[0].mxu0
    %v571 = vadd.f32 0.0, %v570
    %v572 = vpop.f32.mrb[0].mxu0
    %573 = vmatprep.mubr.bf16.mxu0 0
    %574 = vmatmul.mubr.bf16.gmra.mrb[0].mxu0 %v342
    %v575 = vpop.f32.mrb[0].mxu0
    %v576 = vadd.f32 0.0, %v575
    %v577 = vpop.f32.mrb[0].mxu0
    %v578 = vpop.f32.mrb[0].mxu0
    %v579 = vadd.f32 0.0, %v578
    %v580 = vpop.f32.mrb[0].mxu0
    %581 = vmatprep.mubr.bf16.mxu0 0
    %582 = vmatmul.mubr.bf16.gmra.mrb[0].mxu0 %v345
    %v583 = vpop.f32.mrb[0].mxu0
    %v584 = vadd.f32 0.0, %v583
    %v585 = vpop.f32.mrb[0].mxu0
    %v586 = vpop.f32.mrb[0].mxu0
    %v587 = vadd.f32 0.0, %v586
    %v588 = vpop.f32.mrb[0].mxu0
    %589 = vmatprep.mubr.bf16.mxu0 0
    %590 = vmatmul.mubr.bf16.gmra.mrb[0].mxu0 %v348
    %v591 = vpop.f32.mrb[0].mxu0
    %v592 = vadd.f32 0.0, %v591
    %v593 = vpop.f32.mrb[0].mxu0
    %v594 = vpop.f32.mrb[0].mxu0
    %v595 = vadd.f32 0.0, %v594
    %v596 = vpop.f32.mrb[0].mxu0
    %597 = vmatprep.mubr.bf16.mxu0 0
    %598 = vmatmul.mubr.bf16.gmra.mrb[0].mxu0 %v351
    %v599 = vpop.f32.mrb[0].mxu0
    %v600 = vadd.f32 0.0, %v599
    %v601 = vpop.f32.mrb[0].mxu0
    %v602 = vpop.f32.mrb[0].mxu0
    %v603 = vadd.f32 0.0, %v602
    %v604 = vpop.f32.mrb[0].mxu0
    %605 = vmatprep.mubr.bf16.mxu0 0
    %606 = vmatmul.mubr.bf16.gmra.mrb[0].mxu0 %v354
    %v607 = vpop.f32.mrb[0].mxu0
    %v608 = vadd.f32 0.0, %v607
    %v609 = vpop.f32.mrb[0].mxu0
    %v610 = vpop.f32.mrb[0].mxu0
    %v611 = vadd.f32 0.0, %v610
    %v612 = vpop.f32.mrb[0].mxu0
    %613 = vmatprep.mubr.bf16.mxu0 0
    %614 = vmatmul.mubr.bf16.gmra.mrb[0].mxu0 %v357
    %v615 = vpop.f32.mrb[0].mxu0
    %v616 = vadd.f32 0.0, %v615
    %v617 = vpop.f32.mrb[0].mxu0
    %v618 = vpop.f32.mrb[0].mxu0
    %v619 = vadd.f32 0.0, %v618
    %v620 = vpop.f32.mrb[0].mxu0
    %621 = vmatprep.mubr.bf16.mxu0 0
    %622 = vmatmul.mubr.bf16.gmra.mrb[0].mxu0 %v360
    %v623 = vpop.f32.mrb[0].mxu0
    %v624 = vadd.f32 0.0, %v623
    %v625 = vpop.f32.mrb[0].mxu0
    %v626 = vpop.f32.mrb[0].mxu0
    %v627 = vadd.f32 0.0, %v626
    %v628 = vpop.f32.mrb[0].mxu0
    %629 = vmatprep.mubr.bf16.mxu0 0
    %630 = vmatmul.mubr.bf16.gmra.mrb[0].mxu0 %v363
    %v631 = vpop.f32.mrb[0].mxu0
    %v632 = vadd.f32 0.0, %v631
    %v633 = vpop.f32.mrb[0].mxu0
    %v634 = vpop.f32.mrb[0].mxu0
    %v635 = vadd.f32 0.0, %v634
    %v636 = vpop.f32.mrb[0].mxu0
    %637 = vmatprep.mubr.bf16.mxu0 0
    %638 = vmatmul.mubr.bf16.gmra.mrb[0].mxu0 %v366
    %v639 = vpop.f32.mrb[0].mxu0
    %v640 = vadd.f32 0.0, %v639
    %v641 = vpop.f32.mrb[0].mxu0
    %v642 = vpop.f32.mrb[0].mxu0
    %v643 = vadd.f32 0.0, %v642
    %v644 = vpop.f32.mrb[0].mxu0
    %645 = vmatprep.mubr.bf16.mxu0 0
    %646 = vmatmul.mubr.bf16.gmra.mrb[0].mxu0 %v369
    %v647 = vpop.f32.mrb[0].mxu0
    %v648 = vadd.f32 0.0, %v647
    %v649 = vpop.f32.mrb[0].mxu0
    %v650 = vpop.f32.mrb[0].mxu0
    %v651 = vadd.f32 0.0, %v650
    %v652 = vpop.f32.mrb[0].mxu0
    %653 = vmatprep.mubr.bf16.mxu0 0
    %654 = vmatmul.mubr.bf16.gmra.mrb[0].mxu0 %v372
    %v655 = vpop.f32.mrb[0].mxu0
    %v656 = vadd.f32 0.0, %v655
    %v657 = vpop.f32.mrb[0].mxu0
    %v658 = vpop.f32.mrb[0].mxu0
    %v659 = vadd.f32 0.0, %v658
    %v660 = vpop.f32.mrb[0].mxu0
    %661 = vmatprep.mubr.bf16.mxu0 0
    %662 = vmatmul.mubr.bf16.gmra.mrb[0].mxu0 %v375
    %v663 = vpop.f32.mrb[0].mxu0
    %v664 = vadd.f32 0.0, %v663
    %v665 = vpop.f32.mrb[0].mxu0
    %v666 = vpop.f32.mrb[0].mxu0
    %v667 = vadd.f32 0.0, %v666
    %v668 = vpop.f32.mrb[0].mxu0
    %669 = vdwg.mxu0
    %v670 = vld [vmem:[%s2] sm:$0x1]
    %v671 = vld [vmem:[%s3] sm:$0x1]
    %vm672 = vcmask 64512
    %v673 = vsel %vm672, %v416, 0.0
    %v674 = vsel %vm672, %v419, 0.0
    %v675 = vadd.f32 %v673, %v674
    %v676 = vsel %vm672, %v424, 0.0
    %v677 = vadd.f32 %v675, %v676
    %v678 = vsel %vm672, %v427, 0.0
    %v679 = vadd.f32 %v677, %v678
    %v680 = vsel %vm672, %v432, 0.0
    %v681 = vadd.f32 %v679, %v680
    %v682 = vsel %vm672, %v435, 0.0
    %v683 = vadd.f32 %v681, %v682
    %v684 = vsel %vm672, %v440, 0.0
    %v685 = vadd.f32 %v683, %v684
    %v686 = vsel %vm672, %v443, 0.0
    %v687 = vadd.f32 %v685, %v686
    %v688 = vsel %vm672, %v448, 0.0
    %v689 = vadd.f32 %v687, %v688
    %v690 = vsel %vm672, %v451, 0.0
    %v691 = vadd.f32 %v689, %v690
    %v692 = vsel %vm672, %v456, 0.0
    %v693 = vadd.f32 %v691, %v692
    %v694 = vsel %vm672, %v459, 0.0
    %v695 = vadd.f32 %v693, %v694
    %v696 = vsel %vm672, %v464, 0.0
    %v697 = vadd.f32 %v695, %v696
    %v698 = vsel %vm672, %v467, 0.0
    %v699 = vadd.f32 %v697, %v698
    %v700 = vsel %vm672, %v472, 0.0
    %v701 = vadd.f32 %v699, %v700
    %v702 = vsel %vm672, %v475, 0.0
    %v703 = vadd.f32 %v701, %v702
    %v704 = vsel %vm672, %v480, 0.0
    %v705 = vadd.f32 %v703, %v704
    %v706 = vsel %vm672, %v483, 0.0
    %v707 = vadd.f32 %v705, %v706
    %v708 = vsel %vm672, %v488, 0.0
    %v709 = vadd.f32 %v707, %v708
    %v710 = vsel %vm672, %v491, 0.0
    %v711 = vadd.f32 %v709, %v710
    %v712 = vsel %vm672, %v496, 0.0
    %v713 = vadd.f32 %v711, %v712
    %v714 = vsel %vm672, %v499, 0.0
    %v715 = vadd.f32 %v713, %v714
    %v716 = vsel %vm672, %v504, 0.0
    %v717 = vadd.f32 %v715, %v716
    %v718 = vsel %vm672, %v507, 0.0
    %v719 = vadd.f32 %v717, %v718
    %v720 = vsel %vm672, %v512, 0.0
    %v721 = vadd.f32 %v719, %v720
    %v722 = vsel %vm672, %v515, 0.0
    %v723 = vadd.f32 %v721, %v722
    %v724 = vsel %vm672, %v520, 0.0
    %v725 = vadd.f32 %v723, %v724
    %v726 = vsel %vm672, %v523, 0.0
    %v727 = vadd.f32 %v725, %v726
    %v728 = vsel %vm672, %v528, 0.0
    %v729 = vadd.f32 %v727, %v728
    %v730 = vsel %vm672, %v531, 0.0
    %v731 = vadd.f32 %v729, %v730
    %v732 = vsel %vm672, %v536, 0.0
    %v733 = vadd.f32 %v731, %v732
    %v734 = vsel %vm672, %v539, 0.0
    %v735 = vadd.f32 %v733, %v734
    %v736 = vsel %vm672, %v544, 0.0
    %v737 = vadd.f32 %v735, %v736
    %v738 = vsel %vm672, %v547, 0.0
    %v739 = vadd.f32 %v737, %v738
    %v740 = vsel %vm672, %v552, 0.0
    %v741 = vadd.f32 %v739, %v740
    %v742 = vsel %vm672, %v555, 0.0
    %v743 = vadd.f32 %v741, %v742
    %v744 = vsel %vm672, %v560, 0.0
    %v745 = vadd.f32 %v743, %v744
    %v746 = vsel %vm672, %v563, 0.0
    %v747 = vadd.f32 %v745, %v746
    %v748 = vsel %vm672, %v568, 0.0
    %v749 = vadd.f32 %v747, %v748
    %v750 = vsel %vm672, %v571, 0.0
    %v751 = vadd.f32 %v749, %v750
    %v752 = vsel %vm672, %v576, 0.0
    %v753 = vadd.f32 %v751, %v752
    %v754 = vsel %vm672, %v579, 0.0
    %v755 = vadd.f32 %v753, %v754
    %v756 = vsel %vm672, %v584, 0.0
    %v757 = vadd.f32 %v755, %v756
    %v758 = vsel %vm672, %v587, 0.0
    %v759 = vadd.f32 %v757, %v758
    %v760 = vsel %vm672, %v592, 0.0
    %v761 = vadd.f32 %v759, %v760
    %v762 = vsel %vm672, %v595, 0.0
    %v763 = vadd.f32 %v761, %v762
    %v764 = vsel %vm672, %v600, 0.0
    %v765 = vadd.f32 %v763, %v764
    %v766 = vsel %vm672, %v603, 0.0
    %v767 = vadd.f32 %v765, %v766
    %v768 = vsel %vm672, %v608, 0.0
    %v769 = vadd.f32 %v767, %v768
    %v770 = vsel %vm672, %v611, 0.0
    %v771 = vadd.f32 %v769, %v770
    %v772 = vsel %vm672, %v616, 0.0
    %v773 = vadd.f32 %v771, %v772
    %v774 = vsel %vm672, %v619, 0.0
    %v775 = vadd.f32 %v773, %v774
    %v776 = vsel %vm672, %v624, 0.0
    %v777 = vadd.f32 %v775, %v776
    %v778 = vsel %vm672, %v627, 0.0
    %v779 = vadd.f32 %v777, %v778
    %v780 = vsel %vm672, %v632, 0.0
    %v781 = vadd.f32 %v779, %v780
    %v782 = vsel %vm672, %v635, 0.0
    %v783 = vadd.f32 %v781, %v782
    %v784 = vsel %vm672, %v640, 0.0
    %v785 = vadd.f32 %v783, %v784
    %v786 = vsel %vm672, %v643, 0.0
    %v787 = vadd.f32 %v785, %v786
    %v788 = vsel %vm672, %v648, 0.0
    %v789 = vadd.f32 %v787, %v788
    %v790 = vsel %vm672, %v651, 0.0
    %v791 = vadd.f32 %v789, %v790
    %v792 = vsel %vm672, %v656, 0.0
    %v793 = vadd.f32 %v791, %v792
    %v794 = vsel %vm672, %v659, 0.0
    %v795 = vadd.f32 %v793, %v794
    %v796 = vsel %vm672, %v664, 0.0
    %v797 = vadd.f32 %v795, %v796
    %v798 = vsel %vm672, %v667, 0.0
    %v799 = vadd.f32 %v797, %v798
    %v800 = vrot.slane %v799, 4
    %v801 = vadd.f32 %v799, %v800
    %v802 = vrot.slane %v801, 2
    %v803 = vadd.f32 %v801, %v802
    %v804 = vrot.slane %v803, 1
    %v805 = vadd.f32 %v803, %v804
    %v806 = vrcp.pop 512.0
    %v807 = vmul.f32 %v805, %v806
    %v808 = vsub.f32 %v416, %v807
    %v809 = vsub.f32 %v419, %v807
    %v810 = vsub.f32 %v424, %v807
    %v811 = vsub.f32 %v427, %v807
    %v812 = vsub.f32 %v432, %v807
    %v813 = vsub.f32 %v435, %v807
    %v814 = vsub.f32 %v440, %v807
    %v815 = vsub.f32 %v443, %v807
    %v816 = vsub.f32 %v448, %v807
    %v817 = vsub.f32 %v451, %v807
    %v818 = vsub.f32 %v456, %v807
    %v819 = vsub.f32 %v459, %v807
    %v820 = vsub.f32 %v464, %v807
    %v821 = vsub.f32 %v467, %v807
    %v822 = vsub.f32 %v472, %v807
    %v823 = vsub.f32 %v475, %v807
    %v824 = vsub.f32 %v480, %v807
    %v825 = vsub.f32 %v483, %v807
    %v826 = vsub.f32 %v488, %v807
    %v827 = vsub.f32 %v491, %v807
    %v828 = vsub.f32 %v496, %v807
    %v829 = vsub.f32 %v499, %v807
    %v830 = vsub.f32 %v504, %v807
    %v831 = vsub.f32 %v507, %v807
    %v832 = vsub.f32 %v512, %v807
    %v833 = vsub.f32 %v515, %v807
    %v834 = vsub.f32 %v520, %v807
    %v835 = vsub.f32 %v523, %v807
    %v836 = vsub.f32 %v528, %v807
    %v837 = vsub.f32 %v531, %v807
    %v838 = vsub.f32 %v536, %v807
    %v839 = vsub.f32 %v539, %v807
    %v840 = vsub.f32 %v544, %v807
    %v841 = vsub.f32 %v547, %v807
    %v842 = vsub.f32 %v552, %v807
    %v843 = vsub.f32 %v555, %v807
    %v844 = vsub.f32 %v560, %v807
    %v845 = vsub.f32 %v563, %v807
    %v846 = vsub.f32 %v568, %v807
    %v847 = vsub.f32 %v571, %v807
    %v848 = vsub.f32 %v576, %v807
    %v849 = vsub.f32 %v579, %v807
    %v850 = vsub.f32 %v584, %v807
    %v851 = vsub.f32 %v587, %v807
    %v852 = vsub.f32 %v592, %v807
    %v853 = vsub.f32 %v595, %v807
    %v854 = vsub.f32 %v600, %v807
    %v855 = vsub.f32 %v603, %v807
    %v856 = vsub.f32 %v608, %v807
    %v857 = vsub.f32 %v611, %v807
    %v858 = vsub.f32 %v616, %v807
    %v859 = vsub.f32 %v619, %v807
    %v860 = vsub.f32 %v624, %v807
    %v861 = vsub.f32 %v627, %v807
    %v862 = vsub.f32 %v632, %v807
    %v863 = vsub.f32 %v635, %v807
    %v864 = vsub.f32 %v640, %v807
    %v865 = vsub.f32 %v643, %v807
    %v866 = vsub.f32 %v648, %v807
    %v867 = vsub.f32 %v651, %v807
    %v868 = vsub.f32 %v656, %v807
    %v869 = vsub.f32 %v659, %v807
    %v870 = vsub.f32 %v664, %v807
    %v871 = vsub.f32 %v667, %v807
    %v872 = vmul.f32 %v808, %v808
    %v873 = vmul.f32 %v809, %v809
    %v874 = vmul.f32 %v810, %v810
    %v875 = vmul.f32 %v811, %v811
    %v876 = vmul.f32 %v812, %v812
    %v877 = vmul.f32 %v813, %v813
    %v878 = vmul.f32 %v814, %v814
    %v879 = vmul.f32 %v815, %v815
    %v880 = vmul.f32 %v816, %v816
    %v881 = vmul.f32 %v817, %v817
    %v882 = vmul.f32 %v818, %v818
    %v883 = vmul.f32 %v819, %v819
    %v884 = vmul.f32 %v820, %v820
    %v885 = vmul.f32 %v821, %v821
    %v886 = vmul.f32 %v822, %v822
    %v887 = vmul.f32 %v823, %v823
    %v888 = vmul.f32 %v824, %v824
    %v889 = vmul.f32 %v825, %v825
    %v890 = vmul.f32 %v826, %v826
    %v891 = vmul.f32 %v827, %v827
    %v892 = vmul.f32 %v828, %v828
    %v893 = vmul.f32 %v829, %v829
    %v894 = vmul.f32 %v830, %v830
    %v895 = vmul.f32 %v831, %v831
    %v896 = vmul.f32 %v832, %v832
    %v897 = vmul.f32 %v833, %v833
    %v898 = vmul.f32 %v834, %v834
    %v899 = vmul.f32 %v835, %v835
    %v900 = vmul.f32 %v836, %v836
    %v901 = vmul.f32 %v837, %v837
    %v902 = vmul.f32 %v838, %v838
    %v903 = vmul.f32 %v839, %v839
    %v904 = vmul.f32 %v840, %v840
    %v905 = vmul.f32 %v841, %v841
    %v906 = vmul.f32 %v842, %v842
    %v907 = vmul.f32 %v843, %v843
    %v908 = vmul.f32 %v844, %v844
    %v909 = vmul.f32 %v845, %v845
    %v910 = vmul.f32 %v846, %v846
    %v911 = vmul.f32 %v847, %v847
    %v912 = vmul.f32 %v848, %v848
    %v913 = vmul.f32 %v849, %v849
    %v914 = vmul.f32 %v850, %v850
    %v915 = vmul.f32 %v851, %v851
    %v916 = vmul.f32 %v852, %v852
    %v917 = vmul.f32 %v853, %v853
    %v918 = vmul.f32 %v854, %v854
    %v919 = vmul.f32 %v855, %v855
    %v920 = vmul.f32 %v856, %v856
    %v921 = vmul.f32 %v857, %v857
    %v922 = vmul.f32 %v858, %v858
    %v923 = vmul.f32 %v859, %v859
    %v924 = vmul.f32 %v860, %v860
    %v925 = vmul.f32 %v861, %v861
    %v926 = vmul.f32 %v862, %v862
    %v927 = vmul.f32 %v863, %v863
    %v928 = vmul.f32 %v864, %v864
    %v929 = vmul.f32 %v865, %v865
    %v930 = vmul.f32 %v866, %v866
    %v931 = vmul.f32 %v867, %v867
    %v932 = vmul.f32 %v868, %v868
    %v933 = vmul.f32 %v869, %v869
    %v934 = vmul.f32 %v870, %v870
    %v935 = vmul.f32 %v871, %v871
    %v936 = vsel %vm672, %v872, 0.0
    %v937 = vsel %vm672, %v873, 0.0
    %v938 = vadd.f32 %v936, %v937
    %v939 = vsel %vm672, %v874, 0.0
    %v940 = vadd.f32 %v938, %v939
    %v941 = vsel %vm672, %v875, 0.0
    %v942 = vadd.f32 %v940, %v941
    %v943 = vsel %vm672, %v876, 0.0
    %v944 = vadd.f32 %v942, %v943
    %v945 = vsel %vm672, %v877, 0.0
    %v946 = vadd.f32 %v944, %v945
    %v947 = vsel %vm672, %v878, 0.0
    %v948 = vadd.f32 %v946, %v947
    %v949 = vsel %vm672, %v879, 0.0
    %v950 = vadd.f32 %v948, %v949
    %v951 = vsel %vm672, %v880, 0.0
    %v952 = vadd.f32 %v950, %v951
    %v953 = vsel %vm672, %v881, 0.0
    %v954 = vadd.f32 %v952, %v953
    %v955 = vsel %vm672, %v882, 0.0
    %v956 = vadd.f32 %v954, %v955
    %v957 = vsel %vm672, %v883, 0.0
    %v958 = vadd.f32 %v956, %v957
    %v959 = vsel %vm672, %v884, 0.0
    %v960 = vadd.f32 %v958, %v959
    %v961 = vsel %vm672, %v885, 0.0
    %v962 = vadd.f32 %v960, %v961
    %v963 = vsel %vm672, %v886, 0.0
    %v964 = vadd.f32 %v962, %v963
    %v965 = vsel %vm672, %v887, 0.0
    %v966 = vadd.f32 %v964, %v965
    %v967 = vsel %vm672, %v888, 0.0
    %v968 = vadd.f32 %v966, %v967
    %v969 = vsel %vm672, %v889, 0.0
    %v970 = vadd.f32 %v968, %v969
    %v971 = vsel %vm672, %v890, 0.0
    %v972 = vadd.f32 %v970, %v971
    %v973 = vsel %vm672, %v891, 0.0
    %v974 = vadd.f32 %v972, %v973
    %v975 = vsel %vm672, %v892, 0.0
    %v976 = vadd.f32 %v974, %v975
    %v977 = vsel %vm672, %v893, 0.0
    %v978 = vadd.f32 %v976, %v977
    %v979 = vsel %vm672, %v894, 0.0
    %v980 = vadd.f32 %v978, %v979
    %v981 = vsel %vm672, %v895, 0.0
    %v982 = vadd.f32 %v980, %v981
    %v983 = vsel %vm672, %v896, 0.0
    %v984 = vadd.f32 %v982, %v983
    %v985 = vsel %vm672, %v897, 0.0
    %v986 = vadd.f32 %v984, %v985
    %v987 = vsel %vm672, %v898, 0.0
    %v988 = vadd.f32 %v986, %v987
    %v989 = vsel %vm672, %v899, 0.0
    %v990 = vadd.f32 %v988, %v989
    %v991 = vsel %vm672, %v900, 0.0
    %v992 = vadd.f32 %v990, %v991
    %v993 = vsel %vm672, %v901, 0.0
    %v994 = vadd.f32 %v992, %v993
    %v995 = vsel %vm672, %v902, 0.0
    %v996 = vadd.f32 %v994, %v995
    %v997 = vsel %vm672, %v903, 0.0
    %v998 = vadd.f32 %v996, %v997
    %v999 = vsel %vm672, %v904, 0.0
    %v1000 = vadd.f32 %v998, %v999
    %v1001 = vsel %vm672, %v905, 0.0
    %v1002 = vadd.f32 %v1000, %v1001
    %v1003 = vsel %vm672, %v906, 0.0
    %v1004 = vadd.f32 %v1002, %v1003
    %v1005 = vsel %vm672, %v907, 0.0
    %v1006 = vadd.f32 %v1004, %v1005
    %v1007 = vsel %vm672, %v908, 0.0
    %v1008 = vadd.f32 %v1006, %v1007
    %v1009 = vsel %vm672, %v909, 0.0
    %v1010 = vadd.f32 %v1008, %v1009
    %v1011 = vsel %vm672, %v910, 0.0
    %v1012 = vadd.f32 %v1010, %v1011
    %v1013 = vsel %vm672, %v911, 0.0
    %v1014 = vadd.f32 %v1012, %v1013
    %v1015 = vsel %vm672, %v912, 0.0
    %v1016 = vadd.f32 %v1014, %v1015
    %v1017 = vsel %vm672, %v913, 0.0
    %v1018 = vadd.f32 %v1016, %v1017
    %v1019 = vsel %vm672, %v914, 0.0
    %v1020 = vadd.f32 %v1018, %v1019
    %v1021 = vsel %vm672, %v915, 0.0
    %v1022 = vadd.f32 %v1020, %v1021
    %v1023 = vsel %vm672, %v916, 0.0
    %v1024 = vadd.f32 %v1022, %v1023
    %v1025 = vsel %vm672, %v917, 0.0
    %v1026 = vadd.f32 %v1024, %v1025
    %v1027 = vsel %vm672, %v918, 0.0
    %v1028 = vadd.f32 %v1026, %v1027
    %v1029 = vsel %vm672, %v919, 0.0
    %v1030 = vadd.f32 %v1028, %v1029
    %v1031 = vsel %vm672, %v920, 0.0
    %v1032 = vadd.f32 %v1030, %v1031
    %v1033 = vsel %vm672, %v921, 0.0
    %v1034 = vadd.f32 %v1032, %v1033
    %v1035 = vsel %vm672, %v922, 0.0
    %v1036 = vadd.f32 %v1034, %v1035
    %v1037 = vsel %vm672, %v923, 0.0
    %v1038 = vadd.f32 %v1036, %v1037
    %v1039 = vsel %vm672, %v924, 0.0
    %v1040 = vadd.f32 %v1038, %v1039
    %v1041 = vsel %vm672, %v925, 0.0
    %v1042 = vadd.f32 %v1040, %v1041
    %v1043 = vsel %vm672, %v926, 0.0
    %v1044 = vadd.f32 %v1042, %v1043
    %v1045 = vsel %vm672, %v927, 0.0
    %v1046 = vadd.f32 %v1044, %v1045
    %v1047 = vsel %vm672, %v928, 0.0
    %v1048 = vadd.f32 %v1046, %v1047
    %v1049 = vsel %vm672, %v929, 0.0
    %v1050 = vadd.f32 %v1048, %v1049
    %v1051 = vsel %vm672, %v930, 0.0
    %v1052 = vadd.f32 %v1050, %v1051
    %v1053 = vsel %vm672, %v931, 0.0
    %v1054 = vadd.f32 %v1052, %v1053
    %v1055 = vsel %vm672, %v932, 0.0
    %v1056 = vadd.f32 %v1054, %v1055
    %v1057 = vsel %vm672, %v933, 0.0
    %v1058 = vadd.f32 %v1056, %v1057
    %v1059 = vsel %vm672, %v934, 0.0
    %v1060 = vadd.f32 %v1058, %v1059
    %v1061 = vsel %vm672, %v935, 0.0
    %v1062 = vadd.f32 %v1060, %v1061
    %v1063 = vrot.slane %v1062, 4
    %v1064 = vadd.f32 %v1062, %v1063
    %v1065 = vrot.slane %v1064, 2
    %v1066 = vadd.f32 %v1064, %v1065
    %v1067 = vrot.slane %v1066, 1
    %v1068 = vadd.f32 %v1066, %v1067
    %v1069 = vmul.f32 %v1068, %v806
    %v1070 = vadd.f32 %v1069, 1e-05
    %v1071 = vrsqrt.pop %v1070
    %v1072 = vmul.f32 %v808, %v1071
    %v1073 = vmul.f32 %v809, %v1071
    %v1074 = vmul.f32 %v810, %v1071
    %v1075 = vmul.f32 %v811, %v1071
    %v1076 = vmul.f32 %v812, %v1071
    %v1077 = vmul.f32 %v813, %v1071
    %v1078 = vmul.f32 %v814, %v1071
    %v1079 = vmul.f32 %v815, %v1071
    %v1080 = vmul.f32 %v816, %v1071
    %v1081 = vmul.f32 %v817, %v1071
    %v1082 = vmul.f32 %v818, %v1071
    %v1083 = vmul.f32 %v819, %v1071
    %v1084 = vmul.f32 %v820, %v1071
    %v1085 = vmul.f32 %v821, %v1071
    %v1086 = vmul.f32 %v822, %v1071
    %v1087 = vmul.f32 %v823, %v1071
    %v1088 = vmul.f32 %v824, %v1071
    %v1089 = vmul.f32 %v825, %v1071
    %v1090 = vmul.f32 %v826, %v1071
    %v1091 = vmul.f32 %v827, %v1071
    %v1092 = vmul.f32 %v828, %v1071
    %v1093 = vmul.f32 %v829, %v1071
    %v1094 = vmul.f32 %v830, %v1071
    %v1095 = vmul.f32 %v831, %v1071
    %v1096 = vmul.f32 %v832, %v1071
    %v1097 = vmul.f32 %v833, %v1071
    %v1098 = vmul.f32 %v834, %v1071
    %v1099 = vmul.f32 %v835, %v1071
    %v1100 = vmul.f32 %v836, %v1071
    %v1101 = vmul.f32 %v837, %v1071
    %v1102 = vmul.f32 %v838, %v1071
    %v1103 = vmul.f32 %v839, %v1071
    %v1104 = vmul.f32 %v840, %v1071
    %v1105 = vmul.f32 %v841, %v1071
    %v1106 = vmul.f32 %v842, %v1071
    %v1107 = vmul.f32 %v843, %v1071
    %v1108 = vmul.f32 %v844, %v1071
    %v1109 = vmul.f32 %v845, %v1071
    %v1110 = vmul.f32 %v846, %v1071
    %v1111 = vmul.f32 %v847, %v1071
    %v1112 = vmul.f32 %v848, %v1071
    %v1113 = vmul.f32 %v849, %v1071
    %v1114 = vmul.f32 %v850, %v1071
    %v1115 = vmul.f32 %v851, %v1071
    %v1116 = vmul.f32 %v852, %v1071
    %v1117 = vmul.f32 %v853, %v1071
    %v1118 = vmul.f32 %v854, %v1071
    %v1119 = vmul.f32 %v855, %v1071
    %v1120 = vmul.f32 %v856, %v1071
    %v1121 = vmul.f32 %v857, %v1071
    %v1122 = vmul.f32 %v858, %v1071
    %v1123 = vmul.f32 %v859, %v1071
    %v1124 = vmul.f32 %v860, %v1071
    %v1125 = vmul.f32 %v861, %v1071
    %v1126 = vmul.f32 %v862, %v1071
    %v1127 = vmul.f32 %v863, %v1071
    %v1128 = vmul.f32 %v864, %v1071
    %v1129 = vmul.f32 %v865, %v1071
    %v1130 = vmul.f32 %v866, %v1071
    %v1131 = vmul.f32 %v867, %v1071
    %v1132 = vmul.f32 %v868, %v1071
    %v1133 = vmul.f32 %v869, %v1071
    %v1134 = vmul.f32 %v870, %v1071
    %v1135 = vmul.f32 %v871, %v1071
    %v1137 = vlaneseq
    %v1138 = vshrl.u32 %v1137, 7
    %v1139 = vsub.s32 0, %v1138
    %v1140 = vrot.slane %v670, %v1139
    %v1142 = vmul.f32 %v1072, %v1140
    %v1143 = vmul.f32 %v1073, %v1140
    %v1144 = vmul.f32 %v1074, %v1140
    %v1145 = vmul.f32 %v1075, %v1140
    %v1146 = vmul.f32 %v1076, %v1140
    %v1147 = vmul.f32 %v1077, %v1140
    %v1148 = vmul.f32 %v1078, %v1140
    %v1149 = vmul.f32 %v1079, %v1140
    %v1150 = vmul.f32 %v1080, %v1140
    %v1151 = vmul.f32 %v1081, %v1140
    %v1152 = vmul.f32 %v1082, %v1140
    %v1153 = vmul.f32 %v1083, %v1140
    %v1154 = vmul.f32 %v1084, %v1140
    %v1155 = vmul.f32 %v1085, %v1140
    %v1156 = vmul.f32 %v1086, %v1140
    %v1157 = vmul.f32 %v1087, %v1140
    %v1158 = vmul.f32 %v1088, %v1140
    %v1159 = vmul.f32 %v1089, %v1140
    %v1160 = vmul.f32 %v1090, %v1140
    %v1161 = vmul.f32 %v1091, %v1140
    %v1162 = vmul.f32 %v1092, %v1140
    %v1163 = vmul.f32 %v1093, %v1140
    %v1164 = vmul.f32 %v1094, %v1140
    %v1165 = vmul.f32 %v1095, %v1140
    %v1166 = vmul.f32 %v1096, %v1140
    %v1167 = vmul.f32 %v1097, %v1140
    %v1168 = vmul.f32 %v1098, %v1140
    %v1169 = vmul.f32 %v1099, %v1140
    %v1170 = vmul.f32 %v1100, %v1140
    %v1171 = vmul.f32 %v1101, %v1140
    %v1172 = vmul.f32 %v1102, %v1140
    %v1173 = vmul.f32 %v1103, %v1140
    %v1174 = vmul.f32 %v1104, %v1140
    %v1175 = vmul.f32 %v1105, %v1140
    %v1176 = vmul.f32 %v1106, %v1140
    %v1177 = vmul.f32 %v1107, %v1140
    %v1178 = vmul.f32 %v1108, %v1140
    %v1179 = vmul.f32 %v1109, %v1140
    %v1180 = vmul.f32 %v1110, %v1140
    %v1181 = vmul.f32 %v1111, %v1140
    %v1182 = vmul.f32 %v1112, %v1140
    %v1183 = vmul.f32 %v1113, %v1140
    %v1184 = vmul.f32 %v1114, %v1140
    %v1185 = vmul.f32 %v1115, %v1140
    %v1186 = vmul.f32 %v1116, %v1140
    %v1187 = vmul.f32 %v1117, %v1140
    %v1188 = vmul.f32 %v1118, %v1140
    %v1189 = vmul.f32 %v1119, %v1140
    %v1190 = vmul.f32 %v1120, %v1140
    %v1191 = vmul.f32 %v1121, %v1140
    %v1192 = vmul.f32 %v1122, %v1140
    %v1193 = vmul.f32 %v1123, %v1140
    %v1194 = vmul.f32 %v1124, %v1140
    %v1195 = vmul.f32 %v1125, %v1140
    %v1196 = vmul.f32 %v1126, %v1140
    %v1197 = vmul.f32 %v1127, %v1140
    %v1198 = vmul.f32 %v1128, %v1140
    %v1199 = vmul.f32 %v1129, %v1140
    %v1200 = vmul.f32 %v1130, %v1140
    %v1201 = vmul.f32 %v1131, %v1140
    %v1202 = vmul.f32 %v1132, %v1140
    %v1203 = vmul.f32 %v1133, %v1140
    %v1204 = vmul.f32 %v1134, %v1140
    %v1205 = vmul.f32 %v1135, %v1140
    %v1207 = vlaneseq
    %v1208 = vshrl.u32 %v1207, 7
    %v1209 = vsub.s32 0, %v1208
    %v1210 = vrot.slane %v671, %v1209
    %v1212 = vadd.f32 %v1142, %v1210
    %v1213 = vadd.f32 %v1143, %v1210
    %v1214 = vadd.f32 %v1144, %v1210
    %v1215 = vadd.f32 %v1145, %v1210
    %v1216 = vadd.f32 %v1146, %v1210
    %v1217 = vadd.f32 %v1147, %v1210
    %v1218 = vadd.f32 %v1148, %v1210
    %v1219 = vadd.f32 %v1149, %v1210
    %v1220 = vadd.f32 %v1150, %v1210
    %v1221 = vadd.f32 %v1151, %v1210
    %v1222 = vadd.f32 %v1152, %v1210
    %v1223 = vadd.f32 %v1153, %v1210
    %v1224 = vadd.f32 %v1154, %v1210
    %v1225 = vadd.f32 %v1155, %v1210
    %v1226 = vadd.f32 %v1156, %v1210
    %v1227 = vadd.f32 %v1157, %v1210
    %v1228 = vadd.f32 %v1158, %v1210
    %v1229 = vadd.f32 %v1159, %v1210
    %v1230 = vadd.f32 %v1160, %v1210
    %v1231 = vadd.f32 %v1161, %v1210
    %v1232 = vadd.f32 %v1162, %v1210
    %v1233 = vadd.f32 %v1163, %v1210
    %v1234 = vadd.f32 %v1164, %v1210
    %v1235 = vadd.f32 %v1165, %v1210
    %v1236 = vadd.f32 %v1166, %v1210
    %v1237 = vadd.f32 %v1167, %v1210
    %v1238 = vadd.f32 %v1168, %v1210
    %v1239 = vadd.f32 %v1169, %v1210
    %v1240 = vadd.f32 %v1170, %v1210
    %v1241 = vadd.f32 %v1171, %v1210
    %v1242 = vadd.f32 %v1172, %v1210
    %v1243 = vadd.f32 %v1173, %v1210
    %v1244 = vadd.f32 %v1174, %v1210
    %v1245 = vadd.f32 %v1175, %v1210
    %v1246 = vadd.f32 %v1176, %v1210
    %v1247 = vadd.f32 %v1177, %v1210
    %v1248 = vadd.f32 %v1178, %v1210
    %v1249 = vadd.f32 %v1179, %v1210
    %v1250 = vadd.f32 %v1180, %v1210
    %v1251 = vadd.f32 %v1181, %v1210
    %v1252 = vadd.f32 %v1182, %v1210
    %v1253 = vadd.f32 %v1183, %v1210
    %v1254 = vadd.f32 %v1184, %v1210
    %v1255 = vadd.f32 %v1185, %v1210
    %v1256 = vadd.f32 %v1186, %v1210
    %v1257 = vadd.f32 %v1187, %v1210
    %v1258 = vadd.f32 %v1188, %v1210
    %v1259 = vadd.f32 %v1189, %v1210
    %v1260 = vadd.f32 %v1190, %v1210
    %v1261 = vadd.f32 %v1191, %v1210
    %v1262 = vadd.f32 %v1192, %v1210
    %v1263 = vadd.f32 %v1193, %v1210
    %v1264 = vadd.f32 %v1194, %v1210
    %v1265 = vadd.f32 %v1195, %v1210
    %v1266 = vadd.f32 %v1196, %v1210
    %v1267 = vadd.f32 %v1197, %v1210
    %v1268 = vadd.f32 %v1198, %v1210
    %v1269 = vadd.f32 %v1199, %v1210
    %v1270 = vadd.f32 %v1200, %v1210
    %v1271 = vadd.f32 %v1201, %v1210
    %v1272 = vadd.f32 %v1202, %v1210
    %v1273 = vadd.f32 %v1203, %v1210
    %v1274 = vadd.f32 %v1204, %v1210
    %v1275 = vadd.f32 %v1205, %v1210
    %v1276 = vsub.f32 0.0, %v1212
    %v1277 = vsub.f32 0.0, %v1213
    %v1278 = vsub.f32 0.0, %v1214
    %v1279 = vsub.f32 0.0, %v1215
    %v1280 = vsub.f32 0.0, %v1216
    %v1281 = vsub.f32 0.0, %v1217
    %v1282 = vsub.f32 0.0, %v1218
    %v1283 = vsub.f32 0.0, %v1219
    %v1284 = vsub.f32 0.0, %v1220
    %v1285 = vsub.f32 0.0, %v1221
    %v1286 = vsub.f32 0.0, %v1222
    %v1287 = vsub.f32 0.0, %v1223
    %v1288 = vsub.f32 0.0, %v1224
    %v1289 = vsub.f32 0.0, %v1225
    %v1290 = vsub.f32 0.0, %v1226
    %v1291 = vsub.f32 0.0, %v1227
    %v1292 = vsub.f32 0.0, %v1228
    %v1293 = vsub.f32 0.0, %v1229
    %v1294 = vsub.f32 0.0, %v1230
    %v1295 = vsub.f32 0.0, %v1231
    %v1296 = vsub.f32 0.0, %v1232
    %v1297 = vsub.f32 0.0, %v1233
    %v1298 = vsub.f32 0.0, %v1234
    %v1299 = vsub.f32 0.0, %v1235
    %v1300 = vsub.f32 0.0, %v1236
    %v1301 = vsub.f32 0.0, %v1237
    %v1302 = vsub.f32 0.0, %v1238
    %v1303 = vsub.f32 0.0, %v1239
    %v1304 = vsub.f32 0.0, %v1240
    %v1305 = vsub.f32 0.0, %v1241
    %v1306 = vsub.f32 0.0, %v1242
    %v1307 = vsub.f32 0.0, %v1243
    %v1308 = vsub.f32 0.0, %v1244
    %v1309 = vsub.f32 0.0, %v1245
    %v1310 = vsub.f32 0.0, %v1246
    %v1311 = vsub.f32 0.0, %v1247
    %v1312 = vsub.f32 0.0, %v1248
    %v1313 = vsub.f32 0.0, %v1249
    %v1314 = vsub.f32 0.0, %v1250
    %v1315 = vsub.f32 0.0, %v1251
    %v1316 = vsub.f32 0.0, %v1252
    %v1317 = vsub.f32 0.0, %v1253
    %v1318 = vsub.f32 0.0, %v1254
    %v1319 = vsub.f32 0.0, %v1255
    %v1320 = vsub.f32 0.0, %v1256
    %v1321 = vsub.f32 0.0, %v1257
    %v1322 = vsub.f32 0.0, %v1258
    %v1323 = vsub.f32 0.0, %v1259
    %v1324 = vsub.f32 0.0, %v1260
    %v1325 = vsub.f32 0.0, %v1261
    %v1326 = vsub.f32 0.0, %v1262
    %v1327 = vsub.f32 0.0, %v1263
    %v1328 = vsub.f32 0.0, %v1264
    %v1329 = vsub.f32 0.0, %v1265
    %v1330 = vsub.f32 0.0, %v1266
    %v1331 = vsub.f32 0.0, %v1267
    %v1332 = vsub.f32 0.0, %v1268
    %v1333 = vsub.f32 0.0, %v1269
    %v1334 = vsub.f32 0.0, %v1270
    %v1335 = vsub.f32 0.0, %v1271
    %v1336 = vsub.f32 0.0, %v1272
    %v1337 = vsub.f32 0.0, %v1273
    %v1338 = vsub.f32 0.0, %v1274
    %v1339 = vsub.f32 0.0, %v1275
    %v1340 = vmul.f32 %v1276, 1.442695
    %v1341 = vpow.pop %v1340
    %v1342 = vmul.f32 %v1277, 1.442695
    %v1343 = vpow.pop %v1342
    %v1344 = vmul.f32 %v1278, 1.442695
    %v1345 = vpow.pop %v1344
    %v1346 = vmul.f32 %v1279, 1.442695
    %v1347 = vpow.pop %v1346
    %v1348 = vmul.f32 %v1280, 1.442695
    %v1349 = vpow.pop %v1348
    %v1350 = vmul.f32 %v1281, 1.442695
    %v1351 = vpow.pop %v1350
    %v1352 = vmul.f32 %v1282, 1.442695
    %v1353 = vpow.pop %v1352
    %v1354 = vmul.f32 %v1283, 1.442695
    %v1355 = vpow.pop %v1354
    %v1356 = vmul.f32 %v1284, 1.442695
    %v1357 = vpow.pop %v1356
    %v1358 = vmul.f32 %v1285, 1.442695
    %v1359 = vpow.pop %v1358
    %v1360 = vmul.f32 %v1286, 1.442695
    %v1361 = vpow.pop %v1360
    %v1362 = vmul.f32 %v1287, 1.442695
    %v1363 = vpow.pop %v1362
    %v1364 = vmul.f32 %v1288, 1.442695
    %v1365 = vpow.pop %v1364
    %v1366 = vmul.f32 %v1289, 1.442695
    %v1367 = vpow.pop %v1366
    %v1368 = vmul.f32 %v1290, 1.442695
    %v1369 = vpow.pop %v1368
    %v1370 = vmul.f32 %v1291, 1.442695
    %v1371 = vpow.pop %v1370
    %v1372 = vmul.f32 %v1292, 1.442695
    %v1373 = vpow.pop %v1372
    %v1374 = vmul.f32 %v1293, 1.442695
    %v1375 = vpow.pop %v1374
    %v1376 = vmul.f32 %v1294, 1.442695
    %v1377 = vpow.pop %v1376
    %v1378 = vmul.f32 %v1295, 1.442695
    %v1379 = vpow.pop %v1378
    %v1380 = vmul.f32 %v1296, 1.442695
    %v1381 = vpow.pop %v1380
    %v1382 = vmul.f32 %v1297, 1.442695
    %v1383 = vpow.pop %v1382
    %v1384 = vmul.f32 %v1298, 1.442695
    %v1385 = vpow.pop %v1384
    %v1386 = vmul.f32 %v1299, 1.442695
    %v1387 = vpow.pop %v1386
    %v1388 = vmul.f32 %v1300, 1.442695
    %v1389 = vpow.pop %v1388
    %v1390 = vmul.f32 %v1301, 1.442695
    %v1391 = vpow.pop %v1390
    %v1392 = vmul.f32 %v1302, 1.442695
    %v1393 = vpow.pop %v1392
    %v1394 = vmul.f32 %v1303, 1.442695
    %v1395 = vpow.pop %v1394
    %v1396 = vmul.f32 %v1304, 1.442695
    %v1397 = vpow.pop %v1396
    %v1398 = vmul.f32 %v1305, 1.442695
    %v1399 = vpow.pop %v1398
    %v1400 = vmul.f32 %v1306, 1.442695
    %v1401 = vpow.pop %v1400
    %v1402 = vmul.f32 %v1307, 1.442695
    %v1403 = vpow.pop %v1402
    %v1404 = vmul.f32 %v1308, 1.442695
    %v1405 = vpow.pop %v1404
    %v1406 = vmul.f32 %v1309, 1.442695
    %v1407 = vpow.pop %v1406
    %v1408 = vmul.f32 %v1310, 1.442695
    %v1409 = vpow.pop %v1408
    %v1410 = vmul.f32 %v1311, 1.442695
    %v1411 = vpow.pop %v1410
    %v1412 = vmul.f32 %v1312, 1.442695
    %v1413 = vpow.pop %v1412
    %v1414 = vmul.f32 %v1313, 1.442695
    %v1415 = vpow.pop %v1414
    %v1416 = vmul.f32 %v1314, 1.442695
    %v1417 = vpow.pop %v1416
    %v1418 = vmul.f32 %v1315, 1.442695
    %v1419 = vpow.pop %v1418
    %v1420 = vmul.f32 %v1316, 1.442695
    %v1421 = vpow.pop %v1420
    %v1422 = vmul.f32 %v1317, 1.442695
    %v1423 = vpow.pop %v1422
    %v1424 = vmul.f32 %v1318, 1.442695
    %v1425 = vpow.pop %v1424
    %v1426 = vmul.f32 %v1319, 1.442695
    %v1427 = vpow.pop %v1426
    %v1428 = vmul.f32 %v1320, 1.442695
    %v1429 = vpow.pop %v1428
    %v1430 = vmul.f32 %v1321, 1.442695
    %v1431 = vpow.pop %v1430
    %v1432 = vmul.f32 %v1322, 1.442695
    %v1433 = vpow.pop %v1432
    %v1434 = vmul.f32 %v1323, 1.442695
    %v1435 = vpow.pop %v1434
    %v1436 = vmul.f32 %v1324, 1.442695
    %v1437 = vpow.pop %v1436
    %v1438 = vmul.f32 %v1325, 1.442695
    %v1439 = vpow.pop %v1438
    %v1440 = vmul.f32 %v1326, 1.442695
    %v1441 = vpow.pop %v1440
    %v1442 = vmul.f32 %v1327, 1.442695
    %v1443 = vpow.pop %v1442
    %v1444 = vmul.f32 %v1328, 1.442695
    %v1445 = vpow.pop %v1444
    %v1446 = vmul.f32 %v1329, 1.442695
    %v1447 = vpow.pop %v1446
    %v1448 = vmul.f32 %v1330, 1.442695
    %v1449 = vpow.pop %v1448
    %v1450 = vmul.f32 %v1331, 1.442695
    %v1451 = vpow.pop %v1450
    %v1452 = vmul.f32 %v1332, 1.442695
    %v1453 = vpow.pop %v1452
    %v1454 = vmul.f32 %v1333, 1.442695
    %v1455 = vpow.pop %v1454
    %v1456 = vmul.f32 %v1334, 1.442695
    %v1457 = vpow.pop %v1456
    %v1458 = vmul.f32 %v1335, 1.442695
    %v1459 = vpow.pop %v1458
    %v1460 = vmul.f32 %v1336, 1.442695
    %v1461 = vpow.pop %v1460
    %v1462 = vmul.f32 %v1337, 1.442695
    %v1463 = vpow.pop %v1462
    %v1464 = vmul.f32 %v1338, 1.442695
    %v1465 = vpow.pop %v1464
    %v1466 = vmul.f32 %v1339, 1.442695
    %v1467 = vpow.pop %v1466
    %v1468 = vadd.f32 %v1341, 1.0
    %v1469 = vadd.f32 %v1343, 1.0
    %v1470 = vadd.f32 %v1345, 1.0
    %v1471 = vadd.f32 %v1347, 1.0
    %v1472 = vadd.f32 %v1349, 1.0
    %v1473 = vadd.f32 %v1351, 1.0
    %v1474 = vadd.f32 %v1353, 1.0
    %v1475 = vadd.f32 %v1355, 1.0
    %v1476 = vadd.f32 %v1357, 1.0
    %v1477 = vadd.f32 %v1359, 1.0
    %v1478 = vadd.f32 %v1361, 1.0
    %v1479 = vadd.f32 %v1363, 1.0
    %v1480 = vadd.f32 %v1365, 1.0
    %v1481 = vadd.f32 %v1367, 1.0
    %v1482 = vadd.f32 %v1369, 1.0
    %v1483 = vadd.f32 %v1371, 1.0
    %v1484 = vadd.f32 %v1373, 1.0
    %v1485 = vadd.f32 %v1375, 1.0
    %v1486 = vadd.f32 %v1377, 1.0
    %v1487 = vadd.f32 %v1379, 1.0
    %v1488 = vadd.f32 %v1381, 1.0
    %v1489 = vadd.f32 %v1383, 1.0
    %v1490 = vadd.f32 %v1385, 1.0
    %v1491 = vadd.f32 %v1387, 1.0
    %v1492 = vadd.f32 %v1389, 1.0
    %v1493 = vadd.f32 %v1391, 1.0
    %v1494 = vadd.f32 %v1393, 1.0
    %v1495 = vadd.f32 %v1395, 1.0
    %v1496 = vadd.f32 %v1397, 1.0
    %v1497 = vadd.f32 %v1399, 1.0
    %v1498 = vadd.f32 %v1401, 1.0
    %v1499 = vadd.f32 %v1403, 1.0
    %v1500 = vadd.f32 %v1405, 1.0
    %v1501 = vadd.f32 %v1407, 1.0
    %v1502 = vadd.f32 %v1409, 1.0
    %v1503 = vadd.f32 %v1411, 1.0
    %v1504 = vadd.f32 %v1413, 1.0
    %v1505 = vadd.f32 %v1415, 1.0
    %v1506 = vadd.f32 %v1417, 1.0
    %v1507 = vadd.f32 %v1419, 1.0
    %v1508 = vadd.f32 %v1421, 1.0
    %v1509 = vadd.f32 %v1423, 1.0
    %v1510 = vadd.f32 %v1425, 1.0
    %v1511 = vadd.f32 %v1427, 1.0
    %v1512 = vadd.f32 %v1429, 1.0
    %v1513 = vadd.f32 %v1431, 1.0
    %v1514 = vadd.f32 %v1433, 1.0
    %v1515 = vadd.f32 %v1435, 1.0
    %v1516 = vadd.f32 %v1437, 1.0
    %v1517 = vadd.f32 %v1439, 1.0
    %v1518 = vadd.f32 %v1441, 1.0
    %v1519 = vadd.f32 %v1443, 1.0
    %v1520 = vadd.f32 %v1445, 1.0
    %v1521 = vadd.f32 %v1447, 1.0
    %v1522 = vadd.f32 %v1449, 1.0
    %v1523 = vadd.f32 %v1451, 1.0
    %v1524 = vadd.f32 %v1453, 1.0
    %v1525 = vadd.f32 %v1455, 1.0
    %v1526 = vadd.f32 %v1457, 1.0
    %v1527 = vadd.f32 %v1459, 1.0
    %v1528 = vadd.f32 %v1461, 1.0
    %v1529 = vadd.f32 %v1463, 1.0
    %v1530 = vadd.f32 %v1465, 1.0
    %v1531 = vadd.f32 %v1467, 1.0
    %v1532 = vrcp.pop %v1468
    %v1533 = vmul.f32 1.0, %v1532
    %v1534 = vrcp.pop %v1469
    %v1535 = vmul.f32 1.0, %v1534
    %v1536 = vrcp.pop %v1470
    %v1537 = vmul.f32 1.0, %v1536
    %v1538 = vrcp.pop %v1471
    %v1539 = vmul.f32 1.0, %v1538
    %v1540 = vrcp.pop %v1472
    %v1541 = vmul.f32 1.0, %v1540
    %v1542 = vrcp.pop %v1473
    %v1543 = vmul.f32 1.0, %v1542
    %v1544 = vrcp.pop %v1474
    %v1545 = vmul.f32 1.0, %v1544
    %v1546 = vrcp.pop %v1475
    %v1547 = vmul.f32 1.0, %v1546
    %v1548 = vrcp.pop %v1476
    %v1549 = vmul.f32 1.0, %v1548
    %v1550 = vrcp.pop %v1477
    %v1551 = vmul.f32 1.0, %v1550
    %v1552 = vrcp.pop %v1478
    %v1553 = vmul.f32 1.0, %v1552
    %v1554 = vrcp.pop %v1479
    %v1555 = vmul.f32 1.0, %v1554
    %v1556 = vrcp.pop %v1480
    %v1557 = vmul.f32 1.0, %v1556
    %v1558 = vrcp.pop %v1481
    %v1559 = vmul.f32 1.0, %v1558
    %v1560 = vrcp.pop %v1482
    %v1561 = vmul.f32 1.0, %v1560
    %v1562 = vrcp.pop %v1483
    %v1563 = vmul.f32 1.0, %v1562
    %v1564 = vrcp.pop %v1484
    %v1565 = vmul.f32 1.0, %v1564
    %v1566 = vrcp.pop %v1485
    %v1567 = vmul.f32 1.0, %v1566
    %v1568 = vrcp.pop %v1486
    %v1569 = vmul.f32 1.0, %v1568
    %v1570 = vrcp.pop %v1487
    %v1571 = vmul.f32 1.0, %v1570
    %v1572 = vrcp.pop %v1488
    %v1573 = vmul.f32 1.0, %v1572
    %v1574 = vrcp.pop %v1489
    %v1575 = vmul.f32 1.0, %v1574
    %v1576 = vrcp.pop %v1490
    %v1577 = vmul.f32 1.0, %v1576
    %v1578 = vrcp.pop %v1491
    %v1579 = vmul.f32 1.0, %v1578
    %v1580 = vrcp.pop %v1492
    %v1581 = vmul.f32 1.0, %v1580
    %v1582 = vrcp.pop %v1493
    %v1583 = vmul.f32 1.0, %v1582
    %v1584 = vrcp.pop %v1494
    %v1585 = vmul.f32 1.0, %v1584
    %v1586 = vrcp.pop %v1495
    %v1587 = vmul.f32 1.0, %v1586
    %v1588 = vrcp.pop %v1496
    %v1589 = vmul.f32 1.0, %v1588
    %v1590 = vrcp.pop %v1497
    %v1591 = vmul.f32 1.0, %v1590
    %v1592 = vrcp.pop %v1498
    %v1593 = vmul.f32 1.0, %v1592
    %v1594 = vrcp.pop %v1499
    %v1595 = vmul.f32 1.0, %v1594
    %v1596 = vrcp.pop %v1500
    %v1597 = vmul.f32 1.0, %v1596
    %v1598 = vrcp.pop %v1501
    %v1599 = vmul.f32 1.0, %v1598
    %v1600 = vrcp.pop %v1502
    %v1601 = vmul.f32 1.0, %v1600
    %v1602 = vrcp.pop %v1503
    %v1603 = vmul.f32 1.0, %v1602
    %v1604 = vrcp.pop %v1504
    %v1605 = vmul.f32 1.0, %v1604
    %v1606 = vrcp.pop %v1505
    %v1607 = vmul.f32 1.0, %v1606
    %v1608 = vrcp.pop %v1506
    %v1609 = vmul.f32 1.0, %v1608
    %v1610 = vrcp.pop %v1507
    %v1611 = vmul.f32 1.0, %v1610
    %v1612 = vrcp.pop %v1508
    %v1613 = vmul.f32 1.0, %v1612
    %v1614 = vrcp.pop %v1509
    %v1615 = vmul.f32 1.0, %v1614
    %v1616 = vrcp.pop %v1510
    %v1617 = vmul.f32 1.0, %v1616
    %v1618 = vrcp.pop %v1511
    %v1619 = vmul.f32 1.0, %v1618
    %v1620 = vrcp.pop %v1512
    %v1621 = vmul.f32 1.0, %v1620
    %v1622 = vrcp.pop %v1513
    %v1623 = vmul.f32 1.0, %v1622
    %v1624 = vrcp.pop %v1514
    %v1625 = vmul.f32 1.0, %v1624
    %v1626 = vrcp.pop %v1515
    %v1627 = vmul.f32 1.0, %v1626
    %v1628 = vrcp.pop %v1516
    %v1629 = vmul.f32 1.0, %v1628
    %v1630 = vrcp.pop %v1517
    %v1631 = vmul.f32 1.0, %v1630
    %v1632 = vrcp.pop %v1518
    %v1633 = vmul.f32 1.0, %v1632
    %v1634 = vrcp.pop %v1519
    %v1635 = vmul.f32 1.0, %v1634
    %v1636 = vrcp.pop %v1520
    %v1637 = vmul.f32 1.0, %v1636
    %v1638 = vrcp.pop %v1521
    %v1639 = vmul.f32 1.0, %v1638
    %v1640 = vrcp.pop %v1522
    %v1641 = vmul.f32 1.0, %v1640
    %v1642 = vrcp.pop %v1523
    %v1643 = vmul.f32 1.0, %v1642
    %v1644 = vrcp.pop %v1524
    %v1645 = vmul.f32 1.0, %v1644
    %v1646 = vrcp.pop %v1525
    %v1647 = vmul.f32 1.0, %v1646
    %v1648 = vrcp.pop %v1526
    %v1649 = vmul.f32 1.0, %v1648
    %v1650 = vrcp.pop %v1527
    %v1651 = vmul.f32 1.0, %v1650
    %v1652 = vrcp.pop %v1528
    %v1653 = vmul.f32 1.0, %v1652
    %v1654 = vrcp.pop %v1529
    %v1655 = vmul.f32 1.0, %v1654
    %v1656 = vrcp.pop %v1530
    %v1657 = vmul.f32 1.0, %v1656
    %v1658 = vrcp.pop %v1531
    %v1659 = vmul.f32 1.0, %v1658
    %v1660 = vmul.f32 %v1212, %v1533
    %v1661 = vmul.f32 %v1213, %v1535
    %v1662 = vmul.f32 %v1214, %v1537
    %v1663 = vmul.f32 %v1215, %v1539
    %v1664 = vmul.f32 %v1216, %v1541
    %v1665 = vmul.f32 %v1217, %v1543
    %v1666 = vmul.f32 %v1218, %v1545
    %v1667 = vmul.f32 %v1219, %v1547
    %v1668 = vmul.f32 %v1220, %v1549
    %v1669 = vmul.f32 %v1221, %v1551
    %v1670 = vmul.f32 %v1222, %v1553
    %v1671 = vmul.f32 %v1223, %v1555
    %v1672 = vmul.f32 %v1224, %v1557
    %v1673 = vmul.f32 %v1225, %v1559
    %v1674 = vmul.f32 %v1226, %v1561
    %v1675 = vmul.f32 %v1227, %v1563
    %v1676 = vmul.f32 %v1228, %v1565
    %v1677 = vmul.f32 %v1229, %v1567
    %v1678 = vmul.f32 %v1230, %v1569
    %v1679 = vmul.f32 %v1231, %v1571
    %v1680 = vmul.f32 %v1232, %v1573
    %v1681 = vmul.f32 %v1233, %v1575
    %v1682 = vmul.f32 %v1234, %v1577
    %v1683 = vmul.f32 %v1235, %v1579
    %v1684 = vmul.f32 %v1236, %v1581
    %v1685 = vmul.f32 %v1237, %v1583
    %v1686 = vmul.f32 %v1238, %v1585
    %v1687 = vmul.f32 %v1239, %v1587
    %v1688 = vmul.f32 %v1240, %v1589
    %v1689 = vmul.f32 %v1241, %v1591
    %v1690 = vmul.f32 %v1242, %v1593
    %v1691 = vmul.f32 %v1243, %v1595
    %v1692 = vmul.f32 %v1244, %v1597
    %v1693 = vmul.f32 %v1245, %v1599
    %v1694 = vmul.f32 %v1246, %v1601
    %v1695 = vmul.f32 %v1247, %v1603
    %v1696 = vmul.f32 %v1248, %v1605
    %v1697 = vmul.f32 %v1249, %v1607
    %v1698 = vmul.f32 %v1250, %v1609
    %v1699 = vmul.f32 %v1251, %v1611
    %v1700 = vmul.f32 %v1252, %v1613
    %v1701 = vmul.f32 %v1253, %v1615
    %v1702 = vmul.f32 %v1254, %v1617
    %v1703 = vmul.f32 %v1255, %v1619
    %v1704 = vmul.f32 %v1256, %v1621
    %v1705 = vmul.f32 %v1257, %v1623
    %v1706 = vmul.f32 %v1258, %v1625
    %v1707 = vmul.f32 %v1259, %v1627
    %v1708 = vmul.f32 %v1260, %v1629
    %v1709 = vmul.f32 %v1261, %v1631
    %v1710 = vmul.f32 %v1262, %v1633
    %v1711 = vmul.f32 %v1263, %v1635
    %v1712 = vmul.f32 %v1264, %v1637
    %v1713 = vmul.f32 %v1265, %v1639
    %v1714 = vmul.f32 %v1266, %v1641
    %v1715 = vmul.f32 %v1267, %v1643
    %v1716 = vmul.f32 %v1268, %v1645
    %v1717 = vmul.f32 %v1269, %v1647
    %v1718 = vmul.f32 %v1270, %v1649
    %v1719 = vmul.f32 %v1271, %v1651
    %v1720 = vmul.f32 %v1272, %v1653
    %v1721 = vmul.f32 %v1273, %v1655
    %v1722 = vmul.f32 %v1274, %v1657
    %v1723 = vmul.f32 %v1275, %v1659
    $region66: #{tpu_custom_call.1} parent=1
      #allocation5 [shape = 'u8[331776]{0}', space=vmem, size = 0x51000, scoped, tag = 'scoped memory for tpu_custom_call.1']
      %1724 = vst.msk [vmem:[#allocation5] sm:$0xff] %vm672, 0.0
      %1725 = vst.msk [vmem:[#allocation5 + $0x8] sm:$0xff] %vm672, 0.0
      %vm1726 = vcmask 58368
      %1727 = vst.msk [vmem:[#allocation5 + $0x10] sm:$0x3] %vm1726, 0.0
      %1728 = vst.msk [vmem:[#allocation5 + $0x144] sm:$0xff] %vm672, 0.0
      %1729 = vst.msk [vmem:[#allocation5 + $0x14c] sm:$0xff] %vm672, 0.0
      %1730 = vst.msk [vmem:[#allocation5 + $0x154] sm:$0x3] %vm1726, 0.0
      %s1731 = scalar_lea.vmem [#allocation5], 306
      %1732 = vst.msk [vmem:[%s1731] sm:$0xff] %vm672, 0.0
      %1733 = vst.msk [vmem:[%s1731 + $0x8] sm:$0xff] %vm672, 0.0
      %1734 = vst.msk [vmem:[%s1731 + $0x10] sm:$0x3] %vm1726, 0.0
      %1735 = vst.msk [vmem:[%s1731 + $0x144] sm:$0xff] %vm672, 0.0
      %1736 = vst.msk [vmem:[%s1731 + $0x14c] sm:$0xff] %vm672, 0.0
      %1737 = vst.msk [vmem:[%s1731 + $0x154] sm:$0x3] %vm1726, 0.0
      %vm1738 = vcmask 57344
      %1739 = vst.msk [vmem:[#allocation5] sm:$0x1] %vm1738, 0.0
      %1740 = vst.msk [vmem:[#allocation5 + $0x12] sm:$0x1] %vm1738, 0.0
      %1741 = vst.msk [vmem:[#allocation5 + $0x24] sm:$0x1] %vm1738, 0.0
      %1742 = vst.msk [vmem:[#allocation5 + $0x36] sm:$0x1] %vm1738, 0.0
      %1743 = vst.msk [vmem:[#allocation5 + $0x48] sm:$0x1] %vm1738, 0.0
      %1744 = vst.msk [vmem:[#allocation5 + $0x5a] sm:$0x1] %vm1738, 0.0
      %1745 = vst.msk [vmem:[#allocation5 + $0x6c] sm:$0x1] %vm1738, 0.0
      %1746 = vst.msk [vmem:[#allocation5 + $0x7e] sm:$0x1] %vm1738, 0.0
      %1747 = vst.msk [vmem:[#allocation5 + $0x90] sm:$0x1] %vm1738, 0.0
      %1748 = vst.msk [vmem:[#allocation5 + $0xa2] sm:$0x1] %vm1738, 0.0
      %1749 = vst.msk [vmem:[#allocation5 + $0xb4] sm:$0x1] %vm1738, 0.0
      %1750 = vst.msk [vmem:[#allocation5 + $0xc6] sm:$0x1] %vm1738, 0.0
      %1751 = vst.msk [vmem:[#allocation5 + $0xd8] sm:$0x1] %vm1738, 0.0
      %1752 = vst.msk [vmem:[#allocation5 + $0xea] sm:$0x1] %vm1738, 0.0
      %1753 = vst.msk [vmem:[#allocation5 + $0xfc] sm:$0x1] %vm1738, 0.0
      %1754 = vst.msk [vmem:[#allocation5 + $0x10e] sm:$0x1] %vm1738, 0.0
      %1755 = vst.msk [vmem:[#allocation5 + $0x120] sm:$0x1] %vm1738, 0.0
      %1756 = vst.msk [vmem:[#allocation5 + $0x132] sm:$0x1] %vm1738, 0.0
      %1757 = vst.msk [vmem:[#allocation5 + $0x144] sm:$0x1] %vm1738, 0.0
      %1758 = vst.msk [vmem:[#allocation5 + $0x156] sm:$0x1] %vm1738, 0.0
      %1759 = vst.msk [vmem:[#allocation5 + $0x168] sm:$0x1] %vm1738, 0.0
      %1760 = vst.msk [vmem:[#allocation5 + $0x17a] sm:$0x1] %vm1738, 0.0
      %1761 = vst.msk [vmem:[#allocation5 + $0x18c] sm:$0x1] %vm1738, 0.0
      %1762 = vst.msk [vmem:[#allocation5 + $0x19e] sm:$0x1] %vm1738, 0.0
      %1763 = vst.msk [vmem:[#allocation5 + $0x1b0] sm:$0x1] %vm1738, 0.0
      %1764 = vst.msk [vmem:[#allocation5 + $0x1c2] sm:$0x1] %vm1738, 0.0
      %1765 = vst.msk [vmem:[#allocation5 + $0x1d4] sm:$0x1] %vm1738, 0.0
      %1766 = vst.msk [vmem:[#allocation5 + $0x1e6] sm:$0x1] %vm1738, 0.0
      %1767 = vst.msk [vmem:[#allocation5 + $0x1f8] sm:$0x1] %vm1738, 0.0
      %1768 = vst.msk [vmem:[#allocation5 + $0x20a] sm:$0x1] %vm1738, 0.0
      %1769 = vst.msk [vmem:[#allocation5 + $0x21c] sm:$0x1] %vm1738, 0.0
      %1770 = vst.msk [vmem:[#allocation5 + $0x22e] sm:$0x1] %vm1738, 0.0
      %1771 = vst.msk [vmem:[#allocation5 + $0x240] sm:$0x1] %vm1738, 0.0
      %1772 = vst.msk [vmem:[#allocation5 + $0x252] sm:$0x1] %vm1738, 0.0
      %1773 = vst.msk [vmem:[#allocation5 + $0x264] sm:$0x1] %vm1738, 0.0
      %1774 = vst.msk [vmem:[#allocation5 + $0x276] sm:$0x1] %vm1738, 0.0
      %1775 = vst.msk [vmem:[#allocation5 + $0x11] sm:$0x1] %vm1738, 0.0
      %1776 = vst.msk [vmem:[#allocation5 + $0x23] sm:$0x1] %vm1738, 0.0
      %1777 = vst.msk [vmem:[#allocation5 + $0x35] sm:$0x1] %vm1738, 0.0
      %1778 = vst.msk [vmem:[#allocation5 + $0x47] sm:$0x1] %vm1738, 0.0
      %1779 = vst.msk [vmem:[#allocation5 + $0x59] sm:$0x1] %vm1738, 0.0
      %1780 = vst.msk [vmem:[#allocation5 + $0x6b] sm:$0x1] %vm1738, 0.0
      %1781 = vst.msk [vmem:[#allocation5 + $0x7d] sm:$0x1] %vm1738, 0.0
      %1782 = vst.msk [vmem:[#allocation5 + $0x8f] sm:$0x1] %vm1738, 0.0
      %1783 = vst.msk [vmem:[#allocation5 + $0xa1] sm:$0x1] %vm1738, 0.0
      %1784 = vst.msk [vmem:[#allocation5 + $0xb3] sm:$0x1] %vm1738, 0.0
      %1785 = vst.msk [vmem:[#allocation5 + $0xc5] sm:$0x1] %vm1738, 0.0
      %1786 = vst.msk [vmem:[#allocation5 + $0xd7] sm:$0x1] %vm1738, 0.0
      %1787 = vst.msk [vmem:[#allocation5 + $0xe9] sm:$0x1] %vm1738, 0.0
      %1788 = vst.msk [vmem:[#allocation5 + $0xfb] sm:$0x1] %vm1738, 0.0
      %1789 = vst.msk [vmem:[#allocation5 + $0x10d] sm:$0x1] %vm1738, 0.0
      %1790 = vst.msk [vmem:[#allocation5 + $0x11f] sm:$0x1] %vm1738, 0.0
      %1791 = vst.msk [vmem:[#allocation5 + $0x131] sm:$0x1] %vm1738, 0.0
      %1792 = vst.msk [vmem:[#allocation5 + $0x143] sm:$0x1] %vm1738, 0.0
      %1793 = vst.msk [vmem:[#allocation5 + $0x155] sm:$0x1] %vm1738, 0.0
      %1794 = vst.msk [vmem:[#allocation5 + $0x167] sm:$0x1] %vm1738, 0.0
      %1795 = vst.msk [vmem:[#allocation5 + $0x179] sm:$0x1] %vm1738, 0.0
      %1796 = vst.msk [vmem:[#allocation5 + $0x18b] sm:$0x1] %vm1738, 0.0
      %1797 = vst.msk [vmem:[#allocation5 + $0x19d] sm:$0x1] %vm1738, 0.0
      %1798 = vst.msk [vmem:[#allocation5 + $0x1af] sm:$0x1] %vm1738, 0.0
      %1799 = vst.msk [vmem:[#allocation5 + $0x1c1] sm:$0x1] %vm1738, 0.0
      %1800 = vst.msk [vmem:[#allocation5 + $0x1d3] sm:$0x1] %vm1738, 0.0
      %1801 = vst.msk [vmem:[#allocation5 + $0x1e5] sm:$0x1] %vm1738, 0.0
      %1802 = vst.msk [vmem:[#allocation5 + $0x1f7] sm:$0x1] %vm1738, 0.0
      %1803 = vst.msk [vmem:[#allocation5 + $0x209] sm:$0x1] %vm1738, 0.0
      %1804 = vst.msk [vmem:[#allocation5 + $0x21b] sm:$0x1] %vm1738, 0.0
      %1805 = vst.msk [vmem:[#allocation5 + $0x22d] sm:$0x1] %vm1738, 0.0
      %1806 = vst.msk [vmem:[#allocation5 + $0x23f] sm:$0x1] %vm1738, 0.0
      %1807 = vst.msk [vmem:[#allocation5 + $0x251] sm:$0x1] %vm1738, 0.0
      %1808 = vst.msk [vmem:[#allocation5 + $0x263] sm:$0x1] %vm1738, 0.0
      %1809 = vst.msk [vmem:[#allocation5 + $0x275] sm:$0x1] %vm1738, 0.0
      %1810 = vst.msk [vmem:[#allocation5 + $0x287] sm:$0x1] %vm1738, 0.0
      %s1811 = scalar_lea.vmem [#allocation5], 18
      %1812 = vst.msk [vmem:[%s1811 + $0x1] sm:$0xff] %vm672, %v1660
      %1813 = vst.msk [vmem:[%s1811 + $0x9] sm:$0xff] %vm672, %v1661
      %1814 = vst.msk [vmem:[%s1811 + $0x13] sm:$0xff] %vm672, %v1662
      %1815 = vst.msk [vmem:[%s1811 + $0x1b] sm:$0xff] %vm672, %v1663
      %1816 = vst.msk [vmem:[%s1811 + $0x25] sm:$0xff] %vm672, %v1664
      %1817 = vst.msk [vmem:[%s1811 + $0x2d] sm:$0xff] %vm672, %v1665
      %1818 = vst.msk [vmem:[%s1811 + $0x37] sm:$0xff] %vm672, %v1666
      %1819 = vst.msk [vmem:[%s1811 + $0x3f] sm:$0xff] %vm672, %v1667
      %1820 = vst.msk [vmem:[%s1811 + $0x49] sm:$0xff] %vm672, %v1668
      %1821 = vst.msk [vmem:[%s1811 + $0x51] sm:$0xff] %vm672, %v1669
      %1822 = vst.msk [vmem:[%s1811 + $0x5b] sm:$0xff] %vm672, %v1670
      %1823 = vst.msk [vmem:[%s1811 + $0x63] sm:$0xff] %vm672, %v1671
      %1824 = vst.msk [vmem:[%s1811 + $0x6d] sm:$0xff] %vm672, %v1672
      %1825 = vst.msk [vmem:[%s1811 + $0x75] sm:$0xff] %vm672, %v1673
      %1826 = vst.msk [vmem:[%s1811 + $0x7f] sm:$0xff] %vm672, %v1674
      %1827 = vst.msk [vmem:[%s1811 + $0x87] sm:$0xff] %vm672, %v1675
      %1828 = vst.msk [vmem:[%s1811 + $0x91] sm:$0xff] %vm672, %v1676
      %1829 = vst.msk [vmem:[%s1811 + $0x99] sm:$0xff] %vm672, %v1677
      %1830 = vst.msk [vmem:[%s1811 + $0xa3] sm:$0xff] %vm672, %v1678
      %1831 = vst.msk [vmem:[%s1811 + $0xab] sm:$0xff] %vm672, %v1679
      %1832 = vst.msk [vmem:[%s1811 + $0xb5] sm:$0xff] %vm672, %v1680
      %1833 = vst.msk [vmem:[%s1811 + $0xbd] sm:$0xff] %vm672, %v1681
      %1834 = vst.msk [vmem:[%s1811 + $0xc7] sm:$0xff] %vm672, %v1682
      %1835 = vst.msk [vmem:[%s1811 + $0xcf] sm:$0xff] %vm672, %v1683
      %1836 = vst.msk [vmem:[%s1811 + $0xd9] sm:$0xff] %vm672, %v1684
      %1837 = vst.msk [vmem:[%s1811 + $0xe1] sm:$0xff] %vm672, %v1685
      %1838 = vst.msk [vmem:[%s1811 + $0xeb] sm:$0xff] %vm672, %v1686
      %1839 = vst.msk [vmem:[%s1811 + $0xf3] sm:$0xff] %vm672, %v1687
      %1840 = vst.msk [vmem:[%s1811 + $0xfd] sm:$0xff] %vm672, %v1688
      %1841 = vst.msk [vmem:[%s1811 + $0x105] sm:$0xff] %vm672, %v1689
      %1842 = vst.msk [vmem:[%s1811 + $0x10f] sm:$0xff] %vm672, %v1690
      %1843 = vst.msk [vmem:[%s1811 + $0x117] sm:$0xff] %vm672, %v1691
      %1844 = vst.msk [vmem:[%s1811 + $0x145] sm:$0xff] %vm672, %v1692
      %1845 = vst.msk [vmem:[%s1811 + $0x14d] sm:$0xff] %vm672, %v1693
      %1846 = vst.msk [vmem:[%s1811 + $0x157] sm:$0xff] %vm672, %v1694
      %1847 = vst.msk [vmem:[%s1811 + $0x15f] sm:$0xff] %vm672, %v1695
      %1848 = vst.msk [vmem:[%s1811 + $0x169] sm:$0xff] %vm672, %v1696
      %1849 = vst.msk [vmem:[%s1811 + $0x171] sm:$0xff] %vm672, %v1697
      %1850 = vst.msk [vmem:[%s1811 + $0x17b] sm:$0xff] %vm672, %v1698
      %1851 = vst.msk [vmem:[%s1811 + $0x183] sm:$0xff] %vm672, %v1699
      %1852 = vst.msk [vmem:[%s1811 + $0x18d] sm:$0xff] %vm672, %v1700
      %1853 = vst.msk [vmem:[%s1811 + $0x195] sm:$0xff] %vm672, %v1701
      %1854 = vst.msk [vmem:[%s1811 + $0x19f] sm:$0xff] %vm672, %v1702
      %1855 = vst.msk [vmem:[%s1811 + $0x1a7] sm:$0xff] %vm672, %v1703
      %1856 = vst.msk [vmem:[%s1811 + $0x1b1] sm:$0xff] %vm672, %v1704
      %1857 = vst.msk [vmem:[%s1811 + $0x1b9] sm:$0xff] %vm672, %v1705
      %1858 = vst.msk [vmem:[%s1811 + $0x1c3] sm:$0xff] %vm672, %v1706
      %1859 = vst.msk [vmem:[%s1811 + $0x1cb] sm:$0xff] %vm672, %v1707
      %1860 = vst.msk [vmem:[%s1811 + $0x1d5] sm:$0xff] %vm672, %v1708
      %1861 = vst.msk [vmem:[%s1811 + $0x1dd] sm:$0xff] %vm672, %v1709
      %1862 = vst.msk [vmem:[%s1811 + $0x1e7] sm:$0xff] %vm672, %v1710
      %1863 = vst.msk [vmem:[%s1811 + $0x1ef] sm:$0xff] %vm672, %v1711
      %1864 = vst.msk [vmem:[%s1811 + $0x1f9] sm:$0xff] %vm672, %v1712
      %1865 = vst.msk [vmem:[%s1811 + $0x201] sm:$0xff] %vm672, %v1713
      %1866 = vst.msk [vmem:[%s1811 + $0x20b] sm:$0xff] %vm672, %v1714
      %1867 = vst.msk [vmem:[%s1811 + $0x213] sm:$0xff] %vm672, %v1715
      %1868 = vst.msk [vmem:[%s1811 + $0x21d] sm:$0xff] %vm672, %v1716
      %1869 = vst.msk [vmem:[%s1811 + $0x225] sm:$0xff] %vm672, %v1717
      %1870 = vst.msk [vmem:[%s1811 + $0x22f] sm:$0xff] %vm672, %v1718
      %1871 = vst.msk [vmem:[%s1811 + $0x237] sm:$0xff] %vm672, %v1719
      %1872 = vst.msk [vmem:[%s1811 + $0x241] sm:$0xff] %vm672, %v1720
      %1873 = vst.msk [vmem:[%s1811 + $0x249] sm:$0xff] %vm672, %v1721
      %1874 = vst.msk [vmem:[%s1811 + $0x253] sm:$0xff] %vm672, %v1722
      %1875 = vst.msk [vmem:[%s1811 + $0x25b] sm:$0xff] %vm672, %v1723
      %v1876 = vld [vmem:[#allocation5] sm:$0xff]
      %v1877 = vld [vmem:[#allocation5 + $0x8] sm:$0xff]
      %v1878 = vld [vmem:[#allocation5 + $0x10] sm:$0x3]
      %v1879 = vld [vmem:[#allocation5 + $0x12] sm:$0xff]
      %v1880 = vld [vmem:[#allocation5 + $0x1a] sm:$0xff]
      %v1881 = vld [vmem:[#allocation5 + $0x22] sm:$0x3]
      %v1882 = vld [vmem:[#allocation5 + $0x24] sm:$0xff]
      %v1883 = vld [vmem:[#allocation5 + $0x2c] sm:$0xff]
      %v1884 = vld [vmem:[#allocation5 + $0x34] sm:$0x3]
      %v1885 = vld [vmem:[#allocation5 + $0x36] sm:$0xff]
      %v1886 = vld [vmem:[#allocation5 + $0x3e] sm:$0xff]
      %v1887 = vld [vmem:[#allocation5 + $0x46] sm:$0x3]
      %v1888 = vld [vmem:[#allocation5 + $0x48] sm:$0xff]
      %v1889 = vld [vmem:[#allocation5 + $0x50] sm:$0xff]
      %v1890 = vld [vmem:[#allocation5 + $0x58] sm:$0x3]
      %v1891 = vld [vmem:[#allocation5 + $0x5a] sm:$0xff]
      %v1892 = vld [vmem:[#allocation5 + $0x62] sm:$0xff]
      %v1893 = vld [vmem:[#allocation5 + $0x6a] sm:$0x3]
      %v1894 = vld [vmem:[#allocation5 + $0x6c] sm:$0xff]
      %v1895 = vld [vmem:[#allocation5 + $0x74] sm:$0xff]
      %v1896 = vld [vmem:[#allocation5 + $0x7c] sm:$0x3]
      %v1897 = vld [vmem:[#allocation5 + $0x7e] sm:$0xff]
      %v1898 = vld [vmem:[#allocation5 + $0x86] sm:$0xff]
      %v1899 = vld [vmem:[#allocation5 + $0x8e] sm:$0x3]
      %v1900 = vld [vmem:[#allocation5 + $0x90] sm:$0xff]
      %v1901 = vld [vmem:[#allocation5 + $0x98] sm:$0xff]
      %v1902 = vld [vmem:[#allocation5 + $0xa0] sm:$0x3]
      %v1903 = vld [vmem:[#allocation5 + $0xa2] sm:$0xff]
      %v1904 = vld [vmem:[#allocation5 + $0xaa] sm:$0xff]
      %v1905 = vld [vmem:[#allocation5 + $0xb2] sm:$0x3]
      %v1906 = vld [vmem:[#allocation5 + $0xb4] sm:$0xff]
      %v1907 = vld [vmem:[#allocation5 + $0xbc] sm:$0xff]
      %v1908 = vld [vmem:[#allocation5 + $0xc4] sm:$0x3]
      %v1909 = vld [vmem:[#allocation5 + $0xc6] sm:$0xff]
      %v1910 = vld [vmem:[#allocation5 + $0xce] sm:$0xff]
      %v1911 = vld [vmem:[#allocation5 + $0xd6] sm:$0x3]
      %v1912 = vld [vmem:[#allocation5 + $0xd8] sm:$0xff]
      %v1913 = vld [vmem:[#allocation5 + $0xe0] sm:$0xff]
      %v1914 = vld [vmem:[#allocation5 + $0xe8] sm:$0x3]
      %v1915 = vld [vmem:[#allocation5 + $0xea] sm:$0xff]
      %v1916 = vld [vmem:[#allocation5 + $0xf2] sm:$0xff]
      %v1917 = vld [vmem:[#allocation5 + $0xfa] sm:$0x3]
      %v1918 = vld [vmem:[#allocation5 + $0xfc] sm:$0xff]
      %v1919 = vld [vmem:[#allocation5 + $0x104] sm:$0xff]
      %v1920 = vld [vmem:[#allocation5 + $0x10c] sm:$0x3]
      %v1921 = vld [vmem:[#allocation5 + $0x10e] sm:$0xff]
      %v1922 = vld [vmem:[#allocation5 + $0x116] sm:$0xff]
      %v1923 = vld [vmem:[#allocation5 + $0x11e] sm:$0x3]
      %v1924 = vld [vmem:[#allocation5 + $0x120] sm:$0xff]
      %v1925 = vld [vmem:[#allocation5 + $0x128] sm:$0xff]
      %v1926 = vld [vmem:[#allocation5 + $0x130] sm:$0x3]
      %v1927 = vld [vmem:[#allocation5 + $0x132] sm:$0xff]
      %v1928 = vld [vmem:[#allocation5 + $0x13a] sm:$0xff]
      %v1929 = vld [vmem:[#allocation5 + $0x142] sm:$0x3]
      %v1930 = vld [vmem:[#allocation5 + $0x144] sm:$0xff]
      %v1931 = vld [vmem:[#allocation5 + $0x14c] sm:$0xff]
      %v1932 = vld [vmem:[#allocation5 + $0x154] sm:$0x3]
      %v1933 = vld [vmem:[#allocation5 + $0x156] sm:$0xff]
      %v1934 = vld [vmem:[#allocation5 + $0x15e] sm:$0xff]
      %v1935 = vld [vmem:[#allocation5 + $0x166] sm:$0x3]
      %v1936 = vld [vmem:[#allocation5 + $0x168] sm:$0xff]
      %v1937 = vld [vmem:[#allocation5 + $0x170] sm:$0xff]
      %v1938 = vld [vmem:[#allocation5 + $0x178] sm:$0x3]
      %v1939 = vld [vmem:[#allocation5 + $0x17a] sm:$0xff]
      %v1940 = vld [vmem:[#allocation5 + $0x182] sm:$0xff]
      %v1941 = vld [vmem:[#allocation5 + $0x18a] sm:$0x3]
      %v1942 = vld [vmem:[#allocation5 + $0x18c] sm:$0xff]
      %v1943 = vld [vmem:[#allocation5 + $0x194] sm:$0xff]
      %v1944 = vld [vmem:[#allocation5 + $0x19c] sm:$0x3]
      %v1945 = vld [vmem:[#allocation5 + $0x19e] sm:$0xff]
      %v1946 = vld [vmem:[#allocation5 + $0x1a6] sm:$0xff]
      %v1947 = vld [vmem:[#allocation5 + $0x1ae] sm:$0x3]
      %v1948 = vld [vmem:[#allocation5 + $0x1b0] sm:$0xff]
      %v1949 = vld [vmem:[#allocation5 + $0x1b8] sm:$0xff]
      %v1950 = vld [vmem:[#allocation5 + $0x1c0] sm:$0x3]
      %v1951 = vld [vmem:[#allocation5 + $0x1c2] sm:$0xff]
      %v1952 = vld [vmem:[#allocation5 + $0x1ca] sm:$0xff]
      %v1953 = vld [vmem:[#allocation5 + $0x1d2] sm:$0x3]
      %v1954 = vld [vmem:[#allocation5 + $0x1d4] sm:$0xff]
      %v1955 = vld [vmem:[#allocation5 + $0x1dc] sm:$0xff]
      %v1956 = vld [vmem:[#allocation5 + $0x1e4] sm:$0x3]
      %v1957 = vld [vmem:[#allocation5 + $0x1e6] sm:$0xff]
      %v1958 = vld [vmem:[#allocation5 + $0x1ee] sm:$0xff]
      %v1959 = vld [vmem:[#allocation5 + $0x1f6] sm:$0x3]
      %v1960 = vld [vmem:[#allocation5 + $0x1f8] sm:$0xff]
      %v1961 = vld [vmem:[#allocation5 + $0x200] sm:$0xff]
      %v1962 = vld [vmem:[#allocation5 + $0x208] sm:$0x3]
      %v1963 = vld [vmem:[#allocation5 + $0x20a] sm:$0xff]
      %v1964 = vld [vmem:[#allocation5 + $0x212] sm:$0xff]
      %v1965 = vld [vmem:[#allocation5 + $0x21a] sm:$0x3]
      %v1966 = vld [vmem:[#allocation5 + $0x21c] sm:$0xff]
      %v1967 = vld [vmem:[#allocation5 + $0x224] sm:$0xff]
      %v1968 = vld [vmem:[#allocation5 + $0x22c] sm:$0x3]
      %v1969 = vld [vmem:[#allocation5 + $0x22e] sm:$0xff]
      %v1970 = vld [vmem:[#allocation5 + $0x236] sm:$0xff]
      %v1971 = vld [vmem:[#allocation5 + $0x23e] sm:$0x3]
      %v1972 = vld [vmem:[#allocation5 + $0x240] sm:$0xff]
      %v1973 = vld [vmem:[#allocation5 + $0x248] sm:$0xff]
      %v1974 = vld [vmem:[#allocation5 + $0x250] sm:$0x3]
      %v1975 = vld [vmem:[#allocation5 + $0x252] sm:$0xff]
      %v1976 = vld [vmem:[#allocation5 + $0x25a] sm:$0xff]
      %v1977 = vld [vmem:[#allocation5 + $0x262] sm:$0x3]
      %v1978 = vld [vmem:[#allocation5 + $0x264] sm:$0xff]
      %v1979 = vld [vmem:[#allocation5 + $0x26c] sm:$0xff]
      %v1980 = vld [vmem:[#allocation5 + $0x274] sm:$0x3]
      %v1981 = vld [vmem:[#allocation5 + $0x276] sm:$0xff]
      %v1982 = vld [vmem:[#allocation5 + $0x27e] sm:$0xff]
      %v1983 = vld [vmem:[#allocation5 + $0x286] sm:$0x3]
      %v1984 = vpack.c.bf16 %v1877, %v1876
      %v1985 = vpack.c.bf16 %v1880, %v1879
      %v1986 = vpack.c.bf16 %v1883, %v1882
      %v1987 = vpack.c.bf16 %v1886, %v1885
      %v1988 = vpack.c.bf16 %v1889, %v1888
      %v1989 = vpack.c.bf16 %v1892, %v1891
      %v1990 = vpack.c.bf16 %v1895, %v1894
      %v1991 = vpack.c.bf16 %v1898, %v1897
      %v1992 = vpack.c.bf16 %v1901, %v1900
      %v1993 = vpack.c.bf16 %v1904, %v1903
      %v1994 = vpack.c.bf16 %v1907, %v1906
      %v1995 = vpack.c.bf16 %v1910, %v1909
      %v1996 = vpack.c.bf16 %v1913, %v1912
      %v1997 = vpack.c.bf16 %v1916, %v1915
      %v1998 = vpack.c.bf16 %v1919, %v1918
      %v1999 = vpack.c.bf16 %v1922, %v1921
      %v2000 = vpack.c.bf16 %v1931, %v1930
      %v2001 = vpack.c.bf16 %v1934, %v1933
      %v2002 = vpack.c.bf16 %v1937, %v1936
      %v2003 = vpack.c.bf16 %v1940, %v1939
      %v2004 = vpack.c.bf16 %v1943, %v1942
      %v2005 = vpack.c.bf16 %v1946, %v1945
      %v2006 = vpack.c.bf16 %v1949, %v1948
      %v2007 = vpack.c.bf16 %v1952, %v1951
      %v2008 = vpack.c.bf16 %v1955, %v1954
      %v2009 = vpack.c.bf16 %v1958, %v1957
      %v2010 = vpack.c.bf16 %v1961, %v1960
      %v2011 = vpack.c.bf16 %v1964, %v1963
      %v2012 = vpack.c.bf16 %v1967, %v1966
      %v2013 = vpack.c.bf16 %v1970, %v1969
      %v2014 = vpack.c.bf16 %v1973, %v1972
      %v2015 = vpack.c.bf16 %v1976, %v1975
      %v2016 = vld [vmem:[%s4] sm:$0xf]
      %v2018 = vsel %vm672, %v1984, 0
      %v2021 = vsel %vm672, %v1985, 0
      %v2024 = vsel %vm672, %v1986, 0
      %v2027 = vsel %vm672, %v1987, 0
      %v2030 = vsel %vm672, %v1988, 0
      %v2033 = vsel %vm672, %v1989, 0
      %v2036 = vsel %vm672, %v1990, 0
      %v2039 = vsel %vm672, %v1991, 0
      %v2042 = vsel %vm672, %v1992, 0
      %v2045 = vsel %vm672, %v1993, 0
      %v2048 = vsel %vm672, %v1994, 0
      %v2051 = vsel %vm672, %v1995, 0
      %v2054 = vsel %vm672, %v1996, 0
      %v2057 = vsel %vm672, %v1997, 0
      %v2060 = vsel %vm672, %v1998, 0
      %v2063 = vsel %vm672, %v1999, 0
      %v2066 = vsel %vm672, %v2000, 0
      %v2069 = vsel %vm672, %v2001, 0
      %v2072 = vsel %vm672, %v2002, 0
      %v2075 = vsel %vm672, %v2003, 0
      %v2078 = vsel %vm672, %v2004, 0
      %v2081 = vsel %vm672, %v2005, 0
      %v2084 = vsel %vm672, %v2006, 0
      %v2087 = vsel %vm672, %v2007, 0
      %v2090 = vsel %vm672, %v2008, 0
      %v2093 = vsel %vm672, %v2009, 0
      %v2096 = vsel %vm672, %v2010, 0
      %v2099 = vsel %vm672, %v2011, 0
      %v2102 = vsel %vm672, %v2012, 0
      %v2105 = vsel %vm672, %v2013, 0
      %v2108 = vsel %vm672, %v2014, 0
      %v2111 = vsel %vm672, %v2015, 0
      %vm2113 = vcmask 1043456
      %v2115 = vsel %vm2113, %v2016, 0
      %2117 = vmatprep.subr.bf16.mxu0 0
      %2118 = vmatpush1.bf16.msra.mxu0 %v2115
      %2119 = vmatprep.subr.bf16.mxu0 0
      %2120 = vmatpush1.bf16.msra.mxu0 0
      %2121 = vmatprep.subr.bf16.mxu0 0
      %2122 = vmatpush1.bf16.msra.mxu0 0
      %2123 = vmatprep.subr.bf16.mxu0 0
      %2124 = vmatpush1.bf16.msra.mxu0 0
      %2125 = vmatprep.subr.bf16.mxu0 0
      %2126 = vmatpush1.bf16.msra.mxu0 0
      %2127 = vmatprep.subr.bf16.mxu0 0
      %2128 = vmatpush1.bf16.msra.mxu0 0
      %2129 = vmatprep.subr.bf16.mxu0 0
      %2130 = vmatpush1.bf16.msra.mxu0 0
      %2131 = vmatprep.subr.bf16.mxu0 0
      %2132 = vmatpush1.bf16.msra.mxu0 0
      %2133 = vmatprep.subr.bf16.mxu0 0
      %2134 = vmatpush1.bf16.msra.mxu0 0
      %2135 = vmatprep.subr.bf16.mxu0 0
      %2136 = vmatpush1.bf16.msra.mxu0 0
      %2137 = vmatprep.subr.bf16.mxu0 0
      %2138 = vmatpush1.bf16.msra.mxu0 0
      %2139 = vmatprep.subr.bf16.mxu0 0
      %2140 = vmatpush1.bf16.msra.mxu0 0
      %2141 = vmatprep.subr.bf16.mxu0 0
      %2142 = vmatpush1.bf16.msra.mxu0 0
      %2143 = vmatprep.subr.bf16.mxu0 0
      %2144 = vmatpush1.bf16.msra.mxu0 0
      %2145 = vmatprep.subr.bf16.mxu0 0
      %2146 = vmatpush1.bf16.msra.mxu0 0
      %2147 = vmatprep.subr.bf16.mxu0 0
      %2148 = vmatpush1.bf16.msra.mxu0 0
      %2149 = vmatprep.mubr.bf16.mxu0 0
      %2150 = vmatmul.mubr.bf16.gmra.mrb[0].mxu0 %v2018
      %v2151 = vpop.f32.mrb[0].mxu0
      %v2152 = vadd.f32 0.0, %v2151
      %v2153 = vpop.f32.mrb[0].mxu0
      %v2154 = vpop.f32.mrb[0].mxu0
      %v2155 = vadd.f32 0.0, %v2154
      %v2156 = vpop.f32.mrb[0].mxu0
      %2157 = vmatprep.mubr.bf16.mxu0 0
      %2158 = vmatmul.mubr.bf16.gmra.mrb[0].mxu0 %v2021
      %v2159 = vpop.f32.mrb[0].mxu0
      %v2160 = vadd.f32 0.0, %v2159
      %v2161 = vpop.f32.mrb[0].mxu0
      %v2162 = vpop.f32.mrb[0].mxu0
      %v2163 = vadd.f32 0.0, %v2162
      %v2164 = vpop.f32.mrb[0].mxu0
      %2165 = vmatprep.mubr.bf16.mxu0 0
      %2166 = vmatmul.mubr.bf16.gmra.mrb[0].mxu0 %v2024
      %v2167 = vpop.f32.mrb[0].mxu0
      %v2168 = vadd.f32 0.0, %v2167
      %v2169 = vpop.f32.mrb[0].mxu0
      %v2170 = vpop.f32.mrb[0].mxu0
      %v2171 = vadd.f32 0.0, %v2170
      %v2172 = vpop.f32.mrb[0].mxu0
      %2173 = vmatprep.mubr.bf16.mxu0 0
      %2174 = vmatmul.mubr.bf16.gmra.mrb[0].mxu0 %v2027
      %v2175 = vpop.f32.mrb[0].mxu0
      %v2176 = vadd.f32 0.0, %v2175
      %v2177 = vpop.f32.mrb[0].mxu0
      %v2178 = vpop.f32.mrb[0].mxu0
      %v2179 = vadd.f32 0.0, %v2178
      %v2180 = vpop.f32.mrb[0].mxu0
      %2181 = vmatprep.mubr.bf16.mxu0 0
      %2182 = vmatmul.mubr.bf16.gmra.mrb[0].mxu0 %v2030
      %v2183 = vpop.f32.mrb[0].mxu0
      %v2184 = vadd.f32 0.0, %v2183
      %v2185 = vpop.f32.mrb[0].mxu0
      %v2186 = vpop.f32.mrb[0].mxu0
      %v2187 = vadd.f32 0.0, %v2186
      %v2188 = vpop.f32.mrb[0].mxu0
      %2189 = vmatprep.mubr.bf16.mxu0 0
      %2190 = vmatmul.mubr.bf16.gmra.mrb[0].mxu0 %v2033
      %v2191 = vpop.f32.mrb[0].mxu0
      %v2192 = vadd.f32 0.0, %v2191
      %v2193 = vpop.f32.mrb[0].mxu0
      %v2194 = vpop.f32.mrb[0].mxu0
      %v2195 = vadd.f32 0.0, %v2194
      %v2196 = vpop.f32.mrb[0].mxu0
      %2197 = vmatprep.mubr.bf16.mxu0 0
      %2198 = vmatmul.mubr.bf16.gmra.mrb[0].mxu0 %v2036
      %v2199 = vpop.f32.mrb[0].mxu0
      %v2200 = vadd.f32 0.0, %v2199
      %v2201 = vpop.f32.mrb[0].mxu0
      %v2202 = vpop.f32.mrb[0].mxu0
      %v2203 = vadd.f32 0.0, %v2202
      %v2204 = vpop.f32.mrb[0].mxu0
      %2205 = vmatprep.mubr.bf16.mxu0 0
      %2206 = vmatmul.mubr.bf16.gmra.mrb[0].mxu0 %v2039
      %v2207 = vpop.f32.mrb[0].mxu0
      %v2208 = vadd.f32 0.0, %v2207
      %v2209 = vpop.f32.mrb[0].mxu0
      %v2210 = vpop.f32.mrb[0].mxu0
      %v2211 = vadd.f32 0.0, %v2210
      %v2212 = vpop.f32.mrb[0].mxu0
      %2213 = vmatprep.mubr.bf16.mxu0 0
      %2214 = vmatmul.mubr.bf16.gmra.mrb[0].mxu0 %v2042
      %v2215 = vpop.f32.mrb[0].mxu0
      %v2216 = vadd.f32 0.0, %v2215
      %v2217 = vpop.f32.mrb[0].mxu0
      %v2218 = vpop.f32.mrb[0].mxu0
      %v2219 = vadd.f32 0.0, %v2218
      %v2220 = vpop.f32.mrb[0].mxu0
      %2221 = vmatprep.mubr.bf16.mxu0 0
      %2222 = vmatmul.mubr.bf16.gmra.mrb[0].mxu0 %v2045
      %v2223 = vpop.f32.mrb[0].mxu0
      %v2224 = vadd.f32 0.0, %v2223
      %v2225 = vpop.f32.mrb[0].mxu0
      %v2226 = vpop.f32.mrb[0].mxu0
      %v2227 = vadd.f32 0.0, %v2226
      %v2228 = vpop.f32.mrb[0].mxu0
      %2229 = vmatprep.mubr.bf16.mxu0 0
      %2230 = vmatmul.mubr.bf16.gmra.mrb[0].mxu0 %v2048
      %v2231 = vpop.f32.mrb[0].mxu0
      %v2232 = vadd.f32 0.0, %v2231
      %v2233 = vpop.f32.mrb[0].mxu0
      %v2234 = vpop.f32.mrb[0].mxu0
      %v2235 = vadd.f32 0.0, %v2234
      %v2236 = vpop.f32.mrb[0].mxu0
      %2237 = vmatprep.mubr.bf16.mxu0 0
      %2238 = vmatmul.mubr.bf16.gmra.mrb[0].mxu0 %v2051
      %v2239 = vpop.f32.mrb[0].mxu0
      %v2240 = vadd.f32 0.0, %v2239
      %v2241 = vpop.f32.mrb[0].mxu0
      %v2242 = vpop.f32.mrb[0].mxu0
      %v2243 = vadd.f32 0.0, %v2242
      %v2244 = vpop.f32.mrb[0].mxu0
      %2245 = vmatprep.mubr.bf16.mxu0 0
      %2246 = vmatmul.mubr.bf16.gmra.mrb[0].mxu0 %v2054
      %v2247 = vpop.f32.mrb[0].mxu0
      %v2248 = vadd.f32 0.0, %v2247
      %v2249 = vpop.f32.mrb[0].mxu0
      %v2250 = vpop.f32.mrb[0].mxu0
      %v2251 = vadd.f32 0.0, %v2250
      %v2252 = vpop.f32.mrb[0].mxu0
      %2253 = vmatprep.mubr.bf16.mxu0 0
      %2254 = vmatmul.mubr.bf16.gmra.mrb[0].mxu0 %v2057
      %v2255 = vpop.f32.mrb[0].mxu0
      %v2256 = vadd.f32 0.0, %v2255
      %v2257 = vpop.f32.mrb[0].mxu0
      %v2258 = vpop.f32.mrb[0].mxu0
      %v2259 = vadd.f32 0.0, %v2258
      %v2260 = vpop.f32.mrb[0].mxu0
      %2261 = vmatprep.mubr.bf16.mxu0 0
      %2262 = vmatmul.mubr.bf16.gmra.mrb[0].mxu0 %v2060
      %v2263 = vpop.f32.mrb[0].mxu0
      %v2264 = vadd.f32 0.0, %v2263
      %v2265 = vpop.f32.mrb[0].mxu0
      %v2266 = vpop.f32.mrb[0].mxu0
      %v2267 = vadd.f32 0.0, %v2266
      %v2268 = vpop.f32.mrb[0].mxu0
      %2269 = vmatprep.mubr.bf16.mxu0 0
      %2270 = vmatmul.mubr.bf16.gmra.mrb[0].mxu0 %v2063
      %v2271 = vpop.f32.mrb[0].mxu0
      %v2272 = vadd.f32 0.0, %v2271
      %v2273 = vpop.f32.mrb[0].mxu0
      %v2274 = vpop.f32.mrb[0].mxu0
      %v2275 = vadd.f32 0.0, %v2274
      %v2276 = vpop.f32.mrb[0].mxu0
      %2277 = vmatprep.mubr.bf16.mxu0 0
      %2278 = vmatmul.mubr.bf16.gmra.mrb[0].mxu0 %v2066
      %v2279 = vpop.f32.mrb[0].mxu0
      %v2280 = vadd.f32 0.0, %v2279
      %v2281 = vpop.f32.mrb[0].mxu0
      %v2282 = vpop.f32.mrb[0].mxu0
      %v2283 = vadd.f32 0.0, %v2282
      %v2284 = vpop.f32.mrb[0].mxu0
      %2285 = vmatprep.mubr.bf16.mxu0 0
      %2286 = vmatmul.mubr.bf16.gmra.mrb[0].mxu0 %v2069
      %v2287 = vpop.f32.mrb[0].mxu0
      %v2288 = vadd.f32 0.0, %v2287
      %v2289 = vpop.f32.mrb[0].mxu0
      %v2290 = vpop.f32.mrb[0].mxu0
      %v2291 = vadd.f32 0.0, %v2290
      %v2292 = vpop.f32.mrb[0].mxu0
      %2293 = vmatprep.mubr.bf16.mxu0 0
      %2294 = vmatmul.mubr.bf16.gmra.mrb[0].mxu0 %v2072
      %v2295 = vpop.f32.mrb[0].mxu0
      %v2296 = vadd.f32 0.0, %v2295
      %v2297 = vpop.f32.mrb[0].mxu0
      %v2298 = vpop.f32.mrb[0].mxu0
      %v2299 = vadd.f32 0.0, %v2298
      %v2300 = vpop.f32.mrb[0].mxu0
      %2301 = vmatprep.mubr.bf16.mxu0 0
      %2302 = vmatmul.mubr.bf16.gmra.mrb[0].mxu0 %v2075
      %v2303 = vpop.f32.mrb[0].mxu0
      %v2304 = vadd.f32 0.0, %v2303
      %v2305 = vpop.f32.mrb[0].mxu0
      %v2306 = vpop.f32.mrb[0].mxu0
      %v2307 = vadd.f32 0.0, %v2306
      %v2308 = vpop.f32.mrb[0].mxu0
      %2309 = vmatprep.mubr.bf16.mxu0 0
      %2310 = vmatmul.mubr.bf16.gmra.mrb[0].mxu0 %v2078
      %v2311 = vpop.f32.mrb[0].mxu0
      %v2312 = vadd.f32 0.0, %v2311
      %v2313 = vpop.f32.mrb[0].mxu0
      %v2314 = vpop.f32.mrb[0].mxu0
      %v2315 = vadd.f32 0.0, %v2314
      %v2316 = vpop.f32.mrb[0].mxu0
      %2317 = vmatprep.mubr.bf16.mxu0 0
      %2318 = vmatmul.mubr.bf16.gmra.mrb[0].mxu0 %v2081
      %v2319 = vpop.f32.mrb[0].mxu0
      %v2320 = vadd.f32 0.0, %v2319
      %v2321 = vpop.f32.mrb[0].mxu0
      %v2322 = vpop.f32.mrb[0].mxu0
      %v2323 = vadd.f32 0.0, %v2322
      %v2324 = vpop.f32.mrb[0].mxu0
      %2325 = vmatprep.mubr.bf16.mxu0 0
      %2326 = vmatmul.mubr.bf16.gmra.mrb[0].mxu0 %v2084
      %v2327 = vpop.f32.mrb[0].mxu0
      %v2328 = vadd.f32 0.0, %v2327
      %v2329 = vpop.f32.mrb[0].mxu0
      %v2330 = vpop.f32.mrb[0].mxu0
      %v2331 = vadd.f32 0.0, %v2330
      %v2332 = vpop.f32.mrb[0].mxu0
      %2333 = vmatprep.mubr.bf16.mxu0 0
      %2334 = vmatmul.mubr.bf16.gmra.mrb[0].mxu0 %v2087
      %v2335 = vpop.f32.mrb[0].mxu0
      %v2336 = vadd.f32 0.0, %v2335
      %v2337 = vpop.f32.mrb[0].mxu0
      %v2338 = vpop.f32.mrb[0].mxu0
      %v2339 = vadd.f32 0.0, %v2338
      %v2340 = vpop.f32.mrb[0].mxu0
      %2341 = vmatprep.mubr.bf16.mxu0 0
      %2342 = vmatmul.mubr.bf16.gmra.mrb[0].mxu0 %v2090
      %v2343 = vpop.f32.mrb[0].mxu0
      %v2344 = vadd.f32 0.0, %v2343
      %v2345 = vpop.f32.mrb[0].mxu0
      %v2346 = vpop.f32.mrb[0].mxu0
      %v2347 = vadd.f32 0.0, %v2346
      %v2348 = vpop.f32.mrb[0].mxu0
      %2349 = vmatprep.mubr.bf16.mxu0 0
      %2350 = vmatmul.mubr.bf16.gmra.mrb[0].mxu0 %v2093
      %v2351 = vpop.f32.mrb[0].mxu0
      %v2352 = vadd.f32 0.0, %v2351
      %v2353 = vpop.f32.mrb[0].mxu0
      %v2354 = vpop.f32.mrb[0].mxu0
      %v2355 = vadd.f32 0.0, %v2354
      %v2356 = vpop.f32.mrb[0].mxu0
      %2357 = vmatprep.mubr.bf16.mxu0 0
      %2358 = vmatmul.mubr.bf16.gmra.mrb[0].mxu0 %v2096
      %v2359 = vpop.f32.mrb[0].mxu0
      %v2360 = vadd.f32 0.0, %v2359
      %v2361 = vpop.f32.mrb[0].mxu0
      %v2362 = vpop.f32.mrb[0].mxu0
      %v2363 = vadd.f32 0.0, %v2362
      %v2364 = vpop.f32.mrb[0].mxu0
      %2365 = vmatprep.mubr.bf16.mxu0 0
      %2366 = vmatmul.mubr.bf16.gmra.mrb[0].mxu0 %v2099
      %v2367 = vpop.f32.mrb[0].mxu0
      %v2368 = vadd.f32 0.0, %v2367
      %v2369 = vpop.f32.mrb[0].mxu0
      %v2370 = vpop.f32.mrb[0].mxu0
      %v2371 = vadd.f32 0.0, %v2370
      %v2372 = vpop.f32.mrb[0].mxu0
      %2373 = vmatprep.mubr.bf16.mxu0 0
      %2374 = vmatmul.mubr.bf16.gmra.mrb[0].mxu0 %v2102
      %v2375 = vpop.f32.mrb[0].mxu0
      %v2376 = vadd.f32 0.0, %v2375
      %v2377 = vpop.f32.mrb[0].mxu0
      %v2378 = vpop.f32.mrb[0].mxu0
      %v2379 = vadd.f32 0.0, %v2378
      %v2380 = vpop.f32.mrb[0].mxu0
      %2381 = vmatprep.mubr.bf16.mxu0 0
      %2382 = vmatmul.mubr.bf16.gmra.mrb[0].mxu0 %v2105
      %v2383 = vpop.f32.mrb[0].mxu0
      %v2384 = vadd.f32 0.0, %v2383
      %v2385 = vpop.f32.mrb[0].mxu0
      %v2386 = vpop.f32.mrb[0].mxu0
      %v2387 = vadd.f32 0.0, %v2386
      %v2388 = vpop.f32.mrb[0].mxu0
      %2389 = vmatprep.mubr.bf16.mxu0 0
      %2390 = vmatmul.mubr.bf16.gmra.mrb[0].mxu0 %v2108
      %v2391 = vpop.f32.mrb[0].mxu0
      %v2392 = vadd.f32 0.0, %v2391
      %v2393 = vpop.f32.mrb[0].mxu0
      %v2394 = vpop.f32.mrb[0].mxu0
      %v2395 = vadd.f32 0.0, %v2394
      %v2396 = vpop.f32.mrb[0].mxu0
      %2397 = vmatprep.mubr.bf16.mxu0 0
      %2398 = vmatmul.mubr.bf16.gmra.mrb[0].mxu0 %v2111
      %v2399 = vpop.f32.mrb[0].mxu0
      %v2400 = vadd.f32 0.0, %v2399
      %v2401 = vpop.f32.mrb[0].mxu0
      %v2402 = vpop.f32.mrb[0].mxu0
      %v2403 = vadd.f32 0.0, %v2402
      %v2404 = vpop.f32.mrb[0].mxu0
      %2405 = vdwg.mxu0
      %2406 = vst.msk [vmem:[#allocation2] sm:$0xff] %vm672, %v2152
      %2407 = vst.msk [vmem:[#allocation2 + $0x8] sm:$0xff] %vm672, %v2155
      %2408 = vst.msk [vmem:[#allocation2 + $0x10] sm:$0xff] %vm672, %v2160
      %2409 = vst.msk [vmem:[#allocation2 + $0x18] sm:$0xff] %vm672, %v2163
      %2410 = vst.msk [vmem:[#allocation2 + $0x20] sm:$0xff] %vm672, %v2168
      %2411 = vst.msk [vmem:[#allocation2 + $0x28] sm:$0xff] %vm672, %v2171
      %2412 = vst.msk [vmem:[#allocation2 + $0x30] sm:$0xff] %vm672, %v2176
      %2413 = vst.msk [vmem:[#allocation2 + $0x38] sm:$0xff] %vm672, %v2179
      %2414 = vst.msk [vmem:[#allocation2 + $0x40] sm:$0xff] %vm672, %v2184
      %2415 = vst.msk [vmem:[#allocation2 + $0x48] sm:$0xff] %vm672, %v2187
      %2416 = vst.msk [vmem:[#allocation2 + $0x50] sm:$0xff] %vm672, %v2192
      %2417 = vst.msk [vmem:[#allocation2 + $0x58] sm:$0xff] %vm672, %v2195
      %2418 = vst.msk [vmem:[#allocation2 + $0x60] sm:$0xff] %vm672, %v2200
      %2419 = vst.msk [vmem:[#allocation2 + $0x68] sm:$0xff] %vm672, %v2203
      %2420 = vst.msk [vmem:[#allocation2 + $0x70] sm:$0xff] %vm672, %v2208
      %2421 = vst.msk [vmem:[#allocation2 + $0x78] sm:$0xff] %vm672, %v2211
      %2422 = vst.msk [vmem:[#allocation2 + $0x80] sm:$0xff] %vm672, %v2216
      %2423 = vst.msk [vmem:[#allocation2 + $0x88] sm:$0xff] %vm672, %v2219
      %2424 = vst.msk [vmem:[#allocation2 + $0x90] sm:$0xff] %vm672, %v2224
      %2425 = vst.msk [vmem:[#allocation2 + $0x98] sm:$0xff] %vm672, %v2227
      %2426 = vst.msk [vmem:[#allocation2 + $0xa0] sm:$0xff] %vm672, %v2232
      %2427 = vst.msk [vmem:[#allocation2 + $0xa8] sm:$0xff] %vm672, %v2235
      %2428 = vst.msk [vmem:[#allocation2 + $0xb0] sm:$0xff] %vm672, %v2240
      %2429 = vst.msk [vmem:[#allocation2 + $0xb8] sm:$0xff] %vm672, %v2243
      %2430 = vst.msk [vmem:[#allocation2 + $0xc0] sm:$0xff] %vm672, %v2248
      %2431 = vst.msk [vmem:[#allocation2 + $0xc8] sm:$0xff] %vm672, %v2251
      %2432 = vst.msk [vmem:[#allocation2 + $0xd0] sm:$0xff] %vm672, %v2256
      %2433 = vst.msk [vmem:[#allocation2 + $0xd8] sm:$0xff] %vm672, %v2259
      %2434 = vst.msk [vmem:[#allocation2 + $0xe0] sm:$0xff] %vm672, %v2264
      %2435 = vst.msk [vmem:[#allocation2 + $0xe8] sm:$0xff] %vm672, %v2267
      %2436 = vst.msk [vmem:[#allocation2 + $0xf0] sm:$0xff] %vm672, %v2272
      %2437 = vst.msk [vmem:[#allocation2 + $0xf8] sm:$0xff] %vm672, %v2275
      %2438 = vst.msk [vmem:[#allocation2 + $0x100] sm:$0xff] %vm672, %v2280
      %2439 = vst.msk [vmem:[#allocation2 + $0x108] sm:$0xff] %vm672, %v2283
      %2440 = vst.msk [vmem:[#allocation2 + $0x110] sm:$0xff] %vm672, %v2288
      %2441 = vst.msk [vmem:[#allocation2 + $0x118] sm:$0xff] %vm672, %v2291
      %2442 = vst.msk [vmem:[#allocation2 + $0x120] sm:$0xff] %vm672, %v2296
      %2443 = vst.msk [vmem:[#allocation2 + $0x128] sm:$0xff] %vm672, %v2299
      %2444 = vst.msk [vmem:[#allocation2 + $0x130] sm:$0xff] %vm672, %v2304
      %2445 = vst.msk [vmem:[#allocation2 + $0x138] sm:$0xff] %vm672, %v2307
      %2446 = vst.msk [vmem:[#allocation2 + $0x140] sm:$0xff] %vm672, %v2312
      %2447 = vst.msk [vmem:[#allocation2 + $0x148] sm:$0xff] %vm672, %v2315
      %2448 = vst.msk [vmem:[#allocation2 + $0x150] sm:$0xff] %vm672, %v2320
      %2449 = vst.msk [vmem:[#allocation2 + $0x158] sm:$0xff] %vm672, %v2323
      %2450 = vst.msk [vmem:[#allocation2 + $0x160] sm:$0xff] %vm672, %v2328
      %2451 = vst.msk [vmem:[#allocation2 + $0x168] sm:$0xff] %vm672, %v2331
      %2452 = vst.msk [vmem:[#allocation2 + $0x170] sm:$0xff] %vm672, %v2336
      %2453 = vst.msk [vmem:[#allocation2 + $0x178] sm:$0xff] %vm672, %v2339
      %2454 = vst.msk [vmem:[#allocation2 + $0x180] sm:$0xff] %vm672, %v2344
      %2455 = vst.msk [vmem:[#allocation2 + $0x188] sm:$0xff] %vm672, %v2347
      %2456 = vst.msk [vmem:[#allocation2 + $0x190] sm:$0xff] %vm672, %v2352
      %2457 = vst.msk [vmem:[#allocation2 + $0x198] sm:$0xff] %vm672, %v2355
      %2458 = vst.msk [vmem:[#allocation2 + $0x1a0] sm:$0xff] %vm672, %v2360
      %2459 = vst.msk [vmem:[#allocation2 + $0x1a8] sm:$0xff] %vm672, %v2363
      %2460 = vst.msk [vmem:[#allocation2 + $0x1b0] sm:$0xff] %vm672, %v2368
      %2461 = vst.msk [vmem:[#allocation2 + $0x1b8] sm:$0xff] %vm672, %v2371
      %2462 = vst.msk [vmem:[#allocation2 + $0x1c0] sm:$0xff] %vm672, %v2376
      %2463 = vst.msk [vmem:[#allocation2 + $0x1c8] sm:$0xff] %vm672, %v2379
      %2464 = vst.msk [vmem:[#allocation2 + $0x1d0] sm:$0xff] %vm672, %v2384
      %2465 = vst.msk [vmem:[#allocation2 + $0x1d8] sm:$0xff] %vm672, %v2387
      %2466 = vst.msk [vmem:[#allocation2 + $0x1e0] sm:$0xff] %vm672, %v2392
      %2467 = vst.msk [vmem:[#allocation2 + $0x1e8] sm:$0xff] %vm672, %v2395
      %2468 = vst.msk [vmem:[#allocation2 + $0x1f0] sm:$0xff] %vm672, %v2400
      %2469 = vst.msk [vmem:[#allocation2 + $0x1f8] sm:$0xff] %vm672, %v2403
      %vm2566 = vcmask 1046528
      %v2567 = vrot.slane %v1876, 1
      %v2568 = vrot.slane %v1877, 1
      %v2569 = vsel %vm2566, %v2567, %v2568
      %v2570 = vrot.slane %v1878, 1
      %v2571 = vsel %vm2566, %v2568, %v2570
      %v2572 = vrot.slane %v1879, 1
      %v2573 = vrot.slane %v1880, 1
      %v2574 = vsel %vm2566, %v2572, %v2573
      %v2575 = vrot.slane %v1881, 1
      %v2576 = vsel %vm2566, %v2573, %v2575
      %v2577 = vrot.slane %v1882, 1
      %v2578 = vrot.slane %v1883, 1
      %v2579 = vsel %vm2566, %v2577, %v2578
      %v2580 = vrot.slane %v1884, 1
      %v2581 = vsel %vm2566, %v2578, %v2580
      %v2582 = vrot.slane %v1885, 1
      %v2583 = vrot.slane %v1886, 1
      %v2584 = vsel %vm2566, %v2582, %v2583
      %v2585 = vrot.slane %v1887, 1
      %v2586 = vsel %vm2566, %v2583, %v2585
      %v2587 = vrot.slane %v1888, 1
      %v2588 = vrot.slane %v1889, 1
      %v2589 = vsel %vm2566, %v2587, %v2588
      %v2590 = vrot.slane %v1890, 1
      %v2591 = vsel %vm2566, %v2588, %v2590
      %v2592 = vrot.slane %v1891, 1
      %v2593 = vrot.slane %v1892, 1
      %v2594 = vsel %vm2566, %v2592, %v2593
      %v2595 = vrot.slane %v1893, 1
      %v2596 = vsel %vm2566, %v2593, %v2595
      %v2597 = vrot.slane %v1894, 1
      %v2598 = vrot.slane %v1895, 1
      %v2599 = vsel %vm2566, %v2597, %v2598
      %v2600 = vrot.slane %v1896, 1
      %v2601 = vsel %vm2566, %v2598, %v2600
      %v2602 = vrot.slane %v1897, 1
      %v2603 = vrot.slane %v1898, 1
      %v2604 = vsel %vm2566, %v2602, %v2603
      %v2605 = vrot.slane %v1899, 1
      %v2606 = vsel %vm2566, %v2603, %v2605
      %v2607 = vrot.slane %v1900, 1
      %v2608 = vrot.slane %v1901, 1
      %v2609 = vsel %vm2566, %v2607, %v2608
      %v2610 = vrot.slane %v1902, 1
      %v2611 = vsel %vm2566, %v2608, %v2610
      %v2612 = vrot.slane %v1903, 1
      %v2613 = vrot.slane %v1904, 1
      %v2614 = vsel %vm2566, %v2612, %v2613
      %v2615 = vrot.slane %v1905, 1
      %v2616 = vsel %vm2566, %v2613, %v2615
      %v2617 = vrot.slane %v1906, 1
      %v2618 = vrot.slane %v1907, 1
      %v2619 = vsel %vm2566, %v2617, %v2618
      %v2620 = vrot.slane %v1908, 1
      %v2621 = vsel %vm2566, %v2618, %v2620
      %v2622 = vrot.slane %v1909, 1
      %v2623 = vrot.slane %v1910, 1
      %v2624 = vsel %vm2566, %v2622, %v2623
      %v2625 = vrot.slane %v1911, 1
      %v2626 = vsel %vm2566, %v2623, %v2625
      %v2627 = vrot.slane %v1912, 1
      %v2628 = vrot.slane %v1913, 1
      %v2629 = vsel %vm2566, %v2627, %v2628
      %v2630 = vrot.slane %v1914, 1
      %v2631 = vsel %vm2566, %v2628, %v2630
      %v2632 = vrot.slane %v1915, 1
      %v2633 = vrot.slane %v1916, 1
      %v2634 = vsel %vm2566, %v2632, %v2633
      %v2635 = vrot.slane %v1917, 1
      %v2636 = vsel %vm2566, %v2633, %v2635
      %v2637 = vrot.slane %v1918, 1
      %v2638 = vrot.slane %v1919, 1
      %v2639 = vsel %vm2566, %v2637, %v2638
      %v2640 = vrot.slane %v1920, 1
      %v2641 = vsel %vm2566, %v2638, %v2640
      %v2642 = vrot.slane %v1921, 1
      %v2643 = vrot.slane %v1922, 1
      %v2644 = vsel %vm2566, %v2642, %v2643
      %v2645 = vrot.slane %v1923, 1
      %v2646 = vsel %vm2566, %v2643, %v2645
      %v2647 = vrot.slane %v1930, 1
      %v2648 = vrot.slane %v1931, 1
      %v2649 = vsel %vm2566, %v2647, %v2648
      %v2650 = vrot.slane %v1932, 1
      %v2651 = vsel %vm2566, %v2648, %v2650
      %v2652 = vrot.slane %v1933, 1
      %v2653 = vrot.slane %v1934, 1
      %v2654 = vsel %vm2566, %v2652, %v2653
      %v2655 = vrot.slane %v1935, 1
      %v2656 = vsel %vm2566, %v2653, %v2655
      %v2657 = vrot.slane %v1936, 1
      %v2658 = vrot.slane %v1937, 1
      %v2659 = vsel %vm2566, %v2657, %v2658
      %v2660 = vrot.slane %v1938, 1
      %v2661 = vsel %vm2566, %v2658, %v2660
      %v2662 = vrot.slane %v1939, 1
      %v2663 = vrot.slane %v1940, 1
      %v2664 = vsel %vm2566, %v2662, %v2663
      %v2665 = vrot.slane %v1941, 1
      %v2666 = vsel %vm2566, %v2663, %v2665
      %v2667 = vrot.slane %v1942, 1
      %v2668 = vrot.slane %v1943, 1
      %v2669 = vsel %vm2566, %v2667, %v2668
      %v2670 = vrot.slane %v1944, 1
      %v2671 = vsel %vm2566, %v2668, %v2670
      %v2672 = vrot.slane %v1945, 1
      %v2673 = vrot.slane %v1946, 1
      %v2674 = vsel %vm2566, %v2672, %v2673
      %v2675 = vrot.slane %v1947, 1
      %v2676 = vsel %vm2566, %v2673, %v2675
      %v2677 = vrot.slane %v1948, 1
      %v2678 = vrot.slane %v1949, 1
      %v2679 = vsel %vm2566, %v2677, %v2678
      %v2680 = vrot.slane %v1950, 1
      %v2681 = vsel %vm2566, %v2678, %v2680
      %v2682 = vrot.slane %v1951, 1
      %v2683 = vrot.slane %v1952, 1
      %v2684 = vsel %vm2566, %v2682, %v2683
      %v2685 = vrot.slane %v1953, 1
      %v2686 = vsel %vm2566, %v2683, %v2685
      %v2687 = vrot.slane %v1954, 1
      %v2688 = vrot.slane %v1955, 1
      %v2689 = vsel %vm2566, %v2687, %v2688
      %v2690 = vrot.slane %v1956, 1
      %v2691 = vsel %vm2566, %v2688, %v2690
      %v2692 = vrot.slane %v1957, 1
      %v2693 = vrot.slane %v1958, 1
      %v2694 = vsel %vm2566, %v2692, %v2693
      %v2695 = vrot.slane %v1959, 1
      %v2696 = vsel %vm2566, %v2693, %v2695
      %v2697 = vrot.slane %v1960, 1
      %v2698 = vrot.slane %v1961, 1
      %v2699 = vsel %vm2566, %v2697, %v2698
      %v2700 = vrot.slane %v1962, 1
      %v2701 = vsel %vm2566, %v2698, %v2700
      %v2702 = vrot.slane %v1963, 1
      %v2703 = vrot.slane %v1964, 1
      %v2704 = vsel %vm2566, %v2702, %v2703
      %v2705 = vrot.slane %v1965, 1
      %v2706 = vsel %vm2566, %v2703, %v2705
      %v2707 = vrot.slane %v1966, 1
      %v2708 = vrot.slane %v1967, 1
      %v2709 = vsel %vm2566, %v2707, %v2708
      %v2710 = vrot.slane %v1968, 1
      %v2711 = vsel %vm2566, %v2708, %v2710
      %v2712 = vrot.slane %v1969, 1
      %v2713 = vrot.slane %v1970, 1
      %v2714 = vsel %vm2566, %v2712, %v2713
      %v2715 = vrot.slane %v1971, 1
      %v2716 = vsel %vm2566, %v2713, %v2715
      %v2717 = vrot.slane %v1972, 1
      %v2718 = vrot.slane %v1973, 1
      %v2719 = vsel %vm2566, %v2717, %v2718
      %v2720 = vrot.slane %v1974, 1
      %v2721 = vsel %vm2566, %v2718, %v2720
      %v2722 = vrot.slane %v1975, 1
      %v2723 = vrot.slane %v1976, 1
      %v2724 = vsel %vm2566, %v2722, %v2723
      %v2725 = vrot.slane %v1977, 1
      %v2726 = vsel %vm2566, %v2723, %v2725
      %v2791 = vpack.c.bf16 %v2571, %v2569
      %v2792 = vpack.c.bf16 %v2576, %v2574
      %v2793 = vpack.c.bf16 %v2581, %v2579
      %v2794 = vpack.c.bf16 %v2586, %v2584
      %v2795 = vpack.c.bf16 %v2591, %v2589
      %v2796 = vpack.c.bf16 %v2596, %v2594
      %v2797 = vpack.c.bf16 %v2601, %v2599
      %v2798 = vpack.c.bf16 %v2606, %v2604
      %v2799 = vpack.c.bf16 %v2611, %v2609
      %v2800 = vpack.c.bf16 %v2616, %v2614
      %v2801 = vpack.c.bf16 %v2621, %v2619
      %v2802 = vpack.c.bf16 %v2626, %v2624
      %v2803 = vpack.c.bf16 %v2631, %v2629
      %v2804 = vpack.c.bf16 %v2636, %v2634
      %v2805 = vpack.c.bf16 %v2641, %v2639
      %v2806 = vpack.c.bf16 %v2646, %v2644
      %v2807 = vpack.c.bf16 %v2651, %v2649
      %v2808 = vpack.c.bf16 %v2656, %v2654
      %v2809 = vpack.c.bf16 %v2661, %v2659
      %v2810 = vpack.c.bf16 %v2666, %v2664
      %v2811 = vpack.c.bf16 %v2671, %v2669
      %v2812 = vpack.c.bf16 %v2676, %v2674
      %v2813 = vpack.c.bf16 %v2681, %v2679
      %v2814 = vpack.c.bf16 %v2686, %v2684
      %v2815 = vpack.c.bf16 %v2691, %v2689
      %v2816 = vpack.c.bf16 %v2696, %v2694
      %v2817 = vpack.c.bf16 %v2701, %v2699
      %v2818 = vpack.c.bf16 %v2706, %v2704
      %v2819 = vpack.c.bf16 %v2711, %v2709
      %v2820 = vpack.c.bf16 %v2716, %v2714
      %v2821 = vpack.c.bf16 %v2721, %v2719
      %v2822 = vpack.c.bf16 %v2726, %v2724
      %s2823 = scalar_lea.vmem %s4, 4
      %v2824 = vld [vmem:[%s2823] sm:$0xf]
      %v2826 = vsel %vm672, %v2791, 0
      %v2829 = vsel %vm672, %v2792, 0
      %v2832 = vsel %vm672, %v2793, 0
      %v2835 = vsel %vm672, %v2794, 0
      %v2838 = vsel %vm672, %v2795, 0
      %v2841 = vsel %vm672, %v2796, 0
      %v2844 = vsel %vm672, %v2797, 0
      %v2847 = vsel %vm672, %v2798, 0
      %v2850 = vsel %vm672, %v2799, 0
      %v2853 = vsel %vm672, %v2800, 0
      %v2856 = vsel %vm672, %v2801, 0
      %v2859 = vsel %vm672, %v2802, 0
      %v2862 = vsel %vm672, %v2803, 0
      %v2865 = vsel %vm672, %v2804, 0
      %v2868 = vsel %vm672, %v2805, 0
      %v2871 = vsel %vm672, %v2806, 0
      %v2874 = vsel %vm672, %v2807, 0
      %v2877 = vsel %vm672, %v2808, 0
      %v2880 = vsel %vm672, %v2809, 0
      %v2883 = vsel %vm672, %v2810, 0
      %v2886 = vsel %vm672, %v2811, 0
      %v2889 = vsel %vm672, %v2812, 0
      %v2892 = vsel %vm672, %v2813, 0
      %v2895 = vsel %vm672, %v2814, 0
      %v2898 = vsel %vm672, %v2815, 0
      %v2901 = vsel %vm672, %v2816, 0
      %v2904 = vsel %vm672, %v2817, 0
      %v2907 = vsel %vm672, %v2818, 0
      %v2910 = vsel %vm672, %v2819, 0
      %v2913 = vsel %vm672, %v2820, 0
      %v2916 = vsel %vm672, %v2821, 0
      %v2919 = vsel %vm672, %v2822, 0
      %v2922 = vsel %vm2113, %v2824, 0
      %2924 = vmatprep.subr.bf16.mxu0 0
      %2925 = vmatpush1.bf16.msra.mxu0 %v2922
      %2926 = vmatprep.subr.bf16.mxu0 0
      %2927 = vmatpush1.bf16.msra.mxu0 0
      %2928 = vmatprep.subr.bf16.mxu0 0
      %2929 = vmatpush1.bf16.msra.mxu0 0
      %2930 = vmatprep.subr.bf16.mxu0 0
      %2931 = vmatpush1.bf16.msra.mxu0 0
      %2932 = vmatprep.subr.bf16.mxu0 0
      %2933 = vmatpush1.bf16.msra.mxu0 0
      %2934 = vmatprep.subr.bf16.mxu0 0
      %2935 = vmatpush1.bf16.msra.mxu0 0
      %2936 = vmatprep.subr.bf16.mxu0 0
      %2937 = vmatpush1.bf16.msra.mxu0 0
      %2938 = vmatprep.subr.bf16.mxu0 0
      %2939 = vmatpush1.bf16.msra.mxu0 0
      %2940 = vmatprep.subr.bf16.mxu0 0
      %2941 = vmatpush1.bf16.msra.mxu0 0
      %2942 = vmatprep.subr.bf16.mxu0 0
      %2943 = vmatpush1.bf16.msra.mxu0 0
      %2944 = vmatprep.subr.bf16.mxu0 0
      %2945 = vmatpush1.bf16.msra.mxu0 0
      %2946 = vmatprep.subr.bf16.mxu0 0
      %2947 = vmatpush1.bf16.msra.mxu0 0
      %2948 = vmatprep.subr.bf16.mxu0 0
      %2949 = vmatpush1.bf16.msra.mxu0 0
      %2950 = vmatprep.subr.bf16.mxu0 0
      %2951 = vmatpush1.bf16.msra.mxu0 0
      %2952 = vmatprep.subr.bf16.mxu0 0
      %2953 = vmatpush1.bf16.msra.mxu0 0
      %2954 = vmatprep.subr.bf16.mxu0 0
      %2955 = vmatpush1.bf16.msra.mxu0 0
      %2956 = vmatprep.mubr.bf16.mxu0 0
      %2957 = vmatmul.mubr.bf16.gmra.mrb[0].mxu0 %v2826
      %v2958 = vpop.f32.mrb[0].mxu0
      %v2959 = vadd.f32 0.0, %v2958
      %v2960 = vpop.f32.mrb[0].mxu0
      %v2961 = vpop.f32.mrb[0].mxu0
      %v2962 = vadd.f32 0.0, %v2961
      %v2963 = vpop.f32.mrb[0].mxu0
      %2964 = vmatprep.mubr.bf16.mxu0 0
      %2965 = vmatmul.mubr.bf16.gmra.mrb[0].mxu0 %v2829
      %v2966 = vpop.f32.mrb[0].mxu0
      %v2967 = vadd.f32 0.0, %v2966
      %v2968 = vpop.f32.mrb[0].mxu0
      %v2969 = vpop.f32.mrb[0].mxu0
      %v2970 = vadd.f32 0.0, %v2969
      %v2971 = vpop.f32.mrb[0].mxu0
      %2972 = vmatprep.mubr.bf16.mxu0 0
      %2973 = vmatmul.mubr.bf16.gmra.mrb[0].mxu0 %v2832
      %v2974 = vpop.f32.mrb[0].mxu0
      %v2975 = vadd.f32 0.0, %v2974
      %v2976 = vpop.f32.mrb[0].mxu0
      %v2977 = vpop.f32.mrb[0].mxu0
      %v2978 = vadd.f32 0.0, %v2977
      %v2979 = vpop.f32.mrb[0].mxu0
      %2980 = vmatprep.mubr.bf16.mxu0 0
      %2981 = vmatmul.mubr.bf16.gmra.mrb[0].mxu0 %v2835
      %v2982 = vpop.f32.mrb[0].mxu0
      %v2983 = vadd.f32 0.0, %v2982
      %v2984 = vpop.f32.mrb[0].mxu0
      %v2985 = vpop.f32.mrb[0].mxu0
      %v2986 = vadd.f32 0.0, %v2985
      %v2987 = vpop.f32.mrb[0].mxu0
      %2988 = vmatprep.mubr.bf16.mxu0 0
      %2989 = vmatmul.mubr.bf16.gmra.mrb[0].mxu0 %v2838
      %v2990 = vpop.f32.mrb[0].mxu0
      %v2991 = vadd.f32 0.0, %v2990
      %v2992 = vpop.f32.mrb[0].mxu0
      %v2993 = vpop.f32.mrb[0].mxu0
      %v2994 = vadd.f32 0.0, %v2993
      %v2995 = vpop.f32.mrb[0].mxu0
      %2996 = vmatprep.mubr.bf16.mxu0 0
      %2997 = vmatmul.mubr.bf16.gmra.mrb[0].mxu0 %v2841
      %v2998 = vpop.f32.mrb[0].mxu0
      %v2999 = vadd.f32 0.0, %v2998
      %v3000 = vpop.f32.mrb[0].mxu0
      %v3001 = vpop.f32.mrb[0].mxu0
      %v3002 = vadd.f32 0.0, %v3001
      %v3003 = vpop.f32.mrb[0].mxu0
      %3004 = vmatprep.mubr.bf16.mxu0 0
      %3005 = vmatmul.mubr.bf16.gmra.mrb[0].mxu0 %v2844
      %v3006 = vpop.f32.mrb[0].mxu0
      %v3007 = vadd.f32 0.0, %v3006
      %v3008 = vpop.f32.mrb[0].mxu0
      %v3009 = vpop.f32.mrb[0].mxu0
      %v3010 = vadd.f32 0.0, %v3009
      %v3011 = vpop.f32.mrb[0].mxu0
      %3012 = vmatprep.mubr.bf16.mxu0 0
      %3013 = vmatmul.mubr.bf16.gmra.mrb[0].mxu0 %v2847
      %v3014 = vpop.f32.mrb[0].mxu0
      %v3015 = vadd.f32 0.0, %v3014
      %v3016 = vpop.f32.mrb[0].mxu0
      %v3017 = vpop.f32.mrb[0].mxu0
      %v3018 = vadd.f32 0.0, %v3017
      %v3019 = vpop.f32.mrb[0].mxu0
      %3020 = vmatprep.mubr.bf16.mxu0 0
      %3021 = vmatmul.mubr.bf16.gmra.mrb[0].mxu0 %v2850
      %v3022 = vpop.f32.mrb[0].mxu0
      %v3023 = vadd.f32 0.0, %v3022
      %v3024 = vpop.f32.mrb[0].mxu0
      %v3025 = vpop.f32.mrb[0].mxu0
      %v3026 = vadd.f32 0.0, %v3025
      %v3027 = vpop.f32.mrb[0].mxu0
      %3028 = vmatprep.mubr.bf16.mxu0 0
      %3029 = vmatmul.mubr.bf16.gmra.mrb[0].mxu0 %v2853
      %v3030 = vpop.f32.mrb[0].mxu0
      %v3031 = vadd.f32 0.0, %v3030
      %v3032 = vpop.f32.mrb[0].mxu0
      %v3033 = vpop.f32.mrb[0].mxu0
      %v3034 = vadd.f32 0.0, %v3033
      %v3035 = vpop.f32.mrb[0].mxu0
      %3036 = vmatprep.mubr.bf16.mxu0 0
      %3037 = vmatmul.mubr.bf16.gmra.mrb[0].mxu0 %v2856
      %v3038 = vpop.f32.mrb[0].mxu0
      %v3039 = vadd.f32 0.0, %v3038
      %v3040 = vpop.f32.mrb[0].mxu0
      %v3041 = vpop.f32.mrb[0].mxu0
      %v3042 = vadd.f32 0.0, %v3041
      %v3043 = vpop.f32.mrb[0].mxu0
      %3044 = vmatprep.mubr.bf16.mxu0 0
      %3045 = vmatmul.mubr.bf16.gmra.mrb[0].mxu0 %v2859
      %v3046 = vpop.f32.mrb[0].mxu0
      %v3047 = vadd.f32 0.0, %v3046
      %v3048 = vpop.f32.mrb[0].mxu0
      %v3049 = vpop.f32.mrb[0].mxu0
      %v3050 = vadd.f32 0.0, %v3049
      %v3051 = vpop.f32.mrb[0].mxu0
      %3052 = vmatprep.mubr.bf16.mxu0 0
      %3053 = vmatmul.mubr.bf16.gmra.mrb[0].mxu0 %v2862
      %v3054 = vpop.f32.mrb[0].mxu0
      %v3055 = vadd.f32 0.0, %v3054
      %v3056 = vpop.f32.mrb[0].mxu0
      %v3057 = vpop.f32.mrb[0].mxu0
      %v3058 = vadd.f32 0.0, %v3057
      %v3059 = vpop.f32.mrb[0].mxu0
      %3060 = vmatprep.mubr.bf16.mxu0 0
      %3061 = vmatmul.mubr.bf16.gmra.mrb[0].mxu0 %v2865
      %v3062 = vpop.f32.mrb[0].mxu0
      %v3063 = vadd.f32 0.0, %v3062
      %v3064 = vpop.f32.mrb[0].mxu0
      %v3065 = vpop.f32.mrb[0].mxu0
      %v3066 = vadd.f32 0.0, %v3065
      %v3067 = vpop.f32.mrb[0].mxu0
      %3068 = vmatprep.mubr.bf16.mxu0 0
      %3069 = vmatmul.mubr.bf16.gmra.mrb[0].mxu0 %v2868
      %v3070 = vpop.f32.mrb[0].mxu0
      %v3071 = vadd.f32 0.0, %v3070
      %v3072 = vpop.f32.mrb[0].mxu0
      %v3073 = vpop.f32.mrb[0].mxu0
      %v3074 = vadd.f32 0.0, %v3073
      %v3075 = vpop.f32.mrb[0].mxu0
      %3076 = vmatprep.mubr.bf16.mxu0 0
      %3077 = vmatmul.mubr.bf16.gmra.mrb[0].mxu0 %v2871
      %v3078 = vpop.f32.mrb[0].mxu0
      %v3079 = vadd.f32 0.0, %v3078
      %v3080 = vpop.f32.mrb[0].mxu0
      %v3081 = vpop.f32.mrb[0].mxu0
      %v3082 = vadd.f32 0.0, %v3081
      %v3083 = vpop.f32.mrb[0].mxu0
      %3084 = vmatprep.mubr.bf16.mxu0 0
      %3085 = vmatmul.mubr.bf16.gmra.mrb[0].mxu0 %v2874
      %v3086 = vpop.f32.mrb[0].mxu0
      %v3087 = vadd.f32 0.0, %v3086
      %v3088 = vpop.f32.mrb[0].mxu0
      %v3089 = vpop.f32.mrb[0].mxu0
      %v3090 = vadd.f32 0.0, %v3089
      %v3091 = vpop.f32.mrb[0].mxu0
      %3092 = vmatprep.mubr.bf16.mxu0 0
      %3093 = vmatmul.mubr.bf16.gmra.mrb[0].mxu0 %v2877
      %v3094 = vpop.f32.mrb[0].mxu0
      %v3095 = vadd.f32 0.0, %v3094
      %v3096 = vpop.f32.mrb[0].mxu0
      %v3097 = vpop.f32.mrb[0].mxu0
      %v3098 = vadd.f32 0.0, %v3097
      %v3099 = vpop.f32.mrb[0].mxu0
      %3100 = vmatprep.mubr.bf16.mxu0 0
      %3101 = vmatmul.mubr.bf16.gmra.mrb[0].mxu0 %v2880
      %v3102 = vpop.f32.mrb[0].mxu0
      %v3103 = vadd.f32 0.0, %v3102
      %v3104 = vpop.f32.mrb[0].mxu0
      %v3105 = vpop.f32.mrb[0].mxu0
      %v3106 = vadd.f32 0.0, %v3105
      %v3107 = vpop.f32.mrb[0].mxu0
      %3108 = vmatprep.mubr.bf16.mxu0 0
      %3109 = vmatmul.mubr.bf16.gmra.mrb[0].mxu0 %v2883
      %v3110 = vpop.f32.mrb[0].mxu0
      %v3111 = vadd.f32 0.0, %v3110
      %v3112 = vpop.f32.mrb[0].mxu0
      %v3113 = vpop.f32.mrb[0].mxu0
      %v3114 = vadd.f32 0.0, %v3113
      %v3115 = vpop.f32.mrb[0].mxu0
      %3116 = vmatprep.mubr.bf16.mxu0 0
      %3117 = vmatmul.mubr.bf16.gmra.mrb[0].mxu0 %v2886
      %v3118 = vpop.f32.mrb[0].mxu0
      %v3119 = vadd.f32 0.0, %v3118
      %v3120 = vpop.f32.mrb[0].mxu0
      %v3121 = vpop.f32.mrb[0].mxu0
      %v3122 = vadd.f32 0.0, %v3121
      %v3123 = vpop.f32.mrb[0].mxu0
      %3124 = vmatprep.mubr.bf16.mxu0 0
      %3125 = vmatmul.mubr.bf16.gmra.mrb[0].mxu0 %v2889
      %v3126 = vpop.f32.mrb[0].mxu0
      %v3127 = vadd.f32 0.0, %v3126
      %v3128 = vpop.f32.mrb[0].mxu0
      %v3129 = vpop.f32.mrb[0].mxu0
      %v3130 = vadd.f32 0.0, %v3129
      %v3131 = vpop.f32.mrb[0].mxu0
      %3132 = vmatprep.mubr.bf16.mxu0 0
      %3133 = vmatmul.mubr.bf16.gmra.mrb[0].mxu0 %v2892
      %v3134 = vpop.f32.mrb[0].mxu0
      %v3135 = vadd.f32 0.0, %v3134
      %v3136 = vpop.f32.mrb[0].mxu0
      %v3137 = vpop.f32.mrb[0].mxu0
      %v3138 = vadd.f32 0.0, %v3137
      %v3139 = vpop.f32.mrb[0].mxu0
      %3140 = vmatprep.mubr.bf16.mxu0 0
      %3141 = vmatmul.mubr.bf16.gmra.mrb[0].mxu0 %v2895
      %v3142 = vpop.f32.mrb[0].mxu0
      %v3143 = vadd.f32 0.0, %v3142
      %v3144 = vpop.f32.mrb[0].mxu0
      %v3145 = vpop.f32.mrb[0].mxu0
      %v3146 = vadd.f32 0.0, %v3145
      %v3147 = vpop.f32.mrb[0].mxu0
      %3148 = vmatprep.mubr.bf16.mxu0 0
      %3149 = vmatmul.mubr.bf16.gmra.mrb[0].mxu0 %v2898
      %v3150 = vpop.f32.mrb[0].mxu0
      %v3151 = vadd.f32 0.0, %v3150
      %v3152 = vpop.f32.mrb[0].mxu0
      %v3153 = vpop.f32.mrb[0].mxu0
      %v3154 = vadd.f32 0.0, %v3153
      %v3155 = vpop.f32.mrb[0].mxu0
      %3156 = vmatprep.mubr.bf16.mxu0 0
      %3157 = vmatmul.mubr.bf16.gmra.mrb[0].mxu0 %v2901
      %v3158 = vpop.f32.mrb[0].mxu0
      %v3159 = vadd.f32 0.0, %v3158
      %v3160 = vpop.f32.mrb[0].mxu0
      %v3161 = vpop.f32.mrb[0].mxu0
      %v3162 = vadd.f32 0.0, %v3161
      %v3163 = vpop.f32.mrb[0].mxu0
      %3164 = vmatprep.mubr.bf16.mxu0 0
      %3165 = vmatmul.mubr.bf16.gmra.mrb[0].mxu0 %v2904
      %v3166 = vpop.f32.mrb[0].mxu0
      %v3167 = vadd.f32 0.0, %v3166
      %v3168 = vpop.f32.mrb[0].mxu0
      %v3169 = vpop.f32.mrb[0].mxu0
      %v3170 = vadd.f32 0.0, %v3169
      %v3171 = vpop.f32.mrb[0].mxu0
      %3172 = vmatprep.mubr.bf16.mxu0 0
      %3173 = vmatmul.mubr.bf16.gmra.mrb[0].mxu0 %v2907
      %v3174 = vpop.f32.mrb[0].mxu0
      %v3175 = vadd.f32 0.0, %v3174
      %v3176 = vpop.f32.mrb[0].mxu0
      %v3177 = vpop.f32.mrb[0].mxu0
      %v3178 = vadd.f32 0.0, %v3177
      %v3179 = vpop.f32.mrb[0].mxu0
      %3180 = vmatprep.mubr.bf16.mxu0 0
      %3181 = vmatmul.mubr.bf16.gmra.mrb[0].mxu0 %v2910
      %v3182 = vpop.f32.mrb[0].mxu0
      %v3183 = vadd.f32 0.0, %v3182
      %v3184 = vpop.f32.mrb[0].mxu0
      %v3185 = vpop.f32.mrb[0].mxu0
      %v3186 = vadd.f32 0.0, %v3185
      %v3187 = vpop.f32.mrb[0].mxu0
      %3188 = vmatprep.mubr.bf16.mxu0 0
      %3189 = vmatmul.mubr.bf16.gmra.mrb[0].mxu0 %v2913
      %v3190 = vpop.f32.mrb[0].mxu0
      %v3191 = vadd.f32 0.0, %v3190
      %v3192 = vpop.f32.mrb[0].mxu0
      %v3193 = vpop.f32.mrb[0].mxu0
      %v3194 = vadd.f32 0.0, %v3193
      %v3195 = vpop.f32.mrb[0].mxu0
      %3196 = vmatprep.mubr.bf16.mxu0 0
      %3197 = vmatmul.mubr.bf16.gmra.mrb[0].mxu0 %v2916
      %v3198 = vpop.f32.mrb[0].mxu0
      %v3199 = vadd.f32 0.0, %v3198
      %v3200 = vpop.f32.mrb[0].mxu0
      %v3201 = vpop.f32.mrb[0].mxu0
      %v3202 = vadd.f32 0.0, %v3201
      %v3203 = vpop.f32.mrb[0].mxu0
      %3204 = vmatprep.mubr.bf16.mxu0 0
      %3205 = vmatmul.mubr.bf16.gmra.mrb[0].mxu0 %v2919
      %v3206 = vpop.f32.mrb[0].mxu0
      %v3207 = vadd.f32 0.0, %v3206
      %v3208 = vpop.f32.mrb[0].mxu0
      %v3209 = vpop.f32.mrb[0].mxu0
      %v3210 = vadd.f32 0.0, %v3209
      %v3211 = vpop.f32.mrb[0].mxu0
      %3212 = vdwg.mxu0
      %v3213 = vld [vmem:[#allocation2] sm:$0xff]
      %v3214 = vld [vmem:[#allocation2 + $0x8] sm:$0xff]
      %v3215 = vld [vmem:[#allocation2 + $0x10] sm:$0xff]
      %v3216 = vld [vmem:[#allocation2 + $0x18] sm:$0xff]
      %v3217 = vld [vmem:[#allocation2 + $0x20] sm:$0xff]
      %v3218 = vld [vmem:[#allocation2 + $0x28] sm:$0xff]
      %v3219 = vld [vmem:[#allocation2 + $0x30] sm:$0xff]
      %v3220 = vld [vmem:[#allocation2 + $0x38] sm:$0xff]
      %v3221 = vld [vmem:[#allocation2 + $0x40] sm:$0xff]
      %v3222 = vld [vmem:[#allocation2 + $0x48] sm:$0xff]
      %v3223 = vld [vmem:[#allocation2 + $0x50] sm:$0xff]
      %v3224 = vld [vmem:[#allocation2 + $0x58] sm:$0xff]
      %v3225 = vld [vmem:[#allocation2 + $0x60] sm:$0xff]
      %v3226 = vld [vmem:[#allocation2 + $0x68] sm:$0xff]
      %v3227 = vld [vmem:[#allocation2 + $0x70] sm:$0xff]
      %v3228 = vld [vmem:[#allocation2 + $0x78] sm:$0xff]
      %v3229 = vld [vmem:[#allocation2 + $0x80] sm:$0xff]
      %v3230 = vld [vmem:[#allocation2 + $0x88] sm:$0xff]
      %v3231 = vld [vmem:[#allocation2 + $0x90] sm:$0xff]
      %v3232 = vld [vmem:[#allocation2 + $0x98] sm:$0xff]
      %v3233 = vld [vmem:[#allocation2 + $0xa0] sm:$0xff]
      %v3234 = vld [vmem:[#allocation2 + $0xa8] sm:$0xff]
      %v3235 = vld [vmem:[#allocation2 + $0xb0] sm:$0xff]
      %v3236 = vld [vmem:[#allocation2 + $0xb8] sm:$0xff]
      %v3237 = vld [vmem:[#allocation2 + $0xc0] sm:$0xff]
      %v3238 = vld [vmem:[#allocation2 + $0xc8] sm:$0xff]
      %v3239 = vld [vmem:[#allocation2 + $0xd0] sm:$0xff]
      %v3240 = vld [vmem:[#allocation2 + $0xd8] sm:$0xff]
      %v3241 = vld [vmem:[#allocation2 + $0xe0] sm:$0xff]
      %v3242 = vld [vmem:[#allocation2 + $0xe8] sm:$0xff]
      %v3243 = vld [vmem:[#allocation2 + $0xf0] sm:$0xff]
      %v3244 = vld [vmem:[#allocation2 + $0xf8] sm:$0xff]
      %v3245 = vld [vmem:[#allocation2 + $0x100] sm:$0xff]
      %v3246 = vld [vmem:[#allocation2 + $0x108] sm:$0xff]
      %v3247 = vld [vmem:[#allocation2 + $0x110] sm:$0xff]
      %v3248 = vld [vmem:[#allocation2 + $0x118] sm:$0xff]
      %v3249 = vld [vmem:[#allocation2 + $0x120] sm:$0xff]
      %v3250 = vld [vmem:[#allocation2 + $0x128] sm:$0xff]
      %v3251 = vld [vmem:[#allocation2 + $0x130] sm:$0xff]
      %v3252 = vld [vmem:[#allocation2 + $0x138] sm:$0xff]
      %v3253 = vld [vmem:[#allocation2 + $0x140] sm:$0xff]
      %v3254 = vld [vmem:[#allocation2 + $0x148] sm:$0xff]
      %v3255 = vld [vmem:[#allocation2 + $0x150] sm:$0xff]
      %v3256 = vld [vmem:[#allocation2 + $0x158] sm:$0xff]
      %v3257 = vld [vmem:[#allocation2 + $0x160] sm:$0xff]
      %v3258 = vld [vmem:[#allocation2 + $0x168] sm:$0xff]
      %v3259 = vld [vmem:[#allocation2 + $0x170] sm:$0xff]
      %v3260 = vld [vmem:[#allocation2 + $0x178] sm:$0xff]
      %v3261 = vld [vmem:[#allocation2 + $0x180] sm:$0xff]
      %v3262 = vld [vmem:[#allocation2 + $0x188] sm:$0xff]
      %v3263 = vld [vmem:[#allocation2 + $0x190] sm:$0xff]
      %v3264 = vld [vmem:[#allocation2 + $0x198] sm:$0xff]
      %v3265 = vld [vmem:[#allocation2 + $0x1a0] sm:$0xff]
      %v3266 = vld [vmem:[#allocation2 + $0x1a8] sm:$0xff]
      %v3267 = vld [vmem:[#allocation2 + $0x1b0] sm:$0xff]
      %v3268 = vld [vmem:[#allocation2 + $0x1b8] sm:$0xff]
      %v3269 = vld [vmem:[#allocation2 + $0x1c0] sm:$0xff]
      %v3270 = vld [vmem:[#allocation2 + $0x1c8] sm:$0xff]
      %v3271 = vld [vmem:[#allocation2 + $0x1d0] sm:$0xff]
      %v3272 = vld [vmem:[#allocation2 + $0x1d8] sm:$0xff]
      %v3273 = vld [vmem:[#allocation2 + $0x1e0] sm:$0xff]
      %v3274 = vld [vmem:[#allocation2 + $0x1e8] sm:$0xff]
      %v3275 = vld [vmem:[#allocation2 + $0x1f0] sm:$0xff]
      %v3276 = vld [vmem:[#allocation2 + $0x1f8] sm:$0xff]
      %v3277 = vadd.f32 %v3213, %v2959
      %v3278 = vadd.f32 %v3214, %v2962
      %v3279 = vadd.f32 %v3215, %v2967
      %v3280 = vadd.f32 %v3216, %v2970
      %v3281 = vadd.f32 %v3217, %v2975
      %v3282 = vadd.f32 %v3218, %v2978
      %v3283 = vadd.f32 %v3219, %v2983
      %v3284 = vadd.f32 %v3220, %v2986
      %v3285 = vadd.f32 %v3221, %v2991
      %v3286 = vadd.f32 %v3222, %v2994
      %v3287 = vadd.f32 %v3223, %v2999
      %v3288 = vadd.f32 %v3224, %v3002
      %v3289 = vadd.f32 %v3225, %v3007
      %v3290 = vadd.f32 %v3226, %v3010
      %v3291 = vadd.f32 %v3227, %v3015
      %v3292 = vadd.f32 %v3228, %v3018
      %v3293 = vadd.f32 %v3229, %v3023
      %v3294 = vadd.f32 %v3230, %v3026
      %v3295 = vadd.f32 %v3231, %v3031
      %v3296 = vadd.f32 %v3232, %v3034
      %v3297 = vadd.f32 %v3233, %v3039
      %v3298 = vadd.f32 %v3234, %v3042
      %v3299 = vadd.f32 %v3235, %v3047
      %v3300 = vadd.f32 %v3236, %v3050
      %v3301 = vadd.f32 %v3237, %v3055
      %v3302 = vadd.f32 %v3238, %v3058
      %v3303 = vadd.f32 %v3239, %v3063
      %v3304 = vadd.f32 %v3240, %v3066
      %v3305 = vadd.f32 %v3241, %v3071
      %v3306 = vadd.f32 %v3242, %v3074
      %v3307 = vadd.f32 %v3243, %v3079
      %v3308 = vadd.f32 %v3244, %v3082
      %v3309 = vadd.f32 %v3245, %v3087
      %v3310 = vadd.f32 %v3246, %v3090
      %v3311 = vadd.f32 %v3247, %v3095
      %v3312 = vadd.f32 %v3248, %v3098
      %v3313 = vadd.f32 %v3249, %v3103
      %v3314 = vadd.f32 %v3250, %v3106
      %v3315 = vadd.f32 %v3251, %v3111
      %v3316 = vadd.f32 %v3252, %v3114
      %v3317 = vadd.f32 %v3253, %v3119
      %v3318 = vadd.f32 %v3254, %v3122
      %v3319 = vadd.f32 %v3255, %v3127
      %v3320 = vadd.f32 %v3256, %v3130
      %v3321 = vadd.f32 %v3257, %v3135
      %v3322 = vadd.f32 %v3258, %v3138
      %v3323 = vadd.f32 %v3259, %v3143
      %v3324 = vadd.f32 %v3260, %v3146
      %v3325 = vadd.f32 %v3261, %v3151
      %v3326 = vadd.f32 %v3262, %v3154
      %v3327 = vadd.f32 %v3263, %v3159
      %v3328 = vadd.f32 %v3264, %v3162
      %v3329 = vadd.f32 %v3265, %v3167
      %v3330 = vadd.f32 %v3266, %v3170
      %v3331 = vadd.f32 %v3267, %v3175
      %v3332 = vadd.f32 %v3268, %v3178
      %v3333 = vadd.f32 %v3269, %v3183
      %v3334 = vadd.f32 %v3270, %v3186
      %v3335 = vadd.f32 %v3271, %v3191
      %v3336 = vadd.f32 %v3272, %v3194
      %v3337 = vadd.f32 %v3273, %v3199
      %v3338 = vadd.f32 %v3274, %v3202
      %v3339 = vadd.f32 %v3275, %v3207
      %v3340 = vadd.f32 %v3276, %v3210
      %3341 = vst.msk [vmem:[#allocation2] sm:$0xff] %vm672, %v3277
      %3342 = vst.msk [vmem:[#allocation2 + $0x8] sm:$0xff] %vm672, %v3278
      %3343 = vst.msk [vmem:[#allocation2 + $0x10] sm:$0xff] %vm672, %v3279
      %3344 = vst.msk [vmem:[#allocation2 + $0x18] sm:$0xff] %vm672, %v3280
      %3345 = vst.msk [vmem:[#allocation2 + $0x20] sm:$0xff] %vm672, %v3281
      %3346 = vst.msk [vmem:[#allocation2 + $0x28] sm:$0xff] %vm672, %v3282
      %3347 = vst.msk [vmem:[#allocation2 + $0x30] sm:$0xff] %vm672, %v3283
      %3348 = vst.msk [vmem:[#allocation2 + $0x38] sm:$0xff] %vm672, %v3284
      %3349 = vst.msk [vmem:[#allocation2 + $0x40] sm:$0xff] %vm672, %v3285
      %3350 = vst.msk [vmem:[#allocation2 + $0x48] sm:$0xff] %vm672, %v3286
      %3351 = vst.msk [vmem:[#allocation2 + $0x50] sm:$0xff] %vm672, %v3287
      %3352 = vst.msk [vmem:[#allocation2 + $0x58] sm:$0xff] %vm672, %v3288
      %3353 = vst.msk [vmem:[#allocation2 + $0x60] sm:$0xff] %vm672, %v3289
      %3354 = vst.msk [vmem:[#allocation2 + $0x68] sm:$0xff] %vm672, %v3290
      %3355 = vst.msk [vmem:[#allocation2 + $0x70] sm:$0xff] %vm672, %v3291
      %3356 = vst.msk [vmem:[#allocation2 + $0x78] sm:$0xff] %vm672, %v3292
      %3357 = vst.msk [vmem:[#allocation2 + $0x80] sm:$0xff] %vm672, %v3293
      %3358 = vst.msk [vmem:[#allocation2 + $0x88] sm:$0xff] %vm672, %v3294
      %3359 = vst.msk [vmem:[#allocation2 + $0x90] sm:$0xff] %vm672, %v3295
      %3360 = vst.msk [vmem:[#allocation2 + $0x98] sm:$0xff] %vm672, %v3296
      %3361 = vst.msk [vmem:[#allocation2 + $0xa0] sm:$0xff] %vm672, %v3297
      %3362 = vst.msk [vmem:[#allocation2 + $0xa8] sm:$0xff] %vm672, %v3298
      %3363 = vst.msk [vmem:[#allocation2 + $0xb0] sm:$0xff] %vm672, %v3299
      %3364 = vst.msk [vmem:[#allocation2 + $0xb8] sm:$0xff] %vm672, %v3300
      %3365 = vst.msk [vmem:[#allocation2 + $0xc0] sm:$0xff] %vm672, %v3301
      %3366 = vst.msk [vmem:[#allocation2 + $0xc8] sm:$0xff] %vm672, %v3302
      %3367 = vst.msk [vmem:[#allocation2 + $0xd0] sm:$0xff] %vm672, %v3303
      %3368 = vst.msk [vmem:[#allocation2 + $0xd8] sm:$0xff] %vm672, %v3304
      %3369 = vst.msk [vmem:[#allocation2 + $0xe0] sm:$0xff] %vm672, %v3305
      %3370 = vst.msk [vmem:[#allocation2 + $0xe8] sm:$0xff] %vm672, %v3306
      %3371 = vst.msk [vmem:[#allocation2 + $0xf0] sm:$0xff] %vm672, %v3307
      %3372 = vst.msk [vmem:[#allocation2 + $0xf8] sm:$0xff] %vm672, %v3308
      %3373 = vst.msk [vmem:[#allocation2 + $0x100] sm:$0xff] %vm672, %v3309
      %3374 = vst.msk [vmem:[#allocation2 + $0x108] sm:$0xff] %vm672, %v3310
      %3375 = vst.msk [vmem:[#allocation2 + $0x110] sm:$0xff] %vm672, %v3311
      %3376 = vst.msk [vmem:[#allocation2 + $0x118] sm:$0xff] %vm672, %v3312
      %3377 = vst.msk [vmem:[#allocation2 + $0x120] sm:$0xff] %vm672, %v3313
      %3378 = vst.msk [vmem:[#allocation2 + $0x128] sm:$0xff] %vm672, %v3314
      %3379 = vst.msk [vmem:[#allocation2 + $0x130] sm:$0xff] %vm672, %v3315
      %3380 = vst.msk [vmem:[#allocation2 + $0x138] sm:$0xff] %vm672, %v3316
      %3381 = vst.msk [vmem:[#allocation2 + $0x140] sm:$0xff] %vm672, %v3317
      %3382 = vst.msk [vmem:[#allocation2 + $0x148] sm:$0xff] %vm672, %v3318
      %3383 = vst.msk [vmem:[#allocation2 + $0x150] sm:$0xff] %vm672, %v3319
      %3384 = vst.msk [vmem:[#allocation2 + $0x158] sm:$0xff] %vm672, %v3320
      %3385 = vst.msk [vmem:[#allocation2 + $0x160] sm:$0xff] %vm672, %v3321
      %3386 = vst.msk [vmem:[#allocation2 + $0x168] sm:$0xff] %vm672, %v3322
      %3387 = vst.msk [vmem:[#allocation2 + $0x170] sm:$0xff] %vm672, %v3323
      %3388 = vst.msk [vmem:[#allocation2 + $0x178] sm:$0xff] %vm672, %v3324
      %3389 = vst.msk [vmem:[#allocation2 + $0x180] sm:$0xff] %vm672, %v3325
      %3390 = vst.msk [vmem:[#allocation2 + $0x188] sm:$0xff] %vm672, %v3326
      %3391 = vst.msk [vmem:[#allocation2 + $0x190] sm:$0xff] %vm672, %v3327
      %3392 = vst.msk [vmem:[#allocation2 + $0x198] sm:$0xff] %vm672, %v3328
      %3393 = vst.msk [vmem:[#allocation2 + $0x1a0] sm:$0xff] %vm672, %v3329
      %3394 = vst.msk [vmem:[#allocation2 + $0x1a8] sm:$0xff] %vm672, %v3330
      %3395 = vst.msk [vmem:[#allocation2 + $0x1b0] sm:$0xff] %vm672, %v3331
      %3396 = vst.msk [vmem:[#allocation2 + $0x1b8] sm:$0xff] %vm672, %v3332
      %3397 = vst.msk [vmem:[#allocation2 + $0x1c0] sm:$0xff] %vm672, %v3333
      %3398 = vst.msk [vmem:[#allocation2 + $0x1c8] sm:$0xff] %vm672, %v3334
      %3399 = vst.msk [vmem:[#allocation2 + $0x1d0] sm:$0xff] %vm672, %v3335
      %3400 = vst.msk [vmem:[#allocation2 + $0x1d8] sm:$0xff] %vm672, %v3336
      %3401 = vst.msk [vmem:[#allocation2 + $0x1e0] sm:$0xff] %vm672, %v3337
      %3402 = vst.msk [vmem:[#allocation2 + $0x1e8] sm:$0xff] %vm672, %v3338
      %3403 = vst.msk [vmem:[#allocation2 + $0x1f0] sm:$0xff] %vm672, %v3339
      %3404 = vst.msk [vmem:[#allocation2 + $0x1f8] sm:$0xff] %vm672, %v3340
      %vm3405 = vcmask 1045504
      %v3406 = vrot.slane %v1876, 2
      %v3407 = vrot.slane %v1877, 2
      %v3408 = vsel %vm3405, %v3406, %v3407
      %v3409 = vrot.slane %v1878, 2
      %v3410 = vsel %vm3405, %v3407, %v3409
      %v3411 = vrot.slane %v1879, 2
      %v3412 = vrot.slane %v1880, 2
      %v3413 = vsel %vm3405, %v3411, %v3412
      %v3414 = vrot.slane %v1881, 2
      %v3415 = vsel %vm3405, %v3412, %v3414
      %v3416 = vrot.slane %v1882, 2
      %v3417 = vrot.slane %v1883, 2
      %v3418 = vsel %vm3405, %v3416, %v3417
      %v3419 = vrot.slane %v1884, 2
      %v3420 = vsel %vm3405, %v3417, %v3419
      %v3421 = vrot.slane %v1885, 2
      %v3422 = vrot.slane %v1886, 2
      %v3423 = vsel %vm3405, %v3421, %v3422
      %v3424 = vrot.slane %v1887, 2
      %v3425 = vsel %vm3405, %v3422, %v3424
      %v3426 = vrot.slane %v1888, 2
      %v3427 = vrot.slane %v1889, 2
      %v3428 = vsel %vm3405, %v3426, %v3427
      %v3429 = vrot.slane %v1890, 2
      %v3430 = vsel %vm3405, %v3427, %v3429
      %v3431 = vrot.slane %v1891, 2
      %v3432 = vrot.slane %v1892, 2
      %v3433 = vsel %vm3405, %v3431, %v3432
      %v3434 = vrot.slane %v1893, 2
      %v3435 = vsel %vm3405, %v3432, %v3434
      %v3436 = vrot.slane %v1894, 2
      %v3437 = vrot.slane %v1895, 2
      %v3438 = vsel %vm3405, %v3436, %v3437
      %v3439 = vrot.slane %v1896, 2
      %v3440 = vsel %vm3405, %v3437, %v3439
      %v3441 = vrot.slane %v1897, 2
      %v3442 = vrot.slane %v1898, 2
      %v3443 = vsel %vm3405, %v3441, %v3442
      %v3444 = vrot.slane %v1899, 2
      %v3445 = vsel %vm3405, %v3442, %v3444
      %v3446 = vrot.slane %v1900, 2
      %v3447 = vrot.slane %v1901, 2
      %v3448 = vsel %vm3405, %v3446, %v3447
      %v3449 = vrot.slane %v1902, 2
      %v3450 = vsel %vm3405, %v3447, %v3449
      %v3451 = vrot.slane %v1903, 2
      %v3452 = vrot.slane %v1904, 2
      %v3453 = vsel %vm3405, %v3451, %v3452
      %v3454 = vrot.slane %v1905, 2
      %v3455 = vsel %vm3405, %v3452, %v3454
      %v3456 = vrot.slane %v1906, 2
      %v3457 = vrot.slane %v1907, 2
      %v3458 = vsel %vm3405, %v3456, %v3457
      %v3459 = vrot.slane %v1908, 2
      %v3460 = vsel %vm3405, %v3457, %v3459
      %v3461 = vrot.slane %v1909, 2
      %v3462 = vrot.slane %v1910, 2
      %v3463 = vsel %vm3405, %v3461, %v3462
      %v3464 = vrot.slane %v1911, 2
      %v3465 = vsel %vm3405, %v3462, %v3464
      %v3466 = vrot.slane %v1912, 2
      %v3467 = vrot.slane %v1913, 2
      %v3468 = vsel %vm3405, %v3466, %v3467
      %v3469 = vrot.slane %v1914, 2
      %v3470 = vsel %vm3405, %v3467, %v3469
      %v3471 = vrot.slane %v1915, 2
      %v3472 = vrot.slane %v1916, 2
      %v3473 = vsel %vm3405, %v3471, %v3472
      %v3474 = vrot.slane %v1917, 2
      %v3475 = vsel %vm3405, %v3472, %v3474
      %v3476 = vrot.slane %v1918, 2
      %v3477 = vrot.slane %v1919, 2
      %v3478 = vsel %vm3405, %v3476, %v3477
      %v3479 = vrot.slane %v1920, 2
      %v3480 = vsel %vm3405, %v3477, %v3479
      %v3481 = vrot.slane %v1921, 2
      %v3482 = vrot.slane %v1922, 2
      %v3483 = vsel %vm3405, %v3481, %v3482
      %v3484 = vrot.slane %v1923, 2
      %v3485 = vsel %vm3405, %v3482, %v3484
      %v3486 = vrot.slane %v1930, 2
      %v3487 = vrot.slane %v1931, 2
      %v3488 = vsel %vm3405, %v3486, %v3487
      %v3489 = vrot.slane %v1932, 2
      %v3490 = vsel %vm3405, %v3487, %v3489
      %v3491 = vrot.slane %v1933, 2
      %v3492 = vrot.slane %v1934, 2
      %v3493 = vsel %vm3405, %v3491, %v3492
      %v3494 = vrot.slane %v1935, 2
      %v3495 = vsel %vm3405, %v3492, %v3494
      %v3496 = vrot.slane %v1936, 2
      %v3497 = vrot.slane %v1937, 2
      %v3498 = vsel %vm3405, %v3496, %v3497
      %v3499 = vrot.slane %v1938, 2
      %v3500 = vsel %vm3405, %v3497, %v3499
      %v3501 = vrot.slane %v1939, 2
      %v3502 = vrot.slane %v1940, 2
      %v3503 = vsel %vm3405, %v3501, %v3502
      %v3504 = vrot.slane %v1941, 2
      %v3505 = vsel %vm3405, %v3502, %v3504
      %v3506 = vrot.slane %v1942, 2
      %v3507 = vrot.slane %v1943, 2
      %v3508 = vsel %vm3405, %v3506, %v3507
      %v3509 = vrot.slane %v1944, 2
      %v3510 = vsel %vm3405, %v3507, %v3509
      %v3511 = vrot.slane %v1945, 2
      %v3512 = vrot.slane %v1946, 2
      %v3513 = vsel %vm3405, %v3511, %v3512
      %v3514 = vrot.slane %v1947, 2
      %v3515 = vsel %vm3405, %v3512, %v3514
      %v3516 = vrot.slane %v1948, 2
      %v3517 = vrot.slane %v1949, 2
      %v3518 = vsel %vm3405, %v3516, %v3517
      %v3519 = vrot.slane %v1950, 2
      %v3520 = vsel %vm3405, %v3517, %v3519
      %v3521 = vrot.slane %v1951, 2
      %v3522 = vrot.slane %v1952, 2
      %v3523 = vsel %vm3405, %v3521, %v3522
      %v3524 = vrot.slane %v1953, 2
      %v3525 = vsel %vm3405, %v3522, %v3524
      %v3526 = vrot.slane %v1954, 2
      %v3527 = vrot.slane %v1955, 2
      %v3528 = vsel %vm3405, %v3526, %v3527
      %v3529 = vrot.slane %v1956, 2
      %v3530 = vsel %vm3405, %v3527, %v3529
      %v3531 = vrot.slane %v1957, 2
      %v3532 = vrot.slane %v1958, 2
      %v3533 = vsel %vm3405, %v3531, %v3532
      %v3534 = vrot.slane %v1959, 2
      %v3535 = vsel %vm3405, %v3532, %v3534
      %v3536 = vrot.slane %v1960, 2
      %v3537 = vrot.slane %v1961, 2
      %v3538 = vsel %vm3405, %v3536, %v3537
      %v3539 = vrot.slane %v1962, 2
      %v3540 = vsel %vm3405, %v3537, %v3539
      %v3541 = vrot.slane %v1963, 2
      %v3542 = vrot.slane %v1964, 2
      %v3543 = vsel %vm3405, %v3541, %v3542
      %v3544 = vrot.slane %v1965, 2
      %v3545 = vsel %vm3405, %v3542, %v3544
      %v3546 = vrot.slane %v1966, 2
      %v3547 = vrot.slane %v1967, 2
      %v3548 = vsel %vm3405, %v3546, %v3547
      %v3549 = vrot.slane %v1968, 2
      %v3550 = vsel %vm3405, %v3547, %v3549
      %v3551 = vrot.slane %v1969, 2
      %v3552 = vrot.slane %v1970, 2
      %v3553 = vsel %vm3405, %v3551, %v3552
      %v3554 = vrot.slane %v1971, 2
      %v3555 = vsel %vm3405, %v3552, %v3554
      %v3556 = vrot.slane %v1972, 2
      %v3557 = vrot.slane %v1973, 2
      %v3558 = vsel %vm3405, %v3556, %v3557
      %v3559 = vrot.slane %v1974, 2
      %v3560 = vsel %vm3405, %v3557, %v3559
      %v3561 = vrot.slane %v1975, 2
      %v3562 = vrot.slane %v1976, 2
      %v3563 = vsel %vm3405, %v3561, %v3562
      %v3564 = vrot.slane %v1977, 2
      %v3565 = vsel %vm3405, %v3562, %v3564
      %v3630 = vpack.c.bf16 %v3410, %v3408
      %v3631 = vpack.c.bf16 %v3415, %v3413
      %v3632 = vpack.c.bf16 %v3420, %v3418
      %v3633 = vpack.c.bf16 %v3425, %v3423
      %v3634 = vpack.c.bf16 %v3430, %v3428
      %v3635 = vpack.c.bf16 %v3435, %v3433
      %v3636 = vpack.c.bf16 %v3440, %v3438
      %v3637 = vpack.c.bf16 %v3445, %v3443
      %v3638 = vpack.c.bf16 %v3450, %v3448
      %v3639 = vpack.c.bf16 %v3455, %v3453
      %v3640 = vpack.c.bf16 %v3460, %v3458
      %v3641 = vpack.c.bf16 %v3465, %v3463
      %v3642 = vpack.c.bf16 %v3470, %v3468
      %v3643 = vpack.c.bf16 %v3475, %v3473
      %v3644 = vpack.c.bf16 %v3480, %v3478
      %v3645 = vpack.c.bf16 %v3485, %v3483
      %v3646 = vpack.c.bf16 %v3490, %v3488
      %v3647 = vpack.c.bf16 %v3495, %v3493
      %v3648 = vpack.c.bf16 %v3500, %v3498
      %v3649 = vpack.c.bf16 %v3505, %v3503
      %v3650 = vpack.c.bf16 %v3510, %v3508
      %v3651 = vpack.c.bf16 %v3515, %v3513
      %v3652 = vpack.c.bf16 %v3520, %v3518
      %v3653 = vpack.c.bf16 %v3525, %v3523
      %v3654 = vpack.c.bf16 %v3530, %v3528
      %v3655 = vpack.c.bf16 %v3535, %v3533
      %v3656 = vpack.c.bf16 %v3540, %v3538
      %v3657 = vpack.c.bf16 %v3545, %v3543
      %v3658 = vpack.c.bf16 %v3550, %v3548
      %v3659 = vpack.c.bf16 %v3555, %v3553
      %v3660 = vpack.c.bf16 %v3560, %v3558
      %v3661 = vpack.c.bf16 %v3565, %v3563
      %s3662 = scalar_lea.vmem %s4, 8
      %v3663 = vld [vmem:[%s3662] sm:$0xf]
      %v3665 = vsel %vm672, %v3630, 0
      %v3668 = vsel %vm672, %v3631, 0
      %v3671 = vsel %vm672, %v3632, 0
      %v3674 = vsel %vm672, %v3633, 0
      %v3677 = vsel %vm672, %v3634, 0
      %v3680 = vsel %vm672, %v3635, 0
      %v3683 = vsel %vm672, %v3636, 0
      %v3686 = vsel %vm672, %v3637, 0
      %v3689 = vsel %vm672, %v3638, 0
      %v3692 = vsel %vm672, %v3639, 0
      %v3695 = vsel %vm672, %v3640, 0
      %v3698 = vsel %vm672, %v3641, 0
      %v3701 = vsel %vm672, %v3642, 0
      %v3704 = vsel %vm672, %v3643, 0
      %v3707 = vsel %vm672, %v3644, 0
      %v3710 = vsel %vm672, %v3645, 0
      %v3713 = vsel %vm672, %v3646, 0
      %v3716 = vsel %vm672, %v3647, 0
      %v3719 = vsel %vm672, %v3648, 0
      %v3722 = vsel %vm672, %v3649, 0
      %v3725 = vsel %vm672, %v3650, 0
      %v3728 = vsel %vm672, %v3651, 0
      %v3731 = vsel %vm672, %v3652, 0
      %v3734 = vsel %vm672, %v3653, 0
      %v3737 = vsel %vm672, %v3654, 0
      %v3740 = vsel %vm672, %v3655, 0
      %v3743 = vsel %vm672, %v3656, 0
      %v3746 = vsel %vm672, %v3657, 0
      %v3749 = vsel %vm672, %v3658, 0
      %v3752 = vsel %vm672, %v3659, 0
      %v3755 = vsel %vm672, %v3660, 0
      %v3758 = vsel %vm672, %v3661, 0
      %v3761 = vsel %vm2113, %v3663, 0
      %3763 = vmatprep.subr.bf16.mxu0 0
      %3764 = vmatpush1.bf16.msra.mxu0 %v3761
      %3765 = vmatprep.subr.bf16.mxu0 0
      %3766 = vmatpush1.bf16.msra.mxu0 0
      %3767 = vmatprep.subr.bf16.mxu0 0
      %3768 = vmatpush1.bf16.msra.mxu0 0
      %3769 = vmatprep.subr.bf16.mxu0 0
      %3770 = vmatpush1.bf16.msra.mxu0 0
      %3771 = vmatprep.subr.bf16.mxu0 0
      %3772 = vmatpush1.bf16.msra.mxu0 0
      %3773 = vmatprep.subr.bf16.mxu0 0
      %3774 = vmatpush1.bf16.msra.mxu0 0
      %3775 = vmatprep.subr.bf16.mxu0 0
      %3776 = vmatpush1.bf16.msra.mxu0 0
      %3777 = vmatprep.subr.bf16.mxu0 0
      %3778 = vmatpush1.bf16.msra.mxu0 0
      %3779 = vmatprep.subr.bf16.mxu0 0
      %3780 = vmatpush1.bf16.msra.mxu0 0
      %3781 = vmatprep.subr.bf16.mxu0 0
      %3782 = vmatpush1.bf16.msra.mxu0 0
      %3783 = vmatprep.subr.bf16.mxu0 0
      %3784 = vmatpush1.bf16.msra.mxu0 0
      %3785 = vmatprep.subr.bf16.mxu0 0
      %3786 = vmatpush1.bf16.msra.mxu0 0
      %3787 = vmatprep.subr.bf16.mxu0 0
      %3788 = vmatpush1.bf16.msra.mxu0 0
      %3789 = vmatprep.subr.bf16.mxu0 0
      %3790 = vmatpush1.bf16.msra.mxu0 0
      %3791 = vmatprep.subr.bf16.mxu0 0
      %3792 = vmatpush1.bf16.msra.mxu0 0
      %3793 = vmatprep.subr.bf16.mxu0 0
      %3794 = vmatpush1.bf16.msra.mxu0 0
      %3795 = vmatprep.mubr.bf16.mxu0 0
      %3796 = vmatmul.mubr.bf16.gmra.mrb[0].mxu0 %v3665
      %v3797 = vpop.f32.mrb[0].mxu0
      %v3798 = vadd.f32 0.0, %v3797
      %v3799 = vpop.f32.mrb[0].mxu0
      %v3800 = vpop.f32.mrb[0].mxu0
      %v3801 = vadd.f32 0.0, %v3800
      %v3802 = vpop.f32.mrb[0].mxu0
      %3803 = vmatprep.mubr.bf16.mxu0 0
      %3804 = vmatmul.mubr.bf16.gmra.mrb[0].mxu0 %v3668
      %v3805 = vpop.f32.mrb[0].mxu0
      %v3806 = vadd.f32 0.0, %v3805
      %v3807 = vpop.f32.mrb[0].mxu0
      %v3808 = vpop.f32.mrb[0].mxu0
      %v3809 = vadd.f32 0.0, %v3808
      %v3810 = vpop.f32.mrb[0].mxu0
      %3811 = vmatprep.mubr.bf16.mxu0 0
      %3812 = vmatmul.mubr.bf16.gmra.mrb[0].mxu0 %v3671
      %v3813 = vpop.f32.mrb[0].mxu0
      %v3814 = vadd.f32 0.0, %v3813
      %v3815 = vpop.f32.mrb[0].mxu0
      %v3816 = vpop.f32.mrb[0].mxu0
      %v3817 = vadd.f32 0.0, %v3816
      %v3818 = vpop.f32.mrb[0].mxu0
      %3819 = vmatprep.mubr.bf16.mxu0 0
      %3820 = vmatmul.mubr.bf16.gmra.mrb[0].mxu0 %v3674
      %v3821 = vpop.f32.mrb[0].mxu0
      %v3822 = vadd.f32 0.0, %v3821
      %v3823 = vpop.f32.mrb[0].mxu0
      %v3824 = vpop.f32.mrb[0].mxu0
      %v3825 = vadd.f32 0.0, %v3824
      %v3826 = vpop.f32.mrb[0].mxu0
      %3827 = vmatprep.mubr.bf16.mxu0 0
      %3828 = vmatmul.mubr.bf16.gmra.mrb[0].mxu0 %v3677
      %v3829 = vpop.f32.mrb[0].mxu0
      %v3830 = vadd.f32 0.0, %v3829
      %v3831 = vpop.f32.mrb[0].mxu0
      %v3832 = vpop.f32.mrb[0].mxu0
      %v3833 = vadd.f32 0.0, %v3832
      %v3834 = vpop.f32.mrb[0].mxu0
      %3835 = vmatprep.mubr.bf16.mxu0 0
      %3836 = vmatmul.mubr.bf16.gmra.mrb[0].mxu0 %v3680
      %v3837 = vpop.f32.mrb[0].mxu0
      %v3838 = vadd.f32 0.0, %v3837
      %v3839 = vpop.f32.mrb[0].mxu0
      %v3840 = vpop.f32.mrb[0].mxu0
      %v3841 = vadd.f32 0.0, %v3840
      %v3842 = vpop.f32.mrb[0].mxu0
      %3843 = vmatprep.mubr.bf16.mxu0 0
      %3844 = vmatmul.mubr.bf16.gmra.mrb[0].mxu0 %v3683
      %v3845 = vpop.f32.mrb[0].mxu0
      %v3846 = vadd.f32 0.0, %v3845
      %v3847 = vpop.f32.mrb[0].mxu0
      %v3848 = vpop.f32.mrb[0].mxu0
      %v3849 = vadd.f32 0.0, %v3848
      %v3850 = vpop.f32.mrb[0].mxu0
      %3851 = vmatprep.mubr.bf16.mxu0 0
      %3852 = vmatmul.mubr.bf16.gmra.mrb[0].mxu0 %v3686
      %v3853 = vpop.f32.mrb[0].mxu0
      %v3854 = vadd.f32 0.0, %v3853
      %v3855 = vpop.f32.mrb[0].mxu0
      %v3856 = vpop.f32.mrb[0].mxu0
      %v3857 = vadd.f32 0.0, %v3856
      %v3858 = vpop.f32.mrb[0].mxu0
      %3859 = vmatprep.mubr.bf16.mxu0 0
      %3860 = vmatmul.mubr.bf16.gmra.mrb[0].mxu0 %v3689
      %v3861 = vpop.f32.mrb[0].mxu0
      %v3862 = vadd.f32 0.0, %v3861
      %v3863 = vpop.f32.mrb[0].mxu0
      %v3864 = vpop.f32.mrb[0].mxu0
      %v3865 = vadd.f32 0.0, %v3864
      %v3866 = vpop.f32.mrb[0].mxu0
      %3867 = vmatprep.mubr.bf16.mxu0 0
      %3868 = vmatmul.mubr.bf16.gmra.mrb[0].mxu0 %v3692
      %v3869 = vpop.f32.mrb[0].mxu0
      %v3870 = vadd.f32 0.0, %v3869
      %v3871 = vpop.f32.mrb[0].mxu0
      %v3872 = vpop.f32.mrb[0].mxu0
      %v3873 = vadd.f32 0.0, %v3872
      %v3874 = vpop.f32.mrb[0].mxu0
      %3875 = vmatprep.mubr.bf16.mxu0 0
      %3876 = vmatmul.mubr.bf16.gmra.mrb[0].mxu0 %v3695
      %v3877 = vpop.f32.mrb[0].mxu0
      %v3878 = vadd.f32 0.0, %v3877
      %v3879 = vpop.f32.mrb[0].mxu0
      %v3880 = vpop.f32.mrb[0].mxu0
      %v3881 = vadd.f32 0.0, %v3880
      %v3882 = vpop.f32.mrb[0].mxu0
      %3883 = vmatprep.mubr.bf16.mxu0 0
      %3884 = vmatmul.mubr.bf16.gmra.mrb[0].mxu0 %v3698
      %v3885 = vpop.f32.mrb[0].mxu0
      %v3886 = vadd.f32 0.0, %v3885
      %v3887 = vpop.f32.mrb[0].mxu0
      %v3888 = vpop.f32.mrb[0].mxu0
      %v3889 = vadd.f32 0.0, %v3888
      %v3890 = vpop.f32.mrb[0].mxu0
      %3891 = vmatprep.mubr.bf16.mxu0 0
      %3892 = vmatmul.mubr.bf16.gmra.mrb[0].mxu0 %v3701
      %v3893 = vpop.f32.mrb[0].mxu0
      %v3894 = vadd.f32 0.0, %v3893
      %v3895 = vpop.f32.mrb[0].mxu0
      %v3896 = vpop.f32.mrb[0].mxu0
      %v3897 = vadd.f32 0.0, %v3896
      %v3898 = vpop.f32.mrb[0].mxu0
      %3899 = vmatprep.mubr.bf16.mxu0 0
      %3900 = vmatmul.mubr.bf16.gmra.mrb[0].mxu0 %v3704
      %v3901 = vpop.f32.mrb[0].mxu0
      %v3902 = vadd.f32 0.0, %v3901
      %v3903 = vpop.f32.mrb[0].mxu0
      %v3904 = vpop.f32.mrb[0].mxu0
      %v3905 = vadd.f32 0.0, %v3904
      %v3906 = vpop.f32.mrb[0].mxu0
      %3907 = vmatprep.mubr.bf16.mxu0 0
      %3908 = vmatmul.mubr.bf16.gmra.mrb[0].mxu0 %v3707
      %v3909 = vpop.f32.mrb[0].mxu0
      %v3910 = vadd.f32 0.0, %v3909
      %v3911 = vpop.f32.mrb[0].mxu0
      %v3912 = vpop.f32.mrb[0].mxu0
      %v3913 = vadd.f32 0.0, %v3912
      %v3914 = vpop.f32.mrb[0].mxu0
      %3915 = vmatprep.mubr.bf16.mxu0 0
      %3916 = vmatmul.mubr.bf16.gmra.mrb[0].mxu0 %v3710
      %v3917 = vpop.f32.mrb[0].mxu0
      %v3918 = vadd.f32 0.0, %v3917
      %v3919 = vpop.f32.mrb[0].mxu0
      %v3920 = vpop.f32.mrb[0].mxu0
      %v3921 = vadd.f32 0.0, %v3920
      %v3922 = vpop.f32.mrb[0].mxu0
      %3923 = vmatprep.mubr.bf16.mxu0 0
      %3924 = vmatmul.mubr.bf16.gmra.mrb[0].mxu0 %v3713
      %v3925 = vpop.f32.mrb[0].mxu0
      %v3926 = vadd.f32 0.0, %v3925
      %v3927 = vpop.f32.mrb[0].mxu0
      %v3928 = vpop.f32.mrb[0].mxu0
      %v3929 = vadd.f32 0.0, %v3928
      %v3930 = vpop.f32.mrb[0].mxu0
      %3931 = vmatprep.mubr.bf16.mxu0 0
      %3932 = vmatmul.mubr.bf16.gmra.mrb[0].mxu0 %v3716
      %v3933 = vpop.f32.mrb[0].mxu0
      %v3934 = vadd.f32 0.0, %v3933
      %v3935 = vpop.f32.mrb[0].mxu0
      %v3936 = vpop.f32.mrb[0].mxu0
      %v3937 = vadd.f32 0.0, %v3936
      %v3938 = vpop.f32.mrb[0].mxu0
      %3939 = vmatprep.mubr.bf16.mxu0 0
      %3940 = vmatmul.mubr.bf16.gmra.mrb[0].mxu0 %v3719
      %v3941 = vpop.f32.mrb[0].mxu0
      %v3942 = vadd.f32 0.0, %v3941
      %v3943 = vpop.f32.mrb[0].mxu0
      %v3944 = vpop.f32.mrb[0].mxu0
      %v3945 = vadd.f32 0.0, %v3944
      %v3946 = vpop.f32.mrb[0].mxu0
      %3947 = vmatprep.mubr.bf16.mxu0 0
      %3948 = vmatmul.mubr.bf16.gmra.mrb[0].mxu0 %v3722
      %v3949 = vpop.f32.mrb[0].mxu0
      %v3950 = vadd.f32 0.0, %v3949
      %v3951 = vpop.f32.mrb[0].mxu0
      %v3952 = vpop.f32.mrb[0].mxu0
      %v3953 = vadd.f32 0.0, %v3952
      %v3954 = vpop.f32.mrb[0].mxu0
      %3955 = vmatprep.mubr.bf16.mxu0 0
      %3956 = vmatmul.mubr.bf16.gmra.mrb[0].mxu0 %v3725
      %v3957 = vpop.f32.mrb[0].mxu0
      %v3958 = vadd.f32 0.0, %v3957
      %v3959 = vpop.f32.mrb[0].mxu0
      %v3960 = vpop.f32.mrb[0].mxu0
      %v3961 = vadd.f32 0.0, %v3960
      %v3962 = vpop.f32.mrb[0].mxu0
      %3963 = vmatprep.mubr.bf16.mxu0 0
      %3964 = vmatmul.mubr.bf16.gmra.mrb[0].mxu0 %v3728
      %v3965 = vpop.f32.mrb[0].mxu0
      %v3966 = vadd.f32 0.0, %v3965
      %v3967 = vpop.f32.mrb[0].mxu0
      %v3968 = vpop.f32.mrb[0].mxu0
      %v3969 = vadd.f32 0.0, %v3968
      %v3970 = vpop.f32.mrb[0].mxu0
      %3971 = vmatprep.mubr.bf16.mxu0 0
      %3972 = vmatmul.mubr.bf16.gmra.mrb[0].mxu0 %v3731
      %v3973 = vpop.f32.mrb[0].mxu0
      %v3974 = vadd.f32 0.0, %v3973
      %v3975 = vpop.f32.mrb[0].mxu0
      %v3976 = vpop.f32.mrb[0].mxu0
      %v3977 = vadd.f32 0.0, %v3976
      %v3978 = vpop.f32.mrb[0].mxu0
      %3979 = vmatprep.mubr.bf16.mxu0 0
      %3980 = vmatmul.mubr.bf16.gmra.mrb[0].mxu0 %v3734
      %v3981 = vpop.f32.mrb[0].mxu0
      %v3982 = vadd.f32 0.0, %v3981
      %v3983 = vpop.f32.mrb[0].mxu0
      %v3984 = vpop.f32.mrb[0].mxu0
      %v3985 = vadd.f32 0.0, %v3984
      %v3986 = vpop.f32.mrb[0].mxu0
      %3987 = vmatprep.mubr.bf16.mxu0 0
      %3988 = vmatmul.mubr.bf16.gmra.mrb[0].mxu0 %v3737
      %v3989 = vpop.f32.mrb[0].mxu0
      %v3990 = vadd.f32 0.0, %v3989
      %v3991 = vpop.f32.mrb[0].mxu0
      %v3992 = vpop.f32.mrb[0].mxu0
      %v3993 = vadd.f32 0.0, %v3992
      %v3994 = vpop.f32.mrb[0].mxu0
      %3995 = vmatprep.mubr.bf16.mxu0 0
      %3996 = vmatmul.mubr.bf16.gmra.mrb[0].mxu0 %v3740
      %v3997 = vpop.f32.mrb[0].mxu0
      %v3998 = vadd.f32 0.0, %v3997
      %v3999 = vpop.f32.mrb[0].mxu0
      %v4000 = vpop.f32.mrb[0].mxu0
      %v4001 = vadd.f32 0.0, %v4000
      %v4002 = vpop.f32.mrb[0].mxu0
      %4003 = vmatprep.mubr.bf16.mxu0 0
      %4004 = vmatmul.mubr.bf16.gmra.mrb[0].mxu0 %v3743
      %v4005 = vpop.f32.mrb[0].mxu0
      %v4006 = vadd.f32 0.0, %v4005
      %v4007 = vpop.f32.mrb[0].mxu0
      %v4008 = vpop.f32.mrb[0].mxu0
      %v4009 = vadd.f32 0.0, %v4008
      %v4010 = vpop.f32.mrb[0].mxu0
      %4011 = vmatprep.mubr.bf16.mxu0 0
      %4012 = vmatmul.mubr.bf16.gmra.mrb[0].mxu0 %v3746
      %v4013 = vpop.f32.mrb[0].mxu0
      %v4014 = vadd.f32 0.0, %v4013
      %v4015 = vpop.f32.mrb[0].mxu0
      %v4016 = vpop.f32.mrb[0].mxu0
      %v4017 = vadd.f32 0.0, %v4016
      %v4018 = vpop.f32.mrb[0].mxu0
      %4019 = vmatprep.mubr.bf16.mxu0 0
      %4020 = vmatmul.mubr.bf16.gmra.mrb[0].mxu0 %v3749
      %v4021 = vpop.f32.mrb[0].mxu0
      %v4022 = vadd.f32 0.0, %v4021
      %v4023 = vpop.f32.mrb[0].mxu0
      %v4024 = vpop.f32.mrb[0].mxu0
      %v4025 = vadd.f32 0.0, %v4024
      %v4026 = vpop.f32.mrb[0].mxu0
      %4027 = vmatprep.mubr.bf16.mxu0 0
      %4028 = vmatmul.mubr.bf16.gmra.mrb[0].mxu0 %v3752
      %v4029 = vpop.f32.mrb[0].mxu0
      %v4030 = vadd.f32 0.0, %v4029
      %v4031 = vpop.f32.mrb[0].mxu0
      %v4032 = vpop.f32.mrb[0].mxu0
      %v4033 = vadd.f32 0.0, %v4032
      %v4034 = vpop.f32.mrb[0].mxu0
      %4035 = vmatprep.mubr.bf16.mxu0 0
      %4036 = vmatmul.mubr.bf16.gmra.mrb[0].mxu0 %v3755
      %v4037 = vpop.f32.mrb[0].mxu0
      %v4038 = vadd.f32 0.0, %v4037
      %v4039 = vpop.f32.mrb[0].mxu0
      %v4040 = vpop.f32.mrb[0].mxu0
      %v4041 = vadd.f32 0.0, %v4040
      %v4042 = vpop.f32.mrb[0].mxu0
      %4043 = vmatprep.mubr.bf16.mxu0 0
      %4044 = vmatmul.mubr.bf16.gmra.mrb[0].mxu0 %v3758
      %v4045 = vpop.f32.mrb[0].mxu0
      %v4046 = vadd.f32 0.0, %v4045
      %v4047 = vpop.f32.mrb[0].mxu0
      %v4048 = vpop.f32.mrb[0].mxu0
      %v4049 = vadd.f32 0.0, %v4048
      %v4050 = vpop.f32.mrb[0].mxu0
      %4051 = vdwg.mxu0
      %v4052 = vld [vmem:[#allocation2] sm:$0xff]
      %v4053 = vld [vmem:[#allocation2 + $0x8] sm:$0xff]
      %v4054 = vld [vmem:[#allocation2 + $0x10] sm:$0xff]
      %v4055 = vld [vmem:[#allocation2 + $0x18] sm:$0xff]
      %v4056 = vld [vmem:[#allocation2 + $0x20] sm:$0xff]
      %v4057 = vld [vmem:[#allocation2 + $0x28] sm:$0xff]
      %v4058 = vld [vmem:[#allocation2 + $0x30] sm:$0xff]
      %v4059 = vld [vmem:[#allocation2 + $0x38] sm:$0xff]
      %v4060 = vld [vmem:[#allocation2 + $0x40] sm:$0xff]
      %v4061 = vld [vmem:[#allocation2 + $0x48] sm:$0xff]
      %v4062 = vld [vmem:[#allocation2 + $0x50] sm:$0xff]
      %v4063 = vld [vmem:[#allocation2 + $0x58] sm:$0xff]
      %v4064 = vld [vmem:[#allocation2 + $0x60] sm:$0xff]
      %v4065 = vld [vmem:[#allocation2 + $0x68] sm:$0xff]
      %v4066 = vld [vmem:[#allocation2 + $0x70] sm:$0xff]
      %v4067 = vld [vmem:[#allocation2 + $0x78] sm:$0xff]
      %v4068 = vld [vmem:[#allocation2 + $0x80] sm:$0xff]
      %v4069 = vld [vmem:[#allocation2 + $0x88] sm:$0xff]
      %v4070 = vld [vmem:[#allocation2 + $0x90] sm:$0xff]
      %v4071 = vld [vmem:[#allocation2 + $0x98] sm:$0xff]
      %v4072 = vld [vmem:[#allocation2 + $0xa0] sm:$0xff]
      %v4073 = vld [vmem:[#allocation2 + $0xa8] sm:$0xff]
      %v4074 = vld [vmem:[#allocation2 + $0xb0] sm:$0xff]
      %v4075 = vld [vmem:[#allocation2 + $0xb8] sm:$0xff]
      %v4076 = vld [vmem:[#allocation2 + $0xc0] sm:$0xff]
      %v4077 = vld [vmem:[#allocation2 + $0xc8] sm:$0xff]
      %v4078 = vld [vmem:[#allocation2 + $0xd0] sm:$0xff]
      %v4079 = vld [vmem:[#allocation2 + $0xd8] sm:$0xff]
      %v4080 = vld [vmem:[#allocation2 + $0xe0] sm:$0xff]
      %v4081 = vld [vmem:[#allocation2 + $0xe8] sm:$0xff]
      %v4082 = vld [vmem:[#allocation2 + $0xf0] sm:$0xff]
      %v4083 = vld [vmem:[#allocation2 + $0xf8] sm:$0xff]
      %v4084 = vld [vmem:[#allocation2 + $0x100] sm:$0xff]
      %v4085 = vld [vmem:[#allocation2 + $0x108] sm:$0xff]
      %v4086 = vld [vmem:[#allocation2 + $0x110] sm:$0xff]
      %v4087 = vld [vmem:[#allocation2 + $0x118] sm:$0xff]
      %v4088 = vld [vmem:[#allocation2 + $0x120] sm:$0xff]
      %v4089 = vld [vmem:[#allocation2 + $0x128] sm:$0xff]
      %v4090 = vld [vmem:[#allocation2 + $0x130] sm:$0xff]
      %v4091 = vld [vmem:[#allocation2 + $0x138] sm:$0xff]
      %v4092 = vld [vmem:[#allocation2 + $0x140] sm:$0xff]
      %v4093 = vld [vmem:[#allocation2 + $0x148] sm:$0xff]
      %v4094 = vld [vmem:[#allocation2 + $0x150] sm:$0xff]
      %v4095 = vld [vmem:[#allocation2 + $0x158] sm:$0xff]
      %v4096 = vld [vmem:[#allocation2 + $0x160] sm:$0xff]
      %v4097 = vld [vmem:[#allocation2 + $0x168] sm:$0xff]
      %v4098 = vld [vmem:[#allocation2 + $0x170] sm:$0xff]
      %v4099 = vld [vmem:[#allocation2 + $0x178] sm:$0xff]
      %v4100 = vld [vmem:[#allocation2 + $0x180] sm:$0xff]
      %v4101 = vld [vmem:[#allocation2 + $0x188] sm:$0xff]
      %v4102 = vld [vmem:[#allocation2 + $0x190] sm:$0xff]
      %v4103 = vld [vmem:[#allocation2 + $0x198] sm:$0xff]
      %v4104 = vld [vmem:[#allocation2 + $0x1a0] sm:$0xff]
      %v4105 = vld [vmem:[#allocation2 + $0x1a8] sm:$0xff]
      %v4106 = vld [vmem:[#allocation2 + $0x1b0] sm:$0xff]
      %v4107 = vld [vmem:[#allocation2 + $0x1b8] sm:$0xff]
      %v4108 = vld [vmem:[#allocation2 + $0x1c0] sm:$0xff]
      %v4109 = vld [vmem:[#allocation2 + $0x1c8] sm:$0xff]
      %v4110 = vld [vmem:[#allocation2 + $0x1d0] sm:$0xff]
      %v4111 = vld [vmem:[#allocation2 + $0x1d8] sm:$0xff]
      %v4112 = vld [vmem:[#allocation2 + $0x1e0] sm:$0xff]
      %v4113 = vld [vmem:[#allocation2 + $0x1e8] sm:$0xff]
      %v4114 = vld [vmem:[#allocation2 + $0x1f0] sm:$0xff]
      %v4115 = vld [vmem:[#allocation2 + $0x1f8] sm:$0xff]
      %v4116 = vadd.f32 %v4052, %v3798
      %v4117 = vadd.f32 %v4053, %v3801
      %v4118 = vadd.f32 %v4054, %v3806
      %v4119 = vadd.f32 %v4055, %v3809
      %v4120 = vadd.f32 %v4056, %v3814
      %v4121 = vadd.f32 %v4057, %v3817
      %v4122 = vadd.f32 %v4058, %v3822
      %v4123 = vadd.f32 %v4059, %v3825
      %v4124 = vadd.f32 %v4060, %v3830
      %v4125 = vadd.f32 %v4061, %v3833
      %v4126 = vadd.f32 %v4062, %v3838
      %v4127 = vadd.f32 %v4063, %v3841
      %v4128 = vadd.f32 %v4064, %v3846
      %v4129 = vadd.f32 %v4065, %v3849
      %v4130 = vadd.f32 %v4066, %v3854
      %v4131 = vadd.f32 %v4067, %v3857
      %v4132 = vadd.f32 %v4068, %v3862
      %v4133 = vadd.f32 %v4069, %v3865
      %v4134 = vadd.f32 %v4070, %v3870
      %v4135 = vadd.f32 %v4071, %v3873
      %v4136 = vadd.f32 %v4072, %v3878
      %v4137 = vadd.f32 %v4073, %v3881
      %v4138 = vadd.f32 %v4074, %v3886
      %v4139 = vadd.f32 %v4075, %v3889
      %v4140 = vadd.f32 %v4076, %v3894
      %v4141 = vadd.f32 %v4077, %v3897
      %v4142 = vadd.f32 %v4078, %v3902
      %v4143 = vadd.f32 %v4079, %v3905
      %v4144 = vadd.f32 %v4080, %v3910
      %v4145 = vadd.f32 %v4081, %v3913
      %v4146 = vadd.f32 %v4082, %v3918
      %v4147 = vadd.f32 %v4083, %v3921
      %v4148 = vadd.f32 %v4084, %v3926
      %v4149 = vadd.f32 %v4085, %v3929
      %v4150 = vadd.f32 %v4086, %v3934
      %v4151 = vadd.f32 %v4087, %v3937
      %v4152 = vadd.f32 %v4088, %v3942
      %v4153 = vadd.f32 %v4089, %v3945
      %v4154 = vadd.f32 %v4090, %v3950
      %v4155 = vadd.f32 %v4091, %v3953
      %v4156 = vadd.f32 %v4092, %v3958
      %v4157 = vadd.f32 %v4093, %v3961
      %v4158 = vadd.f32 %v4094, %v3966
      %v4159 = vadd.f32 %v4095, %v3969
      %v4160 = vadd.f32 %v4096, %v3974
      %v4161 = vadd.f32 %v4097, %v3977
      %v4162 = vadd.f32 %v4098, %v3982
      %v4163 = vadd.f32 %v4099, %v3985
      %v4164 = vadd.f32 %v4100, %v3990
      %v4165 = vadd.f32 %v4101, %v3993
      %v4166 = vadd.f32 %v4102, %v3998
      %v4167 = vadd.f32 %v4103, %v4001
      %v4168 = vadd.f32 %v4104, %v4006
      %v4169 = vadd.f32 %v4105, %v4009
      %v4170 = vadd.f32 %v4106, %v4014
      %v4171 = vadd.f32 %v4107, %v4017
      %v4172 = vadd.f32 %v4108, %v4022
      %v4173 = vadd.f32 %v4109, %v4025
      %v4174 = vadd.f32 %v4110, %v4030
      %v4175 = vadd.f32 %v4111, %v4033
      %v4176 = vadd.f32 %v4112, %v4038
      %v4177 = vadd.f32 %v4113, %v4041
      %v4178 = vadd.f32 %v4114, %v4046
      %v4179 = vadd.f32 %v4115, %v4049
      %4180 = vst.msk [vmem:[#allocation2] sm:$0xff] %vm672, %v4116
      %4181 = vst.msk [vmem:[#allocation2 + $0x8] sm:$0xff] %vm672, %v4117
      %4182 = vst.msk [vmem:[#allocation2 + $0x10] sm:$0xff] %vm672, %v4118
      %4183 = vst.msk [vmem:[#allocation2 + $0x18] sm:$0xff] %vm672, %v4119
      %4184 = vst.msk [vmem:[#allocation2 + $0x20] sm:$0xff] %vm672, %v4120
      %4185 = vst.msk [vmem:[#allocation2 + $0x28] sm:$0xff] %vm672, %v4121
      %4186 = vst.msk [vmem:[#allocation2 + $0x30] sm:$0xff] %vm672, %v4122
      %4187 = vst.msk [vmem:[#allocation2 + $0x38] sm:$0xff] %vm672, %v4123
      %4188 = vst.msk [vmem:[#allocation2 + $0x40] sm:$0xff] %vm672, %v4124
      %4189 = vst.msk [vmem:[#allocation2 + $0x48] sm:$0xff] %vm672, %v4125
      %4190 = vst.msk [vmem:[#allocation2 + $0x50] sm:$0xff] %vm672, %v4126
      %4191 = vst.msk [vmem:[#allocation2 + $0x58] sm:$0xff] %vm672, %v4127
      %4192 = vst.msk [vmem:[#allocation2 + $0x60] sm:$0xff] %vm672, %v4128
      %4193 = vst.msk [vmem:[#allocation2 + $0x68] sm:$0xff] %vm672, %v4129
      %4194 = vst.msk [vmem:[#allocation2 + $0x70] sm:$0xff] %vm672, %v4130
      %4195 = vst.msk [vmem:[#allocation2 + $0x78] sm:$0xff] %vm672, %v4131
      %4196 = vst.msk [vmem:[#allocation2 + $0x80] sm:$0xff] %vm672, %v4132
      %4197 = vst.msk [vmem:[#allocation2 + $0x88] sm:$0xff] %vm672, %v4133
      %4198 = vst.msk [vmem:[#allocation2 + $0x90] sm:$0xff] %vm672, %v4134
      %4199 = vst.msk [vmem:[#allocation2 + $0x98] sm:$0xff] %vm672, %v4135
      %4200 = vst.msk [vmem:[#allocation2 + $0xa0] sm:$0xff] %vm672, %v4136
      %4201 = vst.msk [vmem:[#allocation2 + $0xa8] sm:$0xff] %vm672, %v4137
      %4202 = vst.msk [vmem:[#allocation2 + $0xb0] sm:$0xff] %vm672, %v4138
      %4203 = vst.msk [vmem:[#allocation2 + $0xb8] sm:$0xff] %vm672, %v4139
      %4204 = vst.msk [vmem:[#allocation2 + $0xc0] sm:$0xff] %vm672, %v4140
      %4205 = vst.msk [vmem:[#allocation2 + $0xc8] sm:$0xff] %vm672, %v4141
      %4206 = vst.msk [vmem:[#allocation2 + $0xd0] sm:$0xff] %vm672, %v4142
      %4207 = vst.msk [vmem:[#allocation2 + $0xd8] sm:$0xff] %vm672, %v4143
      %4208 = vst.msk [vmem:[#allocation2 + $0xe0] sm:$0xff] %vm672, %v4144
      %4209 = vst.msk [vmem:[#allocation2 + $0xe8] sm:$0xff] %vm672, %v4145
      %4210 = vst.msk [vmem:[#allocation2 + $0xf0] sm:$0xff] %vm672, %v4146
      %4211 = vst.msk [vmem:[#allocation2 + $0xf8] sm:$0xff] %vm672, %v4147
      %4212 = vst.msk [vmem:[#allocation2 + $0x100] sm:$0xff] %vm672, %v4148
      %4213 = vst.msk [vmem:[#allocation2 + $0x108] sm:$0xff] %vm672, %v4149
      %4214 = vst.msk [vmem:[#allocation2 + $0x110] sm:$0xff] %vm672, %v4150
      %4215 = vst.msk [vmem:[#allocation2 + $0x118] sm:$0xff] %vm672, %v4151
      %4216 = vst.msk [vmem:[#allocation2 + $0x120] sm:$0xff] %vm672, %v4152
      %4217 = vst.msk [vmem:[#allocation2 + $0x128] sm:$0xff] %vm672, %v4153
      %4218 = vst.msk [vmem:[#allocation2 + $0x130] sm:$0xff] %vm672, %v4154
      %4219 = vst.msk [vmem:[#allocation2 + $0x138] sm:$0xff] %vm672, %v4155
      %4220 = vst.msk [vmem:[#allocation2 + $0x140] sm:$0xff] %vm672, %v4156
      %4221 = vst.msk [vmem:[#allocation2 + $0x148] sm:$0xff] %vm672, %v4157
      %4222 = vst.msk [vmem:[#allocation2 + $0x150] sm:$0xff] %vm672, %v4158
      %4223 = vst.msk [vmem:[#allocation2 + $0x158] sm:$0xff] %vm672, %v4159
      %4224 = vst.msk [vmem:[#allocation2 + $0x160] sm:$0xff] %vm672, %v4160
      %4225 = vst.msk [vmem:[#allocation2 + $0x168] sm:$0xff] %vm672, %v4161
      %4226 = vst.msk [vmem:[#allocation2 + $0x170] sm:$0xff] %vm672, %v4162
      %4227 = vst.msk [vmem:[#allocation2 + $0x178] sm:$0xff] %vm672, %v4163
      %4228 = vst.msk [vmem:[#allocation2 + $0x180] sm:$0xff] %vm672, %v4164
      %4229 = vst.msk [vmem:[#allocation2 + $0x188] sm:$0xff] %vm672, %v4165
      %4230 = vst.msk [vmem:[#allocation2 + $0x190] sm:$0xff] %vm672, %v4166
      %4231 = vst.msk [vmem:[#allocation2 + $0x198] sm:$0xff] %vm672, %v4167
      %4232 = vst.msk [vmem:[#allocation2 + $0x1a0] sm:$0xff] %vm672, %v4168
      %4233 = vst.msk [vmem:[#allocation2 + $0x1a8] sm:$0xff] %vm672, %v4169
      %4234 = vst.msk [vmem:[#allocation2 + $0x1b0] sm:$0xff] %vm672, %v4170
      %4235 = vst.msk [vmem:[#allocation2 + $0x1b8] sm:$0xff] %vm672, %v4171
      %4236 = vst.msk [vmem:[#allocation2 + $0x1c0] sm:$0xff] %vm672, %v4172
      %4237 = vst.msk [vmem:[#allocation2 + $0x1c8] sm:$0xff] %vm672, %v4173
      %4238 = vst.msk [vmem:[#allocation2 + $0x1d0] sm:$0xff] %vm672, %v4174
      %4239 = vst.msk [vmem:[#allocation2 + $0x1d8] sm:$0xff] %vm672, %v4175
      %4240 = vst.msk [vmem:[#allocation2 + $0x1e0] sm:$0xff] %vm672, %v4176
      %4241 = vst.msk [vmem:[#allocation2 + $0x1e8] sm:$0xff] %vm672, %v4177
      %4242 = vst.msk [vmem:[#allocation2 + $0x1f0] sm:$0xff] %vm672, %v4178
      %4243 = vst.msk [vmem:[#allocation2 + $0x1f8] sm:$0xff] %vm672, %v4179
      %v4244 = vpack.c.bf16 %v1925, %v1924
      %v4245 = vpack.c.bf16 %v1979, %v1978
      %s4246 = scalar_lea.vmem %s4, 12
      %v4247 = vld [vmem:[%s4246] sm:$0xf]
      %v4249 = vsel %vm672, %v4244, 0
      %v4252 = vsel %vm672, %v4245, 0
      %v4255 = vsel %vm2113, %v4247, 0
      %4257 = vmatprep.subr.bf16.mxu0 0
      %4258 = vmatpush1.bf16.msra.mxu0 %v4255
      %4259 = vmatprep.subr.bf16.mxu0 0
      %4260 = vmatpush1.bf16.msra.mxu0 0
      %4261 = vmatprep.subr.bf16.mxu0 0
      %4262 = vmatpush1.bf16.msra.mxu0 0
      %4263 = vmatprep.subr.bf16.mxu0 0
      %4264 = vmatpush1.bf16.msra.mxu0 0
      %4265 = vmatprep.subr.bf16.mxu0 0
      %4266 = vmatpush1.bf16.msra.mxu0 0
      %4267 = vmatprep.subr.bf16.mxu0 0
      %4268 = vmatpush1.bf16.msra.mxu0 0
      %4269 = vmatprep.subr.bf16.mxu0 0
      %4270 = vmatpush1.bf16.msra.mxu0 0
      %4271 = vmatprep.subr.bf16.mxu0 0
      %4272 = vmatpush1.bf16.msra.mxu0 0
      %4273 = vmatprep.subr.bf16.mxu0 0
      %4274 = vmatpush1.bf16.msra.mxu0 0
      %4275 = vmatprep.subr.bf16.mxu0 0
      %4276 = vmatpush1.bf16.msra.mxu0 0
      %4277 = vmatprep.subr.bf16.mxu0 0
      %4278 = vmatpush1.bf16.msra.mxu0 0
      %4279 = vmatprep.subr.bf16.mxu0 0
      %4280 = vmatpush1.bf16.msra.mxu0 0
      %4281 = vmatprep.subr.bf16.mxu0 0
      %4282 = vmatpush1.bf16.msra.mxu0 0
      %4283 = vmatprep.subr.bf16.mxu0 0
      %4284 = vmatpush1.bf16.msra.mxu0 0
      %4285 = vmatprep.subr.bf16.mxu0 0
      %4286 = vmatpush1.bf16.msra.mxu0 0
      %4287 = vmatprep.subr.bf16.mxu0 0
      %4288 = vmatpush1.bf16.msra.mxu0 0
      %4289 = vmatprep.mubr.bf16.mxu0 0
      %4290 = vmatmul.mubr.bf16.gmra.mrb[0].mxu0 %v2021
      %v4291 = vpop.f32.mrb[0].mxu0
      %v4292 = vadd.f32 0.0, %v4291
      %v4293 = vpop.f32.mrb[0].mxu0
      %v4294 = vpop.f32.mrb[0].mxu0
      %v4295 = vadd.f32 0.0, %v4294
      %v4296 = vpop.f32.mrb[0].mxu0
      %4297 = vmatprep.mubr.bf16.mxu0 0
      %4298 = vmatmul.mubr.bf16.gmra.mrb[0].mxu0 %v2024
      %v4299 = vpop.f32.mrb[0].mxu0
      %v4300 = vadd.f32 0.0, %v4299
      %v4301 = vpop.f32.mrb[0].mxu0
      %v4302 = vpop.f32.mrb[0].mxu0
      %v4303 = vadd.f32 0.0, %v4302
      %v4304 = vpop.f32.mrb[0].mxu0
      %4305 = vmatprep.mubr.bf16.mxu0 0
      %4306 = vmatmul.mubr.bf16.gmra.mrb[0].mxu0 %v2027
      %v4307 = vpop.f32.mrb[0].mxu0
      %v4308 = vadd.f32 0.0, %v4307
      %v4309 = vpop.f32.mrb[0].mxu0
      %v4310 = vpop.f32.mrb[0].mxu0
      %v4311 = vadd.f32 0.0, %v4310
      %v4312 = vpop.f32.mrb[0].mxu0
      %4313 = vmatprep.mubr.bf16.mxu0 0
      %4314 = vmatmul.mubr.bf16.gmra.mrb[0].mxu0 %v2030
      %v4315 = vpop.f32.mrb[0].mxu0
      %v4316 = vadd.f32 0.0, %v4315
      %v4317 = vpop.f32.mrb[0].mxu0
      %v4318 = vpop.f32.mrb[0].mxu0
      %v4319 = vadd.f32 0.0, %v4318
      %v4320 = vpop.f32.mrb[0].mxu0
      %4321 = vmatprep.mubr.bf16.mxu0 0
      %4322 = vmatmul.mubr.bf16.gmra.mrb[0].mxu0 %v2033
      %v4323 = vpop.f32.mrb[0].mxu0
      %v4324 = vadd.f32 0.0, %v4323
      %v4325 = vpop.f32.mrb[0].mxu0
      %v4326 = vpop.f32.mrb[0].mxu0
      %v4327 = vadd.f32 0.0, %v4326
      %v4328 = vpop.f32.mrb[0].mxu0
      %4329 = vmatprep.mubr.bf16.mxu0 0
      %4330 = vmatmul.mubr.bf16.gmra.mrb[0].mxu0 %v2036
      %v4331 = vpop.f32.mrb[0].mxu0
      %v4332 = vadd.f32 0.0, %v4331
      %v4333 = vpop.f32.mrb[0].mxu0
      %v4334 = vpop.f32.mrb[0].mxu0
      %v4335 = vadd.f32 0.0, %v4334
      %v4336 = vpop.f32.mrb[0].mxu0
      %4337 = vmatprep.mubr.bf16.mxu0 0
      %4338 = vmatmul.mubr.bf16.gmra.mrb[0].mxu0 %v2039
      %v4339 = vpop.f32.mrb[0].mxu0
      %v4340 = vadd.f32 0.0, %v4339
      %v4341 = vpop.f32.mrb[0].mxu0
      %v4342 = vpop.f32.mrb[0].mxu0
      %v4343 = vadd.f32 0.0, %v4342
      %v4344 = vpop.f32.mrb[0].mxu0
      %4345 = vmatprep.mubr.bf16.mxu0 0
      %4346 = vmatmul.mubr.bf16.gmra.mrb[0].mxu0 %v2042
      %v4347 = vpop.f32.mrb[0].mxu0
      %v4348 = vadd.f32 0.0, %v4347
      %v4349 = vpop.f32.mrb[0].mxu0
      %v4350 = vpop.f32.mrb[0].mxu0
      %v4351 = vadd.f32 0.0, %v4350
      %v4352 = vpop.f32.mrb[0].mxu0
      %4353 = vmatprep.mubr.bf16.mxu0 0
      %4354 = vmatmul.mubr.bf16.gmra.mrb[0].mxu0 %v2045
      %v4355 = vpop.f32.mrb[0].mxu0
      %v4356 = vadd.f32 0.0, %v4355
      %v4357 = vpop.f32.mrb[0].mxu0
      %v4358 = vpop.f32.mrb[0].mxu0
      %v4359 = vadd.f32 0.0, %v4358
      %v4360 = vpop.f32.mrb[0].mxu0
      %4361 = vmatprep.mubr.bf16.mxu0 0
      %4362 = vmatmul.mubr.bf16.gmra.mrb[0].mxu0 %v2048
      %v4363 = vpop.f32.mrb[0].mxu0
      %v4364 = vadd.f32 0.0, %v4363
      %v4365 = vpop.f32.mrb[0].mxu0
      %v4366 = vpop.f32.mrb[0].mxu0
      %v4367 = vadd.f32 0.0, %v4366
      %v4368 = vpop.f32.mrb[0].mxu0
      %4369 = vmatprep.mubr.bf16.mxu0 0
      %4370 = vmatmul.mubr.bf16.gmra.mrb[0].mxu0 %v2051
      %v4371 = vpop.f32.mrb[0].mxu0
      %v4372 = vadd.f32 0.0, %v4371
      %v4373 = vpop.f32.mrb[0].mxu0
      %v4374 = vpop.f32.mrb[0].mxu0
      %v4375 = vadd.f32 0.0, %v4374
      %v4376 = vpop.f32.mrb[0].mxu0
      %4377 = vmatprep.mubr.bf16.mxu0 0
      %4378 = vmatmul.mubr.bf16.gmra.mrb[0].mxu0 %v2054
      %v4379 = vpop.f32.mrb[0].mxu0
      %v4380 = vadd.f32 0.0, %v4379
      %v4381 = vpop.f32.mrb[0].mxu0
      %v4382 = vpop.f32.mrb[0].mxu0
      %v4383 = vadd.f32 0.0, %v4382
      %v4384 = vpop.f32.mrb[0].mxu0
      %4385 = vmatprep.mubr.bf16.mxu0 0
      %4386 = vmatmul.mubr.bf16.gmra.mrb[0].mxu0 %v2057
      %v4387 = vpop.f32.mrb[0].mxu0
      %v4388 = vadd.f32 0.0, %v4387
      %v4389 = vpop.f32.mrb[0].mxu0
      %v4390 = vpop.f32.mrb[0].mxu0
      %v4391 = vadd.f32 0.0, %v4390
      %v4392 = vpop.f32.mrb[0].mxu0
      %4393 = vmatprep.mubr.bf16.mxu0 0
      %4394 = vmatmul.mubr.bf16.gmra.mrb[0].mxu0 %v2060
      %v4395 = vpop.f32.mrb[0].mxu0
      %v4396 = vadd.f32 0.0, %v4395
      %v4397 = vpop.f32.mrb[0].mxu0
      %v4398 = vpop.f32.mrb[0].mxu0
      %v4399 = vadd.f32 0.0, %v4398
      %v4400 = vpop.f32.mrb[0].mxu0
      %4401 = vmatprep.mubr.bf16.mxu0 0
      %4402 = vmatmul.mubr.bf16.gmra.mrb[0].mxu0 %v2063
      %v4403 = vpop.f32.mrb[0].mxu0
      %v4404 = vadd.f32 0.0, %v4403
      %v4405 = vpop.f32.mrb[0].mxu0
      %v4406 = vpop.f32.mrb[0].mxu0
      %v4407 = vadd.f32 0.0, %v4406
      %v4408 = vpop.f32.mrb[0].mxu0
      %4409 = vmatprep.mubr.bf16.mxu0 0
      %4410 = vmatmul.mubr.bf16.gmra.mrb[0].mxu0 %v4249
      %v4411 = vpop.f32.mrb[0].mxu0
      %v4412 = vadd.f32 0.0, %v4411
      %v4413 = vpop.f32.mrb[0].mxu0
      %v4414 = vpop.f32.mrb[0].mxu0
      %v4415 = vadd.f32 0.0, %v4414
      %v4416 = vpop.f32.mrb[0].mxu0
      %4417 = vmatprep.mubr.bf16.mxu0 0
      %4418 = vmatmul.mubr.bf16.gmra.mrb[0].mxu0 %v2069
      %v4419 = vpop.f32.mrb[0].mxu0
      %v4420 = vadd.f32 0.0, %v4419
      %v4421 = vpop.f32.mrb[0].mxu0
      %v4422 = vpop.f32.mrb[0].mxu0
      %v4423 = vadd.f32 0.0, %v4422
      %v4424 = vpop.f32.mrb[0].mxu0
      %4425 = vmatprep.mubr.bf16.mxu0 0
      %4426 = vmatmul.mubr.bf16.gmra.mrb[0].mxu0 %v2072
      %v4427 = vpop.f32.mrb[0].mxu0
      %v4428 = vadd.f32 0.0, %v4427
      %v4429 = vpop.f32.mrb[0].mxu0
      %v4430 = vpop.f32.mrb[0].mxu0
      %v4431 = vadd.f32 0.0, %v4430
      %v4432 = vpop.f32.mrb[0].mxu0
      %4433 = vmatprep.mubr.bf16.mxu0 0
      %4434 = vmatmul.mubr.bf16.gmra.mrb[0].mxu0 %v2075
      %v4435 = vpop.f32.mrb[0].mxu0
      %v4436 = vadd.f32 0.0, %v4435
      %v4437 = vpop.f32.mrb[0].mxu0
      %v4438 = vpop.f32.mrb[0].mxu0
      %v4439 = vadd.f32 0.0, %v4438
      %v4440 = vpop.f32.mrb[0].mxu0
      %4441 = vmatprep.mubr.bf16.mxu0 0
      %4442 = vmatmul.mubr.bf16.gmra.mrb[0].mxu0 %v2078
      %v4443 = vpop.f32.mrb[0].mxu0
      %v4444 = vadd.f32 0.0, %v4443
      %v4445 = vpop.f32.mrb[0].mxu0
      %v4446 = vpop.f32.mrb[0].mxu0
      %v4447 = vadd.f32 0.0, %v4446
      %v4448 = vpop.f32.mrb[0].mxu0
      %4449 = vmatprep.mubr.bf16.mxu0 0
      %4450 = vmatmul.mubr.bf16.gmra.mrb[0].mxu0 %v2081
      %v4451 = vpop.f32.mrb[0].mxu0
      %v4452 = vadd.f32 0.0, %v4451
      %v4453 = vpop.f32.mrb[0].mxu0
      %v4454 = vpop.f32.mrb[0].mxu0
      %v4455 = vadd.f32 0.0, %v4454
      %v4456 = vpop.f32.mrb[0].mxu0
      %4457 = vmatprep.mubr.bf16.mxu0 0
      %4458 = vmatmul.mubr.bf16.gmra.mrb[0].mxu0 %v2084
      %v4459 = vpop.f32.mrb[0].mxu0
      %v4460 = vadd.f32 0.0, %v4459
      %v4461 = vpop.f32.mrb[0].mxu0
      %v4462 = vpop.f32.mrb[0].mxu0
      %v4463 = vadd.f32 0.0, %v4462
      %v4464 = vpop.f32.mrb[0].mxu0
      %4465 = vmatprep.mubr.bf16.mxu0 0
      %4466 = vmatmul.mubr.bf16.gmra.mrb[0].mxu0 %v2087
      %v4467 = vpop.f32.mrb[0].mxu0
      %v4468 = vadd.f32 0.0, %v4467
      %v4469 = vpop.f32.mrb[0].mxu0
      %v4470 = vpop.f32.mrb[0].mxu0
      %v4471 = vadd.f32 0.0, %v4470
      %v4472 = vpop.f32.mrb[0].mxu0
      %4473 = vmatprep.mubr.bf16.mxu0 0
      %4474 = vmatmul.mubr.bf16.gmra.mrb[0].mxu0 %v2090
      %v4475 = vpop.f32.mrb[0].mxu0
      %v4476 = vadd.f32 0.0, %v4475
      %v4477 = vpop.f32.mrb[0].mxu0
      %v4478 = vpop.f32.mrb[0].mxu0
      %v4479 = vadd.f32 0.0, %v4478
      %v4480 = vpop.f32.mrb[0].mxu0
      %4481 = vmatprep.mubr.bf16.mxu0 0
      %4482 = vmatmul.mubr.bf16.gmra.mrb[0].mxu0 %v2093
      %v4483 = vpop.f32.mrb[0].mxu0
      %v4484 = vadd.f32 0.0, %v4483
      %v4485 = vpop.f32.mrb[0].mxu0
      %v4486 = vpop.f32.mrb[0].mxu0
      %v4487 = vadd.f32 0.0, %v4486
      %v4488 = vpop.f32.mrb[0].mxu0
      %4489 = vmatprep.mubr.bf16.mxu0 0
      %4490 = vmatmul.mubr.bf16.gmra.mrb[0].mxu0 %v2096
      %v4491 = vpop.f32.mrb[0].mxu0
      %v4492 = vadd.f32 0.0, %v4491
      %v4493 = vpop.f32.mrb[0].mxu0
      %v4494 = vpop.f32.mrb[0].mxu0
      %v4495 = vadd.f32 0.0, %v4494
      %v4496 = vpop.f32.mrb[0].mxu0
      %4497 = vmatprep.mubr.bf16.mxu0 0
      %4498 = vmatmul.mubr.bf16.gmra.mrb[0].mxu0 %v2099
      %v4499 = vpop.f32.mrb[0].mxu0
      %v4500 = vadd.f32 0.0, %v4499
      %v4501 = vpop.f32.mrb[0].mxu0
      %v4502 = vpop.f32.mrb[0].mxu0
      %v4503 = vadd.f32 0.0, %v4502
      %v4504 = vpop.f32.mrb[0].mxu0
      %4505 = vmatprep.mubr.bf16.mxu0 0
      %4506 = vmatmul.mubr.bf16.gmra.mrb[0].mxu0 %v2102
      %v4507 = vpop.f32.mrb[0].mxu0
      %v4508 = vadd.f32 0.0, %v4507
      %v4509 = vpop.f32.mrb[0].mxu0
      %v4510 = vpop.f32.mrb[0].mxu0
      %v4511 = vadd.f32 0.0, %v4510
      %v4512 = vpop.f32.mrb[0].mxu0
      %4513 = vmatprep.mubr.bf16.mxu0 0
      %4514 = vmatmul.mubr.bf16.gmra.mrb[0].mxu0 %v2105
      %v4515 = vpop.f32.mrb[0].mxu0
      %v4516 = vadd.f32 0.0, %v4515
      %v4517 = vpop.f32.mrb[0].mxu0
      %v4518 = vpop.f32.mrb[0].mxu0
      %v4519 = vadd.f32 0.0, %v4518
      %v4520 = vpop.f32.mrb[0].mxu0
      %4521 = vmatprep.mubr.bf16.mxu0 0
      %4522 = vmatmul.mubr.bf16.gmra.mrb[0].mxu0 %v2108
      %v4523 = vpop.f32.mrb[0].mxu0
      %v4524 = vadd.f32 0.0, %v4523
      %v4525 = vpop.f32.mrb[0].mxu0
      %v4526 = vpop.f32.mrb[0].mxu0
      %v4527 = vadd.f32 0.0, %v4526
      %v4528 = vpop.f32.mrb[0].mxu0
      %4529 = vmatprep.mubr.bf16.mxu0 0
      %4530 = vmatmul.mubr.bf16.gmra.mrb[0].mxu0 %v2111
      %v4531 = vpop.f32.mrb[0].mxu0
      %v4532 = vadd.f32 0.0, %v4531
      %v4533 = vpop.f32.mrb[0].mxu0
      %v4534 = vpop.f32.mrb[0].mxu0
      %v4535 = vadd.f32 0.0, %v4534
      %v4536 = vpop.f32.mrb[0].mxu0
      %4537 = vmatprep.mubr.bf16.mxu0 0
      %4538 = vmatmul.mubr.bf16.gmra.mrb[0].mxu0 %v4252
      %v4539 = vpop.f32.mrb[0].mxu0
      %v4540 = vadd.f32 0.0, %v4539
      %v4541 = vpop.f32.mrb[0].mxu0
      %v4542 = vpop.f32.mrb[0].mxu0
      %v4543 = vadd.f32 0.0, %v4542
      %v4544 = vpop.f32.mrb[0].mxu0
      %4545 = vdwg.mxu0
      %v4546 = vld [vmem:[#allocation2] sm:$0xff]
      %v4547 = vld [vmem:[#allocation2 + $0x8] sm:$0xff]
      %v4548 = vld [vmem:[#allocation2 + $0x10] sm:$0xff]
      %v4549 = vld [vmem:[#allocation2 + $0x18] sm:$0xff]
      %v4550 = vld [vmem:[#allocation2 + $0x20] sm:$0xff]
      %v4551 = vld [vmem:[#allocation2 + $0x28] sm:$0xff]
      %v4552 = vld [vmem:[#allocation2 + $0x30] sm:$0xff]
      %v4553 = vld [vmem:[#allocation2 + $0x38] sm:$0xff]
      %v4554 = vld [vmem:[#allocation2 + $0x40] sm:$0xff]
      %v4555 = vld [vmem:[#allocation2 + $0x48] sm:$0xff]
      %v4556 = vld [vmem:[#allocation2 + $0x50] sm:$0xff]
      %v4557 = vld [vmem:[#allocation2 + $0x58] sm:$0xff]
      %v4558 = vld [vmem:[#allocation2 + $0x60] sm:$0xff]
      %v4559 = vld [vmem:[#allocation2 + $0x68] sm:$0xff]
      %v4560 = vld [vmem:[#allocation2 + $0x70] sm:$0xff]
      %v4561 = vld [vmem:[#allocation2 + $0x78] sm:$0xff]
      %v4562 = vld [vmem:[#allocation2 + $0x80] sm:$0xff]
      %v4563 = vld [vmem:[#allocation2 + $0x88] sm:$0xff]
      %v4564 = vld [vmem:[#allocation2 + $0x90] sm:$0xff]
      %v4565 = vld [vmem:[#allocation2 + $0x98] sm:$0xff]
      %v4566 = vld [vmem:[#allocation2 + $0xa0] sm:$0xff]
      %v4567 = vld [vmem:[#allocation2 + $0xa8] sm:$0xff]
      %v4568 = vld [vmem:[#allocation2 + $0xb0] sm:$0xff]
      %v4569 = vld [vmem:[#allocation2 + $0xb8] sm:$0xff]
      %v4570 = vld [vmem:[#allocation2 + $0xc0] sm:$0xff]
      %v4571 = vld [vmem:[#allocation2 + $0xc8] sm:$0xff]
      %v4572 = vld [vmem:[#allocation2 + $0xd0] sm:$0xff]
      %v4573 = vld [vmem:[#allocation2 + $0xd8] sm:$0xff]
      %v4574 = vld [vmem:[#allocation2 + $0xe0] sm:$0xff]
      %v4575 = vld [vmem:[#allocation2 + $0xe8] sm:$0xff]
      %v4576 = vld [vmem:[#allocation2 + $0xf0] sm:$0xff]
      %v4577 = vld [vmem:[#allocation2 + $0xf8] sm:$0xff]
      %v4578 = vld [vmem:[#allocation2 + $0x100] sm:$0xff]
      %v4579 = vld [vmem:[#allocation2 + $0x108] sm:$0xff]
      %v4580 = vld [vmem:[#allocation2 + $0x110] sm:$0xff]
      %v4581 = vld [vmem:[#allocation2 + $0x118] sm:$0xff]
      %v4582 = vld [vmem:[#allocation2 + $0x120] sm:$0xff]
      %v4583 = vld [vmem:[#allocation2 + $0x128] sm:$0xff]
      %v4584 = vld [vmem:[#allocation2 + $0x130] sm:$0xff]
      %v4585 = vld [vmem:[#allocation2 + $0x138] sm:$0xff]
      %v4586 = vld [vmem:[#allocation2 + $0x140] sm:$0xff]
      %v4587 = vld [vmem:[#allocation2 + $0x148] sm:$0xff]
      %v4588 = vld [vmem:[#allocation2 + $0x150] sm:$0xff]
      %v4589 = vld [vmem:[#allocation2 + $0x158] sm:$0xff]
      %v4590 = vld [vmem:[#allocation2 + $0x160] sm:$0xff]
      %v4591 = vld [vmem:[#allocation2 + $0x168] sm:$0xff]
      %v4592 = vld [vmem:[#allocation2 + $0x170] sm:$0xff]
      %v4593 = vld [vmem:[#allocation2 + $0x178] sm:$0xff]
      %v4594 = vld [vmem:[#allocation2 + $0x180] sm:$0xff]
      %v4595 = vld [vmem:[#allocation2 + $0x188] sm:$0xff]
      %v4596 = vld [vmem:[#allocation2 + $0x190] sm:$0xff]
      %v4597 = vld [vmem:[#allocation2 + $0x198] sm:$0xff]
      %v4598 = vld [vmem:[#allocation2 + $0x1a0] sm:$0xff]
      %v4599 = vld [vmem:[#allocation2 + $0x1a8] sm:$0xff]
      %v4600 = vld [vmem:[#allocation2 + $0x1b0] sm:$0xff]
      %v4601 = vld [vmem:[#allocation2 + $0x1b8] sm:$0xff]
      %v4602 = vld [vmem:[#allocation2 + $0x1c0] sm:$0xff]
      %v4603 = vld [vmem:[#allocation2 + $0x1c8] sm:$0xff]
      %v4604 = vld [vmem:[#allocation2 + $0x1d0] sm:$0xff]
      %v4605 = vld [vmem:[#allocation2 + $0x1d8] sm:$0xff]
      %v4606 = vld [vmem:[#allocation2 + $0x1e0] sm:$0xff]
      %v4607 = vld [vmem:[#allocation2 + $0x1e8] sm:$0xff]
      %v4608 = vld [vmem:[#allocation2 + $0x1f0] sm:$0xff]
      %v4609 = vld [vmem:[#allocation2 + $0x1f8] sm:$0xff]
      %v4610 = vadd.f32 %v4546, %v4292
      %v4611 = vadd.f32 %v4547, %v4295
      %v4612 = vadd.f32 %v4548, %v4300
      %v4613 = vadd.f32 %v4549, %v4303
      %v4614 = vadd.f32 %v4550, %v4308
      %v4615 = vadd.f32 %v4551, %v4311
      %v4616 = vadd.f32 %v4552, %v4316
      %v4617 = vadd.f32 %v4553, %v4319
      %v4618 = vadd.f32 %v4554, %v4324
      %v4619 = vadd.f32 %v4555, %v4327
      %v4620 = vadd.f32 %v4556, %v4332
      %v4621 = vadd.f32 %v4557, %v4335
      %v4622 = vadd.f32 %v4558, %v4340
      %v4623 = vadd.f32 %v4559, %v4343
      %v4624 = vadd.f32 %v4560, %v4348
      %v4625 = vadd.f32 %v4561, %v4351
      %v4626 = vadd.f32 %v4562, %v4356
      %v4627 = vadd.f32 %v4563, %v4359
      %v4628 = vadd.f32 %v4564, %v4364
      %v4629 = vadd.f32 %v4565, %v4367
      %v4630 = vadd.f32 %v4566, %v4372
      %v4631 = vadd.f32 %v4567, %v4375
      %v4632 = vadd.f32 %v4568, %v4380
      %v4633 = vadd.f32 %v4569, %v4383
      %v4634 = vadd.f32 %v4570, %v4388
      %v4635 = vadd.f32 %v4571, %v4391
      %v4636 = vadd.f32 %v4572, %v4396
      %v4637 = vadd.f32 %v4573, %v4399
      %v4638 = vadd.f32 %v4574, %v4404
      %v4639 = vadd.f32 %v4575, %v4407
      %v4640 = vadd.f32 %v4576, %v4412
      %v4641 = vadd.f32 %v4577, %v4415
      %v4642 = vadd.f32 %v4578, %v4420
      %v4643 = vadd.f32 %v4579, %v4423
      %v4644 = vadd.f32 %v4580, %v4428
      %v4645 = vadd.f32 %v4581, %v4431
      %v4646 = vadd.f32 %v4582, %v4436
      %v4647 = vadd.f32 %v4583, %v4439
      %v4648 = vadd.f32 %v4584, %v4444
      %v4649 = vadd.f32 %v4585, %v4447
      %v4650 = vadd.f32 %v4586, %v4452
      %v4651 = vadd.f32 %v4587, %v4455
      %v4652 = vadd.f32 %v4588, %v4460
      %v4653 = vadd.f32 %v4589, %v4463
      %v4654 = vadd.f32 %v4590, %v4468
      %v4655 = vadd.f32 %v4591, %v4471
      %v4656 = vadd.f32 %v4592, %v4476
      %v4657 = vadd.f32 %v4593, %v4479
      %v4658 = vadd.f32 %v4594, %v4484
      %v4659 = vadd.f32 %v4595, %v4487
      %v4660 = vadd.f32 %v4596, %v4492
      %v4661 = vadd.f32 %v4597, %v4495
      %v4662 = vadd.f32 %v4598, %v4500
      %v4663 = vadd.f32 %v4599, %v4503
      %v4664 = vadd.f32 %v4600, %v4508
      %v4665 = vadd.f32 %v4601, %v4511
      %v4666 = vadd.f32 %v4602, %v4516
      %v4667 = vadd.f32 %v4603, %v4519
      %v4668 = vadd.f32 %v4604, %v4524
      %v4669 = vadd.f32 %v4605, %v4527
      %v4670 = vadd.f32 %v4606, %v4532
      %v4671 = vadd.f32 %v4607, %v4535
      %v4672 = vadd.f32 %v4608, %v4540
      %v4673 = vadd.f32 %v4609, %v4543
      %4674 = vst.msk [vmem:[#allocation2] sm:$0xff] %vm672, %v4610
      %4675 = vst.msk [vmem:[#allocation2 + $0x8] sm:$0xff] %vm672, %v4611
      %4676 = vst.msk [vmem:[#allocation2 + $0x10] sm:$0xff] %vm672, %v4612
      %4677 = vst.msk [vmem:[#allocation2 + $0x18] sm:$0xff] %vm672, %v4613
      %4678 = vst.msk [vmem:[#allocation2 + $0x20] sm:$0xff] %vm672, %v4614
      %4679 = vst.msk [vmem:[#allocation2 + $0x28] sm:$0xff] %vm672, %v4615
      %4680 = vst.msk [vmem:[#allocation2 + $0x30] sm:$0xff] %vm672, %v4616
      %4681 = vst.msk [vmem:[#allocation2 + $0x38] sm:$0xff] %vm672, %v4617
      %4682 = vst.msk [vmem:[#allocation2 + $0x40] sm:$0xff] %vm672, %v4618
      %4683 = vst.msk [vmem:[#allocation2 + $0x48] sm:$0xff] %vm672, %v4619
      %4684 = vst.msk [vmem:[#allocation2 + $0x50] sm:$0xff] %vm672, %v4620
      %4685 = vst.msk [vmem:[#allocation2 + $0x58] sm:$0xff] %vm672, %v4621
      %4686 = vst.msk [vmem:[#allocation2 + $0x60] sm:$0xff] %vm672, %v4622
      %4687 = vst.msk [vmem:[#allocation2 + $0x68] sm:$0xff] %vm672, %v4623
      %4688 = vst.msk [vmem:[#allocation2 + $0x70] sm:$0xff] %vm672, %v4624
      %4689 = vst.msk [vmem:[#allocation2 + $0x78] sm:$0xff] %vm672, %v4625
      %4690 = vst.msk [vmem:[#allocation2 + $0x80] sm:$0xff] %vm672, %v4626
      %4691 = vst.msk [vmem:[#allocation2 + $0x88] sm:$0xff] %vm672, %v4627
      %4692 = vst.msk [vmem:[#allocation2 + $0x90] sm:$0xff] %vm672, %v4628
      %4693 = vst.msk [vmem:[#allocation2 + $0x98] sm:$0xff] %vm672, %v4629
      %4694 = vst.msk [vmem:[#allocation2 + $0xa0] sm:$0xff] %vm672, %v4630
      %4695 = vst.msk [vmem:[#allocation2 + $0xa8] sm:$0xff] %vm672, %v4631
      %4696 = vst.msk [vmem:[#allocation2 + $0xb0] sm:$0xff] %vm672, %v4632
      %4697 = vst.msk [vmem:[#allocation2 + $0xb8] sm:$0xff] %vm672, %v4633
      %4698 = vst.msk [vmem:[#allocation2 + $0xc0] sm:$0xff] %vm672, %v4634
      %4699 = vst.msk [vmem:[#allocation2 + $0xc8] sm:$0xff] %vm672, %v4635
      %4700 = vst.msk [vmem:[#allocation2 + $0xd0] sm:$0xff] %vm672, %v4636
      %4701 = vst.msk [vmem:[#allocation2 + $0xd8] sm:$0xff] %vm672, %v4637
      %4702 = vst.msk [vmem:[#allocation2 + $0xe0] sm:$0xff] %vm672, %v4638
      %4703 = vst.msk [vmem:[#allocation2 + $0xe8] sm:$0xff] %vm672, %v4639
      %4704 = vst.msk [vmem:[#allocation2 + $0xf0] sm:$0xff] %vm672, %v4640
      %4705 = vst.msk [vmem:[#allocation2 + $0xf8] sm:$0xff] %vm672, %v4641
      %4706 = vst.msk [vmem:[#allocation2 + $0x100] sm:$0xff] %vm672, %v4642
      %4707 = vst.msk [vmem:[#allocation2 + $0x108] sm:$0xff] %vm672, %v4643
      %4708 = vst.msk [vmem:[#allocation2 + $0x110] sm:$0xff] %vm672, %v4644
      %4709 = vst.msk [vmem:[#allocation2 + $0x118] sm:$0xff] %vm672, %v4645
      %4710 = vst.msk [vmem:[#allocation2 + $0x120] sm:$0xff] %vm672, %v4646
      %4711 = vst.msk [vmem:[#allocation2 + $0x128] sm:$0xff] %vm672, %v4647
      %4712 = vst.msk [vmem:[#allocation2 + $0x130] sm:$0xff] %vm672, %v4648
      %4713 = vst.msk [vmem:[#allocation2 + $0x138] sm:$0xff] %vm672, %v4649
      %4714 = vst.msk [vmem:[#allocation2 + $0x140] sm:$0xff] %vm672, %v4650
      %4715 = vst.msk [vmem:[#allocation2 + $0x148] sm:$0xff] %vm672, %v4651
      %4716 = vst.msk [vmem:[#allocation2 + $0x150] sm:$0xff] %vm672, %v4652
      %4717 = vst.msk [vmem:[#allocation2 + $0x158] sm:$0xff] %vm672, %v4653
      %4718 = vst.msk [vmem:[#allocation2 + $0x160] sm:$0xff] %vm672, %v4654
      %4719 = vst.msk [vmem:[#allocation2 + $0x168] sm:$0xff] %vm672, %v4655
      %4720 = vst.msk [vmem:[#allocation2 + $0x170] sm:$0xff] %vm672, %v4656
      %4721 = vst.msk [vmem:[#allocation2 + $0x178] sm:$0xff] %vm672, %v4657
      %4722 = vst.msk [vmem:[#allocation2 + $0x180] sm:$0xff] %vm672, %v4658
      %4723 = vst.msk [vmem:[#allocation2 + $0x188] sm:$0xff] %vm672, %v4659
      %4724 = vst.msk [vmem:[#allocation2 + $0x190] sm:$0xff] %vm672, %v4660
      %4725 = vst.msk [vmem:[#allocation2 + $0x198] sm:$0xff] %vm672, %v4661
      %4726 = vst.msk [vmem:[#allocation2 + $0x1a0] sm:$0xff] %vm672, %v4662
      %4727 = vst.msk [vmem:[#allocation2 + $0x1a8] sm:$0xff] %vm672, %v4663
      %4728 = vst.msk [vmem:[#allocation2 + $0x1b0] sm:$0xff] %vm672, %v4664
      %4729 = vst.msk [vmem:[#allocation2 + $0x1b8] sm:$0xff] %vm672, %v4665
      %4730 = vst.msk [vmem:[#allocation2 + $0x1c0] sm:$0xff] %vm672, %v4666
      %4731 = vst.msk [vmem:[#allocation2 + $0x1c8] sm:$0xff] %vm672, %v4667
      %4732 = vst.msk [vmem:[#allocation2 + $0x1d0] sm:$0xff] %vm672, %v4668
      %4733 = vst.msk [vmem:[#allocation2 + $0x1d8] sm:$0xff] %vm672, %v4669
      %4734 = vst.msk [vmem:[#allocation2 + $0x1e0] sm:$0xff] %vm672, %v4670
      %4735 = vst.msk [vmem:[#allocation2 + $0x1e8] sm:$0xff] %vm672, %v4671
      %4736 = vst.msk [vmem:[#allocation2 + $0x1f0] sm:$0xff] %vm672, %v4672
      %4737 = vst.msk [vmem:[#allocation2 + $0x1f8] sm:$0xff] %vm672, %v4673
      %v4744 = vrot.slane %v1924, 1
      %v4745 = vrot.slane %v1925, 1
      %v4746 = vsel %vm2566, %v4744, %v4745
      %v4747 = vrot.slane %v1926, 1
      %v4748 = vsel %vm2566, %v4745, %v4747
      %v4749 = vrot.slane %v1978, 1
      %v4750 = vrot.slane %v1979, 1
      %v4751 = vsel %vm2566, %v4749, %v4750
      %v4752 = vrot.slane %v1980, 1
      %v4753 = vsel %vm2566, %v4750, %v4752
      %v4758 = vpack.c.bf16 %v4748, %v4746
      %v4759 = vpack.c.bf16 %v4753, %v4751
      %s4760 = scalar_lea.vmem %s4, 16
      %v4761 = vld [vmem:[%s4760] sm:$0xf]
      %v4763 = vsel %vm672, %v4758, 0
      %v4766 = vsel %vm672, %v4759, 0
      %v4769 = vsel %vm2113, %v4761, 0
      %4771 = vmatprep.subr.bf16.mxu0 0
      %4772 = vmatpush1.bf16.msra.mxu0 %v4769
      %4773 = vmatprep.subr.bf16.mxu0 0
      %4774 = vmatpush1.bf16.msra.mxu0 0
      %4775 = vmatprep.subr.bf16.mxu0 0
      %4776 = vmatpush1.bf16.msra.mxu0 0
      %4777 = vmatprep.subr.bf16.mxu0 0
      %4778 = vmatpush1.bf16.msra.mxu0 0
      %4779 = vmatprep.subr.bf16.mxu0 0
      %4780 = vmatpush1.bf16.msra.mxu0 0
      %4781 = vmatprep.subr.bf16.mxu0 0
      %4782 = vmatpush1.bf16.msra.mxu0 0
      %4783 = vmatprep.subr.bf16.mxu0 0
      %4784 = vmatpush1.bf16.msra.mxu0 0
      %4785 = vmatprep.subr.bf16.mxu0 0
      %4786 = vmatpush1.bf16.msra.mxu0 0
      %4787 = vmatprep.subr.bf16.mxu0 0
      %4788 = vmatpush1.bf16.msra.mxu0 0
      %4789 = vmatprep.subr.bf16.mxu0 0
      %4790 = vmatpush1.bf16.msra.mxu0 0
      %4791 = vmatprep.subr.bf16.mxu0 0
      %4792 = vmatpush1.bf16.msra.mxu0 0
      %4793 = vmatprep.subr.bf16.mxu0 0
      %4794 = vmatpush1.bf16.msra.mxu0 0
      %4795 = vmatprep.subr.bf16.mxu0 0
      %4796 = vmatpush1.bf16.msra.mxu0 0
      %4797 = vmatprep.subr.bf16.mxu0 0
      %4798 = vmatpush1.bf16.msra.mxu0 0
      %4799 = vmatprep.subr.bf16.mxu0 0
      %4800 = vmatpush1.bf16.msra.mxu0 0
      %4801 = vmatprep.subr.bf16.mxu0 0
      %4802 = vmatpush1.bf16.msra.mxu0 0
      %4803 = vmatprep.mubr.bf16.mxu0 0
      %4804 = vmatmul.mubr.bf16.gmra.mrb[0].mxu0 %v2829
      %v4805 = vpop.f32.mrb[0].mxu0
      %v4806 = vadd.f32 0.0, %v4805
      %v4807 = vpop.f32.mrb[0].mxu0
      %v4808 = vpop.f32.mrb[0].mxu0
      %v4809 = vadd.f32 0.0, %v4808
      %v4810 = vpop.f32.mrb[0].mxu0
      %4811 = vmatprep.mubr.bf16.mxu0 0
      %4812 = vmatmul.mubr.bf16.gmra.mrb[0].mxu0 %v2832
      %v4813 = vpop.f32.mrb[0].mxu0
      %v4814 = vadd.f32 0.0, %v4813
      %v4815 = vpop.f32.mrb[0].mxu0
      %v4816 = vpop.f32.mrb[0].mxu0
      %v4817 = vadd.f32 0.0, %v4816
      %v4818 = vpop.f32.mrb[0].mxu0
      %4819 = vmatprep.mubr.bf16.mxu0 0
      %4820 = vmatmul.mubr.bf16.gmra.mrb[0].mxu0 %v2835
      %v4821 = vpop.f32.mrb[0].mxu0
      %v4822 = vadd.f32 0.0, %v4821
      %v4823 = vpop.f32.mrb[0].mxu0
      %v4824 = vpop.f32.mrb[0].mxu0
      %v4825 = vadd.f32 0.0, %v4824
      %v4826 = vpop.f32.mrb[0].mxu0
      %4827 = vmatprep.mubr.bf16.mxu0 0
      %4828 = vmatmul.mubr.bf16.gmra.mrb[0].mxu0 %v2838
      %v4829 = vpop.f32.mrb[0].mxu0
      %v4830 = vadd.f32 0.0, %v4829
      %v4831 = vpop.f32.mrb[0].mxu0
      %v4832 = vpop.f32.mrb[0].mxu0
      %v4833 = vadd.f32 0.0, %v4832
      %v4834 = vpop.f32.mrb[0].mxu0
      %4835 = vmatprep.mubr.bf16.mxu0 0
      %4836 = vmatmul.mubr.bf16.gmra.mrb[0].mxu0 %v2841
      %v4837 = vpop.f32.mrb[0].mxu0
      %v4838 = vadd.f32 0.0, %v4837
      %v4839 = vpop.f32.mrb[0].mxu0
      %v4840 = vpop.f32.mrb[0].mxu0
      %v4841 = vadd.f32 0.0, %v4840
      %v4842 = vpop.f32.mrb[0].mxu0
      %4843 = vmatprep.mubr.bf16.mxu0 0
      %4844 = vmatmul.mubr.bf16.gmra.mrb[0].mxu0 %v2844
      %v4845 = vpop.f32.mrb[0].mxu0
      %v4846 = vadd.f32 0.0, %v4845
      %v4847 = vpop.f32.mrb[0].mxu0
      %v4848 = vpop.f32.mrb[0].mxu0
      %v4849 = vadd.f32 0.0, %v4848
      %v4850 = vpop.f32.mrb[0].mxu0
      %4851 = vmatprep.mubr.bf16.mxu0 0
      %4852 = vmatmul.mubr.bf16.gmra.mrb[0].mxu0 %v2847
      %v4853 = vpop.f32.mrb[0].mxu0
      %v4854 = vadd.f32 0.0, %v4853
      %v4855 = vpop.f32.mrb[0].mxu0
      %v4856 = vpop.f32.mrb[0].mxu0
      %v4857 = vadd.f32 0.0, %v4856
      %v4858 = vpop.f32.mrb[0].mxu0
      %4859 = vmatprep.mubr.bf16.mxu0 0
      %4860 = vmatmul.mubr.bf16.gmra.mrb[0].mxu0 %v2850
      %v4861 = vpop.f32.mrb[0].mxu0
      %v4862 = vadd.f32 0.0, %v4861
      %v4863 = vpop.f32.mrb[0].mxu0
      %v4864 = vpop.f32.mrb[0].mxu0
      %v4865 = vadd.f32 0.0, %v4864
      %v4866 = vpop.f32.mrb[0].mxu0
      %4867 = vmatprep.mubr.bf16.mxu0 0
      %4868 = vmatmul.mubr.bf16.gmra.mrb[0].mxu0 %v2853
      %v4869 = vpop.f32.mrb[0].mxu0
      %v4870 = vadd.f32 0.0, %v4869
      %v4871 = vpop.f32.mrb[0].mxu0
      %v4872 = vpop.f32.mrb[0].mxu0
      %v4873 = vadd.f32 0.0, %v4872
      %v4874 = vpop.f32.mrb[0].mxu0
      %4875 = vmatprep.mubr.bf16.mxu0 0
      %4876 = vmatmul.mubr.bf16.gmra.mrb[0].mxu0 %v2856
      %v4877 = vpop.f32.mrb[0].mxu0
      %v4878 = vadd.f32 0.0, %v4877
      %v4879 = vpop.f32.mrb[0].mxu0
      %v4880 = vpop.f32.mrb[0].mxu0
      %v4881 = vadd.f32 0.0, %v4880
      %v4882 = vpop.f32.mrb[0].mxu0
      %4883 = vmatprep.mubr.bf16.mxu0 0
      %4884 = vmatmul.mubr.bf16.gmra.mrb[0].mxu0 %v2859
      %v4885 = vpop.f32.mrb[0].mxu0
      %v4886 = vadd.f32 0.0, %v4885
      %v4887 = vpop.f32.mrb[0].mxu0
      %v4888 = vpop.f32.mrb[0].mxu0
      %v4889 = vadd.f32 0.0, %v4888
      %v4890 = vpop.f32.mrb[0].mxu0
      %4891 = vmatprep.mubr.bf16.mxu0 0
      %4892 = vmatmul.mubr.bf16.gmra.mrb[0].mxu0 %v2862
      %v4893 = vpop.f32.mrb[0].mxu0
      %v4894 = vadd.f32 0.0, %v4893
      %v4895 = vpop.f32.mrb[0].mxu0
      %v4896 = vpop.f32.mrb[0].mxu0
      %v4897 = vadd.f32 0.0, %v4896
      %v4898 = vpop.f32.mrb[0].mxu0
      %4899 = vmatprep.mubr.bf16.mxu0 0
      %4900 = vmatmul.mubr.bf16.gmra.mrb[0].mxu0 %v2865
      %v4901 = vpop.f32.mrb[0].mxu0
      %v4902 = vadd.f32 0.0, %v4901
      %v4903 = vpop.f32.mrb[0].mxu0
      %v4904 = vpop.f32.mrb[0].mxu0
      %v4905 = vadd.f32 0.0, %v4904
      %v4906 = vpop.f32.mrb[0].mxu0
      %4907 = vmatprep.mubr.bf16.mxu0 0
      %4908 = vmatmul.mubr.bf16.gmra.mrb[0].mxu0 %v2868
      %v4909 = vpop.f32.mrb[0].mxu0
      %v4910 = vadd.f32 0.0, %v4909
      %v4911 = vpop.f32.mrb[0].mxu0
      %v4912 = vpop.f32.mrb[0].mxu0
      %v4913 = vadd.f32 0.0, %v4912
      %v4914 = vpop.f32.mrb[0].mxu0
      %4915 = vmatprep.mubr.bf16.mxu0 0
      %4916 = vmatmul.mubr.bf16.gmra.mrb[0].mxu0 %v2871
      %v4917 = vpop.f32.mrb[0].mxu0
      %v4918 = vadd.f32 0.0, %v4917
      %v4919 = vpop.f32.mrb[0].mxu0
      %v4920 = vpop.f32.mrb[0].mxu0
      %v4921 = vadd.f32 0.0, %v4920
      %v4922 = vpop.f32.mrb[0].mxu0
      %4923 = vmatprep.mubr.bf16.mxu0 0
      %4924 = vmatmul.mubr.bf16.gmra.mrb[0].mxu0 %v4763
      %v4925 = vpop.f32.mrb[0].mxu0
      %v4926 = vadd.f32 0.0, %v4925
      %v4927 = vpop.f32.mrb[0].mxu0
      %v4928 = vpop.f32.mrb[0].mxu0
      %v4929 = vadd.f32 0.0, %v4928
      %v4930 = vpop.f32.mrb[0].mxu0
      %4931 = vmatprep.mubr.bf16.mxu0 0
      %4932 = vmatmul.mubr.bf16.gmra.mrb[0].mxu0 %v2877
      %v4933 = vpop.f32.mrb[0].mxu0
      %v4934 = vadd.f32 0.0, %v4933
      %v4935 = vpop.f32.mrb[0].mxu0
      %v4936 = vpop.f32.mrb[0].mxu0
      %v4937 = vadd.f32 0.0, %v4936
      %v4938 = vpop.f32.mrb[0].mxu0
      %4939 = vmatprep.mubr.bf16.mxu0 0
      %4940 = vmatmul.mubr.bf16.gmra.mrb[0].mxu0 %v2880
      %v4941 = vpop.f32.mrb[0].mxu0
      %v4942 = vadd.f32 0.0, %v4941
      %v4943 = vpop.f32.mrb[0].mxu0
      %v4944 = vpop.f32.mrb[0].mxu0
      %v4945 = vadd.f32 0.0, %v4944
      %v4946 = vpop.f32.mrb[0].mxu0
      %4947 = vmatprep.mubr.bf16.mxu0 0
      %4948 = vmatmul.mubr.bf16.gmra.mrb[0].mxu0 %v2883
      %v4949 = vpop.f32.mrb[0].mxu0
      %v4950 = vadd.f32 0.0, %v4949
      %v4951 = vpop.f32.mrb[0].mxu0
      %v4952 = vpop.f32.mrb[0].mxu0
      %v4953 = vadd.f32 0.0, %v4952
      %v4954 = vpop.f32.mrb[0].mxu0
      %4955 = vmatprep.mubr.bf16.mxu0 0
      %4956 = vmatmul.mubr.bf16.gmra.mrb[0].mxu0 %v2886
      %v4957 = vpop.f32.mrb[0].mxu0
      %v4958 = vadd.f32 0.0, %v4957
      %v4959 = vpop.f32.mrb[0].mxu0
      %v4960 = vpop.f32.mrb[0].mxu0
      %v4961 = vadd.f32 0.0, %v4960
      %v4962 = vpop.f32.mrb[0].mxu0
      %4963 = vmatprep.mubr.bf16.mxu0 0
      %4964 = vmatmul.mubr.bf16.gmra.mrb[0].mxu0 %v2889
      %v4965 = vpop.f32.mrb[0].mxu0
      %v4966 = vadd.f32 0.0, %v4965
      %v4967 = vpop.f32.mrb[0].mxu0
      %v4968 = vpop.f32.mrb[0].mxu0
      %v4969 = vadd.f32 0.0, %v4968
      %v4970 = vpop.f32.mrb[0].mxu0
      %4971 = vmatprep.mubr.bf16.mxu0 0
      %4972 = vmatmul.mubr.bf16.gmra.mrb[0].mxu0 %v2892
      %v4973 = vpop.f32.mrb[0].mxu0
      %v4974 = vadd.f32 0.0, %v4973
      %v4975 = vpop.f32.mrb[0].mxu0
      %v4976 = vpop.f32.mrb[0].mxu0
      %v4977 = vadd.f32 0.0, %v4976
      %v4978 = vpop.f32.mrb[0].mxu0
      %4979 = vmatprep.mubr.bf16.mxu0 0
      %4980 = vmatmul.mubr.bf16.gmra.mrb[0].mxu0 %v2895
      %v4981 = vpop.f32.mrb[0].mxu0
      %v4982 = vadd.f32 0.0, %v4981
      %v4983 = vpop.f32.mrb[0].mxu0
      %v4984 = vpop.f32.mrb[0].mxu0
      %v4985 = vadd.f32 0.0, %v4984
      %v4986 = vpop.f32.mrb[0].mxu0
      %4987 = vmatprep.mubr.bf16.mxu0 0
      %4988 = vmatmul.mubr.bf16.gmra.mrb[0].mxu0 %v2898
      %v4989 = vpop.f32.mrb[0].mxu0
      %v4990 = vadd.f32 0.0, %v4989
      %v4991 = vpop.f32.mrb[0].mxu0
      %v4992 = vpop.f32.mrb[0].mxu0
      %v4993 = vadd.f32 0.0, %v4992
      %v4994 = vpop.f32.mrb[0].mxu0
      %4995 = vmatprep.mubr.bf16.mxu0 0
      %4996 = vmatmul.mubr.bf16.gmra.mrb[0].mxu0 %v2901
      %v4997 = vpop.f32.mrb[0].mxu0
      %v4998 = vadd.f32 0.0, %v4997
      %v4999 = vpop.f32.mrb[0].mxu0
      %v5000 = vpop.f32.mrb[0].mxu0
      %v5001 = vadd.f32 0.0, %v5000
      %v5002 = vpop.f32.mrb[0].mxu0
      %5003 = vmatprep.mubr.bf16.mxu0 0
      %5004 = vmatmul.mubr.bf16.gmra.mrb[0].mxu0 %v2904
      %v5005 = vpop.f32.mrb[0].mxu0
      %v5006 = vadd.f32 0.0, %v5005
      %v5007 = vpop.f32.mrb[0].mxu0
      %v5008 = vpop.f32.mrb[0].mxu0
      %v5009 = vadd.f32 0.0, %v5008
      %v5010 = vpop.f32.mrb[0].mxu0
      %5011 = vmatprep.mubr.bf16.mxu0 0
      %5012 = vmatmul.mubr.bf16.gmra.mrb[0].mxu0 %v2907
      %v5013 = vpop.f32.mrb[0].mxu0
      %v5014 = vadd.f32 0.0, %v5013
      %v5015 = vpop.f32.mrb[0].mxu0
      %v5016 = vpop.f32.mrb[0].mxu0
      %v5017 = vadd.f32 0.0, %v5016
      %v5018 = vpop.f32.mrb[0].mxu0
      %5019 = vmatprep.mubr.bf16.mxu0 0
      %5020 = vmatmul.mubr.bf16.gmra.mrb[0].mxu0 %v2910
      %v5021 = vpop.f32.mrb[0].mxu0
      %v5022 = vadd.f32 0.0, %v5021
      %v5023 = vpop.f32.mrb[0].mxu0
      %v5024 = vpop.f32.mrb[0].mxu0
      %v5025 = vadd.f32 0.0, %v5024
      %v5026 = vpop.f32.mrb[0].mxu0
      %5027 = vmatprep.mubr.bf16.mxu0 0
      %5028 = vmatmul.mubr.bf16.gmra.mrb[0].mxu0 %v2913
      %v5029 = vpop.f32.mrb[0].mxu0
      %v5030 = vadd.f32 0.0, %v5029
      %v5031 = vpop.f32.mrb[0].mxu0
      %v5032 = vpop.f32.mrb[0].mxu0
      %v5033 = vadd.f32 0.0, %v5032
      %v5034 = vpop.f32.mrb[0].mxu0
      %5035 = vmatprep.mubr.bf16.mxu0 0
      %5036 = vmatmul.mubr.bf16.gmra.mrb[0].mxu0 %v2916
      %v5037 = vpop.f32.mrb[0].mxu0
      %v5038 = vadd.f32 0.0, %v5037
      %v5039 = vpop.f32.mrb[0].mxu0
      %v5040 = vpop.f32.mrb[0].mxu0
      %v5041 = vadd.f32 0.0, %v5040
      %v5042 = vpop.f32.mrb[0].mxu0
      %5043 = vmatprep.mubr.bf16.mxu0 0
      %5044 = vmatmul.mubr.bf16.gmra.mrb[0].mxu0 %v2919
      %v5045 = vpop.f32.mrb[0].mxu0
      %v5046 = vadd.f32 0.0, %v5045
      %v5047 = vpop.f32.mrb[0].mxu0
      %v5048 = vpop.f32.mrb[0].mxu0
      %v5049 = vadd.f32 0.0, %v5048
      %v5050 = vpop.f32.mrb[0].mxu0
      %5051 = vmatprep.mubr.bf16.mxu0 0
      %5052 = vmatmul.mubr.bf16.gmra.mrb[0].mxu0 %v4766
      %v5053 = vpop.f32.mrb[0].mxu0
      %v5054 = vadd.f32 0.0, %v5053
      %v5055 = vpop.f32.mrb[0].mxu0
      %v5056 = vpop.f32.mrb[0].mxu0
      %v5057 = vadd.f32 0.0, %v5056
      %v5058 = vpop.f32.mrb[0].mxu0
      %5059 = vdwg.mxu0
      %v5060 = vld [vmem:[#allocation2] sm:$0xff]
      %v5061 = vld [vmem:[#allocation2 + $0x8] sm:$0xff]
      %v5062 = vld [vmem:[#allocation2 + $0x10] sm:$0xff]
      %v5063 = vld [vmem:[#allocation2 + $0x18] sm:$0xff]
      %v5064 = vld [vmem:[#allocation2 + $0x20] sm:$0xff]
      %v5065 = vld [vmem:[#allocation2 + $0x28] sm:$0xff]
      %v5066 = vld [vmem:[#allocation2 + $0x30] sm:$0xff]
      %v5067 = vld [vmem:[#allocation2 + $0x38] sm:$0xff]
      %v5068 = vld [vmem:[#allocation2 + $0x40] sm:$0xff]
      %v5069 = vld [vmem:[#allocation2 + $0x48] sm:$0xff]
      %v5070 = vld [vmem:[#allocation2 + $0x50] sm:$0xff]
      %v5071 = vld [vmem:[#allocation2 + $0x58] sm:$0xff]
      %v5072 = vld [vmem:[#allocation2 + $0x60] sm:$0xff]
      %v5073 = vld [vmem:[#allocation2 + $0x68] sm:$0xff]
      %v5074 = vld [vmem:[#allocation2 + $0x70] sm:$0xff]
      %v5075 = vld [vmem:[#allocation2 + $0x78] sm:$0xff]
      %v5076 = vld [vmem:[#allocation2 + $0x80] sm:$0xff]
      %v5077 = vld [vmem:[#allocation2 + $0x88] sm:$0xff]
      %v5078 = vld [vmem:[#allocation2 + $0x90] sm:$0xff]
      %v5079 = vld [vmem:[#allocation2 + $0x98] sm:$0xff]
      %v5080 = vld [vmem:[#allocation2 + $0xa0] sm:$0xff]
      %v5081 = vld [vmem:[#allocation2 + $0xa8] sm:$0xff]
      %v5082 = vld [vmem:[#allocation2 + $0xb0] sm:$0xff]
      %v5083 = vld [vmem:[#allocation2 + $0xb8] sm:$0xff]
      %v5084 = vld [vmem:[#allocation2 + $0xc0] sm:$0xff]
      %v5085 = vld [vmem:[#allocation2 + $0xc8] sm:$0xff]
      %v5086 = vld [vmem:[#allocation2 + $0xd0] sm:$0xff]
      %v5087 = vld [vmem:[#allocation2 + $0xd8] sm:$0xff]
      %v5088 = vld [vmem:[#allocation2 + $0xe0] sm:$0xff]
      %v5089 = vld [vmem:[#allocation2 + $0xe8] sm:$0xff]
      %v5090 = vld [vmem:[#allocation2 + $0xf0] sm:$0xff]
      %v5091 = vld [vmem:[#allocation2 + $0xf8] sm:$0xff]
      %v5092 = vld [vmem:[#allocation2 + $0x100] sm:$0xff]
      %v5093 = vld [vmem:[#allocation2 + $0x108] sm:$0xff]
      %v5094 = vld [vmem:[#allocation2 + $0x110] sm:$0xff]
      %v5095 = vld [vmem:[#allocation2 + $0x118] sm:$0xff]
      %v5096 = vld [vmem:[#allocation2 + $0x120] sm:$0xff]
      %v5097 = vld [vmem:[#allocation2 + $0x128] sm:$0xff]
      %v5098 = vld [vmem:[#allocation2 + $0x130] sm:$0xff]
      %v5099 = vld [vmem:[#allocation2 + $0x138] sm:$0xff]
      %v5100 = vld [vmem:[#allocation2 + $0x140] sm:$0xff]
      %v5101 = vld [vmem:[#allocation2 + $0x148] sm:$0xff]
      %v5102 = vld [vmem:[#allocation2 + $0x150] sm:$0xff]
      %v5103 = vld [vmem:[#allocation2 + $0x158] sm:$0xff]
      %v5104 = vld [vmem:[#allocation2 + $0x160] sm:$0xff]
      %v5105 = vld [vmem:[#allocation2 + $0x168] sm:$0xff]
      %v5106 = vld [vmem:[#allocation2 + $0x170] sm:$0xff]
      %v5107 = vld [vmem:[#allocation2 + $0x178] sm:$0xff]
      %v5108 = vld [vmem:[#allocation2 + $0x180] sm:$0xff]
      %v5109 = vld [vmem:[#allocation2 + $0x188] sm:$0xff]
      %v5110 = vld [vmem:[#allocation2 + $0x190] sm:$0xff]
      %v5111 = vld [vmem:[#allocation2 + $0x198] sm:$0xff]
      %v5112 = vld [vmem:[#allocation2 + $0x1a0] sm:$0xff]
      %v5113 = vld [vmem:[#allocation2 + $0x1a8] sm:$0xff]
      %v5114 = vld [vmem:[#allocation2 + $0x1b0] sm:$0xff]
      %v5115 = vld [vmem:[#allocation2 + $0x1b8] sm:$0xff]
      %v5116 = vld [vmem:[#allocation2 + $0x1c0] sm:$0xff]
      %v5117 = vld [vmem:[#allocation2 + $0x1c8] sm:$0xff]
      %v5118 = vld [vmem:[#allocation2 + $0x1d0] sm:$0xff]
      %v5119 = vld [vmem:[#allocation2 + $0x1d8] sm:$0xff]
      %v5120 = vld [vmem:[#allocation2 + $0x1e0] sm:$0xff]
      %v5121 = vld [vmem:[#allocation2 + $0x1e8] sm:$0xff]
      %v5122 = vld [vmem:[#allocation2 + $0x1f0] sm:$0xff]
      %v5123 = vld [vmem:[#allocation2 + $0x1f8] sm:$0xff]
      %v5124 = vadd.f32 %v5060, %v4806
      %v5125 = vadd.f32 %v5061, %v4809
      %v5126 = vadd.f32 %v5062, %v4814
      %v5127 = vadd.f32 %v5063, %v4817
      %v5128 = vadd.f32 %v5064, %v4822
      %v5129 = vadd.f32 %v5065, %v4825
      %v5130 = vadd.f32 %v5066, %v4830
      %v5131 = vadd.f32 %v5067, %v4833
      %v5132 = vadd.f32 %v5068, %v4838
      %v5133 = vadd.f32 %v5069, %v4841
      %v5134 = vadd.f32 %v5070, %v4846
      %v5135 = vadd.f32 %v5071, %v4849
      %v5136 = vadd.f32 %v5072, %v4854
      %v5137 = vadd.f32 %v5073, %v4857
      %v5138 = vadd.f32 %v5074, %v4862
      %v5139 = vadd.f32 %v5075, %v4865
      %v5140 = vadd.f32 %v5076, %v4870
      %v5141 = vadd.f32 %v5077, %v4873
      %v5142 = vadd.f32 %v5078, %v4878
      %v5143 = vadd.f32 %v5079, %v4881
      %v5144 = vadd.f32 %v5080, %v4886
      %v5145 = vadd.f32 %v5081, %v4889
      %v5146 = vadd.f32 %v5082, %v4894
      %v5147 = vadd.f32 %v5083, %v4897
      %v5148 = vadd.f32 %v5084, %v4902
      %v5149 = vadd.f32 %v5085, %v4905
      %v5150 = vadd.f32 %v5086, %v4910
      %v5151 = vadd.f32 %v5087, %v4913
      %v5152 = vadd.f32 %v5088, %v4918
      %v5153 = vadd.f32 %v5089, %v4921
      %v5154 = vadd.f32 %v5090, %v4926
      %v5155 = vadd.f32 %v5091, %v4929
      %v5156 = vadd.f32 %v5092, %v4934
      %v5157 = vadd.f32 %v5093, %v4937
      %v5158 = vadd.f32 %v5094, %v4942
      %v5159 = vadd.f32 %v5095, %v4945
      %v5160 = vadd.f32 %v5096, %v4950
      %v5161 = vadd.f32 %v5097, %v4953
      %v5162 = vadd.f32 %v5098, %v4958
      %v5163 = vadd.f32 %v5099, %v4961
      %v5164 = vadd.f32 %v5100, %v4966
      %v5165 = vadd.f32 %v5101, %v4969
      %v5166 = vadd.f32 %v5102, %v4974
      %v5167 = vadd.f32 %v5103, %v4977
      %v5168 = vadd.f32 %v5104, %v4982
      %v5169 = vadd.f32 %v5105, %v4985
      %v5170 = vadd.f32 %v5106, %v4990
      %v5171 = vadd.f32 %v5107, %v4993
      %v5172 = vadd.f32 %v5108, %v4998
      %v5173 = vadd.f32 %v5109, %v5001
      %v5174 = vadd.f32 %v5110, %v5006
      %v5175 = vadd.f32 %v5111, %v5009
      %v5176 = vadd.f32 %v5112, %v5014
      %v5177 = vadd.f32 %v5113, %v5017
      %v5178 = vadd.f32 %v5114, %v5022
      %v5179 = vadd.f32 %v5115, %v5025
      %v5180 = vadd.f32 %v5116, %v5030
      %v5181 = vadd.f32 %v5117, %v5033
      %v5182 = vadd.f32 %v5118, %v5038
      %v5183 = vadd.f32 %v5119, %v5041
      %v5184 = vadd.f32 %v5120, %v5046
      %v5185 = vadd.f32 %v5121, %v5049
      %v5186 = vadd.f32 %v5122, %v5054
      %v5187 = vadd.f32 %v5123, %v5057
      %5188 = vst.msk [vmem:[#allocation2] sm:$0xff] %vm672, %v5124
      %5189 = vst.msk [vmem:[#allocation2 + $0x8] sm:$0xff] %vm672, %v5125
      %5190 = vst.msk [vmem:[#allocation2 + $0x10] sm:$0xff] %vm672, %v5126
      %5191 = vst.msk [vmem:[#allocation2 + $0x18] sm:$0xff] %vm672, %v5127
      %5192 = vst.msk [vmem:[#allocation2 + $0x20] sm:$0xff] %vm672, %v5128
      %5193 = vst.msk [vmem:[#allocation2 + $0x28] sm:$0xff] %vm672, %v5129
      %5194 = vst.msk [vmem:[#allocation2 + $0x30] sm:$0xff] %vm672, %v5130
      %5195 = vst.msk [vmem:[#allocation2 + $0x38] sm:$0xff] %vm672, %v5131
      %5196 = vst.msk [vmem:[#allocation2 + $0x40] sm:$0xff] %vm672, %v5132
      %5197 = vst.msk [vmem:[#allocation2 + $0x48] sm:$0xff] %vm672, %v5133
      %5198 = vst.msk [vmem:[#allocation2 + $0x50] sm:$0xff] %vm672, %v5134
      %5199 = vst.msk [vmem:[#allocation2 + $0x58] sm:$0xff] %vm672, %v5135
      %5200 = vst.msk [vmem:[#allocation2 + $0x60] sm:$0xff] %vm672, %v5136
      %5201 = vst.msk [vmem:[#allocation2 + $0x68] sm:$0xff] %vm672, %v5137
      %5202 = vst.msk [vmem:[#allocation2 + $0x70] sm:$0xff] %vm672, %v5138
      %5203 = vst.msk [vmem:[#allocation2 + $0x78] sm:$0xff] %vm672, %v5139
      %5204 = vst.msk [vmem:[#allocation2 + $0x80] sm:$0xff] %vm672, %v5140
      %5205 = vst.msk [vmem:[#allocation2 + $0x88] sm:$0xff] %vm672, %v5141
      %5206 = vst.msk [vmem:[#allocation2 + $0x90] sm:$0xff] %vm672, %v5142
      %5207 = vst.msk [vmem:[#allocation2 + $0x98] sm:$0xff] %vm672, %v5143
      %5208 = vst.msk [vmem:[#allocation2 + $0xa0] sm:$0xff] %vm672, %v5144
      %5209 = vst.msk [vmem:[#allocation2 + $0xa8] sm:$0xff] %vm672, %v5145
      %5210 = vst.msk [vmem:[#allocation2 + $0xb0] sm:$0xff] %vm672, %v5146
      %5211 = vst.msk [vmem:[#allocation2 + $0xb8] sm:$0xff] %vm672, %v5147
      %5212 = vst.msk [vmem:[#allocation2 + $0xc0] sm:$0xff] %vm672, %v5148
      %5213 = vst.msk [vmem:[#allocation2 + $0xc8] sm:$0xff] %vm672, %v5149
      %5214 = vst.msk [vmem:[#allocation2 + $0xd0] sm:$0xff] %vm672, %v5150
      %5215 = vst.msk [vmem:[#allocation2 + $0xd8] sm:$0xff] %vm672, %v5151
      %5216 = vst.msk [vmem:[#allocation2 + $0xe0] sm:$0xff] %vm672, %v5152
      %5217 = vst.msk [vmem:[#allocation2 + $0xe8] sm:$0xff] %vm672, %v5153
      %5218 = vst.msk [vmem:[#allocation2 + $0xf0] sm:$0xff] %vm672, %v5154
      %5219 = vst.msk [vmem:[#allocation2 + $0xf8] sm:$0xff] %vm672, %v5155
      %5220 = vst.msk [vmem:[#allocation2 + $0x100] sm:$0xff] %vm672, %v5156
      %5221 = vst.msk [vmem:[#allocation2 + $0x108] sm:$0xff] %vm672, %v5157
      %5222 = vst.msk [vmem:[#allocation2 + $0x110] sm:$0xff] %vm672, %v5158
      %5223 = vst.msk [vmem:[#allocation2 + $0x118] sm:$0xff] %vm672, %v5159
      %5224 = vst.msk [vmem:[#allocation2 + $0x120] sm:$0xff] %vm672, %v5160
      %5225 = vst.msk [vmem:[#allocation2 + $0x128] sm:$0xff] %vm672, %v5161
      %5226 = vst.msk [vmem:[#allocation2 + $0x130] sm:$0xff] %vm672, %v5162
      %5227 = vst.msk [vmem:[#allocation2 + $0x138] sm:$0xff] %vm672, %v5163
      %5228 = vst.msk [vmem:[#allocation2 + $0x140] sm:$0xff] %vm672, %v5164
      %5229 = vst.msk [vmem:[#allocation2 + $0x148] sm:$0xff] %vm672, %v5165
      %5230 = vst.msk [vmem:[#allocation2 + $0x150] sm:$0xff] %vm672, %v5166
      %5231 = vst.msk [vmem:[#allocation2 + $0x158] sm:$0xff] %vm672, %v5167
      %5232 = vst.msk [vmem:[#allocation2 + $0x160] sm:$0xff] %vm672, %v5168
      %5233 = vst.msk [vmem:[#allocation2 + $0x168] sm:$0xff] %vm672, %v5169
      %5234 = vst.msk [vmem:[#allocation2 + $0x170] sm:$0xff] %vm672, %v5170
      %5235 = vst.msk [vmem:[#allocation2 + $0x178] sm:$0xff] %vm672, %v5171
      %5236 = vst.msk [vmem:[#allocation2 + $0x180] sm:$0xff] %vm672, %v5172
      %5237 = vst.msk [vmem:[#allocation2 + $0x188] sm:$0xff] %vm672, %v5173
      %5238 = vst.msk [vmem:[#allocation2 + $0x190] sm:$0xff] %vm672, %v5174
      %5239 = vst.msk [vmem:[#allocation2 + $0x198] sm:$0xff] %vm672, %v5175
      %5240 = vst.msk [vmem:[#allocation2 + $0x1a0] sm:$0xff] %vm672, %v5176
      %5241 = vst.msk [vmem:[#allocation2 + $0x1a8] sm:$0xff] %vm672, %v5177
      %5242 = vst.msk [vmem:[#allocation2 + $0x1b0] sm:$0xff] %vm672, %v5178
      %5243 = vst.msk [vmem:[#allocation2 + $0x1b8] sm:$0xff] %vm672, %v5179
      %5244 = vst.msk [vmem:[#allocation2 + $0x1c0] sm:$0xff] %vm672, %v5180
      %5245 = vst.msk [vmem:[#allocation2 + $0x1c8] sm:$0xff] %vm672, %v5181
      %5246 = vst.msk [vmem:[#allocation2 + $0x1d0] sm:$0xff] %vm672, %v5182
      %5247 = vst.msk [vmem:[#allocation2 + $0x1d8] sm:$0xff] %vm672, %v5183
      %5248 = vst.msk [vmem:[#allocation2 + $0x1e0] sm:$0xff] %vm672, %v5184
      %5249 = vst.msk [vmem:[#allocation2 + $0x1e8] sm:$0xff] %vm672, %v5185
      %5250 = vst.msk [vmem:[#allocation2 + $0x1f0] sm:$0xff] %vm672, %v5186
      %5251 = vst.msk [vmem:[#allocation2 + $0x1f8] sm:$0xff] %vm672, %v5187
      %v5252 = vrot.slane %v1924, 2
      %v5253 = vrot.slane %v1925, 2
      %v5254 = vsel %vm3405, %v5252, %v5253
      %v5255 = vrot.slane %v1926, 2
      %v5256 = vsel %vm3405, %v5253, %v5255
      %v5257 = vrot.slane %v1978, 2
      %v5258 = vrot.slane %v1979, 2
      %v5259 = vsel %vm3405, %v5257, %v5258
      %v5260 = vrot.slane %v1980, 2
      %v5261 = vsel %vm3405, %v5258, %v5260
      %v5266 = vpack.c.bf16 %v5256, %v5254
      %v5267 = vpack.c.bf16 %v5261, %v5259
      %s5268 = scalar_lea.vmem %s4, 20
      %v5269 = vld [vmem:[%s5268] sm:$0xf]
      %v5271 = vsel %vm672, %v5266, 0
      %v5274 = vsel %vm672, %v5267, 0
      %v5277 = vsel %vm2113, %v5269, 0
      %5279 = vmatprep.subr.bf16.mxu0 0
      %5280 = vmatpush1.bf16.msra.mxu0 %v5277
      %5281 = vmatprep.subr.bf16.mxu0 0
      %5282 = vmatpush1.bf16.msra.mxu0 0
      %5283 = vmatprep.subr.bf16.mxu0 0
      %5284 = vmatpush1.bf16.msra.mxu0 0
      %5285 = vmatprep.subr.bf16.mxu0 0
      %5286 = vmatpush1.bf16.msra.mxu0 0
      %5287 = vmatprep.subr.bf16.mxu0 0
      %5288 = vmatpush1.bf16.msra.mxu0 0
      %5289 = vmatprep.subr.bf16.mxu0 0
      %5290 = vmatpush1.bf16.msra.mxu0 0
      %5291 = vmatprep.subr.bf16.mxu0 0
      %5292 = vmatpush1.bf16.msra.mxu0 0
      %5293 = vmatprep.subr.bf16.mxu0 0
      %5294 = vmatpush1.bf16.msra.mxu0 0
      %5295 = vmatprep.subr.bf16.mxu0 0
      %5296 = vmatpush1.bf16.msra.mxu0 0
      %5297 = vmatprep.subr.bf16.mxu0 0
      %5298 = vmatpush1.bf16.msra.mxu0 0
      %5299 = vmatprep.subr.bf16.mxu0 0
      %5300 = vmatpush1.bf16.msra.mxu0 0
      %5301 = vmatprep.subr.bf16.mxu0 0
      %5302 = vmatpush1.bf16.msra.mxu0 0
      %5303 = vmatprep.subr.bf16.mxu0 0
      %5304 = vmatpush1.bf16.msra.mxu0 0
      %5305 = vmatprep.subr.bf16.mxu0 0
      %5306 = vmatpush1.bf16.msra.mxu0 0
      %5307 = vmatprep.subr.bf16.mxu0 0
      %5308 = vmatpush1.bf16.msra.mxu0 0
      %5309 = vmatprep.subr.bf16.mxu0 0
      %5310 = vmatpush1.bf16.msra.mxu0 0
      %5311 = vmatprep.mubr.bf16.mxu0 0
      %5312 = vmatmul.mubr.bf16.gmra.mrb[0].mxu0 %v3668
      %v5313 = vpop.f32.mrb[0].mxu0
      %v5314 = vadd.f32 0.0, %v5313
      %v5315 = vpop.f32.mrb[0].mxu0
      %v5316 = vpop.f32.mrb[0].mxu0
      %v5317 = vadd.f32 0.0, %v5316
      %v5318 = vpop.f32.mrb[0].mxu0
      %5319 = vmatprep.mubr.bf16.mxu0 0
      %5320 = vmatmul.mubr.bf16.gmra.mrb[0].mxu0 %v3671
      %v5321 = vpop.f32.mrb[0].mxu0
      %v5322 = vadd.f32 0.0, %v5321
      %v5323 = vpop.f32.mrb[0].mxu0
      %v5324 = vpop.f32.mrb[0].mxu0
      %v5325 = vadd.f32 0.0, %v5324
      %v5326 = vpop.f32.mrb[0].mxu0
      %5327 = vmatprep.mubr.bf16.mxu0 0
      %5328 = vmatmul.mubr.bf16.gmra.mrb[0].mxu0 %v3674
      %v5329 = vpop.f32.mrb[0].mxu0
      %v5330 = vadd.f32 0.0, %v5329
      %v5331 = vpop.f32.mrb[0].mxu0
      %v5332 = vpop.f32.mrb[0].mxu0
      %v5333 = vadd.f32 0.0, %v5332
      %v5334 = vpop.f32.mrb[0].mxu0
      %5335 = vmatprep.mubr.bf16.mxu0 0
      %5336 = vmatmul.mubr.bf16.gmra.mrb[0].mxu0 %v3677
      %v5337 = vpop.f32.mrb[0].mxu0
      %v5338 = vadd.f32 0.0, %v5337
      %v5339 = vpop.f32.mrb[0].mxu0
      %v5340 = vpop.f32.mrb[0].mxu0
      %v5341 = vadd.f32 0.0, %v5340
      %v5342 = vpop.f32.mrb[0].mxu0
      %5343 = vmatprep.mubr.bf16.mxu0 0
      %5344 = vmatmul.mubr.bf16.gmra.mrb[0].mxu0 %v3680
      %v5345 = vpop.f32.mrb[0].mxu0
      %v5346 = vadd.f32 0.0, %v5345
      %v5347 = vpop.f32.mrb[0].mxu0
      %v5348 = vpop.f32.mrb[0].mxu0
      %v5349 = vadd.f32 0.0, %v5348
      %v5350 = vpop.f32.mrb[0].mxu0
      %5351 = vmatprep.mubr.bf16.mxu0 0
      %5352 = vmatmul.mubr.bf16.gmra.mrb[0].mxu0 %v3683
      %v5353 = vpop.f32.mrb[0].mxu0
      %v5354 = vadd.f32 0.0, %v5353
      %v5355 = vpop.f32.mrb[0].mxu0
      %v5356 = vpop.f32.mrb[0].mxu0
      %v5357 = vadd.f32 0.0, %v5356
      %v5358 = vpop.f32.mrb[0].mxu0
      %5359 = vmatprep.mubr.bf16.mxu0 0
      %5360 = vmatmul.mubr.bf16.gmra.mrb[0].mxu0 %v3686
      %v5361 = vpop.f32.mrb[0].mxu0
      %v5362 = vadd.f32 0.0, %v5361
      %v5363 = vpop.f32.mrb[0].mxu0
      %v5364 = vpop.f32.mrb[0].mxu0
      %v5365 = vadd.f32 0.0, %v5364
      %v5366 = vpop.f32.mrb[0].mxu0
      %5367 = vmatprep.mubr.bf16.mxu0 0
      %5368 = vmatmul.mubr.bf16.gmra.mrb[0].mxu0 %v3689
      %v5369 = vpop.f32.mrb[0].mxu0
      %v5370 = vadd.f32 0.0, %v5369
      %v5371 = vpop.f32.mrb[0].mxu0
      %v5372 = vpop.f32.mrb[0].mxu0
      %v5373 = vadd.f32 0.0, %v5372
      %v5374 = vpop.f32.mrb[0].mxu0
      %5375 = vmatprep.mubr.bf16.mxu0 0
      %5376 = vmatmul.mubr.bf16.gmra.mrb[0].mxu0 %v3692
      %v5377 = vpop.f32.mrb[0].mxu0
      %v5378 = vadd.f32 0.0, %v5377
      %v5379 = vpop.f32.mrb[0].mxu0
      %v5380 = vpop.f32.mrb[0].mxu0
      %v5381 = vadd.f32 0.0, %v5380
      %v5382 = vpop.f32.mrb[0].mxu0
      %5383 = vmatprep.mubr.bf16.mxu0 0
      %5384 = vmatmul.mubr.bf16.gmra.mrb[0].mxu0 %v3695
      %v5385 = vpop.f32.mrb[0].mxu0
      %v5386 = vadd.f32 0.0, %v5385
      %v5387 = vpop.f32.mrb[0].mxu0
      %v5388 = vpop.f32.mrb[0].mxu0
      %v5389 = vadd.f32 0.0, %v5388
      %v5390 = vpop.f32.mrb[0].mxu0
      %5391 = vmatprep.mubr.bf16.mxu0 0
      %5392 = vmatmul.mubr.bf16.gmra.mrb[0].mxu0 %v3698
      %v5393 = vpop.f32.mrb[0].mxu0
      %v5394 = vadd.f32 0.0, %v5393
      %v5395 = vpop.f32.mrb[0].mxu0
      %v5396 = vpop.f32.mrb[0].mxu0
      %v5397 = vadd.f32 0.0, %v5396
      %v5398 = vpop.f32.mrb[0].mxu0
      %5399 = vmatprep.mubr.bf16.mxu0 0
      %5400 = vmatmul.mubr.bf16.gmra.mrb[0].mxu0 %v3701
      %v5401 = vpop.f32.mrb[0].mxu0
      %v5402 = vadd.f32 0.0, %v5401
      %v5403 = vpop.f32.mrb[0].mxu0
      %v5404 = vpop.f32.mrb[0].mxu0
      %v5405 = vadd.f32 0.0, %v5404
      %v5406 = vpop.f32.mrb[0].mxu0
      %5407 = vmatprep.mubr.bf16.mxu0 0
      %5408 = vmatmul.mubr.bf16.gmra.mrb[0].mxu0 %v3704
      %v5409 = vpop.f32.mrb[0].mxu0
      %v5410 = vadd.f32 0.0, %v5409
      %v5411 = vpop.f32.mrb[0].mxu0
      %v5412 = vpop.f32.mrb[0].mxu0
      %v5413 = vadd.f32 0.0, %v5412
      %v5414 = vpop.f32.mrb[0].mxu0
      %5415 = vmatprep.mubr.bf16.mxu0 0
      %5416 = vmatmul.mubr.bf16.gmra.mrb[0].mxu0 %v3707
      %v5417 = vpop.f32.mrb[0].mxu0
      %v5418 = vadd.f32 0.0, %v5417
      %v5419 = vpop.f32.mrb[0].mxu0
      %v5420 = vpop.f32.mrb[0].mxu0
      %v5421 = vadd.f32 0.0, %v5420
      %v5422 = vpop.f32.mrb[0].mxu0
      %5423 = vmatprep.mubr.bf16.mxu0 0
      %5424 = vmatmul.mubr.bf16.gmra.mrb[0].mxu0 %v3710
      %v5425 = vpop.f32.mrb[0].mxu0
      %v5426 = vadd.f32 0.0, %v5425
      %v5427 = vpop.f32.mrb[0].mxu0
      %v5428 = vpop.f32.mrb[0].mxu0
      %v5429 = vadd.f32 0.0, %v5428
      %v5430 = vpop.f32.mrb[0].mxu0
      %5431 = vmatprep.mubr.bf16.mxu0 0
      %5432 = vmatmul.mubr.bf16.gmra.mrb[0].mxu0 %v5271
      %v5433 = vpop.f32.mrb[0].mxu0
      %v5434 = vadd.f32 0.0, %v5433
      %v5435 = vpop.f32.mrb[0].mxu0
      %v5436 = vpop.f32.mrb[0].mxu0
      %v5437 = vadd.f32 0.0, %v5436
      %v5438 = vpop.f32.mrb[0].mxu0
      %5439 = vmatprep.mubr.bf16.mxu0 0
      %5440 = vmatmul.mubr.bf16.gmra.mrb[0].mxu0 %v3716
      %v5441 = vpop.f32.mrb[0].mxu0
      %v5442 = vadd.f32 0.0, %v5441
      %v5443 = vpop.f32.mrb[0].mxu0
      %v5444 = vpop.f32.mrb[0].mxu0
      %v5445 = vadd.f32 0.0, %v5444
      %v5446 = vpop.f32.mrb[0].mxu0
      %5447 = vmatprep.mubr.bf16.mxu0 0
      %5448 = vmatmul.mubr.bf16.gmra.mrb[0].mxu0 %v3719
      %v5449 = vpop.f32.mrb[0].mxu0
      %v5450 = vadd.f32 0.0, %v5449
      %v5451 = vpop.f32.mrb[0].mxu0
      %v5452 = vpop.f32.mrb[0].mxu0
      %v5453 = vadd.f32 0.0, %v5452
      %v5454 = vpop.f32.mrb[0].mxu0
      %5455 = vmatprep.mubr.bf16.mxu0 0
      %5456 = vmatmul.mubr.bf16.gmra.mrb[0].mxu0 %v3722
      %v5457 = vpop.f32.mrb[0].mxu0
      %v5458 = vadd.f32 0.0, %v5457
      %v5459 = vpop.f32.mrb[0].mxu0
      %v5460 = vpop.f32.mrb[0].mxu0
      %v5461 = vadd.f32 0.0, %v5460
      %v5462 = vpop.f32.mrb[0].mxu0
      %5463 = vmatprep.mubr.bf16.mxu0 0
      %5464 = vmatmul.mubr.bf16.gmra.mrb[0].mxu0 %v3725
      %v5465 = vpop.f32.mrb[0].mxu0
      %v5466 = vadd.f32 0.0, %v5465
      %v5467 = vpop.f32.mrb[0].mxu0
      %v5468 = vpop.f32.mrb[0].mxu0
      %v5469 = vadd.f32 0.0, %v5468
      %v5470 = vpop.f32.mrb[0].mxu0
      %5471 = vmatprep.mubr.bf16.mxu0 0
      %5472 = vmatmul.mubr.bf16.gmra.mrb[0].mxu0 %v3728
      %v5473 = vpop.f32.mrb[0].mxu0
      %v5474 = vadd.f32 0.0, %v5473
      %v5475 = vpop.f32.mrb[0].mxu0
      %v5476 = vpop.f32.mrb[0].mxu0
      %v5477 = vadd.f32 0.0, %v5476
      %v5478 = vpop.f32.mrb[0].mxu0
      %5479 = vmatprep.mubr.bf16.mxu0 0
      %5480 = vmatmul.mubr.bf16.gmra.mrb[0].mxu0 %v3731
      %v5481 = vpop.f32.mrb[0].mxu0
      %v5482 = vadd.f32 0.0, %v5481
      %v5483 = vpop.f32.mrb[0].mxu0
      %v5484 = vpop.f32.mrb[0].mxu0
      %v5485 = vadd.f32 0.0, %v5484
      %v5486 = vpop.f32.mrb[0].mxu0
      %5487 = vmatprep.mubr.bf16.mxu0 0
      %5488 = vmatmul.mubr.bf16.gmra.mrb[0].mxu0 %v3734
      %v5489 = vpop.f32.mrb[0].mxu0
      %v5490 = vadd.f32 0.0, %v5489
      %v5491 = vpop.f32.mrb[0].mxu0
      %v5492 = vpop.f32.mrb[0].mxu0
      %v5493 = vadd.f32 0.0, %v5492
      %v5494 = vpop.f32.mrb[0].mxu0
      %5495 = vmatprep.mubr.bf16.mxu0 0
      %5496 = vmatmul.mubr.bf16.gmra.mrb[0].mxu0 %v3737
      %v5497 = vpop.f32.mrb[0].mxu0
      %v5498 = vadd.f32 0.0, %v5497
      %v5499 = vpop.f32.mrb[0].mxu0
      %v5500 = vpop.f32.mrb[0].mxu0
      %v5501 = vadd.f32 0.0, %v5500
      %v5502 = vpop.f32.mrb[0].mxu0
      %5503 = vmatprep.mubr.bf16.mxu0 0
      %5504 = vmatmul.mubr.bf16.gmra.mrb[0].mxu0 %v3740
      %v5505 = vpop.f32.mrb[0].mxu0
      %v5506 = vadd.f32 0.0, %v5505
      %v5507 = vpop.f32.mrb[0].mxu0
      %v5508 = vpop.f32.mrb[0].mxu0
      %v5509 = vadd.f32 0.0, %v5508
      %v5510 = vpop.f32.mrb[0].mxu0
      %5511 = vmatprep.mubr.bf16.mxu0 0
      %5512 = vmatmul.mubr.bf16.gmra.mrb[0].mxu0 %v3743
      %v5513 = vpop.f32.mrb[0].mxu0
      %v5514 = vadd.f32 0.0, %v5513
      %v5515 = vpop.f32.mrb[0].mxu0
      %v5516 = vpop.f32.mrb[0].mxu0
      %v5517 = vadd.f32 0.0, %v5516
      %v5518 = vpop.f32.mrb[0].mxu0
      %5519 = vmatprep.mubr.bf16.mxu0 0
      %5520 = vmatmul.mubr.bf16.gmra.mrb[0].mxu0 %v3746
      %v5521 = vpop.f32.mrb[0].mxu0
      %v5522 = vadd.f32 0.0, %v5521
      %v5523 = vpop.f32.mrb[0].mxu0
      %v5524 = vpop.f32.mrb[0].mxu0
      %v5525 = vadd.f32 0.0, %v5524
      %v5526 = vpop.f32.mrb[0].mxu0
      %5527 = vmatprep.mubr.bf16.mxu0 0
      %5528 = vmatmul.mubr.bf16.gmra.mrb[0].mxu0 %v3749
      %v5529 = vpop.f32.mrb[0].mxu0
      %v5530 = vadd.f32 0.0, %v5529
      %v5531 = vpop.f32.mrb[0].mxu0
      %v5532 = vpop.f32.mrb[0].mxu0
      %v5533 = vadd.f32 0.0, %v5532
      %v5534 = vpop.f32.mrb[0].mxu0
      %5535 = vmatprep.mubr.bf16.mxu0 0
      %5536 = vmatmul.mubr.bf16.gmra.mrb[0].mxu0 %v3752
      %v5537 = vpop.f32.mrb[0].mxu0
      %v5538 = vadd.f32 0.0, %v5537
      %v5539 = vpop.f32.mrb[0].mxu0
      %v5540 = vpop.f32.mrb[0].mxu0
      %v5541 = vadd.f32 0.0, %v5540
      %v5542 = vpop.f32.mrb[0].mxu0
      %5543 = vmatprep.mubr.bf16.mxu0 0
      %5544 = vmatmul.mubr.bf16.gmra.mrb[0].mxu0 %v3755
      %v5545 = vpop.f32.mrb[0].mxu0
      %v5546 = vadd.f32 0.0, %v5545
      %v5547 = vpop.f32.mrb[0].mxu0
      %v5548 = vpop.f32.mrb[0].mxu0
      %v5549 = vadd.f32 0.0, %v5548
      %v5550 = vpop.f32.mrb[0].mxu0
      %5551 = vmatprep.mubr.bf16.mxu0 0
      %5552 = vmatmul.mubr.bf16.gmra.mrb[0].mxu0 %v3758
      %v5553 = vpop.f32.mrb[0].mxu0
      %v5554 = vadd.f32 0.0, %v5553
      %v5555 = vpop.f32.mrb[0].mxu0
      %v5556 = vpop.f32.mrb[0].mxu0
      %v5557 = vadd.f32 0.0, %v5556
      %v5558 = vpop.f32.mrb[0].mxu0
      %5559 = vmatprep.mubr.bf16.mxu0 0
      %5560 = vmatmul.mubr.bf16.gmra.mrb[0].mxu0 %v5274
      %v5561 = vpop.f32.mrb[0].mxu0
      %v5562 = vadd.f32 0.0, %v5561
      %v5563 = vpop.f32.mrb[0].mxu0
      %v5564 = vpop.f32.mrb[0].mxu0
      %v5565 = vadd.f32 0.0, %v5564
      %v5566 = vpop.f32.mrb[0].mxu0
      %5567 = vdwg.mxu0
      %v5568 = vld [vmem:[#allocation2] sm:$0xff]
      %v5569 = vld [vmem:[#allocation2 + $0x8] sm:$0xff]
      %v5570 = vld [vmem:[#allocation2 + $0x10] sm:$0xff]
      %v5571 = vld [vmem:[#allocation2 + $0x18] sm:$0xff]
      %v5572 = vld [vmem:[#allocation2 + $0x20] sm:$0xff]
      %v5573 = vld [vmem:[#allocation2 + $0x28] sm:$0xff]
      %v5574 = vld [vmem:[#allocation2 + $0x30] sm:$0xff]
      %v5575 = vld [vmem:[#allocation2 + $0x38] sm:$0xff]
      %v5576 = vld [vmem:[#allocation2 + $0x40] sm:$0xff]
      %v5577 = vld [vmem:[#allocation2 + $0x48] sm:$0xff]
      %v5578 = vld [vmem:[#allocation2 + $0x50] sm:$0xff]
      %v5579 = vld [vmem:[#allocation2 + $0x58] sm:$0xff]
      %v5580 = vld [vmem:[#allocation2 + $0x60] sm:$0xff]
      %v5581 = vld [vmem:[#allocation2 + $0x68] sm:$0xff]
      %v5582 = vld [vmem:[#allocation2 + $0x70] sm:$0xff]
      %v5583 = vld [vmem:[#allocation2 + $0x78] sm:$0xff]
      %v5584 = vld [vmem:[#allocation2 + $0x80] sm:$0xff]
      %v5585 = vld [vmem:[#allocation2 + $0x88] sm:$0xff]
      %v5586 = vld [vmem:[#allocation2 + $0x90] sm:$0xff]
      %v5587 = vld [vmem:[#allocation2 + $0x98] sm:$0xff]
      %v5588 = vld [vmem:[#allocation2 + $0xa0] sm:$0xff]
      %v5589 = vld [vmem:[#allocation2 + $0xa8] sm:$0xff]
      %v5590 = vld [vmem:[#allocation2 + $0xb0] sm:$0xff]
      %v5591 = vld [vmem:[#allocation2 + $0xb8] sm:$0xff]
      %v5592 = vld [vmem:[#allocation2 + $0xc0] sm:$0xff]
      %v5593 = vld [vmem:[#allocation2 + $0xc8] sm:$0xff]
      %v5594 = vld [vmem:[#allocation2 + $0xd0] sm:$0xff]
      %v5595 = vld [vmem:[#allocation2 + $0xd8] sm:$0xff]
      %v5596 = vld [vmem:[#allocation2 + $0xe0] sm:$0xff]
      %v5597 = vld [vmem:[#allocation2 + $0xe8] sm:$0xff]
      %v5598 = vld [vmem:[#allocation2 + $0xf0] sm:$0xff]
      %v5599 = vld [vmem:[#allocation2 + $0xf8] sm:$0xff]
      %v5600 = vld [vmem:[#allocation2 + $0x100] sm:$0xff]
      %v5601 = vld [vmem:[#allocation2 + $0x108] sm:$0xff]
      %v5602 = vld [vmem:[#allocation2 + $0x110] sm:$0xff]
      %v5603 = vld [vmem:[#allocation2 + $0x118] sm:$0xff]
      %v5604 = vld [vmem:[#allocation2 + $0x120] sm:$0xff]
      %v5605 = vld [vmem:[#allocation2 + $0x128] sm:$0xff]
      %v5606 = vld [vmem:[#allocation2 + $0x130] sm:$0xff]
      %v5607 = vld [vmem:[#allocation2 + $0x138] sm:$0xff]
      %v5608 = vld [vmem:[#allocation2 + $0x140] sm:$0xff]
      %v5609 = vld [vmem:[#allocation2 + $0x148] sm:$0xff]
      %v5610 = vld [vmem:[#allocation2 + $0x150] sm:$0xff]
      %v5611 = vld [vmem:[#allocation2 + $0x158] sm:$0xff]
      %v5612 = vld [vmem:[#allocation2 + $0x160] sm:$0xff]
      %v5613 = vld [vmem:[#allocation2 + $0x168] sm:$0xff]
      %v5614 = vld [vmem:[#allocation2 + $0x170] sm:$0xff]
      %v5615 = vld [vmem:[#allocation2 + $0x178] sm:$0xff]
      %v5616 = vld [vmem:[#allocation2 + $0x180] sm:$0xff]
      %v5617 = vld [vmem:[#allocation2 + $0x188] sm:$0xff]
      %v5618 = vld [vmem:[#allocation2 + $0x190] sm:$0xff]
      %v5619 = vld [vmem:[#allocation2 + $0x198] sm:$0xff]
      %v5620 = vld [vmem:[#allocation2 + $0x1a0] sm:$0xff]
      %v5621 = vld [vmem:[#allocation2 + $0x1a8] sm:$0xff]
      %v5622 = vld [vmem:[#allocation2 + $0x1b0] sm:$0xff]
      %v5623 = vld [vmem:[#allocation2 + $0x1b8] sm:$0xff]
      %v5624 = vld [vmem:[#allocation2 + $0x1c0] sm:$0xff]
      %v5625 = vld [vmem:[#allocation2 + $0x1c8] sm:$0xff]
      %v5626 = vld [vmem:[#allocation2 + $0x1d0] sm:$0xff]
      %v5627 = vld [vmem:[#allocation2 + $0x1d8] sm:$0xff]
      %v5628 = vld [vmem:[#allocation2 + $0x1e0] sm:$0xff]
      %v5629 = vld [vmem:[#allocation2 + $0x1e8] sm:$0xff]
      %v5630 = vld [vmem:[#allocation2 + $0x1f0] sm:$0xff]
      %v5631 = vld [vmem:[#allocation2 + $0x1f8] sm:$0xff]
      %v5632 = vadd.f32 %v5568, %v5314
      %v5633 = vadd.f32 %v5569, %v5317
      %v5634 = vadd.f32 %v5570, %v5322
      %v5635 = vadd.f32 %v5571, %v5325
      %v5636 = vadd.f32 %v5572, %v5330
      %v5637 = vadd.f32 %v5573, %v5333
      %v5638 = vadd.f32 %v5574, %v5338
      %v5639 = vadd.f32 %v5575, %v5341
      %v5640 = vadd.f32 %v5576, %v5346
      %v5641 = vadd.f32 %v5577, %v5349
      %v5642 = vadd.f32 %v5578, %v5354
      %v5643 = vadd.f32 %v5579, %v5357
      %v5644 = vadd.f32 %v5580, %v5362
      %v5645 = vadd.f32 %v5581, %v5365
      %v5646 = vadd.f32 %v5582, %v5370
      %v5647 = vadd.f32 %v5583, %v5373
      %v5648 = vadd.f32 %v5584, %v5378
      %v5649 = vadd.f32 %v5585, %v5381
      %v5650 = vadd.f32 %v5586, %v5386
      %v5651 = vadd.f32 %v5587, %v5389
      %v5652 = vadd.f32 %v5588, %v5394
      %v5653 = vadd.f32 %v5589, %v5397
      %v5654 = vadd.f32 %v5590, %v5402
      %v5655 = vadd.f32 %v5591, %v5405
      %v5656 = vadd.f32 %v5592, %v5410
      %v5657 = vadd.f32 %v5593, %v5413
      %v5658 = vadd.f32 %v5594, %v5418
      %v5659 = vadd.f32 %v5595, %v5421
      %v5660 = vadd.f32 %v5596, %v5426
      %v5661 = vadd.f32 %v5597, %v5429
      %v5662 = vadd.f32 %v5598, %v5434
      %v5663 = vadd.f32 %v5599, %v5437
      %v5664 = vadd.f32 %v5600, %v5442
      %v5665 = vadd.f32 %v5601, %v5445
      %v5666 = vadd.f32 %v5602, %v5450
      %v5667 = vadd.f32 %v5603, %v5453
      %v5668 = vadd.f32 %v5604, %v5458
      %v5669 = vadd.f32 %v5605, %v5461
      %v5670 = vadd.f32 %v5606, %v5466
      %v5671 = vadd.f32 %v5607, %v5469
      %v5672 = vadd.f32 %v5608, %v5474
      %v5673 = vadd.f32 %v5609, %v5477
      %v5674 = vadd.f32 %v5610, %v5482
      %v5675 = vadd.f32 %v5611, %v5485
      %v5676 = vadd.f32 %v5612, %v5490
      %v5677 = vadd.f32 %v5613, %v5493
      %v5678 = vadd.f32 %v5614, %v5498
      %v5679 = vadd.f32 %v5615, %v5501
      %v5680 = vadd.f32 %v5616, %v5506
      %v5681 = vadd.f32 %v5617, %v5509
      %v5682 = vadd.f32 %v5618, %v5514
      %v5683 = vadd.f32 %v5619, %v5517
      %v5684 = vadd.f32 %v5620, %v5522
      %v5685 = vadd.f32 %v5621, %v5525
      %v5686 = vadd.f32 %v5622, %v5530
      %v5687 = vadd.f32 %v5623, %v5533
      %v5688 = vadd.f32 %v5624, %v5538
      %v5689 = vadd.f32 %v5625, %v5541
      %v5690 = vadd.f32 %v5626, %v5546
      %v5691 = vadd.f32 %v5627, %v5549
      %v5692 = vadd.f32 %v5628, %v5554
      %v5693 = vadd.f32 %v5629, %v5557
      %v5694 = vadd.f32 %v5630, %v5562
      %v5695 = vadd.f32 %v5631, %v5565
      %5696 = vst.msk [vmem:[#allocation2] sm:$0xff] %vm672, %v5632
      %5697 = vst.msk [vmem:[#allocation2 + $0x8] sm:$0xff] %vm672, %v5633
      %5698 = vst.msk [vmem:[#allocation2 + $0x10] sm:$0xff] %vm672, %v5634
      %5699 = vst.msk [vmem:[#allocation2 + $0x18] sm:$0xff] %vm672, %v5635
      %5700 = vst.msk [vmem:[#allocation2 + $0x20] sm:$0xff] %vm672, %v5636
      %5701 = vst.msk [vmem:[#allocation2 + $0x28] sm:$0xff] %vm672, %v5637
      %5702 = vst.msk [vmem:[#allocation2 + $0x30] sm:$0xff] %vm672, %v5638
      %5703 = vst.msk [vmem:[#allocation2 + $0x38] sm:$0xff] %vm672, %v5639
      %5704 = vst.msk [vmem:[#allocation2 + $0x40] sm:$0xff] %vm672, %v5640
      %5705 = vst.msk [vmem:[#allocation2 + $0x48] sm:$0xff] %vm672, %v5641
      %5706 = vst.msk [vmem:[#allocation2 + $0x50] sm:$0xff] %vm672, %v5642
      %5707 = vst.msk [vmem:[#allocation2 + $0x58] sm:$0xff] %vm672, %v5643
      %5708 = vst.msk [vmem:[#allocation2 + $0x60] sm:$0xff] %vm672, %v5644
      %5709 = vst.msk [vmem:[#allocation2 + $0x68] sm:$0xff] %vm672, %v5645
      %5710 = vst.msk [vmem:[#allocation2 + $0x70] sm:$0xff] %vm672, %v5646
      %5711 = vst.msk [vmem:[#allocation2 + $0x78] sm:$0xff] %vm672, %v5647
      %5712 = vst.msk [vmem:[#allocation2 + $0x80] sm:$0xff] %vm672, %v5648
      %5713 = vst.msk [vmem:[#allocation2 + $0x88] sm:$0xff] %vm672, %v5649
      %5714 = vst.msk [vmem:[#allocation2 + $0x90] sm:$0xff] %vm672, %v5650
      %5715 = vst.msk [vmem:[#allocation2 + $0x98] sm:$0xff] %vm672, %v5651
      %5716 = vst.msk [vmem:[#allocation2 + $0xa0] sm:$0xff] %vm672, %v5652
      %5717 = vst.msk [vmem:[#allocation2 + $0xa8] sm:$0xff] %vm672, %v5653
      %5718 = vst.msk [vmem:[#allocation2 + $0xb0] sm:$0xff] %vm672, %v5654
      %5719 = vst.msk [vmem:[#allocation2 + $0xb8] sm:$0xff] %vm672, %v5655
      %5720 = vst.msk [vmem:[#allocation2 + $0xc0] sm:$0xff] %vm672, %v5656
      %5721 = vst.msk [vmem:[#allocation2 + $0xc8] sm:$0xff] %vm672, %v5657
      %5722 = vst.msk [vmem:[#allocation2 + $0xd0] sm:$0xff] %vm672, %v5658
      %5723 = vst.msk [vmem:[#allocation2 + $0xd8] sm:$0xff] %vm672, %v5659
      %5724 = vst.msk [vmem:[#allocation2 + $0xe0] sm:$0xff] %vm672, %v5660
      %5725 = vst.msk [vmem:[#allocation2 + $0xe8] sm:$0xff] %vm672, %v5661
      %5726 = vst.msk [vmem:[#allocation2 + $0xf0] sm:$0xff] %vm672, %v5662
      %5727 = vst.msk [vmem:[#allocation2 + $0xf8] sm:$0xff] %vm672, %v5663
      %5728 = vst.msk [vmem:[#allocation2 + $0x100] sm:$0xff] %vm672, %v5664
      %5729 = vst.msk [vmem:[#allocation2 + $0x108] sm:$0xff] %vm672, %v5665
      %5730 = vst.msk [vmem:[#allocation2 + $0x110] sm:$0xff] %vm672, %v5666
      %5731 = vst.msk [vmem:[#allocation2 + $0x118] sm:$0xff] %vm672, %v5667
      %5732 = vst.msk [vmem:[#allocation2 + $0x120] sm:$0xff] %vm672, %v5668
      %5733 = vst.msk [vmem:[#allocation2 + $0x128] sm:$0xff] %vm672, %v5669
      %5734 = vst.msk [vmem:[#allocation2 + $0x130] sm:$0xff] %vm672, %v5670
      %5735 = vst.msk [vmem:[#allocation2 + $0x138] sm:$0xff] %vm672, %v5671
      %5736 = vst.msk [vmem:[#allocation2 + $0x140] sm:$0xff] %vm672, %v5672
      %5737 = vst.msk [vmem:[#allocation2 + $0x148] sm:$0xff] %vm672, %v5673
      %5738 = vst.msk [vmem:[#allocation2 + $0x150] sm:$0xff] %vm672, %v5674
      %5739 = vst.msk [vmem:[#allocation2 + $0x158] sm:$0xff] %vm672, %v5675
      %5740 = vst.msk [vmem:[#allocation2 + $0x160] sm:$0xff] %vm672, %v5676
      %5741 = vst.msk [vmem:[#allocation2 + $0x168] sm:$0xff] %vm672, %v5677
      %5742 = vst.msk [vmem:[#allocation2 + $0x170] sm:$0xff] %vm672, %v5678
      %5743 = vst.msk [vmem:[#allocation2 + $0x178] sm:$0xff] %vm672, %v5679
      %5744 = vst.msk [vmem:[#allocation2 + $0x180] sm:$0xff] %vm672, %v5680
      %5745 = vst.msk [vmem:[#allocation2 + $0x188] sm:$0xff] %vm672, %v5681
      %5746 = vst.msk [vmem:[#allocation2 + $0x190] sm:$0xff] %vm672, %v5682
      %5747 = vst.msk [vmem:[#allocation2 + $0x198] sm:$0xff] %vm672, %v5683
      %5748 = vst.msk [vmem:[#allocation2 + $0x1a0] sm:$0xff] %vm672, %v5684
      %5749 = vst.msk [vmem:[#allocation2 + $0x1a8] sm:$0xff] %vm672, %v5685
      %5750 = vst.msk [vmem:[#allocation2 + $0x1b0] sm:$0xff] %vm672, %v5686
      %5751 = vst.msk [vmem:[#allocation2 + $0x1b8] sm:$0xff] %vm672, %v5687
      %5752 = vst.msk [vmem:[#allocation2 + $0x1c0] sm:$0xff] %vm672, %v5688
      %5753 = vst.msk [vmem:[#allocation2 + $0x1c8] sm:$0xff] %vm672, %v5689
      %5754 = vst.msk [vmem:[#allocation2 + $0x1d0] sm:$0xff] %vm672, %v5690
      %5755 = vst.msk [vmem:[#allocation2 + $0x1d8] sm:$0xff] %vm672, %v5691
      %5756 = vst.msk [vmem:[#allocation2 + $0x1e0] sm:$0xff] %vm672, %v5692
      %5757 = vst.msk [vmem:[#allocation2 + $0x1e8] sm:$0xff] %vm672, %v5693
      %5758 = vst.msk [vmem:[#allocation2 + $0x1f0] sm:$0xff] %vm672, %v5694
      %5759 = vst.msk [vmem:[#allocation2 + $0x1f8] sm:$0xff] %vm672, %v5695
      %v5760 = vpack.c.bf16 %v1928, %v1927
      %v5761 = vpack.c.bf16 %v1982, %v1981
      %s5762 = scalar_lea.vmem %s4, 24
      %v5763 = vld [vmem:[%s5762] sm:$0xf]
      %v5765 = vsel %vm672, %v5760, 0
      %v5768 = vsel %vm672, %v5761, 0
      %v5771 = vsel %vm2113, %v5763, 0
      %5773 = vmatprep.subr.bf16.mxu0 0
      %5774 = vmatpush1.bf16.msra.mxu0 %v5771
      %5775 = vmatprep.subr.bf16.mxu0 0
      %5776 = vmatpush1.bf16.msra.mxu0 0
      %5777 = vmatprep.subr.bf16.mxu0 0
      %5778 = vmatpush1.bf16.msra.mxu0 0
      %5779 = vmatprep.subr.bf16.mxu0 0
      %5780 = vmatpush1.bf16.msra.mxu0 0
      %5781 = vmatprep.subr.bf16.mxu0 0
      %5782 = vmatpush1.bf16.msra.mxu0 0
      %5783 = vmatprep.subr.bf16.mxu0 0
      %5784 = vmatpush1.bf16.msra.mxu0 0
      %5785 = vmatprep.subr.bf16.mxu0 0
      %5786 = vmatpush1.bf16.msra.mxu0 0
      %5787 = vmatprep.subr.bf16.mxu0 0
      %5788 = vmatpush1.bf16.msra.mxu0 0
      %5789 = vmatprep.subr.bf16.mxu0 0
      %5790 = vmatpush1.bf16.msra.mxu0 0
      %5791 = vmatprep.subr.bf16.mxu0 0
      %5792 = vmatpush1.bf16.msra.mxu0 0
      %5793 = vmatprep.subr.bf16.mxu0 0
      %5794 = vmatpush1.bf16.msra.mxu0 0
      %5795 = vmatprep.subr.bf16.mxu0 0
      %5796 = vmatpush1.bf16.msra.mxu0 0
      %5797 = vmatprep.subr.bf16.mxu0 0
      %5798 = vmatpush1.bf16.msra.mxu0 0
      %5799 = vmatprep.subr.bf16.mxu0 0
      %5800 = vmatpush1.bf16.msra.mxu0 0
      %5801 = vmatprep.subr.bf16.mxu0 0
      %5802 = vmatpush1.bf16.msra.mxu0 0
      %5803 = vmatprep.subr.bf16.mxu0 0
      %5804 = vmatpush1.bf16.msra.mxu0 0
      %5805 = vmatprep.mubr.bf16.mxu0 0
      %5806 = vmatmul.mubr.bf16.gmra.mrb[0].mxu0 %v2024
      %v5807 = vpop.f32.mrb[0].mxu0
      %v5808 = vadd.f32 0.0, %v5807
      %v5809 = vpop.f32.mrb[0].mxu0
      %v5810 = vpop.f32.mrb[0].mxu0
      %v5811 = vadd.f32 0.0, %v5810
      %v5812 = vpop.f32.mrb[0].mxu0
      %5813 = vmatprep.mubr.bf16.mxu0 0
      %5814 = vmatmul.mubr.bf16.gmra.mrb[0].mxu0 %v2027
      %v5815 = vpop.f32.mrb[0].mxu0
      %v5816 = vadd.f32 0.0, %v5815
      %v5817 = vpop.f32.mrb[0].mxu0
      %v5818 = vpop.f32.mrb[0].mxu0
      %v5819 = vadd.f32 0.0, %v5818
      %v5820 = vpop.f32.mrb[0].mxu0
      %5821 = vmatprep.mubr.bf16.mxu0 0
      %5822 = vmatmul.mubr.bf16.gmra.mrb[0].mxu0 %v2030
      %v5823 = vpop.f32.mrb[0].mxu0
      %v5824 = vadd.f32 0.0, %v5823
      %v5825 = vpop.f32.mrb[0].mxu0
      %v5826 = vpop.f32.mrb[0].mxu0
      %v5827 = vadd.f32 0.0, %v5826
      %v5828 = vpop.f32.mrb[0].mxu0
      %5829 = vmatprep.mubr.bf16.mxu0 0
      %5830 = vmatmul.mubr.bf16.gmra.mrb[0].mxu0 %v2033
      %v5831 = vpop.f32.mrb[0].mxu0
      %v5832 = vadd.f32 0.0, %v5831
      %v5833 = vpop.f32.mrb[0].mxu0
      %v5834 = vpop.f32.mrb[0].mxu0
      %v5835 = vadd.f32 0.0, %v5834
      %v5836 = vpop.f32.mrb[0].mxu0
      %5837 = vmatprep.mubr.bf16.mxu0 0
      %5838 = vmatmul.mubr.bf16.gmra.mrb[0].mxu0 %v2036
      %v5839 = vpop.f32.mrb[0].mxu0
      %v5840 = vadd.f32 0.0, %v5839
      %v5841 = vpop.f32.mrb[0].mxu0
      %v5842 = vpop.f32.mrb[0].mxu0
      %v5843 = vadd.f32 0.0, %v5842
      %v5844 = vpop.f32.mrb[0].mxu0
      %5845 = vmatprep.mubr.bf16.mxu0 0
      %5846 = vmatmul.mubr.bf16.gmra.mrb[0].mxu0 %v2039
      %v5847 = vpop.f32.mrb[0].mxu0
      %v5848 = vadd.f32 0.0, %v5847
      %v5849 = vpop.f32.mrb[0].mxu0
      %v5850 = vpop.f32.mrb[0].mxu0
      %v5851 = vadd.f32 0.0, %v5850
      %v5852 = vpop.f32.mrb[0].mxu0
      %5853 = vmatprep.mubr.bf16.mxu0 0
      %5854 = vmatmul.mubr.bf16.gmra.mrb[0].mxu0 %v2042
      %v5855 = vpop.f32.mrb[0].mxu0
      %v5856 = vadd.f32 0.0, %v5855
      %v5857 = vpop.f32.mrb[0].mxu0
      %v5858 = vpop.f32.mrb[0].mxu0
      %v5859 = vadd.f32 0.0, %v5858
      %v5860 = vpop.f32.mrb[0].mxu0
      %5861 = vmatprep.mubr.bf16.mxu0 0
      %5862 = vmatmul.mubr.bf16.gmra.mrb[0].mxu0 %v2045
      %v5863 = vpop.f32.mrb[0].mxu0
      %v5864 = vadd.f32 0.0, %v5863
      %v5865 = vpop.f32.mrb[0].mxu0
      %v5866 = vpop.f32.mrb[0].mxu0
      %v5867 = vadd.f32 0.0, %v5866
      %v5868 = vpop.f32.mrb[0].mxu0
      %5869 = vmatprep.mubr.bf16.mxu0 0
      %5870 = vmatmul.mubr.bf16.gmra.mrb[0].mxu0 %v2048
      %v5871 = vpop.f32.mrb[0].mxu0
      %v5872 = vadd.f32 0.0, %v5871
      %v5873 = vpop.f32.mrb[0].mxu0
      %v5874 = vpop.f32.mrb[0].mxu0
      %v5875 = vadd.f32 0.0, %v5874
      %v5876 = vpop.f32.mrb[0].mxu0
      %5877 = vmatprep.mubr.bf16.mxu0 0
      %5878 = vmatmul.mubr.bf16.gmra.mrb[0].mxu0 %v2051
      %v5879 = vpop.f32.mrb[0].mxu0
      %v5880 = vadd.f32 0.0, %v5879
      %v5881 = vpop.f32.mrb[0].mxu0
      %v5882 = vpop.f32.mrb[0].mxu0
      %v5883 = vadd.f32 0.0, %v5882
      %v5884 = vpop.f32.mrb[0].mxu0
      %5885 = vmatprep.mubr.bf16.mxu0 0
      %5886 = vmatmul.mubr.bf16.gmra.mrb[0].mxu0 %v2054
      %v5887 = vpop.f32.mrb[0].mxu0
      %v5888 = vadd.f32 0.0, %v5887
      %v5889 = vpop.f32.mrb[0].mxu0
      %v5890 = vpop.f32.mrb[0].mxu0
      %v5891 = vadd.f32 0.0, %v5890
      %v5892 = vpop.f32.mrb[0].mxu0
      %5893 = vmatprep.mubr.bf16.mxu0 0
      %5894 = vmatmul.mubr.bf16.gmra.mrb[0].mxu0 %v2057
      %v5895 = vpop.f32.mrb[0].mxu0
      %v5896 = vadd.f32 0.0, %v5895
      %v5897 = vpop.f32.mrb[0].mxu0
      %v5898 = vpop.f32.mrb[0].mxu0
      %v5899 = vadd.f32 0.0, %v5898
      %v5900 = vpop.f32.mrb[0].mxu0
      %5901 = vmatprep.mubr.bf16.mxu0 0
      %5902 = vmatmul.mubr.bf16.gmra.mrb[0].mxu0 %v2060
      %v5903 = vpop.f32.mrb[0].mxu0
      %v5904 = vadd.f32 0.0, %v5903
      %v5905 = vpop.f32.mrb[0].mxu0
      %v5906 = vpop.f32.mrb[0].mxu0
      %v5907 = vadd.f32 0.0, %v5906
      %v5908 = vpop.f32.mrb[0].mxu0
      %5909 = vmatprep.mubr.bf16.mxu0 0
      %5910 = vmatmul.mubr.bf16.gmra.mrb[0].mxu0 %v2063
      %v5911 = vpop.f32.mrb[0].mxu0
      %v5912 = vadd.f32 0.0, %v5911
      %v5913 = vpop.f32.mrb[0].mxu0
      %v5914 = vpop.f32.mrb[0].mxu0
      %v5915 = vadd.f32 0.0, %v5914
      %v5916 = vpop.f32.mrb[0].mxu0
      %5917 = vmatprep.mubr.bf16.mxu0 0
      %5918 = vmatmul.mubr.bf16.gmra.mrb[0].mxu0 %v4249
      %v5919 = vpop.f32.mrb[0].mxu0
      %v5920 = vadd.f32 0.0, %v5919
      %v5921 = vpop.f32.mrb[0].mxu0
      %v5922 = vpop.f32.mrb[0].mxu0
      %v5923 = vadd.f32 0.0, %v5922
      %v5924 = vpop.f32.mrb[0].mxu0
      %5925 = vmatprep.mubr.bf16.mxu0 0
      %5926 = vmatmul.mubr.bf16.gmra.mrb[0].mxu0 %v5765
      %v5927 = vpop.f32.mrb[0].mxu0
      %v5928 = vadd.f32 0.0, %v5927
      %v5929 = vpop.f32.mrb[0].mxu0
      %v5930 = vpop.f32.mrb[0].mxu0
      %v5931 = vadd.f32 0.0, %v5930
      %v5932 = vpop.f32.mrb[0].mxu0
      %5933 = vmatprep.mubr.bf16.mxu0 0
      %5934 = vmatmul.mubr.bf16.gmra.mrb[0].mxu0 %v2072
      %v5935 = vpop.f32.mrb[0].mxu0
      %v5936 = vadd.f32 0.0, %v5935
      %v5937 = vpop.f32.mrb[0].mxu0
      %v5938 = vpop.f32.mrb[0].mxu0
      %v5939 = vadd.f32 0.0, %v5938
      %v5940 = vpop.f32.mrb[0].mxu0
      %5941 = vmatprep.mubr.bf16.mxu0 0
      %5942 = vmatmul.mubr.bf16.gmra.mrb[0].mxu0 %v2075
      %v5943 = vpop.f32.mrb[0].mxu0
      %v5944 = vadd.f32 0.0, %v5943
      %v5945 = vpop.f32.mrb[0].mxu0
      %v5946 = vpop.f32.mrb[0].mxu0
      %v5947 = vadd.f32 0.0, %v5946
      %v5948 = vpop.f32.mrb[0].mxu0
      %5949 = vmatprep.mubr.bf16.mxu0 0
      %5950 = vmatmul.mubr.bf16.gmra.mrb[0].mxu0 %v2078
      %v5951 = vpop.f32.mrb[0].mxu0
      %v5952 = vadd.f32 0.0, %v5951
      %v5953 = vpop.f32.mrb[0].mxu0
      %v5954 = vpop.f32.mrb[0].mxu0
      %v5955 = vadd.f32 0.0, %v5954
      %v5956 = vpop.f32.mrb[0].mxu0
      %5957 = vmatprep.mubr.bf16.mxu0 0
      %5958 = vmatmul.mubr.bf16.gmra.mrb[0].mxu0 %v2081
      %v5959 = vpop.f32.mrb[0].mxu0
      %v5960 = vadd.f32 0.0, %v5959
      %v5961 = vpop.f32.mrb[0].mxu0
      %v5962 = vpop.f32.mrb[0].mxu0
      %v5963 = vadd.f32 0.0, %v5962
      %v5964 = vpop.f32.mrb[0].mxu0
      %5965 = vmatprep.mubr.bf16.mxu0 0
      %5966 = vmatmul.mubr.bf16.gmra.mrb[0].mxu0 %v2084
      %v5967 = vpop.f32.mrb[0].mxu0
      %v5968 = vadd.f32 0.0, %v5967
      %v5969 = vpop.f32.mrb[0].mxu0
      %v5970 = vpop.f32.mrb[0].mxu0
      %v5971 = vadd.f32 0.0, %v5970
      %v5972 = vpop.f32.mrb[0].mxu0
      %5973 = vmatprep.mubr.bf16.mxu0 0
      %5974 = vmatmul.mubr.bf16.gmra.mrb[0].mxu0 %v2087
      %v5975 = vpop.f32.mrb[0].mxu0
      %v5976 = vadd.f32 0.0, %v5975
      %v5977 = vpop.f32.mrb[0].mxu0
      %v5978 = vpop.f32.mrb[0].mxu0
      %v5979 = vadd.f32 0.0, %v5978
      %v5980 = vpop.f32.mrb[0].mxu0
      %5981 = vmatprep.mubr.bf16.mxu0 0
      %5982 = vmatmul.mubr.bf16.gmra.mrb[0].mxu0 %v2090
      %v5983 = vpop.f32.mrb[0].mxu0
      %v5984 = vadd.f32 0.0, %v5983
      %v5985 = vpop.f32.mrb[0].mxu0
      %v5986 = vpop.f32.mrb[0].mxu0
      %v5987 = vadd.f32 0.0, %v5986
      %v5988 = vpop.f32.mrb[0].mxu0
      %5989 = vmatprep.mubr.bf16.mxu0 0
      %5990 = vmatmul.mubr.bf16.gmra.mrb[0].mxu0 %v2093
      %v5991 = vpop.f32.mrb[0].mxu0
      %v5992 = vadd.f32 0.0, %v5991
      %v5993 = vpop.f32.mrb[0].mxu0
      %v5994 = vpop.f32.mrb[0].mxu0
      %v5995 = vadd.f32 0.0, %v5994
      %v5996 = vpop.f32.mrb[0].mxu0
      %5997 = vmatprep.mubr.bf16.mxu0 0
      %5998 = vmatmul.mubr.bf16.gmra.mrb[0].mxu0 %v2096
      %v5999 = vpop.f32.mrb[0].mxu0
      %v6000 = vadd.f32 0.0, %v5999
      %v6001 = vpop.f32.mrb[0].mxu0
      %v6002 = vpop.f32.mrb[0].mxu0
      %v6003 = vadd.f32 0.0, %v6002
      %v6004 = vpop.f32.mrb[0].mxu0
      %6005 = vmatprep.mubr.bf16.mxu0 0
      %6006 = vmatmul.mubr.bf16.gmra.mrb[0].mxu0 %v2099
      %v6007 = vpop.f32.mrb[0].mxu0
      %v6008 = vadd.f32 0.0, %v6007
      %v6009 = vpop.f32.mrb[0].mxu0
      %v6010 = vpop.f32.mrb[0].mxu0
      %v6011 = vadd.f32 0.0, %v6010
      %v6012 = vpop.f32.mrb[0].mxu0
      %6013 = vmatprep.mubr.bf16.mxu0 0
      %6014 = vmatmul.mubr.bf16.gmra.mrb[0].mxu0 %v2102
      %v6015 = vpop.f32.mrb[0].mxu0
      %v6016 = vadd.f32 0.0, %v6015
      %v6017 = vpop.f32.mrb[0].mxu0
      %v6018 = vpop.f32.mrb[0].mxu0
      %v6019 = vadd.f32 0.0, %v6018
      %v6020 = vpop.f32.mrb[0].mxu0
      %6021 = vmatprep.mubr.bf16.mxu0 0
      %6022 = vmatmul.mubr.bf16.gmra.mrb[0].mxu0 %v2105
      %v6023 = vpop.f32.mrb[0].mxu0
      %v6024 = vadd.f32 0.0, %v6023
      %v6025 = vpop.f32.mrb[0].mxu0
      %v6026 = vpop.f32.mrb[0].mxu0
      %v6027 = vadd.f32 0.0, %v6026
      %v6028 = vpop.f32.mrb[0].mxu0
      %6029 = vmatprep.mubr.bf16.mxu0 0
      %6030 = vmatmul.mubr.bf16.gmra.mrb[0].mxu0 %v2108
      %v6031 = vpop.f32.mrb[0].mxu0
      %v6032 = vadd.f32 0.0, %v6031
      %v6033 = vpop.f32.mrb[0].mxu0
      %v6034 = vpop.f32.mrb[0].mxu0
      %v6035 = vadd.f32 0.0, %v6034
      %v6036 = vpop.f32.mrb[0].mxu0
      %6037 = vmatprep.mubr.bf16.mxu0 0
      %6038 = vmatmul.mubr.bf16.gmra.mrb[0].mxu0 %v2111
      %v6039 = vpop.f32.mrb[0].mxu0
      %v6040 = vadd.f32 0.0, %v6039
      %v6041 = vpop.f32.mrb[0].mxu0
      %v6042 = vpop.f32.mrb[0].mxu0
      %v6043 = vadd.f32 0.0, %v6042
      %v6044 = vpop.f32.mrb[0].mxu0
      %6045 = vmatprep.mubr.bf16.mxu0 0
      %6046 = vmatmul.mubr.bf16.gmra.mrb[0].mxu0 %v4252
      %v6047 = vpop.f32.mrb[0].mxu0
      %v6048 = vadd.f32 0.0, %v6047
      %v6049 = vpop.f32.mrb[0].mxu0
      %v6050 = vpop.f32.mrb[0].mxu0
      %v6051 = vadd.f32 0.0, %v6050
      %v6052 = vpop.f32.mrb[0].mxu0
      %6053 = vmatprep.mubr.bf16.mxu0 0
      %6054 = vmatmul.mubr.bf16.gmra.mrb[0].mxu0 %v5768
      %v6055 = vpop.f32.mrb[0].mxu0
      %v6056 = vadd.f32 0.0, %v6055
      %v6057 = vpop.f32.mrb[0].mxu0
      %v6058 = vpop.f32.mrb[0].mxu0
      %v6059 = vadd.f32 0.0, %v6058
      %v6060 = vpop.f32.mrb[0].mxu0
      %6061 = vdwg.mxu0
      %v6062 = vld [vmem:[#allocation2] sm:$0xff]
      %v6063 = vld [vmem:[#allocation2 + $0x8] sm:$0xff]
      %v6064 = vld [vmem:[#allocation2 + $0x10] sm:$0xff]
      %v6065 = vld [vmem:[#allocation2 + $0x18] sm:$0xff]
      %v6066 = vld [vmem:[#allocation2 + $0x20] sm:$0xff]
      %v6067 = vld [vmem:[#allocation2 + $0x28] sm:$0xff]
      %v6068 = vld [vmem:[#allocation2 + $0x30] sm:$0xff]
      %v6069 = vld [vmem:[#allocation2 + $0x38] sm:$0xff]
      %v6070 = vld [vmem:[#allocation2 + $0x40] sm:$0xff]
      %v6071 = vld [vmem:[#allocation2 + $0x48] sm:$0xff]
      %v6072 = vld [vmem:[#allocation2 + $0x50] sm:$0xff]
      %v6073 = vld [vmem:[#allocation2 + $0x58] sm:$0xff]
      %v6074 = vld [vmem:[#allocation2 + $0x60] sm:$0xff]
      %v6075 = vld [vmem:[#allocation2 + $0x68] sm:$0xff]
      %v6076 = vld [vmem:[#allocation2 + $0x70] sm:$0xff]
      %v6077 = vld [vmem:[#allocation2 + $0x78] sm:$0xff]
      %v6078 = vld [vmem:[#allocation2 + $0x80] sm:$0xff]
      %v6079 = vld [vmem:[#allocation2 + $0x88] sm:$0xff]
      %v6080 = vld [vmem:[#allocation2 + $0x90] sm:$0xff]
      %v6081 = vld [vmem:[#allocation2 + $0x98] sm:$0xff]
      %v6082 = vld [vmem:[#allocation2 + $0xa0] sm:$0xff]
      %v6083 = vld [vmem:[#allocation2 + $0xa8] sm:$0xff]
      %v6084 = vld [vmem:[#allocation2 + $0xb0] sm:$0xff]
      %v6085 = vld [vmem:[#allocation2 + $0xb8] sm:$0xff]
      %v6086 = vld [vmem:[#allocation2 + $0xc0] sm:$0xff]
      %v6087 = vld [vmem:[#allocation2 + $0xc8] sm:$0xff]
      %v6088 = vld [vmem:[#allocation2 + $0xd0] sm:$0xff]
      %v6089 = vld [vmem:[#allocation2 + $0xd8] sm:$0xff]
      %v6090 = vld [vmem:[#allocation2 + $0xe0] sm:$0xff]
      %v6091 = vld [vmem:[#allocation2 + $0xe8] sm:$0xff]
      %v6092 = vld [vmem:[#allocation2 + $0xf0] sm:$0xff]
      %v6093 = vld [vmem:[#allocation2 + $0xf8] sm:$0xff]
      %v6094 = vld [vmem:[#allocation2 + $0x100] sm:$0xff]
      %v6095 = vld [vmem:[#allocation2 + $0x108] sm:$0xff]
      %v6096 = vld [vmem:[#allocation2 + $0x110] sm:$0xff]
      %v6097 = vld [vmem:[#allocation2 + $0x118] sm:$0xff]
      %v6098 = vld [vmem:[#allocation2 + $0x120] sm:$0xff]
      %v6099 = vld [vmem:[#allocation2 + $0x128] sm:$0xff]
      %v6100 = vld [vmem:[#allocation2 + $0x130] sm:$0xff]
      %v6101 = vld [vmem:[#allocation2 + $0x138] sm:$0xff]
      %v6102 = vld [vmem:[#allocation2 + $0x140] sm:$0xff]
      %v6103 = vld [vmem:[#allocation2 + $0x148] sm:$0xff]
      %v6104 = vld [vmem:[#allocation2 + $0x150] sm:$0xff]
      %v6105 = vld [vmem:[#allocation2 + $0x158] sm:$0xff]
      %v6106 = vld [vmem:[#allocation2 + $0x160] sm:$0xff]
      %v6107 = vld [vmem:[#allocation2 + $0x168] sm:$0xff]
      %v6108 = vld [vmem:[#allocation2 + $0x170] sm:$0xff]
      %v6109 = vld [vmem:[#allocation2 + $0x178] sm:$0xff]
      %v6110 = vld [vmem:[#allocation2 + $0x180] sm:$0xff]
      %v6111 = vld [vmem:[#allocation2 + $0x188] sm:$0xff]
      %v6112 = vld [vmem:[#allocation2 + $0x190] sm:$0xff]
      %v6113 = vld [vmem:[#allocation2 + $0x198] sm:$0xff]
      %v6114 = vld [vmem:[#allocation2 + $0x1a0] sm:$0xff]
      %v6115 = vld [vmem:[#allocation2 + $0x1a8] sm:$0xff]
      %v6116 = vld [vmem:[#allocation2 + $0x1b0] sm:$0xff]
      %v6117 = vld [vmem:[#allocation2 + $0x1b8] sm:$0xff]
      %v6118 = vld [vmem:[#allocation2 + $0x1c0] sm:$0xff]
      %v6119 = vld [vmem:[#allocation2 + $0x1c8] sm:$0xff]
      %v6120 = vld [vmem:[#allocation2 + $0x1d0] sm:$0xff]
      %v6121 = vld [vmem:[#allocation2 + $0x1d8] sm:$0xff]
      %v6122 = vld [vmem:[#allocation2 + $0x1e0] sm:$0xff]
      %v6123 = vld [vmem:[#allocation2 + $0x1e8] sm:$0xff]
      %v6124 = vld [vmem:[#allocation2 + $0x1f0] sm:$0xff]
      %v6125 = vld [vmem:[#allocation2 + $0x1f8] sm:$0xff]
      %v6126 = vadd.f32 %v6062, %v5808
      %v6127 = vadd.f32 %v6063, %v5811
      %v6128 = vadd.f32 %v6064, %v5816
      %v6129 = vadd.f32 %v6065, %v5819
      %v6130 = vadd.f32 %v6066, %v5824
      %v6131 = vadd.f32 %v6067, %v5827
      %v6132 = vadd.f32 %v6068, %v5832
      %v6133 = vadd.f32 %v6069, %v5835
      %v6134 = vadd.f32 %v6070, %v5840
      %v6135 = vadd.f32 %v6071, %v5843
      %v6136 = vadd.f32 %v6072, %v5848
      %v6137 = vadd.f32 %v6073, %v5851
      %v6138 = vadd.f32 %v6074, %v5856
      %v6139 = vadd.f32 %v6075, %v5859
      %v6140 = vadd.f32 %v6076, %v5864
      %v6141 = vadd.f32 %v6077, %v5867
      %v6142 = vadd.f32 %v6078, %v5872
      %v6143 = vadd.f32 %v6079, %v5875
      %v6144 = vadd.f32 %v6080, %v5880
      %v6145 = vadd.f32 %v6081, %v5883
      %v6146 = vadd.f32 %v6082, %v5888
      %v6147 = vadd.f32 %v6083, %v5891
      %v6148 = vadd.f32 %v6084, %v5896
      %v6149 = vadd.f32 %v6085, %v5899
      %v6150 = vadd.f32 %v6086, %v5904
      %v6151 = vadd.f32 %v6087, %v5907
      %v6152 = vadd.f32 %v6088, %v5912
      %v6153 = vadd.f32 %v6089, %v5915
      %v6154 = vadd.f32 %v6090, %v5920
      %v6155 = vadd.f32 %v6091, %v5923
      %v6156 = vadd.f32 %v6092, %v5928
      %v6157 = vadd.f32 %v6093, %v5931
      %v6158 = vadd.f32 %v6094, %v5936
      %v6159 = vadd.f32 %v6095, %v5939
      %v6160 = vadd.f32 %v6096, %v5944
      %v6161 = vadd.f32 %v6097, %v5947
      %v6162 = vadd.f32 %v6098, %v5952
      %v6163 = vadd.f32 %v6099, %v5955
      %v6164 = vadd.f32 %v6100, %v5960
      %v6165 = vadd.f32 %v6101, %v5963
      %v6166 = vadd.f32 %v6102, %v5968
      %v6167 = vadd.f32 %v6103, %v5971
      %v6168 = vadd.f32 %v6104, %v5976
      %v6169 = vadd.f32 %v6105, %v5979
      %v6170 = vadd.f32 %v6106, %v5984
      %v6171 = vadd.f32 %v6107, %v5987
      %v6172 = vadd.f32 %v6108, %v5992
      %v6173 = vadd.f32 %v6109, %v5995
      %v6174 = vadd.f32 %v6110, %v6000
      %v6175 = vadd.f32 %v6111, %v6003
      %v6176 = vadd.f32 %v6112, %v6008
      %v6177 = vadd.f32 %v6113, %v6011
      %v6178 = vadd.f32 %v6114, %v6016
      %v6179 = vadd.f32 %v6115, %v6019
      %v6180 = vadd.f32 %v6116, %v6024
      %v6181 = vadd.f32 %v6117, %v6027
      %v6182 = vadd.f32 %v6118, %v6032
      %v6183 = vadd.f32 %v6119, %v6035
      %v6184 = vadd.f32 %v6120, %v6040
      %v6185 = vadd.f32 %v6121, %v6043
      %v6186 = vadd.f32 %v6122, %v6048
      %v6187 = vadd.f32 %v6123, %v6051
      %v6188 = vadd.f32 %v6124, %v6056
      %v6189 = vadd.f32 %v6125, %v6059
      %6190 = vst.msk [vmem:[#allocation2] sm:$0xff] %vm672, %v6126
      %6191 = vst.msk [vmem:[#allocation2 + $0x8] sm:$0xff] %vm672, %v6127
      %6192 = vst.msk [vmem:[#allocation2 + $0x10] sm:$0xff] %vm672, %v6128
      %6193 = vst.msk [vmem:[#allocation2 + $0x18] sm:$0xff] %vm672, %v6129
      %6194 = vst.msk [vmem:[#allocation2 + $0x20] sm:$0xff] %vm672, %v6130
      %6195 = vst.msk [vmem:[#allocation2 + $0x28] sm:$0xff] %vm672, %v6131
      %6196 = vst.msk [vmem:[#allocation2 + $0x30] sm:$0xff] %vm672, %v6132
      %6197 = vst.msk [vmem:[#allocation2 + $0x38] sm:$0xff] %vm672, %v6133
      %6198 = vst.msk [vmem:[#allocation2 + $0x40] sm:$0xff] %vm672, %v6134
      %6199 = vst.msk [vmem:[#allocation2 + $0x48] sm:$0xff] %vm672, %v6135
      %6200 = vst.msk [vmem:[#allocation2 + $0x50] sm:$0xff] %vm672, %v6136
      %6201 = vst.msk [vmem:[#allocation2 + $0x58] sm:$0xff] %vm672, %v6137
      %6202 = vst.msk [vmem:[#allocation2 + $0x60] sm:$0xff] %vm672, %v6138
      %6203 = vst.msk [vmem:[#allocation2 + $0x68] sm:$0xff] %vm672, %v6139
      %6204 = vst.msk [vmem:[#allocation2 + $0x70] sm:$0xff] %vm672, %v6140
      %6205 = vst.msk [vmem:[#allocation2 + $0x78] sm:$0xff] %vm672, %v6141
      %6206 = vst.msk [vmem:[#allocation2 + $0x80] sm:$0xff] %vm672, %v6142
      %6207 = vst.msk [vmem:[#allocation2 + $0x88] sm:$0xff] %vm672, %v6143
      %6208 = vst.msk [vmem:[#allocation2 + $0x90] sm:$0xff] %vm672, %v6144
      %6209 = vst.msk [vmem:[#allocation2 + $0x98] sm:$0xff] %vm672, %v6145
      %6210 = vst.msk [vmem:[#allocation2 + $0xa0] sm:$0xff] %vm672, %v6146
      %6211 = vst.msk [vmem:[#allocation2 + $0xa8] sm:$0xff] %vm672, %v6147
      %6212 = vst.msk [vmem:[#allocation2 + $0xb0] sm:$0xff] %vm672, %v6148
      %6213 = vst.msk [vmem:[#allocation2 + $0xb8] sm:$0xff] %vm672, %v6149
      %6214 = vst.msk [vmem:[#allocation2 + $0xc0] sm:$0xff] %vm672, %v6150
      %6215 = vst.msk [vmem:[#allocation2 + $0xc8] sm:$0xff] %vm672, %v6151
      %6216 = vst.msk [vmem:[#allocation2 + $0xd0] sm:$0xff] %vm672, %v6152
      %6217 = vst.msk [vmem:[#allocation2 + $0xd8] sm:$0xff] %vm672, %v6153
      %6218 = vst.msk [vmem:[#allocation2 + $0xe0] sm:$0xff] %vm672, %v6154
      %6219 = vst.msk [vmem:[#allocation2 + $0xe8] sm:$0xff] %vm672, %v6155
      %6220 = vst.msk [vmem:[#allocation2 + $0xf0] sm:$0xff] %vm672, %v6156
      %6221 = vst.msk [vmem:[#allocation2 + $0xf8] sm:$0xff] %vm672, %v6157
      %6222 = vst.msk [vmem:[#allocation2 + $0x100] sm:$0xff] %vm672, %v6158
      %6223 = vst.msk [vmem:[#allocation2 + $0x108] sm:$0xff] %vm672, %v6159
      %6224 = vst.msk [vmem:[#allocation2 + $0x110] sm:$0xff] %vm672, %v6160
      %6225 = vst.msk [vmem:[#allocation2 + $0x118] sm:$0xff] %vm672, %v6161
      %6226 = vst.msk [vmem:[#allocation2 + $0x120] sm:$0xff] %vm672, %v6162
      %6227 = vst.msk [vmem:[#allocation2 + $0x128] sm:$0xff] %vm672, %v6163
      %6228 = vst.msk [vmem:[#allocation2 + $0x130] sm:$0xff] %vm672, %v6164
      %6229 = vst.msk [vmem:[#allocation2 + $0x138] sm:$0xff] %vm672, %v6165
      %6230 = vst.msk [vmem:[#allocation2 + $0x140] sm:$0xff] %vm672, %v6166
      %6231 = vst.msk [vmem:[#allocation2 + $0x148] sm:$0xff] %vm672, %v6167
      %6232 = vst.msk [vmem:[#allocation2 + $0x150] sm:$0xff] %vm672, %v6168
      %6233 = vst.msk [vmem:[#allocation2 + $0x158] sm:$0xff] %vm672, %v6169
      %6234 = vst.msk [vmem:[#allocation2 + $0x160] sm:$0xff] %vm672, %v6170
      %6235 = vst.msk [vmem:[#allocation2 + $0x168] sm:$0xff] %vm672, %v6171
      %6236 = vst.msk [vmem:[#allocation2 + $0x170] sm:$0xff] %vm672, %v6172
      %6237 = vst.msk [vmem:[#allocation2 + $0x178] sm:$0xff] %vm672, %v6173
      %6238 = vst.msk [vmem:[#allocation2 + $0x180] sm:$0xff] %vm672, %v6174
      %6239 = vst.msk [vmem:[#allocation2 + $0x188] sm:$0xff] %vm672, %v6175
      %6240 = vst.msk [vmem:[#allocation2 + $0x190] sm:$0xff] %vm672, %v6176
      %6241 = vst.msk [vmem:[#allocation2 + $0x198] sm:$0xff] %vm672, %v6177
      %6242 = vst.msk [vmem:[#allocation2 + $0x1a0] sm:$0xff] %vm672, %v6178
      %6243 = vst.msk [vmem:[#allocation2 + $0x1a8] sm:$0xff] %vm672, %v6179
      %6244 = vst.msk [vmem:[#allocation2 + $0x1b0] sm:$0xff] %vm672, %v6180
      %6245 = vst.msk [vmem:[#allocation2 + $0x1b8] sm:$0xff] %vm672, %v6181
      %6246 = vst.msk [vmem:[#allocation2 + $0x1c0] sm:$0xff] %vm672, %v6182
      %6247 = vst.msk [vmem:[#allocation2 + $0x1c8] sm:$0xff] %vm672, %v6183
      %6248 = vst.msk [vmem:[#allocation2 + $0x1d0] sm:$0xff] %vm672, %v6184
      %6249 = vst.msk [vmem:[#allocation2 + $0x1d8] sm:$0xff] %vm672, %v6185
      %6250 = vst.msk [vmem:[#allocation2 + $0x1e0] sm:$0xff] %vm672, %v6186
      %6251 = vst.msk [vmem:[#allocation2 + $0x1e8] sm:$0xff] %vm672, %v6187
      %6252 = vst.msk [vmem:[#allocation2 + $0x1f0] sm:$0xff] %vm672, %v6188
      %6253 = vst.msk [vmem:[#allocation2 + $0x1f8] sm:$0xff] %vm672, %v6189
      %v6260 = vrot.slane %v1927, 1
      %v6261 = vrot.slane %v1928, 1
      %v6262 = vsel %vm2566, %v6260, %v6261
      %v6263 = vrot.slane %v1929, 1
      %v6264 = vsel %vm2566, %v6261, %v6263
      %v6265 = vrot.slane %v1981, 1
      %v6266 = vrot.slane %v1982, 1
      %v6267 = vsel %vm2566, %v6265, %v6266
      %v6268 = vrot.slane %v1983, 1
      %v6269 = vsel %vm2566, %v6266, %v6268
      %v6274 = vpack.c.bf16 %v6264, %v6262
      %v6275 = vpack.c.bf16 %v6269, %v6267
      %s6276 = scalar_lea.vmem %s4, 28
      %v6277 = vld [vmem:[%s6276] sm:$0xf]
      %v6279 = vsel %vm672, %v6274, 0
      %v6282 = vsel %vm672, %v6275, 0
      %v6285 = vsel %vm2113, %v6277, 0
      %6287 = vmatprep.subr.bf16.mxu0 0
      %6288 = vmatpush1.bf16.msra.mxu0 %v6285
      %6289 = vmatprep.subr.bf16.mxu0 0
      %6290 = vmatpush1.bf16.msra.mxu0 0
      %6291 = vmatprep.subr.bf16.mxu0 0
      %6292 = vmatpush1.bf16.msra.mxu0 0
      %6293 = vmatprep.subr.bf16.mxu0 0
      %6294 = vmatpush1.bf16.msra.mxu0 0
      %6295 = vmatprep.subr.bf16.mxu0 0
      %6296 = vmatpush1.bf16.msra.mxu0 0
      %6297 = vmatprep.subr.bf16.mxu0 0
      %6298 = vmatpush1.bf16.msra.mxu0 0
      %6299 = vmatprep.subr.bf16.mxu0 0
      %6300 = vmatpush1.bf16.msra.mxu0 0
      %6301 = vmatprep.subr.bf16.mxu0 0
      %6302 = vmatpush1.bf16.msra.mxu0 0
      %6303 = vmatprep.subr.bf16.mxu0 0
      %6304 = vmatpush1.bf16.msra.mxu0 0
      %6305 = vmatprep.subr.bf16.mxu0 0
      %6306 = vmatpush1.bf16.msra.mxu0 0
      %6307 = vmatprep.subr.bf16.mxu0 0
      %6308 = vmatpush1.bf16.msra.mxu0 0
      %6309 = vmatprep.subr.bf16.mxu0 0
      %6310 = vmatpush1.bf16.msra.mxu0 0
      %6311 = vmatprep.subr.bf16.mxu0 0
      %6312 = vmatpush1.bf16.msra.mxu0 0
      %6313 = vmatprep.subr.bf16.mxu0 0
      %6314 = vmatpush1.bf16.msra.mxu0 0
      %6315 = vmatprep.subr.bf16.mxu0 0
      %6316 = vmatpush1.bf16.msra.mxu0 0
      %6317 = vmatprep.subr.bf16.mxu0 0
      %6318 = vmatpush1.bf16.msra.mxu0 0
      %6319 = vmatprep.mubr.bf16.mxu0 0
      %6320 = vmatmul.mubr.bf16.gmra.mrb[0].mxu0 %v2832
      %v6321 = vpop.f32.mrb[0].mxu0
      %v6322 = vadd.f32 0.0, %v6321
      %v6323 = vpop.f32.mrb[0].mxu0
      %v6324 = vpop.f32.mrb[0].mxu0
      %v6325 = vadd.f32 0.0, %v6324
      %v6326 = vpop.f32.mrb[0].mxu0
      %6327 = vmatprep.mubr.bf16.mxu0 0
      %6328 = vmatmul.mubr.bf16.gmra.mrb[0].mxu0 %v2835
      %v6329 = vpop.f32.mrb[0].mxu0
      %v6330 = vadd.f32 0.0, %v6329
      %v6331 = vpop.f32.mrb[0].mxu0
      %v6332 = vpop.f32.mrb[0].mxu0
      %v6333 = vadd.f32 0.0, %v6332
      %v6334 = vpop.f32.mrb[0].mxu0
      %6335 = vmatprep.mubr.bf16.mxu0 0
      %6336 = vmatmul.mubr.bf16.gmra.mrb[0].mxu0 %v2838
      %v6337 = vpop.f32.mrb[0].mxu0
      %v6338 = vadd.f32 0.0, %v6337
      %v6339 = vpop.f32.mrb[0].mxu0
      %v6340 = vpop.f32.mrb[0].mxu0
      %v6341 = vadd.f32 0.0, %v6340
      %v6342 = vpop.f32.mrb[0].mxu0
      %6343 = vmatprep.mubr.bf16.mxu0 0
      %6344 = vmatmul.mubr.bf16.gmra.mrb[0].mxu0 %v2841
      %v6345 = vpop.f32.mrb[0].mxu0
      %v6346 = vadd.f32 0.0, %v6345
      %v6347 = vpop.f32.mrb[0].mxu0
      %v6348 = vpop.f32.mrb[0].mxu0
      %v6349 = vadd.f32 0.0, %v6348
      %v6350 = vpop.f32.mrb[0].mxu0
      %6351 = vmatprep.mubr.bf16.mxu0 0
      %6352 = vmatmul.mubr.bf16.gmra.mrb[0].mxu0 %v2844
      %v6353 = vpop.f32.mrb[0].mxu0
      %v6354 = vadd.f32 0.0, %v6353
      %v6355 = vpop.f32.mrb[0].mxu0
      %v6356 = vpop.f32.mrb[0].mxu0
      %v6357 = vadd.f32 0.0, %v6356
      %v6358 = vpop.f32.mrb[0].mxu0
      %6359 = vmatprep.mubr.bf16.mxu0 0
      %6360 = vmatmul.mubr.bf16.gmra.mrb[0].mxu0 %v2847
      %v6361 = vpop.f32.mrb[0].mxu0
      %v6362 = vadd.f32 0.0, %v6361
      %v6363 = vpop.f32.mrb[0].mxu0
      %v6364 = vpop.f32.mrb[0].mxu0
      %v6365 = vadd.f32 0.0, %v6364
      %v6366 = vpop.f32.mrb[0].mxu0
      %6367 = vmatprep.mubr.bf16.mxu0 0
      %6368 = vmatmul.mubr.bf16.gmra.mrb[0].mxu0 %v2850
      %v6369 = vpop.f32.mrb[0].mxu0
      %v6370 = vadd.f32 0.0, %v6369
      %v6371 = vpop.f32.mrb[0].mxu0
      %v6372 = vpop.f32.mrb[0].mxu0
      %v6373 = vadd.f32 0.0, %v6372
      %v6374 = vpop.f32.mrb[0].mxu0
      %6375 = vmatprep.mubr.bf16.mxu0 0
      %6376 = vmatmul.mubr.bf16.gmra.mrb[0].mxu0 %v2853
      %v6377 = vpop.f32.mrb[0].mxu0
      %v6378 = vadd.f32 0.0, %v6377
      %v6379 = vpop.f32.mrb[0].mxu0
      %v6380 = vpop.f32.mrb[0].mxu0
      %v6381 = vadd.f32 0.0, %v6380
      %v6382 = vpop.f32.mrb[0].mxu0
      %6383 = vmatprep.mubr.bf16.mxu0 0
      %6384 = vmatmul.mubr.bf16.gmra.mrb[0].mxu0 %v2856
      %v6385 = vpop.f32.mrb[0].mxu0
      %v6386 = vadd.f32 0.0, %v6385
      %v6387 = vpop.f32.mrb[0].mxu0
      %v6388 = vpop.f32.mrb[0].mxu0
      %v6389 = vadd.f32 0.0, %v6388
      %v6390 = vpop.f32.mrb[0].mxu0
      %6391 = vmatprep.mubr.bf16.mxu0 0
      %6392 = vmatmul.mubr.bf16.gmra.mrb[0].mxu0 %v2859
      %v6393 = vpop.f32.mrb[0].mxu0
      %v6394 = vadd.f32 0.0, %v6393
      %v6395 = vpop.f32.mrb[0].mxu0
      %v6396 = vpop.f32.mrb[0].mxu0
      %v6397 = vadd.f32 0.0, %v6396
      %v6398 = vpop.f32.mrb[0].mxu0
      %6399 = vmatprep.mubr.bf16.mxu0 0
      %6400 = vmatmul.mubr.bf16.gmra.mrb[0].mxu0 %v2862
      %v6401 = vpop.f32.mrb[0].mxu0
      %v6402 = vadd.f32 0.0, %v6401
      %v6403 = vpop.f32.mrb[0].mxu0
      %v6404 = vpop.f32.mrb[0].mxu0
      %v6405 = vadd.f32 0.0, %v6404
      %v6406 = vpop.f32.mrb[0].mxu0
      %6407 = vmatprep.mubr.bf16.mxu0 0
      %6408 = vmatmul.mubr.bf16.gmra.mrb[0].mxu0 %v2865
      %v6409 = vpop.f32.mrb[0].mxu0
      %v6410 = vadd.f32 0.0, %v6409
      %v6411 = vpop.f32.mrb[0].mxu0
      %v6412 = vpop.f32.mrb[0].mxu0
      %v6413 = vadd.f32 0.0, %v6412
      %v6414 = vpop.f32.mrb[0].mxu0
      %6415 = vmatprep.mubr.bf16.mxu0 0
      %6416 = vmatmul.mubr.bf16.gmra.mrb[0].mxu0 %v2868
      %v6417 = vpop.f32.mrb[0].mxu0
      %v6418 = vadd.f32 0.0, %v6417
      %v6419 = vpop.f32.mrb[0].mxu0
      %v6420 = vpop.f32.mrb[0].mxu0
      %v6421 = vadd.f32 0.0, %v6420
      %v6422 = vpop.f32.mrb[0].mxu0
      %6423 = vmatprep.mubr.bf16.mxu0 0
      %6424 = vmatmul.mubr.bf16.gmra.mrb[0].mxu0 %v2871
      %v6425 = vpop.f32.mrb[0].mxu0
      %v6426 = vadd.f32 0.0, %v6425
      %v6427 = vpop.f32.mrb[0].mxu0
      %v6428 = vpop.f32.mrb[0].mxu0
      %v6429 = vadd.f32 0.0, %v6428
      %v6430 = vpop.f32.mrb[0].mxu0
      %6431 = vmatprep.mubr.bf16.mxu0 0
      %6432 = vmatmul.mubr.bf16.gmra.mrb[0].mxu0 %v4763
      %v6433 = vpop.f32.mrb[0].mxu0
      %v6434 = vadd.f32 0.0, %v6433
      %v6435 = vpop.f32.mrb[0].mxu0
      %v6436 = vpop.f32.mrb[0].mxu0
      %v6437 = vadd.f32 0.0, %v6436
      %v6438 = vpop.f32.mrb[0].mxu0
      %6439 = vmatprep.mubr.bf16.mxu0 0
      %6440 = vmatmul.mubr.bf16.gmra.mrb[0].mxu0 %v6279
      %v6441 = vpop.f32.mrb[0].mxu0
      %v6442 = vadd.f32 0.0, %v6441
      %v6443 = vpop.f32.mrb[0].mxu0
      %v6444 = vpop.f32.mrb[0].mxu0
      %v6445 = vadd.f32 0.0, %v6444
      %v6446 = vpop.f32.mrb[0].mxu0
      %6447 = vmatprep.mubr.bf16.mxu0 0
      %6448 = vmatmul.mubr.bf16.gmra.mrb[0].mxu0 %v2880
      %v6449 = vpop.f32.mrb[0].mxu0
      %v6450 = vadd.f32 0.0, %v6449
      %v6451 = vpop.f32.mrb[0].mxu0
      %v6452 = vpop.f32.mrb[0].mxu0
      %v6453 = vadd.f32 0.0, %v6452
      %v6454 = vpop.f32.mrb[0].mxu0
      %6455 = vmatprep.mubr.bf16.mxu0 0
      %6456 = vmatmul.mubr.bf16.gmra.mrb[0].mxu0 %v2883
      %v6457 = vpop.f32.mrb[0].mxu0
      %v6458 = vadd.f32 0.0, %v6457
      %v6459 = vpop.f32.mrb[0].mxu0
      %v6460 = vpop.f32.mrb[0].mxu0
      %v6461 = vadd.f32 0.0, %v6460
      %v6462 = vpop.f32.mrb[0].mxu0
      %6463 = vmatprep.mubr.bf16.mxu0 0
      %6464 = vmatmul.mubr.bf16.gmra.mrb[0].mxu0 %v2886
      %v6465 = vpop.f32.mrb[0].mxu0
      %v6466 = vadd.f32 0.0, %v6465
      %v6467 = vpop.f32.mrb[0].mxu0
      %v6468 = vpop.f32.mrb[0].mxu0
      %v6469 = vadd.f32 0.0, %v6468
      %v6470 = vpop.f32.mrb[0].mxu0
      %6471 = vmatprep.mubr.bf16.mxu0 0
      %6472 = vmatmul.mubr.bf16.gmra.mrb[0].mxu0 %v2889
      %v6473 = vpop.f32.mrb[0].mxu0
      %v6474 = vadd.f32 0.0, %v6473
      %v6475 = vpop.f32.mrb[0].mxu0
      %v6476 = vpop.f32.mrb[0].mxu0
      %v6477 = vadd.f32 0.0, %v6476
      %v6478 = vpop.f32.mrb[0].mxu0
      %6479 = vmatprep.mubr.bf16.mxu0 0
      %6480 = vmatmul.mubr.bf16.gmra.mrb[0].mxu0 %v2892
      %v6481 = vpop.f32.mrb[0].mxu0
      %v6482 = vadd.f32 0.0, %v6481
      %v6483 = vpop.f32.mrb[0].mxu0
      %v6484 = vpop.f32.mrb[0].mxu0
      %v6485 = vadd.f32 0.0, %v6484
      %v6486 = vpop.f32.mrb[0].mxu0
      %6487 = vmatprep.mubr.bf16.mxu0 0
      %6488 = vmatmul.mubr.bf16.gmra.mrb[0].mxu0 %v2895
      %v6489 = vpop.f32.mrb[0].mxu0
      %v6490 = vadd.f32 0.0, %v6489
      %v6491 = vpop.f32.mrb[0].mxu0
      %v6492 = vpop.f32.mrb[0].mxu0
      %v6493 = vadd.f32 0.0, %v6492
      %v6494 = vpop.f32.mrb[0].mxu0
      %6495 = vmatprep.mubr.bf16.mxu0 0
      %6496 = vmatmul.mubr.bf16.gmra.mrb[0].mxu0 %v2898
      %v6497 = vpop.f32.mrb[0].mxu0
      %v6498 = vadd.f32 0.0, %v6497
      %v6499 = vpop.f32.mrb[0].mxu0
      %v6500 = vpop.f32.mrb[0].mxu0
      %v6501 = vadd.f32 0.0, %v6500
      %v6502 = vpop.f32.mrb[0].mxu0
      %6503 = vmatprep.mubr.bf16.mxu0 0
      %6504 = vmatmul.mubr.bf16.gmra.mrb[0].mxu0 %v2901
      %v6505 = vpop.f32.mrb[0].mxu0
      %v6506 = vadd.f32 0.0, %v6505
      %v6507 = vpop.f32.mrb[0].mxu0
      %v6508 = vpop.f32.mrb[0].mxu0
      %v6509 = vadd.f32 0.0, %v6508
      %v6510 = vpop.f32.mrb[0].mxu0
      %6511 = vmatprep.mubr.bf16.mxu0 0
      %6512 = vmatmul.mubr.bf16.gmra.mrb[0].mxu0 %v2904
      %v6513 = vpop.f32.mrb[0].mxu0
      %v6514 = vadd.f32 0.0, %v6513
      %v6515 = vpop.f32.mrb[0].mxu0
      %v6516 = vpop.f32.mrb[0].mxu0
      %v6517 = vadd.f32 0.0, %v6516
      %v6518 = vpop.f32.mrb[0].mxu0
      %6519 = vmatprep.mubr.bf16.mxu0 0
      %6520 = vmatmul.mubr.bf16.gmra.mrb[0].mxu0 %v2907
      %v6521 = vpop.f32.mrb[0].mxu0
      %v6522 = vadd.f32 0.0, %v6521
      %v6523 = vpop.f32.mrb[0].mxu0
      %v6524 = vpop.f32.mrb[0].mxu0
      %v6525 = vadd.f32 0.0, %v6524
      %v6526 = vpop.f32.mrb[0].mxu0
      %6527 = vmatprep.mubr.bf16.mxu0 0
      %6528 = vmatmul.mubr.bf16.gmra.mrb[0].mxu0 %v2910
      %v6529 = vpop.f32.mrb[0].mxu0
      %v6530 = vadd.f32 0.0, %v6529
      %v6531 = vpop.f32.mrb[0].mxu0
      %v6532 = vpop.f32.mrb[0].mxu0
      %v6533 = vadd.f32 0.0, %v6532
      %v6534 = vpop.f32.mrb[0].mxu0
      %6535 = vmatprep.mubr.bf16.mxu0 0
      %6536 = vmatmul.mubr.bf16.gmra.mrb[0].mxu0 %v2913
      %v6537 = vpop.f32.mrb[0].mxu0
      %v6538 = vadd.f32 0.0, %v6537
      %v6539 = vpop.f32.mrb[0].mxu0
      %v6540 = vpop.f32.mrb[0].mxu0
      %v6541 = vadd.f32 0.0, %v6540
      %v6542 = vpop.f32.mrb[0].mxu0
      %6543 = vmatprep.mubr.bf16.mxu0 0
      %6544 = vmatmul.mubr.bf16.gmra.mrb[0].mxu0 %v2916
      %v6545 = vpop.f32.mrb[0].mxu0
      %v6546 = vadd.f32 0.0, %v6545
      %v6547 = vpop.f32.mrb[0].mxu0
      %v6548 = vpop.f32.mrb[0].mxu0
      %v6549 = vadd.f32 0.0, %v6548
      %v6550 = vpop.f32.mrb[0].mxu0
      %6551 = vmatprep.mubr.bf16.mxu0 0
      %6552 = vmatmul.mubr.bf16.gmra.mrb[0].mxu0 %v2919
      %v6553 = vpop.f32.mrb[0].mxu0
      %v6554 = vadd.f32 0.0, %v6553
      %v6555 = vpop.f32.mrb[0].mxu0
      %v6556 = vpop.f32.mrb[0].mxu0
      %v6557 = vadd.f32 0.0, %v6556
      %v6558 = vpop.f32.mrb[0].mxu0
      %6559 = vmatprep.mubr.bf16.mxu0 0
      %6560 = vmatmul.mubr.bf16.gmra.mrb[0].mxu0 %v4766
      %v6561 = vpop.f32.mrb[0].mxu0
      %v6562 = vadd.f32 0.0, %v6561
      %v6563 = vpop.f32.mrb[0].mxu0
      %v6564 = vpop.f32.mrb[0].mxu0
      %v6565 = vadd.f32 0.0, %v6564
      %v6566 = vpop.f32.mrb[0].mxu0
      %6567 = vmatprep.mubr.bf16.mxu0 0
      %6568 = vmatmul.mubr.bf16.gmra.mrb[0].mxu0 %v6282
      %v6569 = vpop.f32.mrb[0].mxu0
      %v6570 = vadd.f32 0.0, %v6569
      %v6571 = vpop.f32.mrb[0].mxu0
      %v6572 = vpop.f32.mrb[0].mxu0
      %v6573 = vadd.f32 0.0, %v6572
      %v6574 = vpop.f32.mrb[0].mxu0
      %6575 = vdwg.mxu0
      %v6576 = vld [vmem:[#allocation2] sm:$0xff]
      %v6577 = vld [vmem:[#allocation2 + $0x8] sm:$0xff]
      %v6578 = vld [vmem:[#allocation2 + $0x10] sm:$0xff]
      %v6579 = vld [vmem:[#allocation2 + $0x18] sm:$0xff]
      %v6580 = vld [vmem:[#allocation2 + $0x20] sm:$0xff]
      %v6581 = vld [vmem:[#allocation2 + $0x28] sm:$0xff]
      %v6582 = vld [vmem:[#allocation2 + $0x30] sm:$0xff]
      %v6583 = vld [vmem:[#allocation2 + $0x38] sm:$0xff]
      %v6584 = vld [vmem:[#allocation2 + $0x40] sm:$0xff]
      %v6585 = vld [vmem:[#allocation2 + $0x48] sm:$0xff]
      %v6586 = vld [vmem:[#allocation2 + $0x50] sm:$0xff]
      %v6587 = vld [vmem:[#allocation2 + $0x58] sm:$0xff]
      %v6588 = vld [vmem:[#allocation2 + $0x60] sm:$0xff]
      %v6589 = vld [vmem:[#allocation2 + $0x68] sm:$0xff]
      %v6590 = vld [vmem:[#allocation2 + $0x70] sm:$0xff]
      %v6591 = vld [vmem:[#allocation2 + $0x78] sm:$0xff]
      %v6592 = vld [vmem:[#allocation2 + $0x80] sm:$0xff]
      %v6593 = vld [vmem:[#allocation2 + $0x88] sm:$0xff]
      %v6594 = vld [vmem:[#allocation2 + $0x90] sm:$0xff]
      %v6595 = vld [vmem:[#allocation2 + $0x98] sm:$0xff]
      %v6596 = vld [vmem:[#allocation2 + $0xa0] sm:$0xff]
      %v6597 = vld [vmem:[#allocation2 + $0xa8] sm:$0xff]
      %v6598 = vld [vmem:[#allocation2 + $0xb0] sm:$0xff]
      %v6599 = vld [vmem:[#allocation2 + $0xb8] sm:$0xff]
      %v6600 = vld [vmem:[#allocation2 + $0xc0] sm:$0xff]
      %v6601 = vld [vmem:[#allocation2 + $0xc8] sm:$0xff]
      %v6602 = vld [vmem:[#allocation2 + $0xd0] sm:$0xff]
      %v6603 = vld [vmem:[#allocation2 + $0xd8] sm:$0xff]
      %v6604 = vld [vmem:[#allocation2 + $0xe0] sm:$0xff]
      %v6605 = vld [vmem:[#allocation2 + $0xe8] sm:$0xff]
      %v6606 = vld [vmem:[#allocation2 + $0xf0] sm:$0xff]
      %v6607 = vld [vmem:[#allocation2 + $0xf8] sm:$0xff]
      %v6608 = vld [vmem:[#allocation2 + $0x100] sm:$0xff]
      %v6609 = vld [vmem:[#allocation2 + $0x108] sm:$0xff]
      %v6610 = vld [vmem:[#allocation2 + $0x110] sm:$0xff]
      %v6611 = vld [vmem:[#allocation2 + $0x118] sm:$0xff]
      %v6612 = vld [vmem:[#allocation2 + $0x120] sm:$0xff]
      %v6613 = vld [vmem:[#allocation2 + $0x128] sm:$0xff]
      %v6614 = vld [vmem:[#allocation2 + $0x130] sm:$0xff]
      %v6615 = vld [vmem:[#allocation2 + $0x138] sm:$0xff]
      %v6616 = vld [vmem:[#allocation2 + $0x140] sm:$0xff]
      %v6617 = vld [vmem:[#allocation2 + $0x148] sm:$0xff]
      %v6618 = vld [vmem:[#allocation2 + $0x150] sm:$0xff]
      %v6619 = vld [vmem:[#allocation2 + $0x158] sm:$0xff]
      %v6620 = vld [vmem:[#allocation2 + $0x160] sm:$0xff]
      %v6621 = vld [vmem:[#allocation2 + $0x168] sm:$0xff]
      %v6622 = vld [vmem:[#allocation2 + $0x170] sm:$0xff]
      %v6623 = vld [vmem:[#allocation2 + $0x178] sm:$0xff]
      %v6624 = vld [vmem:[#allocation2 + $0x180] sm:$0xff]
      %v6625 = vld [vmem:[#allocation2 + $0x188] sm:$0xff]
      %v6626 = vld [vmem:[#allocation2 + $0x190] sm:$0xff]
      %v6627 = vld [vmem:[#allocation2 + $0x198] sm:$0xff]
      %v6628 = vld [vmem:[#allocation2 + $0x1a0] sm:$0xff]
      %v6629 = vld [vmem:[#allocation2 + $0x1a8] sm:$0xff]
      %v6630 = vld [vmem:[#allocation2 + $0x1b0] sm:$0xff]
      %v6631 = vld [vmem:[#allocation2 + $0x1b8] sm:$0xff]
      %v6632 = vld [vmem:[#allocation2 + $0x1c0] sm:$0xff]
      %v6633 = vld [vmem:[#allocation2 + $0x1c8] sm:$0xff]
      %v6634 = vld [vmem:[#allocation2 + $0x1d0] sm:$0xff]
      %v6635 = vld [vmem:[#allocation2 + $0x1d8] sm:$0xff]
      %v6636 = vld [vmem:[#allocation2 + $0x1e0] sm:$0xff]
      %v6637 = vld [vmem:[#allocation2 + $0x1e8] sm:$0xff]
      %v6638 = vld [vmem:[#allocation2 + $0x1f0] sm:$0xff]
      %v6639 = vld [vmem:[#allocation2 + $0x1f8] sm:$0xff]
      %v6640 = vadd.f32 %v6576, %v6322
      %v6641 = vadd.f32 %v6577, %v6325
      %v6642 = vadd.f32 %v6578, %v6330
      %v6643 = vadd.f32 %v6579, %v6333
      %v6644 = vadd.f32 %v6580, %v6338
      %v6645 = vadd.f32 %v6581, %v6341
      %v6646 = vadd.f32 %v6582, %v6346
      %v6647 = vadd.f32 %v6583, %v6349
      %v6648 = vadd.f32 %v6584, %v6354
      %v6649 = vadd.f32 %v6585, %v6357
      %v6650 = vadd.f32 %v6586, %v6362
      %v6651 = vadd.f32 %v6587, %v6365
      %v6652 = vadd.f32 %v6588, %v6370
      %v6653 = vadd.f32 %v6589, %v6373
      %v6654 = vadd.f32 %v6590, %v6378
      %v6655 = vadd.f32 %v6591, %v6381
      %v6656 = vadd.f32 %v6592, %v6386
      %v6657 = vadd.f32 %v6593, %v6389
      %v6658 = vadd.f32 %v6594, %v6394
      %v6659 = vadd.f32 %v6595, %v6397
      %v6660 = vadd.f32 %v6596, %v6402
      %v6661 = vadd.f32 %v6597, %v6405
      %v6662 = vadd.f32 %v6598, %v6410
      %v6663 = vadd.f32 %v6599, %v6413
      %v6664 = vadd.f32 %v6600, %v6418
      %v6665 = vadd.f32 %v6601, %v6421
      %v6666 = vadd.f32 %v6602, %v6426
      %v6667 = vadd.f32 %v6603, %v6429
      %v6668 = vadd.f32 %v6604, %v6434
      %v6669 = vadd.f32 %v6605, %v6437
      %v6670 = vadd.f32 %v6606, %v6442
      %v6671 = vadd.f32 %v6607, %v6445
      %v6672 = vadd.f32 %v6608, %v6450
      %v6673 = vadd.f32 %v6609, %v6453
      %v6674 = vadd.f32 %v6610, %v6458
      %v6675 = vadd.f32 %v6611, %v6461
      %v6676 = vadd.f32 %v6612, %v6466
      %v6677 = vadd.f32 %v6613, %v6469
      %v6678 = vadd.f32 %v6614, %v6474
      %v6679 = vadd.f32 %v6615, %v6477
      %v6680 = vadd.f32 %v6616, %v6482
      %v6681 = vadd.f32 %v6617, %v6485
      %v6682 = vadd.f32 %v6618, %v6490
      %v6683 = vadd.f32 %v6619, %v6493
      %v6684 = vadd.f32 %v6620, %v6498
      %v6685 = vadd.f32 %v6621, %v6501
      %v6686 = vadd.f32 %v6622, %v6506
      %v6687 = vadd.f32 %v6623, %v6509
      %v6688 = vadd.f32 %v6624, %v6514
      %v6689 = vadd.f32 %v6625, %v6517
      %v6690 = vadd.f32 %v6626, %v6522
      %v6691 = vadd.f32 %v6627, %v6525
      %v6692 = vadd.f32 %v6628, %v6530
      %v6693 = vadd.f32 %v6629, %v6533
      %v6694 = vadd.f32 %v6630, %v6538
      %v6695 = vadd.f32 %v6631, %v6541
      %v6696 = vadd.f32 %v6632, %v6546
      %v6697 = vadd.f32 %v6633, %v6549
      %v6698 = vadd.f32 %v6634, %v6554
      %v6699 = vadd.f32 %v6635, %v6557
      %v6700 = vadd.f32 %v6636, %v6562
      %v6701 = vadd.f32 %v6637, %v6565
      %v6702 = vadd.f32 %v6638, %v6570
      %v6703 = vadd.f32 %v6639, %v6573
      %6704 = vst.msk [vmem:[#allocation2] sm:$0xff] %vm672, %v6640
      %6705 = vst.msk [vmem:[#allocation2 + $0x8] sm:$0xff] %vm672, %v6641
      %6706 = vst.msk [vmem:[#allocation2 + $0x10] sm:$0xff] %vm672, %v6642
      %6707 = vst.msk [vmem:[#allocation2 + $0x18] sm:$0xff] %vm672, %v6643
      %6708 = vst.msk [vmem:[#allocation2 + $0x20] sm:$0xff] %vm672, %v6644
      %6709 = vst.msk [vmem:[#allocation2 + $0x28] sm:$0xff] %vm672, %v6645
      %6710 = vst.msk [vmem:[#allocation2 + $0x30] sm:$0xff] %vm672, %v6646
      %6711 = vst.msk [vmem:[#allocation2 + $0x38] sm:$0xff] %vm672, %v6647
      %6712 = vst.msk [vmem:[#allocation2 + $0x40] sm:$0xff] %vm672, %v6648
      %6713 = vst.msk [vmem:[#allocation2 + $0x48] sm:$0xff] %vm672, %v6649
      %6714 = vst.msk [vmem:[#allocation2 + $0x50] sm:$0xff] %vm672, %v6650
      %6715 = vst.msk [vmem:[#allocation2 + $0x58] sm:$0xff] %vm672, %v6651
      %6716 = vst.msk [vmem:[#allocation2 + $0x60] sm:$0xff] %vm672, %v6652
      %6717 = vst.msk [vmem:[#allocation2 + $0x68] sm:$0xff] %vm672, %v6653
      %6718 = vst.msk [vmem:[#allocation2 + $0x70] sm:$0xff] %vm672, %v6654
      %6719 = vst.msk [vmem:[#allocation2 + $0x78] sm:$0xff] %vm672, %v6655
      %6720 = vst.msk [vmem:[#allocation2 + $0x80] sm:$0xff] %vm672, %v6656
      %6721 = vst.msk [vmem:[#allocation2 + $0x88] sm:$0xff] %vm672, %v6657
      %6722 = vst.msk [vmem:[#allocation2 + $0x90] sm:$0xff] %vm672, %v6658
      %6723 = vst.msk [vmem:[#allocation2 + $0x98] sm:$0xff] %vm672, %v6659
      %6724 = vst.msk [vmem:[#allocation2 + $0xa0] sm:$0xff] %vm672, %v6660
      %6725 = vst.msk [vmem:[#allocation2 + $0xa8] sm:$0xff] %vm672, %v6661
      %6726 = vst.msk [vmem:[#allocation2 + $0xb0] sm:$0xff] %vm672, %v6662
      %6727 = vst.msk [vmem:[#allocation2 + $0xb8] sm:$0xff] %vm672, %v6663
      %6728 = vst.msk [vmem:[#allocation2 + $0xc0] sm:$0xff] %vm672, %v6664
      %6729 = vst.msk [vmem:[#allocation2 + $0xc8] sm:$0xff] %vm672, %v6665
      %6730 = vst.msk [vmem:[#allocation2 + $0xd0] sm:$0xff] %vm672, %v6666
      %6731 = vst.msk [vmem:[#allocation2 + $0xd8] sm:$0xff] %vm672, %v6667
      %6732 = vst.msk [vmem:[#allocation2 + $0xe0] sm:$0xff] %vm672, %v6668
      %6733 = vst.msk [vmem:[#allocation2 + $0xe8] sm:$0xff] %vm672, %v6669
      %6734 = vst.msk [vmem:[#allocation2 + $0xf0] sm:$0xff] %vm672, %v6670
      %6735 = vst.msk [vmem:[#allocation2 + $0xf8] sm:$0xff] %vm672, %v6671
      %6736 = vst.msk [vmem:[#allocation2 + $0x100] sm:$0xff] %vm672, %v6672
      %6737 = vst.msk [vmem:[#allocation2 + $0x108] sm:$0xff] %vm672, %v6673
      %6738 = vst.msk [vmem:[#allocation2 + $0x110] sm:$0xff] %vm672, %v6674
      %6739 = vst.msk [vmem:[#allocation2 + $0x118] sm:$0xff] %vm672, %v6675
      %6740 = vst.msk [vmem:[#allocation2 + $0x120] sm:$0xff] %vm672, %v6676
      %6741 = vst.msk [vmem:[#allocation2 + $0x128] sm:$0xff] %vm672, %v6677
      %6742 = vst.msk [vmem:[#allocation2 + $0x130] sm:$0xff] %vm672, %v6678
      %6743 = vst.msk [vmem:[#allocation2 + $0x138] sm:$0xff] %vm672, %v6679
      %6744 = vst.msk [vmem:[#allocation2 + $0x140] sm:$0xff] %vm672, %v6680
      %6745 = vst.msk [vmem:[#allocation2 + $0x148] sm:$0xff] %vm672, %v6681
      %6746 = vst.msk [vmem:[#allocation2 + $0x150] sm:$0xff] %vm672, %v6682
      %6747 = vst.msk [vmem:[#allocation2 + $0x158] sm:$0xff] %vm672, %v6683
      %6748 = vst.msk [vmem:[#allocation2 + $0x160] sm:$0xff] %vm672, %v6684
      %6749 = vst.msk [vmem:[#allocation2 + $0x168] sm:$0xff] %vm672, %v6685
      %6750 = vst.msk [vmem:[#allocation2 + $0x170] sm:$0xff] %vm672, %v6686
      %6751 = vst.msk [vmem:[#allocation2 + $0x178] sm:$0xff] %vm672, %v6687
      %6752 = vst.msk [vmem:[#allocation2 + $0x180] sm:$0xff] %vm672, %v6688
      %6753 = vst.msk [vmem:[#allocation2 + $0x188] sm:$0xff] %vm672, %v6689
      %6754 = vst.msk [vmem:[#allocation2 + $0x190] sm:$0xff] %vm672, %v6690
      %6755 = vst.msk [vmem:[#allocation2 + $0x198] sm:$0xff] %vm672, %v6691
      %6756 = vst.msk [vmem:[#allocation2 + $0x1a0] sm:$0xff] %vm672, %v6692
      %6757 = vst.msk [vmem:[#allocation2 + $0x1a8] sm:$0xff] %vm672, %v6693
      %6758 = vst.msk [vmem:[#allocation2 + $0x1b0] sm:$0xff] %vm672, %v6694
      %6759 = vst.msk [vmem:[#allocation2 + $0x1b8] sm:$0xff] %vm672, %v6695
      %6760 = vst.msk [vmem:[#allocation2 + $0x1c0] sm:$0xff] %vm672, %v6696
      %6761 = vst.msk [vmem:[#allocation2 + $0x1c8] sm:$0xff] %vm672, %v6697
      %6762 = vst.msk [vmem:[#allocation2 + $0x1d0] sm:$0xff] %vm672, %v6698
      %6763 = vst.msk [vmem:[#allocation2 + $0x1d8] sm:$0xff] %vm672, %v6699
      %6764 = vst.msk [vmem:[#allocation2 + $0x1e0] sm:$0xff] %vm672, %v6700
      %6765 = vst.msk [vmem:[#allocation2 + $0x1e8] sm:$0xff] %vm672, %v6701
      %6766 = vst.msk [vmem:[#allocation2 + $0x1f0] sm:$0xff] %vm672, %v6702
      %6767 = vst.msk [vmem:[#allocation2 + $0x1f8] sm:$0xff] %vm672, %v6703
      %v6768 = vrot.slane %v1927, 2
      %v6769 = vrot.slane %v1928, 2
      %v6770 = vsel %vm3405, %v6768, %v6769
      %v6771 = vrot.slane %v1929, 2
      %v6772 = vsel %vm3405, %v6769, %v6771
      %v6773 = vrot.slane %v1981, 2
      %v6774 = vrot.slane %v1982, 2
      %v6775 = vsel %vm3405, %v6773, %v6774
      %v6776 = vrot.slane %v1983, 2
      %v6777 = vsel %vm3405, %v6774, %v6776
      %v6782 = vpack.c.bf16 %v6772, %v6770
      %v6783 = vpack.c.bf16 %v6777, %v6775
      %s6784 = scalar_lea.vmem %s4, 32
      %v6785 = vld [vmem:[%s6784] sm:$0xf]
      %v6787 = vsel %vm672, %v6782, 0
      %v6790 = vsel %vm672, %v6783, 0
      %v6793 = vsel %vm2113, %v6785, 0
      %6795 = vmatprep.subr.bf16.mxu0 0
      %6796 = vmatpush1.bf16.msra.mxu0 %v6793
      %6797 = vmatprep.subr.bf16.mxu0 0
      %6798 = vmatpush1.bf16.msra.mxu0 0
      %6799 = vmatprep.subr.bf16.mxu0 0
      %6800 = vmatpush1.bf16.msra.mxu0 0
      %6801 = vmatprep.subr.bf16.mxu0 0
      %6802 = vmatpush1.bf16.msra.mxu0 0
      %6803 = vmatprep.subr.bf16.mxu0 0
      %6804 = vmatpush1.bf16.msra.mxu0 0
      %6805 = vmatprep.subr.bf16.mxu0 0
      %6806 = vmatpush1.bf16.msra.mxu0 0
      %6807 = vmatprep.subr.bf16.mxu0 0
      %6808 = vmatpush1.bf16.msra.mxu0 0
      %6809 = vmatprep.subr.bf16.mxu0 0
      %6810 = vmatpush1.bf16.msra.mxu0 0
      %6811 = vmatprep.subr.bf16.mxu0 0
      %6812 = vmatpush1.bf16.msra.mxu0 0
      %6813 = vmatprep.subr.bf16.mxu0 0
      %6814 = vmatpush1.bf16.msra.mxu0 0
      %6815 = vmatprep.subr.bf16.mxu0 0
      %6816 = vmatpush1.bf16.msra.mxu0 0
      %6817 = vmatprep.subr.bf16.mxu0 0
      %6818 = vmatpush1.bf16.msra.mxu0 0
      %6819 = vmatprep.subr.bf16.mxu0 0
      %6820 = vmatpush1.bf16.msra.mxu0 0
      %6821 = vmatprep.subr.bf16.mxu0 0
      %6822 = vmatpush1.bf16.msra.mxu0 0
      %6823 = vmatprep.subr.bf16.mxu0 0
      %6824 = vmatpush1.bf16.msra.mxu0 0
      %6825 = vmatprep.subr.bf16.mxu0 0
      %6826 = vmatpush1.bf16.msra.mxu0 0
      %6827 = vmatprep.mubr.bf16.mxu0 0
      %6828 = vmatmul.mubr.bf16.gmra.mrb[0].mxu0 %v3671
      %v6829 = vpop.f32.mrb[0].mxu0
      %v6830 = vadd.f32 0.0, %v6829
      %v6831 = vpop.f32.mrb[0].mxu0
      %v6832 = vpop.f32.mrb[0].mxu0
      %v6833 = vadd.f32 0.0, %v6832
      %v6834 = vpop.f32.mrb[0].mxu0
      %6835 = vmatprep.mubr.bf16.mxu0 0
      %6836 = vmatmul.mubr.bf16.gmra.mrb[0].mxu0 %v3674
      %v6837 = vpop.f32.mrb[0].mxu0
      %v6838 = vadd.f32 0.0, %v6837
      %v6839 = vpop.f32.mrb[0].mxu0
      %v6840 = vpop.f32.mrb[0].mxu0
      %v6841 = vadd.f32 0.0, %v6840
      %v6842 = vpop.f32.mrb[0].mxu0
      %6843 = vmatprep.mubr.bf16.mxu0 0
      %6844 = vmatmul.mubr.bf16.gmra.mrb[0].mxu0 %v3677
      %v6845 = vpop.f32.mrb[0].mxu0
      %v6846 = vadd.f32 0.0, %v6845
      %v6847 = vpop.f32.mrb[0].mxu0
      %v6848 = vpop.f32.mrb[0].mxu0
      %v6849 = vadd.f32 0.0, %v6848
      %v6850 = vpop.f32.mrb[0].mxu0
      %6851 = vmatprep.mubr.bf16.mxu0 0
      %6852 = vmatmul.mubr.bf16.gmra.mrb[0].mxu0 %v3680
      %v6853 = vpop.f32.mrb[0].mxu0
      %v6854 = vadd.f32 0.0, %v6853
      %v6855 = vpop.f32.mrb[0].mxu0
      %v6856 = vpop.f32.mrb[0].mxu0
      %v6857 = vadd.f32 0.0, %v6856
      %v6858 = vpop.f32.mrb[0].mxu0
      %6859 = vmatprep.mubr.bf16.mxu0 0
      %6860 = vmatmul.mubr.bf16.gmra.mrb[0].mxu0 %v3683
      %v6861 = vpop.f32.mrb[0].mxu0
      %v6862 = vadd.f32 0.0, %v6861
      %v6863 = vpop.f32.mrb[0].mxu0
      %v6864 = vpop.f32.mrb[0].mxu0
      %v6865 = vadd.f32 0.0, %v6864
      %v6866 = vpop.f32.mrb[0].mxu0
      %6867 = vmatprep.mubr.bf16.mxu0 0
      %6868 = vmatmul.mubr.bf16.gmra.mrb[0].mxu0 %v3686
      %v6869 = vpop.f32.mrb[0].mxu0
      %v6870 = vadd.f32 0.0, %v6869
      %v6871 = vpop.f32.mrb[0].mxu0
      %v6872 = vpop.f32.mrb[0].mxu0
      %v6873 = vadd.f32 0.0, %v6872
      %v6874 = vpop.f32.mrb[0].mxu0
      %6875 = vmatprep.mubr.bf16.mxu0 0
      %6876 = vmatmul.mubr.bf16.gmra.mrb[0].mxu0 %v3689
      %v6877 = vpop.f32.mrb[0].mxu0
      %v6878 = vadd.f32 0.0, %v6877
      %v6879 = vpop.f32.mrb[0].mxu0
      %v6880 = vpop.f32.mrb[0].mxu0
      %v6881 = vadd.f32 0.0, %v6880
      %v6882 = vpop.f32.mrb[0].mxu0
      %6883 = vmatprep.mubr.bf16.mxu0 0
      %6884 = vmatmul.mubr.bf16.gmra.mrb[0].mxu0 %v3692
      %v6885 = vpop.f32.mrb[0].mxu0
      %v6886 = vadd.f32 0.0, %v6885
      %v6887 = vpop.f32.mrb[0].mxu0
      %v6888 = vpop.f32.mrb[0].mxu0
      %v6889 = vadd.f32 0.0, %v6888
      %v6890 = vpop.f32.mrb[0].mxu0
      %6891 = vmatprep.mubr.bf16.mxu0 0
      %6892 = vmatmul.mubr.bf16.gmra.mrb[0].mxu0 %v3695
      %v6893 = vpop.f32.mrb[0].mxu0
      %v6894 = vadd.f32 0.0, %v6893
      %v6895 = vpop.f32.mrb[0].mxu0
      %v6896 = vpop.f32.mrb[0].mxu0
      %v6897 = vadd.f32 0.0, %v6896
      %v6898 = vpop.f32.mrb[0].mxu0
      %6899 = vmatprep.mubr.bf16.mxu0 0
      %6900 = vmatmul.mubr.bf16.gmra.mrb[0].mxu0 %v3698
      %v6901 = vpop.f32.mrb[0].mxu0
      %v6902 = vadd.f32 0.0, %v6901
      %v6903 = vpop.f32.mrb[0].mxu0
      %v6904 = vpop.f32.mrb[0].mxu0
      %v6905 = vadd.f32 0.0, %v6904
      %v6906 = vpop.f32.mrb[0].mxu0
      %6907 = vmatprep.mubr.bf16.mxu0 0
      %6908 = vmatmul.mubr.bf16.gmra.mrb[0].mxu0 %v3701
      %v6909 = vpop.f32.mrb[0].mxu0
      %v6910 = vadd.f32 0.0, %v6909
      %v6911 = vpop.f32.mrb[0].mxu0
      %v6912 = vpop.f32.mrb[0].mxu0
      %v6913 = vadd.f32 0.0, %v6912
      %v6914 = vpop.f32.mrb[0].mxu0
      %6915 = vmatprep.mubr.bf16.mxu0 0
      %6916 = vmatmul.mubr.bf16.gmra.mrb[0].mxu0 %v3704
      %v6917 = vpop.f32.mrb[0].mxu0
      %v6918 = vadd.f32 0.0, %v6917
      %v6919 = vpop.f32.mrb[0].mxu0
      %v6920 = vpop.f32.mrb[0].mxu0
      %v6921 = vadd.f32 0.0, %v6920
      %v6922 = vpop.f32.mrb[0].mxu0
      %6923 = vmatprep.mubr.bf16.mxu0 0
      %6924 = vmatmul.mubr.bf16.gmra.mrb[0].mxu0 %v3707
      %v6925 = vpop.f32.mrb[0].mxu0
      %v6926 = vadd.f32 0.0, %v6925
      %v6927 = vpop.f32.mrb[0].mxu0
      %v6928 = vpop.f32.mrb[0].mxu0
      %v6929 = vadd.f32 0.0, %v6928
      %v6930 = vpop.f32.mrb[0].mxu0
      %6931 = vmatprep.mubr.bf16.mxu0 0
      %6932 = vmatmul.mubr.bf16.gmra.mrb[0].mxu0 %v3710
      %v6933 = vpop.f32.mrb[0].mxu0
      %v6934 = vadd.f32 0.0, %v6933
      %v6935 = vpop.f32.mrb[0].mxu0
      %v6936 = vpop.f32.mrb[0].mxu0
      %v6937 = vadd.f32 0.0, %v6936
      %v6938 = vpop.f32.mrb[0].mxu0
      %6939 = vmatprep.mubr.bf16.mxu0 0
      %6940 = vmatmul.mubr.bf16.gmra.mrb[0].mxu0 %v5271
      %v6941 = vpop.f32.mrb[0].mxu0
      %v6942 = vadd.f32 0.0, %v6941
      %v6943 = vpop.f32.mrb[0].mxu0
      %v6944 = vpop.f32.mrb[0].mxu0
      %v6945 = vadd.f32 0.0, %v6944
      %v6946 = vpop.f32.mrb[0].mxu0
      %6947 = vmatprep.mubr.bf16.mxu0 0
      %6948 = vmatmul.mubr.bf16.gmra.mrb[0].mxu0 %v6787
      %v6949 = vpop.f32.mrb[0].mxu0
      %v6950 = vadd.f32 0.0, %v6949
      %v6951 = vpop.f32.mrb[0].mxu0
      %v6952 = vpop.f32.mrb[0].mxu0
      %v6953 = vadd.f32 0.0, %v6952
      %v6954 = vpop.f32.mrb[0].mxu0
      %6955 = vmatprep.mubr.bf16.mxu0 0
      %6956 = vmatmul.mubr.bf16.gmra.mrb[0].mxu0 %v3719
      %v6957 = vpop.f32.mrb[0].mxu0
      %v6958 = vadd.f32 0.0, %v6957
      %v6959 = vpop.f32.mrb[0].mxu0
      %v6960 = vpop.f32.mrb[0].mxu0
      %v6961 = vadd.f32 0.0, %v6960
      %v6962 = vpop.f32.mrb[0].mxu0
      %6963 = vmatprep.mubr.bf16.mxu0 0
      %6964 = vmatmul.mubr.bf16.gmra.mrb[0].mxu0 %v3722
      %v6965 = vpop.f32.mrb[0].mxu0
      %v6966 = vadd.f32 0.0, %v6965
      %v6967 = vpop.f32.mrb[0].mxu0
      %v6968 = vpop.f32.mrb[0].mxu0
      %v6969 = vadd.f32 0.0, %v6968
      %v6970 = vpop.f32.mrb[0].mxu0
      %6971 = vmatprep.mubr.bf16.mxu0 0
      %6972 = vmatmul.mubr.bf16.gmra.mrb[0].mxu0 %v3725
      %v6973 = vpop.f32.mrb[0].mxu0
      %v6974 = vadd.f32 0.0, %v6973
      %v6975 = vpop.f32.mrb[0].mxu0
      %v6976 = vpop.f32.mrb[0].mxu0
      %v6977 = vadd.f32 0.0, %v6976
      %v6978 = vpop.f32.mrb[0].mxu0
      %6979 = vmatprep.mubr.bf16.mxu0 0
      %6980 = vmatmul.mubr.bf16.gmra.mrb[0].mxu0 %v3728
      %v6981 = vpop.f32.mrb[0].mxu0
      %v6982 = vadd.f32 0.0, %v6981
      %v6983 = vpop.f32.mrb[0].mxu0
      %v6984 = vpop.f32.mrb[0].mxu0
      %v6985 = vadd.f32 0.0, %v6984
      %v6986 = vpop.f32.mrb[0].mxu0
      %6987 = vmatprep.mubr.bf16.mxu0 0
      %6988 = vmatmul.mubr.bf16.gmra.mrb[0].mxu0 %v3731
      %v6989 = vpop.f32.mrb[0].mxu0
      %v6990 = vadd.f32 0.0, %v6989
      %v6991 = vpop.f32.mrb[0].mxu0
      %v6992 = vpop.f32.mrb[0].mxu0
      %v6993 = vadd.f32 0.0, %v6992
      %v6994 = vpop.f32.mrb[0].mxu0
      %6995 = vmatprep.mubr.bf16.mxu0 0
      %6996 = vmatmul.mubr.bf16.gmra.mrb[0].mxu0 %v3734
      %v6997 = vpop.f32.mrb[0].mxu0
      %v6998 = vadd.f32 0.0, %v6997
      %v6999 = vpop.f32.mrb[0].mxu0
      %v7000 = vpop.f32.mrb[0].mxu0
      %v7001 = vadd.f32 0.0, %v7000
      %v7002 = vpop.f32.mrb[0].mxu0
      %7003 = vmatprep.mubr.bf16.mxu0 0
      %7004 = vmatmul.mubr.bf16.gmra.mrb[0].mxu0 %v3737
      %v7005 = vpop.f32.mrb[0].mxu0
      %v7006 = vadd.f32 0.0, %v7005
      %v7007 = vpop.f32.mrb[0].mxu0
      %v7008 = vpop.f32.mrb[0].mxu0
      %v7009 = vadd.f32 0.0, %v7008
      %v7010 = vpop.f32.mrb[0].mxu0
      %7011 = vmatprep.mubr.bf16.mxu0 0
      %7012 = vmatmul.mubr.bf16.gmra.mrb[0].mxu0 %v3740
      %v7013 = vpop.f32.mrb[0].mxu0
      %v7014 = vadd.f32 0.0, %v7013
      %v7015 = vpop.f32.mrb[0].mxu0
      %v7016 = vpop.f32.mrb[0].mxu0
      %v7017 = vadd.f32 0.0, %v7016
      %v7018 = vpop.f32.mrb[0].mxu0
      %7019 = vmatprep.mubr.bf16.mxu0 0
      %7020 = vmatmul.mubr.bf16.gmra.mrb[0].mxu0 %v3743
      %v7021 = vpop.f32.mrb[0].mxu0
      %v7022 = vadd.f32 0.0, %v7021
      %v7023 = vpop.f32.mrb[0].mxu0
      %v7024 = vpop.f32.mrb[0].mxu0
      %v7025 = vadd.f32 0.0, %v7024
      %v7026 = vpop.f32.mrb[0].mxu0
      %7027 = vmatprep.mubr.bf16.mxu0 0
      %7028 = vmatmul.mubr.bf16.gmra.mrb[0].mxu0 %v3746
      %v7029 = vpop.f32.mrb[0].mxu0
      %v7030 = vadd.f32 0.0, %v7029
      %v7031 = vpop.f32.mrb[0].mxu0
      %v7032 = vpop.f32.mrb[0].mxu0
      %v7033 = vadd.f32 0.0, %v7032
      %v7034 = vpop.f32.mrb[0].mxu0
      %7035 = vmatprep.mubr.bf16.mxu0 0
      %7036 = vmatmul.mubr.bf16.gmra.mrb[0].mxu0 %v3749
      %v7037 = vpop.f32.mrb[0].mxu0
      %v7038 = vadd.f32 0.0, %v7037
      %v7039 = vpop.f32.mrb[0].mxu0
      %v7040 = vpop.f32.mrb[0].mxu0
      %v7041 = vadd.f32 0.0, %v7040
      %v7042 = vpop.f32.mrb[0].mxu0
      %7043 = vmatprep.mubr.bf16.mxu0 0
      %7044 = vmatmul.mubr.bf16.gmra.mrb[0].mxu0 %v3752
      %v7045 = vpop.f32.mrb[0].mxu0
      %v7046 = vadd.f32 0.0, %v7045
      %v7047 = vpop.f32.mrb[0].mxu0
      %v7048 = vpop.f32.mrb[0].mxu0
      %v7049 = vadd.f32 0.0, %v7048
      %v7050 = vpop.f32.mrb[0].mxu0
      %7051 = vmatprep.mubr.bf16.mxu0 0
      %7052 = vmatmul.mubr.bf16.gmra.mrb[0].mxu0 %v3755
      %v7053 = vpop.f32.mrb[0].mxu0
      %v7054 = vadd.f32 0.0, %v7053
      %v7055 = vpop.f32.mrb[0].mxu0
      %v7056 = vpop.f32.mrb[0].mxu0
      %v7057 = vadd.f32 0.0, %v7056
      %v7058 = vpop.f32.mrb[0].mxu0
      %7059 = vmatprep.mubr.bf16.mxu0 0
      %7060 = vmatmul.mubr.bf16.gmra.mrb[0].mxu0 %v3758
      %v7061 = vpop.f32.mrb[0].mxu0
      %v7062 = vadd.f32 0.0, %v7061
      %v7063 = vpop.f32.mrb[0].mxu0
      %v7064 = vpop.f32.mrb[0].mxu0
      %v7065 = vadd.f32 0.0, %v7064
      %v7066 = vpop.f32.mrb[0].mxu0
      %7067 = vmatprep.mubr.bf16.mxu0 0
      %7068 = vmatmul.mubr.bf16.gmra.mrb[0].mxu0 %v5274
      %v7069 = vpop.f32.mrb[0].mxu0
      %v7070 = vadd.f32 0.0, %v7069
      %v7071 = vpop.f32.mrb[0].mxu0
      %v7072 = vpop.f32.mrb[0].mxu0
      %v7073 = vadd.f32 0.0, %v7072
      %v7074 = vpop.f32.mrb[0].mxu0
      %7075 = vmatprep.mubr.bf16.mxu0 0
      %7076 = vmatmul.mubr.bf16.gmra.mrb[0].mxu0 %v6790
      %v7077 = vpop.f32.mrb[0].mxu0
      %v7078 = vadd.f32 0.0, %v7077
      %v7079 = vpop.f32.mrb[0].mxu0
      %v7080 = vpop.f32.mrb[0].mxu0
      %v7081 = vadd.f32 0.0, %v7080
      %v7082 = vpop.f32.mrb[0].mxu0
      %7083 = vdwg.mxu0
      %v7084 = vld [vmem:[#allocation2] sm:$0xff]
      %v7085 = vld [vmem:[#allocation2 + $0x8] sm:$0xff]
      %v7086 = vld [vmem:[#allocation2 + $0x10] sm:$0xff]
      %v7087 = vld [vmem:[#allocation2 + $0x18] sm:$0xff]
      %v7088 = vld [vmem:[#allocation2 + $0x20] sm:$0xff]
      %v7089 = vld [vmem:[#allocation2 + $0x28] sm:$0xff]
      %v7090 = vld [vmem:[#allocation2 + $0x30] sm:$0xff]
      %v7091 = vld [vmem:[#allocation2 + $0x38] sm:$0xff]
      %v7092 = vld [vmem:[#allocation2 + $0x40] sm:$0xff]
      %v7093 = vld [vmem:[#allocation2 + $0x48] sm:$0xff]
      %v7094 = vld [vmem:[#allocation2 + $0x50] sm:$0xff]
      %v7095 = vld [vmem:[#allocation2 + $0x58] sm:$0xff]
      %v7096 = vld [vmem:[#allocation2 + $0x60] sm:$0xff]
      %v7097 = vld [vmem:[#allocation2 + $0x68] sm:$0xff]
      %v7098 = vld [vmem:[#allocation2 + $0x70] sm:$0xff]
      %v7099 = vld [vmem:[#allocation2 + $0x78] sm:$0xff]
      %v7100 = vld [vmem:[#allocation2 + $0x80] sm:$0xff]
      %v7101 = vld [vmem:[#allocation2 + $0x88] sm:$0xff]
      %v7102 = vld [vmem:[#allocation2 + $0x90] sm:$0xff]
      %v7103 = vld [vmem:[#allocation2 + $0x98] sm:$0xff]
      %v7104 = vld [vmem:[#allocation2 + $0xa0] sm:$0xff]
      %v7105 = vld [vmem:[#allocation2 + $0xa8] sm:$0xff]
      %v7106 = vld [vmem:[#allocation2 + $0xb0] sm:$0xff]
      %v7107 = vld [vmem:[#allocation2 + $0xb8] sm:$0xff]
      %v7108 = vld [vmem:[#allocation2 + $0xc0] sm:$0xff]
      %v7109 = vld [vmem:[#allocation2 + $0xc8] sm:$0xff]
      %v7110 = vld [vmem:[#allocation2 + $0xd0] sm:$0xff]
      %v7111 = vld [vmem:[#allocation2 + $0xd8] sm:$0xff]
      %v7112 = vld [vmem:[#allocation2 + $0xe0] sm:$0xff]
      %v7113 = vld [vmem:[#allocation2 + $0xe8] sm:$0xff]
      %v7114 = vld [vmem:[#allocation2 + $0xf0] sm:$0xff]
      %v7115 = vld [vmem:[#allocation2 + $0xf8] sm:$0xff]
      %v7116 = vld [vmem:[#allocation2 + $0x100] sm:$0xff]
      %v7117 = vld [vmem:[#allocation2 + $0x108] sm:$0xff]
      %v7118 = vld [vmem:[#allocation2 + $0x110] sm:$0xff]
      %v7119 = vld [vmem:[#allocation2 + $0x118] sm:$0xff]
      %v7120 = vld [vmem:[#allocation2 + $0x120] sm:$0xff]
      %v7121 = vld [vmem:[#allocation2 + $0x128] sm:$0xff]
      %v7122 = vld [vmem:[#allocation2 + $0x130] sm:$0xff]
      %v7123 = vld [vmem:[#allocation2 + $0x138] sm:$0xff]
      %v7124 = vld [vmem:[#allocation2 + $0x140] sm:$0xff]
      %v7125 = vld [vmem:[#allocation2 + $0x148] sm:$0xff]
      %v7126 = vld [vmem:[#allocation2 + $0x150] sm:$0xff]
      %v7127 = vld [vmem:[#allocation2 + $0x158] sm:$0xff]
      %v7128 = vld [vmem:[#allocation2 + $0x160] sm:$0xff]
      %v7129 = vld [vmem:[#allocation2 + $0x168] sm:$0xff]
      %v7130 = vld [vmem:[#allocation2 + $0x170] sm:$0xff]
      %v7131 = vld [vmem:[#allocation2 + $0x178] sm:$0xff]
      %v7132 = vld [vmem:[#allocation2 + $0x180] sm:$0xff]
      %v7133 = vld [vmem:[#allocation2 + $0x188] sm:$0xff]
      %v7134 = vld [vmem:[#allocation2 + $0x190] sm:$0xff]
      %v7135 = vld [vmem:[#allocation2 + $0x198] sm:$0xff]
      %v7136 = vld [vmem:[#allocation2 + $0x1a0] sm:$0xff]
      %v7137 = vld [vmem:[#allocation2 + $0x1a8] sm:$0xff]
      %v7138 = vld [vmem:[#allocation2 + $0x1b0] sm:$0xff]
      %v7139 = vld [vmem:[#allocation2 + $0x1b8] sm:$0xff]
      %v7140 = vld [vmem:[#allocation2 + $0x1c0] sm:$0xff]
      %v7141 = vld [vmem:[#allocation2 + $0x1c8] sm:$0xff]
      %v7142 = vld [vmem:[#allocation2 + $0x1d0] sm:$0xff]
      %v7143 = vld [vmem:[#allocation2 + $0x1d8] sm:$0xff]
      %v7144 = vld [vmem:[#allocation2 + $0x1e0] sm:$0xff]
      %v7145 = vld [vmem:[#allocation2 + $0x1e8] sm:$0xff]
      %v7146 = vld [vmem:[#allocation2 + $0x1f0] sm:$0xff]
      %v7147 = vld [vmem:[#allocation2 + $0x1f8] sm:$0xff]
      %v7148 = vadd.f32 %v7084, %v6830
      %v7149 = vadd.f32 %v7085, %v6833
      %v7150 = vadd.f32 %v7086, %v6838
      %v7151 = vadd.f32 %v7087, %v6841
      %v7152 = vadd.f32 %v7088, %v6846
      %v7153 = vadd.f32 %v7089, %v6849
      %v7154 = vadd.f32 %v7090, %v6854
      %v7155 = vadd.f32 %v7091, %v6857
      %v7156 = vadd.f32 %v7092, %v6862
      %v7157 = vadd.f32 %v7093, %v6865
      %v7158 = vadd.f32 %v7094, %v6870
      %v7159 = vadd.f32 %v7095, %v6873
      %v7160 = vadd.f32 %v7096, %v6878
      %v7161 = vadd.f32 %v7097, %v6881
      %v7162 = vadd.f32 %v7098, %v6886
      %v7163 = vadd.f32 %v7099, %v6889
      %v7164 = vadd.f32 %v7100, %v6894
      %v7165 = vadd.f32 %v7101, %v6897
      %v7166 = vadd.f32 %v7102, %v6902
      %v7167 = vadd.f32 %v7103, %v6905
      %v7168 = vadd.f32 %v7104, %v6910
      %v7169 = vadd.f32 %v7105, %v6913
      %v7170 = vadd.f32 %v7106, %v6918
      %v7171 = vadd.f32 %v7107, %v6921
      %v7172 = vadd.f32 %v7108, %v6926
      %v7173 = vadd.f32 %v7109, %v6929
      %v7174 = vadd.f32 %v7110, %v6934
      %v7175 = vadd.f32 %v7111, %v6937
      %v7176 = vadd.f32 %v7112, %v6942
      %v7177 = vadd.f32 %v7113, %v6945
      %v7178 = vadd.f32 %v7114, %v6950
      %v7179 = vadd.f32 %v7115, %v6953
      %v7180 = vadd.f32 %v7116, %v6958
      %v7181 = vadd.f32 %v7117, %v6961
      %v7182 = vadd.f32 %v7118, %v6966
      %v7183 = vadd.f32 %v7119, %v6969
      %v7184 = vadd.f32 %v7120, %v6974
      %v7185 = vadd.f32 %v7121, %v6977
      %v7186 = vadd.f32 %v7122, %v6982
      %v7187 = vadd.f32 %v7123, %v6985
      %v7188 = vadd.f32 %v7124, %v6990
      %v7189 = vadd.f32 %v7125, %v6993
      %v7190 = vadd.f32 %v7126, %v6998
      %v7191 = vadd.f32 %v7127, %v7001
      %v7192 = vadd.f32 %v7128, %v7006
      %v7193 = vadd.f32 %v7129, %v7009
      %v7194 = vadd.f32 %v7130, %v7014
      %v7195 = vadd.f32 %v7131, %v7017
      %v7196 = vadd.f32 %v7132, %v7022
      %v7197 = vadd.f32 %v7133, %v7025
      %v7198 = vadd.f32 %v7134, %v7030
      %v7199 = vadd.f32 %v7135, %v7033
      %v7200 = vadd.f32 %v7136, %v7038
      %v7201 = vadd.f32 %v7137, %v7041
      %v7202 = vadd.f32 %v7138, %v7046
      %v7203 = vadd.f32 %v7139, %v7049
      %v7204 = vadd.f32 %v7140, %v7054
      %v7205 = vadd.f32 %v7141, %v7057
      %v7206 = vadd.f32 %v7142, %v7062
      %v7207 = vadd.f32 %v7143, %v7065
      %v7208 = vadd.f32 %v7144, %v7070
      %v7209 = vadd.f32 %v7145, %v7073
      %v7210 = vadd.f32 %v7146, %v7078
      %v7211 = vadd.f32 %v7147, %v7081
      %7212 = vst.msk [vmem:[#allocation2] sm:$0xff] %vm672, %v7148
      %7213 = vst.msk [vmem:[#allocation2 + $0x8] sm:$0xff] %vm672, %v7149
      %7214 = vst.msk [vmem:[#allocation2 + $0x10] sm:$0xff] %vm672, %v7150
      %7215 = vst.msk [vmem:[#allocation2 + $0x18] sm:$0xff] %vm672, %v7151
      %7216 = vst.msk [vmem:[#allocation2 + $0x20] sm:$0xff] %vm672, %v7152
      %7217 = vst.msk [vmem:[#allocation2 + $0x28] sm:$0xff] %vm672, %v7153
      %7218 = vst.msk [vmem:[#allocation2 + $0x30] sm:$0xff] %vm672, %v7154
      %7219 = vst.msk [vmem:[#allocation2 + $0x38] sm:$0xff] %vm672, %v7155
      %7220 = vst.msk [vmem:[#allocation2 + $0x40] sm:$0xff] %vm672, %v7156
      %7221 = vst.msk [vmem:[#allocation2 + $0x48] sm:$0xff] %vm672, %v7157
      %7222 = vst.msk [vmem:[#allocation2 + $0x50] sm:$0xff] %vm672, %v7158
      %7223 = vst.msk [vmem:[#allocation2 + $0x58] sm:$0xff] %vm672, %v7159
      %7224 = vst.msk [vmem:[#allocation2 + $0x60] sm:$0xff] %vm672, %v7160
      %7225 = vst.msk [vmem:[#allocation2 + $0x68] sm:$0xff] %vm672, %v7161
      %7226 = vst.msk [vmem:[#allocation2 + $0x70] sm:$0xff] %vm672, %v7162
      %7227 = vst.msk [vmem:[#allocation2 + $0x78] sm:$0xff] %vm672, %v7163
      %7228 = vst.msk [vmem:[#allocation2 + $0x80] sm:$0xff] %vm672, %v7164
      %7229 = vst.msk [vmem:[#allocation2 + $0x88] sm:$0xff] %vm672, %v7165
      %7230 = vst.msk [vmem:[#allocation2 + $0x90] sm:$0xff] %vm672, %v7166
      %7231 = vst.msk [vmem:[#allocation2 + $0x98] sm:$0xff] %vm672, %v7167
      %7232 = vst.msk [vmem:[#allocation2 + $0xa0] sm:$0xff] %vm672, %v7168
      %7233 = vst.msk [vmem:[#allocation2 + $0xa8] sm:$0xff] %vm672, %v7169
      %7234 = vst.msk [vmem:[#allocation2 + $0xb0] sm:$0xff] %vm672, %v7170
      %7235 = vst.msk [vmem:[#allocation2 + $0xb8] sm:$0xff] %vm672, %v7171
      %7236 = vst.msk [vmem:[#allocation2 + $0xc0] sm:$0xff] %vm672, %v7172
      %7237 = vst.msk [vmem:[#allocation2 + $0xc8] sm:$0xff] %vm672, %v7173
      %7238 = vst.msk [vmem:[#allocation2 + $0xd0] sm:$0xff] %vm672, %v7174
      %7239 = vst.msk [vmem:[#allocation2 + $0xd8] sm:$0xff] %vm672, %v7175
      %7240 = vst.msk [vmem:[#allocation2 + $0xe0] sm:$0xff] %vm672, %v7176
      %7241 = vst.msk [vmem:[#allocation2 + $0xe8] sm:$0xff] %vm672, %v7177
      %7242 = vst.msk [vmem:[#allocation2 + $0xf0] sm:$0xff] %vm672, %v7178
      %7243 = vst.msk [vmem:[#allocation2 + $0xf8] sm:$0xff] %vm672, %v7179
      %7244 = vst.msk [vmem:[#allocation2 + $0x100] sm:$0xff] %vm672, %v7180
      %7245 = vst.msk [vmem:[#allocation2 + $0x108] sm:$0xff] %vm672, %v7181
      %7246 = vst.msk [vmem:[#allocation2 + $0x110] sm:$0xff] %vm672, %v7182
      %7247 = vst.msk [vmem:[#allocation2 + $0x118] sm:$0xff] %vm672, %v7183
      %7248 = vst.msk [vmem:[#allocation2 + $0x120] sm:$0xff] %vm672, %v7184
      %7249 = vst.msk [vmem:[#allocation2 + $0x128] sm:$0xff] %vm672, %v7185
      %7250 = vst.msk [vmem:[#allocation2 + $0x130] sm:$0xff] %vm672, %v7186
      %7251 = vst.msk [vmem:[#allocation2 + $0x138] sm:$0xff] %vm672, %v7187
      %7252 = vst.msk [vmem:[#allocation2 + $0x140] sm:$0xff] %vm672, %v7188
      %7253 = vst.msk [vmem:[#allocation2 + $0x148] sm:$0xff] %vm672, %v7189
      %7254 = vst.msk [vmem:[#allocation2 + $0x150] sm:$0xff] %vm672, %v7190
      %7255 = vst.msk [vmem:[#allocation2 + $0x158] sm:$0xff] %vm672, %v7191
      %7256 = vst.msk [vmem:[#allocation2 + $0x160] sm:$0xff] %vm672, %v7192
      %7257 = vst.msk [vmem:[#allocation2 + $0x168] sm:$0xff] %vm672, %v7193
      %7258 = vst.msk [vmem:[#allocation2 + $0x170] sm:$0xff] %vm672, %v7194
      %7259 = vst.msk [vmem:[#allocation2 + $0x178] sm:$0xff] %vm672, %v7195
      %7260 = vst.msk [vmem:[#allocation2 + $0x180] sm:$0xff] %vm672, %v7196
      %7261 = vst.msk [vmem:[#allocation2 + $0x188] sm:$0xff] %vm672, %v7197
      %7262 = vst.msk [vmem:[#allocation2 + $0x190] sm:$0xff] %vm672, %v7198
      %7263 = vst.msk [vmem:[#allocation2 + $0x198] sm:$0xff] %vm672, %v7199
      %7264 = vst.msk [vmem:[#allocation2 + $0x1a0] sm:$0xff] %vm672, %v7200
      %7265 = vst.msk [vmem:[#allocation2 + $0x1a8] sm:$0xff] %vm672, %v7201
      %7266 = vst.msk [vmem:[#allocation2 + $0x1b0] sm:$0xff] %vm672, %v7202
      %7267 = vst.msk [vmem:[#allocation2 + $0x1b8] sm:$0xff] %vm672, %v7203
      %7268 = vst.msk [vmem:[#allocation2 + $0x1c0] sm:$0xff] %vm672, %v7204
      %7269 = vst.msk [vmem:[#allocation2 + $0x1c8] sm:$0xff] %vm672, %v7205
      %7270 = vst.msk [vmem:[#allocation2 + $0x1d0] sm:$0xff] %vm672, %v7206
      %7271 = vst.msk [vmem:[#allocation2 + $0x1d8] sm:$0xff] %vm672, %v7207
      %7272 = vst.msk [vmem:[#allocation2 + $0x1e0] sm:$0xff] %vm672, %v7208
      %7273 = vst.msk [vmem:[#allocation2 + $0x1e8] sm:$0xff] %vm672, %v7209
      %7274 = vst.msk [vmem:[#allocation2 + $0x1f0] sm:$0xff] %vm672, %v7210
      %7275 = vst.msk [vmem:[#allocation2 + $0x1f8] sm:$0xff] %vm672, %v7211
    %v7276 = vld [vmem:[#allocation2] sm:$0xff]
    %v7277 = vld [vmem:[#allocation2 + $0x8] sm:$0xff]
    %v7278 = vld [vmem:[#allocation2 + $0x10] sm:$0xff]
    %v7279 = vld [vmem:[#allocation2 + $0x18] sm:$0xff]
    %v7280 = vld [vmem:[#allocation2 + $0x20] sm:$0xff]
    %v7281 = vld [vmem:[#allocation2 + $0x28] sm:$0xff]
    %v7282 = vld [vmem:[#allocation2 + $0x30] sm:$0xff]
    %v7283 = vld [vmem:[#allocation2 + $0x38] sm:$0xff]
    %v7284 = vld [vmem:[#allocation2 + $0x40] sm:$0xff]
    %v7285 = vld [vmem:[#allocation2 + $0x48] sm:$0xff]
    %v7286 = vld [vmem:[#allocation2 + $0x50] sm:$0xff]
    %v7287 = vld [vmem:[#allocation2 + $0x58] sm:$0xff]
    %v7288 = vld [vmem:[#allocation2 + $0x60] sm:$0xff]
    %v7289 = vld [vmem:[#allocation2 + $0x68] sm:$0xff]
    %v7290 = vld [vmem:[#allocation2 + $0x70] sm:$0xff]
    %v7291 = vld [vmem:[#allocation2 + $0x78] sm:$0xff]
    %v7292 = vld [vmem:[#allocation2 + $0x80] sm:$0xff]
    %v7293 = vld [vmem:[#allocation2 + $0x88] sm:$0xff]
    %v7294 = vld [vmem:[#allocation2 + $0x90] sm:$0xff]
    %v7295 = vld [vmem:[#allocation2 + $0x98] sm:$0xff]
    %v7296 = vld [vmem:[#allocation2 + $0xa0] sm:$0xff]
    %v7297 = vld [vmem:[#allocation2 + $0xa8] sm:$0xff]
    %v7298 = vld [vmem:[#allocation2 + $0xb0] sm:$0xff]
    %v7299 = vld [vmem:[#allocation2 + $0xb8] sm:$0xff]
    %v7300 = vld [vmem:[#allocation2 + $0xc0] sm:$0xff]
    %v7301 = vld [vmem:[#allocation2 + $0xc8] sm:$0xff]
    %v7302 = vld [vmem:[#allocation2 + $0xd0] sm:$0xff]
    %v7303 = vld [vmem:[#allocation2 + $0xd8] sm:$0xff]
    %v7304 = vld [vmem:[#allocation2 + $0xe0] sm:$0xff]
    %v7305 = vld [vmem:[#allocation2 + $0xe8] sm:$0xff]
    %v7306 = vld [vmem:[#allocation2 + $0xf0] sm:$0xff]
    %v7307 = vld [vmem:[#allocation2 + $0xf8] sm:$0xff]
    %v7308 = vld [vmem:[#allocation2 + $0x100] sm:$0xff]
    %v7309 = vld [vmem:[#allocation2 + $0x108] sm:$0xff]
    %v7310 = vld [vmem:[#allocation2 + $0x110] sm:$0xff]
    %v7311 = vld [vmem:[#allocation2 + $0x118] sm:$0xff]
    %v7312 = vld [vmem:[#allocation2 + $0x120] sm:$0xff]
    %v7313 = vld [vmem:[#allocation2 + $0x128] sm:$0xff]
    %v7314 = vld [vmem:[#allocation2 + $0x130] sm:$0xff]
    %v7315 = vld [vmem:[#allocation2 + $0x138] sm:$0xff]
    %v7316 = vld [vmem:[#allocation2 + $0x140] sm:$0xff]
    %v7317 = vld [vmem:[#allocation2 + $0x148] sm:$0xff]
    %v7318 = vld [vmem:[#allocation2 + $0x150] sm:$0xff]
    %v7319 = vld [vmem:[#allocation2 + $0x158] sm:$0xff]
    %v7320 = vld [vmem:[#allocation2 + $0x160] sm:$0xff]
    %v7321 = vld [vmem:[#allocation2 + $0x168] sm:$0xff]
    %v7322 = vld [vmem:[#allocation2 + $0x170] sm:$0xff]
    %v7323 = vld [vmem:[#allocation2 + $0x178] sm:$0xff]
    %v7324 = vld [vmem:[#allocation2 + $0x180] sm:$0xff]
    %v7325 = vld [vmem:[#allocation2 + $0x188] sm:$0xff]
    %v7326 = vld [vmem:[#allocation2 + $0x190] sm:$0xff]
    %v7327 = vld [vmem:[#allocation2 + $0x198] sm:$0xff]
    %v7328 = vld [vmem:[#allocation2 + $0x1a0] sm:$0xff]
    %v7329 = vld [vmem:[#allocation2 + $0x1a8] sm:$0xff]
    %v7330 = vld [vmem:[#allocation2 + $0x1b0] sm:$0xff]
    %v7331 = vld [vmem:[#allocation2 + $0x1b8] sm:$0xff]
    %v7332 = vld [vmem:[#allocation2 + $0x1c0] sm:$0xff]
    %v7333 = vld [vmem:[#allocation2 + $0x1c8] sm:$0xff]
    %v7334 = vld [vmem:[#allocation2 + $0x1d0] sm:$0xff]
    %v7335 = vld [vmem:[#allocation2 + $0x1d8] sm:$0xff]
    %v7336 = vld [vmem:[#allocation2 + $0x1e0] sm:$0xff]
    %v7337 = vld [vmem:[#allocation2 + $0x1e8] sm:$0xff]
    %v7338 = vld [vmem:[#allocation2 + $0x1f0] sm:$0xff]
    %v7339 = vld [vmem:[#allocation2 + $0x1f8] sm:$0xff]
    %v7340 = vld [vmem:[%s5] sm:$0x1]
    %v7341 = vld [vmem:[%s6] sm:$0x1]
    %v7342 = vsel %vm672, %v7276, 0.0
    %v7343 = vsel %vm672, %v7277, 0.0
    %v7344 = vadd.f32 %v7342, %v7343
    %v7345 = vsel %vm672, %v7278, 0.0
    %v7346 = vadd.f32 %v7344, %v7345
    %v7347 = vsel %vm672, %v7279, 0.0
    %v7348 = vadd.f32 %v7346, %v7347
    %v7349 = vsel %vm672, %v7280, 0.0
    %v7350 = vadd.f32 %v7348, %v7349
    %v7351 = vsel %vm672, %v7281, 0.0
    %v7352 = vadd.f32 %v7350, %v7351
    %v7353 = vsel %vm672, %v7282, 0.0
    %v7354 = vadd.f32 %v7352, %v7353
    %v7355 = vsel %vm672, %v7283, 0.0
    %v7356 = vadd.f32 %v7354, %v7355
    %v7357 = vsel %vm672, %v7284, 0.0
    %v7358 = vadd.f32 %v7356, %v7357
    %v7359 = vsel %vm672, %v7285, 0.0
    %v7360 = vadd.f32 %v7358, %v7359
    %v7361 = vsel %vm672, %v7286, 0.0
    %v7362 = vadd.f32 %v7360, %v7361
    %v7363 = vsel %vm672, %v7287, 0.0
    %v7364 = vadd.f32 %v7362, %v7363
    %v7365 = vsel %vm672, %v7288, 0.0
    %v7366 = vadd.f32 %v7364, %v7365
    %v7367 = vsel %vm672, %v7289, 0.0
    %v7368 = vadd.f32 %v7366, %v7367
    %v7369 = vsel %vm672, %v7290, 0.0
    %v7370 = vadd.f32 %v7368, %v7369
    %v7371 = vsel %vm672, %v7291, 0.0
    %v7372 = vadd.f32 %v7370, %v7371
    %v7373 = vsel %vm672, %v7292, 0.0
    %v7374 = vadd.f32 %v7372, %v7373
    %v7375 = vsel %vm672, %v7293, 0.0
    %v7376 = vadd.f32 %v7374, %v7375
    %v7377 = vsel %vm672, %v7294, 0.0
    %v7378 = vadd.f32 %v7376, %v7377
    %v7379 = vsel %vm672, %v7295, 0.0
    %v7380 = vadd.f32 %v7378, %v7379
    %v7381 = vsel %vm672, %v7296, 0.0
    %v7382 = vadd.f32 %v7380, %v7381
    %v7383 = vsel %vm672, %v7297, 0.0
    %v7384 = vadd.f32 %v7382, %v7383
    %v7385 = vsel %vm672, %v7298, 0.0
    %v7386 = vadd.f32 %v7384, %v7385
    %v7387 = vsel %vm672, %v7299, 0.0
    %v7388 = vadd.f32 %v7386, %v7387
    %v7389 = vsel %vm672, %v7300, 0.0
    %v7390 = vadd.f32 %v7388, %v7389
    %v7391 = vsel %vm672, %v7301, 0.0
    %v7392 = vadd.f32 %v7390, %v7391
    %v7393 = vsel %vm672, %v7302, 0.0
    %v7394 = vadd.f32 %v7392, %v7393
    %v7395 = vsel %vm672, %v7303, 0.0
    %v7396 = vadd.f32 %v7394, %v7395
    %v7397 = vsel %vm672, %v7304, 0.0
    %v7398 = vadd.f32 %v7396, %v7397
    %v7399 = vsel %vm672, %v7305, 0.0
    %v7400 = vadd.f32 %v7398, %v7399
    %v7401 = vsel %vm672, %v7306, 0.0
    %v7402 = vadd.f32 %v7400, %v7401
    %v7403 = vsel %vm672, %v7307, 0.0
    %v7404 = vadd.f32 %v7402, %v7403
    %v7405 = vsel %vm672, %v7308, 0.0
    %v7406 = vadd.f32 %v7404, %v7405
    %v7407 = vsel %vm672, %v7309, 0.0
    %v7408 = vadd.f32 %v7406, %v7407
    %v7409 = vsel %vm672, %v7310, 0.0
    %v7410 = vadd.f32 %v7408, %v7409
    %v7411 = vsel %vm672, %v7311, 0.0
    %v7412 = vadd.f32 %v7410, %v7411
    %v7413 = vsel %vm672, %v7312, 0.0
    %v7414 = vadd.f32 %v7412, %v7413
    %v7415 = vsel %vm672, %v7313, 0.0
    %v7416 = vadd.f32 %v7414, %v7415
    %v7417 = vsel %vm672, %v7314, 0.0
    %v7418 = vadd.f32 %v7416, %v7417
    %v7419 = vsel %vm672, %v7315, 0.0
    %v7420 = vadd.f32 %v7418, %v7419
    %v7421 = vsel %vm672, %v7316, 0.0
    %v7422 = vadd.f32 %v7420, %v7421
    %v7423 = vsel %vm672, %v7317, 0.0
    %v7424 = vadd.f32 %v7422, %v7423
    %v7425 = vsel %vm672, %v7318, 0.0
    %v7426 = vadd.f32 %v7424, %v7425
    %v7427 = vsel %vm672, %v7319, 0.0
    %v7428 = vadd.f32 %v7426, %v7427
    %v7429 = vsel %vm672, %v7320, 0.0
    %v7430 = vadd.f32 %v7428, %v7429
    %v7431 = vsel %vm672, %v7321, 0.0
    %v7432 = vadd.f32 %v7430, %v7431
    %v7433 = vsel %vm672, %v7322, 0.0
    %v7434 = vadd.f32 %v7432, %v7433
    %v7435 = vsel %vm672, %v7323, 0.0
    %v7436 = vadd.f32 %v7434, %v7435
    %v7437 = vsel %vm672, %v7324, 0.0
    %v7438 = vadd.f32 %v7436, %v7437
    %v7439 = vsel %vm672, %v7325, 0.0
    %v7440 = vadd.f32 %v7438, %v7439
    %v7441 = vsel %vm672, %v7326, 0.0
    %v7442 = vadd.f32 %v7440, %v7441
    %v7443 = vsel %vm672, %v7327, 0.0
    %v7444 = vadd.f32 %v7442, %v7443
    %v7445 = vsel %vm672, %v7328, 0.0
    %v7446 = vadd.f32 %v7444, %v7445
    %v7447 = vsel %vm672, %v7329, 0.0
    %v7448 = vadd.f32 %v7446, %v7447
    %v7449 = vsel %vm672, %v7330, 0.0
    %v7450 = vadd.f32 %v7448, %v7449
    %v7451 = vsel %vm672, %v7331, 0.0
    %v7452 = vadd.f32 %v7450, %v7451
    %v7453 = vsel %vm672, %v7332, 0.0
    %v7454 = vadd.f32 %v7452, %v7453
    %v7455 = vsel %vm672, %v7333, 0.0
    %v7456 = vadd.f32 %v7454, %v7455
    %v7457 = vsel %vm672, %v7334, 0.0
    %v7458 = vadd.f32 %v7456, %v7457
    %v7459 = vsel %vm672, %v7335, 0.0
    %v7460 = vadd.f32 %v7458, %v7459
    %v7461 = vsel %vm672, %v7336, 0.0
    %v7462 = vadd.f32 %v7460, %v7461
    %v7463 = vsel %vm672, %v7337, 0.0
    %v7464 = vadd.f32 %v7462, %v7463
    %v7465 = vsel %vm672, %v7338, 0.0
    %v7466 = vadd.f32 %v7464, %v7465
    %v7467 = vsel %vm672, %v7339, 0.0
    %v7468 = vadd.f32 %v7466, %v7467
    %v7469 = vrot.slane %v7468, 4
    %v7470 = vadd.f32 %v7468, %v7469
    %v7471 = vrot.slane %v7470, 2
    %v7472 = vadd.f32 %v7470, %v7471
    %v7473 = vrot.slane %v7472, 1
    %v7474 = vadd.f32 %v7472, %v7473
    %v7475 = vmul.f32 %v7474, %v806
    %v7476 = vsub.f32 %v7276, %v7475
    %v7477 = vsub.f32 %v7277, %v7475
    %v7478 = vsub.f32 %v7278, %v7475
    %v7479 = vsub.f32 %v7279, %v7475
    %v7480 = vsub.f32 %v7280, %v7475
    %v7481 = vsub.f32 %v7281, %v7475
    %v7482 = vsub.f32 %v7282, %v7475
    %v7483 = vsub.f32 %v7283, %v7475
    %v7484 = vsub.f32 %v7284, %v7475
    %v7485 = vsub.f32 %v7285, %v7475
    %v7486 = vsub.f32 %v7286, %v7475
    %v7487 = vsub.f32 %v7287, %v7475
    %v7488 = vsub.f32 %v7288, %v7475
    %v7489 = vsub.f32 %v7289, %v7475
    %v7490 = vsub.f32 %v7290, %v7475
    %v7491 = vsub.f32 %v7291, %v7475
    %v7492 = vsub.f32 %v7292, %v7475
    %v7493 = vsub.f32 %v7293, %v7475
    %v7494 = vsub.f32 %v7294, %v7475
    %v7495 = vsub.f32 %v7295, %v7475
    %v7496 = vsub.f32 %v7296, %v7475
    %v7497 = vsub.f32 %v7297, %v7475
    %v7498 = vsub.f32 %v7298, %v7475
    %v7499 = vsub.f32 %v7299, %v7475
    %v7500 = vsub.f32 %v7300, %v7475
    %v7501 = vsub.f32 %v7301, %v7475
    %v7502 = vsub.f32 %v7302, %v7475
    %v7503 = vsub.f32 %v7303, %v7475
    %v7504 = vsub.f32 %v7304, %v7475
    %v7505 = vsub.f32 %v7305, %v7475
    %v7506 = vsub.f32 %v7306, %v7475
    %v7507 = vsub.f32 %v7307, %v7475
    %v7508 = vsub.f32 %v7308, %v7475
    %v7509 = vsub.f32 %v7309, %v7475
    %v7510 = vsub.f32 %v7310, %v7475
    %v7511 = vsub.f32 %v7311, %v7475
    %v7512 = vsub.f32 %v7312, %v7475
    %v7513 = vsub.f32 %v7313, %v7475
    %v7514 = vsub.f32 %v7314, %v7475
    %v7515 = vsub.f32 %v7315, %v7475
    %v7516 = vsub.f32 %v7316, %v7475
    %v7517 = vsub.f32 %v7317, %v7475
    %v7518 = vsub.f32 %v7318, %v7475
    %v7519 = vsub.f32 %v7319, %v7475
    %v7520 = vsub.f32 %v7320, %v7475
    %v7521 = vsub.f32 %v7321, %v7475
    %v7522 = vsub.f32 %v7322, %v7475
    %v7523 = vsub.f32 %v7323, %v7475
    %v7524 = vsub.f32 %v7324, %v7475
    %v7525 = vsub.f32 %v7325, %v7475
    %v7526 = vsub.f32 %v7326, %v7475
    %v7527 = vsub.f32 %v7327, %v7475
    %v7528 = vsub.f32 %v7328, %v7475
    %v7529 = vsub.f32 %v7329, %v7475
    %v7530 = vsub.f32 %v7330, %v7475
    %v7531 = vsub.f32 %v7331, %v7475
    %v7532 = vsub.f32 %v7332, %v7475
    %v7533 = vsub.f32 %v7333, %v7475
    %v7534 = vsub.f32 %v7334, %v7475
    %v7535 = vsub.f32 %v7335, %v7475
    %v7536 = vsub.f32 %v7336, %v7475
    %v7537 = vsub.f32 %v7337, %v7475
    %v7538 = vsub.f32 %v7338, %v7475
    %v7539 = vsub.f32 %v7339, %v7475
    %v7540 = vmul.f32 %v7476, %v7476
    %v7541 = vmul.f32 %v7477, %v7477
    %v7542 = vmul.f32 %v7478, %v7478
    %v7543 = vmul.f32 %v7479, %v7479
    %v7544 = vmul.f32 %v7480, %v7480
    %v7545 = vmul.f32 %v7481, %v7481
    %v7546 = vmul.f32 %v7482, %v7482
    %v7547 = vmul.f32 %v7483, %v7483
    %v7548 = vmul.f32 %v7484, %v7484
    %v7549 = vmul.f32 %v7485, %v7485
    %v7550 = vmul.f32 %v7486, %v7486
    %v7551 = vmul.f32 %v7487, %v7487
    %v7552 = vmul.f32 %v7488, %v7488
    %v7553 = vmul.f32 %v7489, %v7489
    %v7554 = vmul.f32 %v7490, %v7490
    %v7555 = vmul.f32 %v7491, %v7491
    %v7556 = vmul.f32 %v7492, %v7492
    %v7557 = vmul.f32 %v7493, %v7493
    %v7558 = vmul.f32 %v7494, %v7494
    %v7559 = vmul.f32 %v7495, %v7495
    %v7560 = vmul.f32 %v7496, %v7496
    %v7561 = vmul.f32 %v7497, %v7497
    %v7562 = vmul.f32 %v7498, %v7498
    %v7563 = vmul.f32 %v7499, %v7499
    %v7564 = vmul.f32 %v7500, %v7500
    %v7565 = vmul.f32 %v7501, %v7501
    %v7566 = vmul.f32 %v7502, %v7502
    %v7567 = vmul.f32 %v7503, %v7503
    %v7568 = vmul.f32 %v7504, %v7504
    %v7569 = vmul.f32 %v7505, %v7505
    %v7570 = vmul.f32 %v7506, %v7506
    %v7571 = vmul.f32 %v7507, %v7507
    %v7572 = vmul.f32 %v7508, %v7508
    %v7573 = vmul.f32 %v7509, %v7509
    %v7574 = vmul.f32 %v7510, %v7510
    %v7575 = vmul.f32 %v7511, %v7511
    %v7576 = vmul.f32 %v7512, %v7512
    %v7577 = vmul.f32 %v7513, %v7513
    %v7578 = vmul.f32 %v7514, %v7514
    %v7579 = vmul.f32 %v7515, %v7515
    %v7580 = vmul.f32 %v7516, %v7516
    %v7581 = vmul.f32 %v7517, %v7517
    %v7582 = vmul.f32 %v7518, %v7518
    %v7583 = vmul.f32 %v7519, %v7519
    %v7584 = vmul.f32 %v7520, %v7520
    %v7585 = vmul.f32 %v7521, %v7521
    %v7586 = vmul.f32 %v7522, %v7522
    %v7587 = vmul.f32 %v7523, %v7523
    %v7588 = vmul.f32 %v7524, %v7524
    %v7589 = vmul.f32 %v7525, %v7525
    %v7590 = vmul.f32 %v7526, %v7526
    %v7591 = vmul.f32 %v7527, %v7527
    %v7592 = vmul.f32 %v7528, %v7528
    %v7593 = vmul.f32 %v7529, %v7529
    %v7594 = vmul.f32 %v7530, %v7530
    %v7595 = vmul.f32 %v7531, %v7531
    %v7596 = vmul.f32 %v7532, %v7532
    %v7597 = vmul.f32 %v7533, %v7533
    %v7598 = vmul.f32 %v7534, %v7534
    %v7599 = vmul.f32 %v7535, %v7535
    %v7600 = vmul.f32 %v7536, %v7536
    %v7601 = vmul.f32 %v7537, %v7537
    %v7602 = vmul.f32 %v7538, %v7538
    %v7603 = vmul.f32 %v7539, %v7539
    %v7604 = vsel %vm672, %v7540, 0.0
    %v7605 = vsel %vm672, %v7541, 0.0
    %v7606 = vadd.f32 %v7604, %v7605
    %v7607 = vsel %vm672, %v7542, 0.0
    %v7608 = vadd.f32 %v7606, %v7607
    %v7609 = vsel %vm672, %v7543, 0.0
    %v7610 = vadd.f32 %v7608, %v7609
    %v7611 = vsel %vm672, %v7544, 0.0
    %v7612 = vadd.f32 %v7610, %v7611
    %v7613 = vsel %vm672, %v7545, 0.0
    %v7614 = vadd.f32 %v7612, %v7613
    %v7615 = vsel %vm672, %v7546, 0.0
    %v7616 = vadd.f32 %v7614, %v7615
    %v7617 = vsel %vm672, %v7547, 0.0
    %v7618 = vadd.f32 %v7616, %v7617
    %v7619 = vsel %vm672, %v7548, 0.0
    %v7620 = vadd.f32 %v7618, %v7619
    %v7621 = vsel %vm672, %v7549, 0.0
    %v7622 = vadd.f32 %v7620, %v7621
    %v7623 = vsel %vm672, %v7550, 0.0
    %v7624 = vadd.f32 %v7622, %v7623
    %v7625 = vsel %vm672, %v7551, 0.0
    %v7626 = vadd.f32 %v7624, %v7625
    %v7627 = vsel %vm672, %v7552, 0.0
    %v7628 = vadd.f32 %v7626, %v7627
    %v7629 = vsel %vm672, %v7553, 0.0
    %v7630 = vadd.f32 %v7628, %v7629
    %v7631 = vsel %vm672, %v7554, 0.0
    %v7632 = vadd.f32 %v7630, %v7631
    %v7633 = vsel %vm672, %v7555, 0.0
    %v7634 = vadd.f32 %v7632, %v7633
    %v7635 = vsel %vm672, %v7556, 0.0
    %v7636 = vadd.f32 %v7634, %v7635
    %v7637 = vsel %vm672, %v7557, 0.0
    %v7638 = vadd.f32 %v7636, %v7637
    %v7639 = vsel %vm672, %v7558, 0.0
    %v7640 = vadd.f32 %v7638, %v7639
    %v7641 = vsel %vm672, %v7559, 0.0
    %v7642 = vadd.f32 %v7640, %v7641
    %v7643 = vsel %vm672, %v7560, 0.0
    %v7644 = vadd.f32 %v7642, %v7643
    %v7645 = vsel %vm672, %v7561, 0.0
    %v7646 = vadd.f32 %v7644, %v7645
    %v7647 = vsel %vm672, %v7562, 0.0
    %v7648 = vadd.f32 %v7646, %v7647
    %v7649 = vsel %vm672, %v7563, 0.0
    %v7650 = vadd.f32 %v7648, %v7649
    %v7651 = vsel %vm672, %v7564, 0.0
    %v7652 = vadd.f32 %v7650, %v7651
    %v7653 = vsel %vm672, %v7565, 0.0
    %v7654 = vadd.f32 %v7652, %v7653
    %v7655 = vsel %vm672, %v7566, 0.0
    %v7656 = vadd.f32 %v7654, %v7655
    %v7657 = vsel %vm672, %v7567, 0.0
    %v7658 = vadd.f32 %v7656, %v7657
    %v7659 = vsel %vm672, %v7568, 0.0
    %v7660 = vadd.f32 %v7658, %v7659
    %v7661 = vsel %vm672, %v7569, 0.0
    %v7662 = vadd.f32 %v7660, %v7661
    %v7663 = vsel %vm672, %v7570, 0.0
    %v7664 = vadd.f32 %v7662, %v7663
    %v7665 = vsel %vm672, %v7571, 0.0
    %v7666 = vadd.f32 %v7664, %v7665
    %v7667 = vsel %vm672, %v7572, 0.0
    %v7668 = vadd.f32 %v7666, %v7667
    %v7669 = vsel %vm672, %v7573, 0.0
    %v7670 = vadd.f32 %v7668, %v7669
    %v7671 = vsel %vm672, %v7574, 0.0
    %v7672 = vadd.f32 %v7670, %v7671
    %v7673 = vsel %vm672, %v7575, 0.0
    %v7674 = vadd.f32 %v7672, %v7673
    %v7675 = vsel %vm672, %v7576, 0.0
    %v7676 = vadd.f32 %v7674, %v7675
    %v7677 = vsel %vm672, %v7577, 0.0
    %v7678 = vadd.f32 %v7676, %v7677
    %v7679 = vsel %vm672, %v7578, 0.0
    %v7680 = vadd.f32 %v7678, %v7679
    %v7681 = vsel %vm672, %v7579, 0.0
    %v7682 = vadd.f32 %v7680, %v7681
    %v7683 = vsel %vm672, %v7580, 0.0
    %v7684 = vadd.f32 %v7682, %v7683
    %v7685 = vsel %vm672, %v7581, 0.0
    %v7686 = vadd.f32 %v7684, %v7685
    %v7687 = vsel %vm672, %v7582, 0.0
    %v7688 = vadd.f32 %v7686, %v7687
    %v7689 = vsel %vm672, %v7583, 0.0
    %v7690 = vadd.f32 %v7688, %v7689
    %v7691 = vsel %vm672, %v7584, 0.0
    %v7692 = vadd.f32 %v7690, %v7691
    %v7693 = vsel %vm672, %v7585, 0.0
    %v7694 = vadd.f32 %v7692, %v7693
    %v7695 = vsel %vm672, %v7586, 0.0
    %v7696 = vadd.f32 %v7694, %v7695
    %v7697 = vsel %vm672, %v7587, 0.0
    %v7698 = vadd.f32 %v7696, %v7697
    %v7699 = vsel %vm672, %v7588, 0.0
    %v7700 = vadd.f32 %v7698, %v7699
    %v7701 = vsel %vm672, %v7589, 0.0
    %v7702 = vadd.f32 %v7700, %v7701
    %v7703 = vsel %vm672, %v7590, 0.0
    %v7704 = vadd.f32 %v7702, %v7703
    %v7705 = vsel %vm672, %v7591, 0.0
    %v7706 = vadd.f32 %v7704, %v7705
    %v7707 = vsel %vm672, %v7592, 0.0
    %v7708 = vadd.f32 %v7706, %v7707
    %v7709 = vsel %vm672, %v7593, 0.0
    %v7710 = vadd.f32 %v7708, %v7709
    %v7711 = vsel %vm672, %v7594, 0.0
    %v7712 = vadd.f32 %v7710, %v7711
    %v7713 = vsel %vm672, %v7595, 0.0
    %v7714 = vadd.f32 %v7712, %v7713
    %v7715 = vsel %vm672, %v7596, 0.0
    %v7716 = vadd.f32 %v7714, %v7715
    %v7717 = vsel %vm672, %v7597, 0.0
    %v7718 = vadd.f32 %v7716, %v7717
    %v7719 = vsel %vm672, %v7598, 0.0
    %v7720 = vadd.f32 %v7718, %v7719
    %v7721 = vsel %vm672, %v7599, 0.0
    %v7722 = vadd.f32 %v7720, %v7721
    %v7723 = vsel %vm672, %v7600, 0.0
    %v7724 = vadd.f32 %v7722, %v7723
    %v7725 = vsel %vm672, %v7601, 0.0
    %v7726 = vadd.f32 %v7724, %v7725
    %v7727 = vsel %vm672, %v7602, 0.0
    %v7728 = vadd.f32 %v7726, %v7727
    %v7729 = vsel %vm672, %v7603, 0.0
    %v7730 = vadd.f32 %v7728, %v7729
    %v7731 = vrot.slane %v7730, 4
    %v7732 = vadd.f32 %v7730, %v7731
    %v7733 = vrot.slane %v7732, 2
    %v7734 = vadd.f32 %v7732, %v7733
    %v7735 = vrot.slane %v7734, 1
    %v7736 = vadd.f32 %v7734, %v7735
    %v7737 = vmul.f32 %v7736, %v806
    %v7738 = vadd.f32 %v7737, 1e-05
    %v7739 = vrsqrt.pop %v7738
    %v7740 = vmul.f32 %v7476, %v7739
    %v7741 = vmul.f32 %v7477, %v7739
    %v7742 = vmul.f32 %v7478, %v7739
    %v7743 = vmul.f32 %v7479, %v7739
    %v7744 = vmul.f32 %v7480, %v7739
    %v7745 = vmul.f32 %v7481, %v7739
    %v7746 = vmul.f32 %v7482, %v7739
    %v7747 = vmul.f32 %v7483, %v7739
    %v7748 = vmul.f32 %v7484, %v7739
    %v7749 = vmul.f32 %v7485, %v7739
    %v7750 = vmul.f32 %v7486, %v7739
    %v7751 = vmul.f32 %v7487, %v7739
    %v7752 = vmul.f32 %v7488, %v7739
    %v7753 = vmul.f32 %v7489, %v7739
    %v7754 = vmul.f32 %v7490, %v7739
    %v7755 = vmul.f32 %v7491, %v7739
    %v7756 = vmul.f32 %v7492, %v7739
    %v7757 = vmul.f32 %v7493, %v7739
    %v7758 = vmul.f32 %v7494, %v7739
    %v7759 = vmul.f32 %v7495, %v7739
    %v7760 = vmul.f32 %v7496, %v7739
    %v7761 = vmul.f32 %v7497, %v7739
    %v7762 = vmul.f32 %v7498, %v7739
    %v7763 = vmul.f32 %v7499, %v7739
    %v7764 = vmul.f32 %v7500, %v7739
    %v7765 = vmul.f32 %v7501, %v7739
    %v7766 = vmul.f32 %v7502, %v7739
    %v7767 = vmul.f32 %v7503, %v7739
    %v7768 = vmul.f32 %v7504, %v7739
    %v7769 = vmul.f32 %v7505, %v7739
    %v7770 = vmul.f32 %v7506, %v7739
    %v7771 = vmul.f32 %v7507, %v7739
    %v7772 = vmul.f32 %v7508, %v7739
    %v7773 = vmul.f32 %v7509, %v7739
    %v7774 = vmul.f32 %v7510, %v7739
    %v7775 = vmul.f32 %v7511, %v7739
    %v7776 = vmul.f32 %v7512, %v7739
    %v7777 = vmul.f32 %v7513, %v7739
    %v7778 = vmul.f32 %v7514, %v7739
    %v7779 = vmul.f32 %v7515, %v7739
    %v7780 = vmul.f32 %v7516, %v7739
    %v7781 = vmul.f32 %v7517, %v7739
    %v7782 = vmul.f32 %v7518, %v7739
    %v7783 = vmul.f32 %v7519, %v7739
    %v7784 = vmul.f32 %v7520, %v7739
    %v7785 = vmul.f32 %v7521, %v7739
    %v7786 = vmul.f32 %v7522, %v7739
    %v7787 = vmul.f32 %v7523, %v7739
    %v7788 = vmul.f32 %v7524, %v7739
    %v7789 = vmul.f32 %v7525, %v7739
    %v7790 = vmul.f32 %v7526, %v7739
    %v7791 = vmul.f32 %v7527, %v7739
    %v7792 = vmul.f32 %v7528, %v7739
    %v7793 = vmul.f32 %v7529, %v7739
    %v7794 = vmul.f32 %v7530, %v7739
    %v7795 = vmul.f32 %v7531, %v7739
    %v7796 = vmul.f32 %v7532, %v7739
    %v7797 = vmul.f32 %v7533, %v7739
    %v7798 = vmul.f32 %v7534, %v7739
    %v7799 = vmul.f32 %v7535, %v7739
    %v7800 = vmul.f32 %v7536, %v7739
    %v7801 = vmul.f32 %v7537, %v7739
    %v7802 = vmul.f32 %v7538, %v7739
    %v7803 = vmul.f32 %v7539, %v7739
    %v7805 = vlaneseq
    %v7806 = vshrl.u32 %v7805, 7
    %v7807 = vsub.s32 0, %v7806
    %v7808 = vrot.slane %v7340, %v7807
    %v7810 = vmul.f32 %v7740, %v7808
    %v7811 = vmul.f32 %v7741, %v7808
    %v7812 = vmul.f32 %v7742, %v7808
    %v7813 = vmul.f32 %v7743, %v7808
    %v7814 = vmul.f32 %v7744, %v7808
    %v7815 = vmul.f32 %v7745, %v7808
    %v7816 = vmul.f32 %v7746, %v7808
    %v7817 = vmul.f32 %v7747, %v7808
    %v7818 = vmul.f32 %v7748, %v7808
    %v7819 = vmul.f32 %v7749, %v7808
    %v7820 = vmul.f32 %v7750, %v7808
    %v7821 = vmul.f32 %v7751, %v7808
    %v7822 = vmul.f32 %v7752, %v7808
    %v7823 = vmul.f32 %v7753, %v7808
    %v7824 = vmul.f32 %v7754, %v7808
    %v7825 = vmul.f32 %v7755, %v7808
    %v7826 = vmul.f32 %v7756, %v7808
    %v7827 = vmul.f32 %v7757, %v7808
    %v7828 = vmul.f32 %v7758, %v7808
    %v7829 = vmul.f32 %v7759, %v7808
    %v7830 = vmul.f32 %v7760, %v7808
    %v7831 = vmul.f32 %v7761, %v7808
    %v7832 = vmul.f32 %v7762, %v7808
    %v7833 = vmul.f32 %v7763, %v7808
    %v7834 = vmul.f32 %v7764, %v7808
    %v7835 = vmul.f32 %v7765, %v7808
    %v7836 = vmul.f32 %v7766, %v7808
    %v7837 = vmul.f32 %v7767, %v7808
    %v7838 = vmul.f32 %v7768, %v7808
    %v7839 = vmul.f32 %v7769, %v7808
    %v7840 = vmul.f32 %v7770, %v7808
    %v7841 = vmul.f32 %v7771, %v7808
    %v7842 = vmul.f32 %v7772, %v7808
    %v7843 = vmul.f32 %v7773, %v7808
    %v7844 = vmul.f32 %v7774, %v7808
    %v7845 = vmul.f32 %v7775, %v7808
    %v7846 = vmul.f32 %v7776, %v7808
    %v7847 = vmul.f32 %v7777, %v7808
    %v7848 = vmul.f32 %v7778, %v7808
    %v7849 = vmul.f32 %v7779, %v7808
    %v7850 = vmul.f32 %v7780, %v7808
    %v7851 = vmul.f32 %v7781, %v7808
    %v7852 = vmul.f32 %v7782, %v7808
    %v7853 = vmul.f32 %v7783, %v7808
    %v7854 = vmul.f32 %v7784, %v7808
    %v7855 = vmul.f32 %v7785, %v7808
    %v7856 = vmul.f32 %v7786, %v7808
    %v7857 = vmul.f32 %v7787, %v7808
    %v7858 = vmul.f32 %v7788, %v7808
    %v7859 = vmul.f32 %v7789, %v7808
    %v7860 = vmul.f32 %v7790, %v7808
    %v7861 = vmul.f32 %v7791, %v7808
    %v7862 = vmul.f32 %v7792, %v7808
    %v7863 = vmul.f32 %v7793, %v7808
    %v7864 = vmul.f32 %v7794, %v7808
    %v7865 = vmul.f32 %v7795, %v7808
    %v7866 = vmul.f32 %v7796, %v7808
    %v7867 = vmul.f32 %v7797, %v7808
    %v7868 = vmul.f32 %v7798, %v7808
    %v7869 = vmul.f32 %v7799, %v7808
    %v7870 = vmul.f32 %v7800, %v7808
    %v7871 = vmul.f32 %v7801, %v7808
    %v7872 = vmul.f32 %v7802, %v7808
    %v7873 = vmul.f32 %v7803, %v7808
    %v7875 = vlaneseq
    %v7876 = vshrl.u32 %v7875, 7
    %v7877 = vsub.s32 0, %v7876
    %v7878 = vrot.slane %v7341, %v7877
    %v7880 = vadd.f32 %v7810, %v7878
    %v7881 = vadd.f32 %v7811, %v7878
    %v7882 = vadd.f32 %v7812, %v7878
    %v7883 = vadd.f32 %v7813, %v7878
    %v7884 = vadd.f32 %v7814, %v7878
    %v7885 = vadd.f32 %v7815, %v7878
    %v7886 = vadd.f32 %v7816, %v7878
    %v7887 = vadd.f32 %v7817, %v7878
    %v7888 = vadd.f32 %v7818, %v7878
    %v7889 = vadd.f32 %v7819, %v7878
    %v7890 = vadd.f32 %v7820, %v7878
    %v7891 = vadd.f32 %v7821, %v7878
    %v7892 = vadd.f32 %v7822, %v7878
    %v7893 = vadd.f32 %v7823, %v7878
    %v7894 = vadd.f32 %v7824, %v7878
    %v7895 = vadd.f32 %v7825, %v7878
    %v7896 = vadd.f32 %v7826, %v7878
    %v7897 = vadd.f32 %v7827, %v7878
    %v7898 = vadd.f32 %v7828, %v7878
    %v7899 = vadd.f32 %v7829, %v7878
    %v7900 = vadd.f32 %v7830, %v7878
    %v7901 = vadd.f32 %v7831, %v7878
    %v7902 = vadd.f32 %v7832, %v7878
    %v7903 = vadd.f32 %v7833, %v7878
    %v7904 = vadd.f32 %v7834, %v7878
    %v7905 = vadd.f32 %v7835, %v7878
    %v7906 = vadd.f32 %v7836, %v7878
    %v7907 = vadd.f32 %v7837, %v7878
    %v7908 = vadd.f32 %v7838, %v7878
    %v7909 = vadd.f32 %v7839, %v7878
    %v7910 = vadd.f32 %v7840, %v7878
    %v7911 = vadd.f32 %v7841, %v7878
    %v7912 = vadd.f32 %v7842, %v7878
    %v7913 = vadd.f32 %v7843, %v7878
    %v7914 = vadd.f32 %v7844, %v7878
    %v7915 = vadd.f32 %v7845, %v7878
    %v7916 = vadd.f32 %v7846, %v7878
    %v7917 = vadd.f32 %v7847, %v7878
    %v7918 = vadd.f32 %v7848, %v7878
    %v7919 = vadd.f32 %v7849, %v7878
    %v7920 = vadd.f32 %v7850, %v7878
    %v7921 = vadd.f32 %v7851, %v7878
    %v7922 = vadd.f32 %v7852, %v7878
    %v7923 = vadd.f32 %v7853, %v7878
    %v7924 = vadd.f32 %v7854, %v7878
    %v7925 = vadd.f32 %v7855, %v7878
    %v7926 = vadd.f32 %v7856, %v7878
    %v7927 = vadd.f32 %v7857, %v7878
    %v7928 = vadd.f32 %v7858, %v7878
    %v7929 = vadd.f32 %v7859, %v7878
    %v7930 = vadd.f32 %v7860, %v7878
    %v7931 = vadd.f32 %v7861, %v7878
    %v7932 = vadd.f32 %v7862, %v7878
    %v7933 = vadd.f32 %v7863, %v7878
    %v7934 = vadd.f32 %v7864, %v7878
    %v7935 = vadd.f32 %v7865, %v7878
    %v7936 = vadd.f32 %v7866, %v7878
    %v7937 = vadd.f32 %v7867, %v7878
    %v7938 = vadd.f32 %v7868, %v7878
    %v7939 = vadd.f32 %v7869, %v7878
    %v7940 = vadd.f32 %v7870, %v7878
    %v7941 = vadd.f32 %v7871, %v7878
    %v7942 = vadd.f32 %v7872, %v7878
    %v7943 = vadd.f32 %v7873, %v7878
    %7944 = vst.msk [vmem:[#allocation2] sm:$0xff] %vm672, %v7880
    %7945 = vst.msk [vmem:[#allocation2 + $0x8] sm:$0xff] %vm672, %v7881
    %7946 = vst.msk [vmem:[#allocation2 + $0x10] sm:$0xff] %vm672, %v7882
    %7947 = vst.msk [vmem:[#allocation2 + $0x18] sm:$0xff] %vm672, %v7883
    %7948 = vst.msk [vmem:[#allocation2 + $0x20] sm:$0xff] %vm672, %v7884
    %7949 = vst.msk [vmem:[#allocation2 + $0x28] sm:$0xff] %vm672, %v7885
    %7950 = vst.msk [vmem:[#allocation2 + $0x30] sm:$0xff] %vm672, %v7886
    %7951 = vst.msk [vmem:[#allocation2 + $0x38] sm:$0xff] %vm672, %v7887
    %7952 = vst.msk [vmem:[#allocation2 + $0x40] sm:$0xff] %vm672, %v7888
    %7953 = vst.msk [vmem:[#allocation2 + $0x48] sm:$0xff] %vm672, %v7889
    %7954 = vst.msk [vmem:[#allocation2 + $0x50] sm:$0xff] %vm672, %v7890
    %7955 = vst.msk [vmem:[#allocation2 + $0x58] sm:$0xff] %vm672, %v7891
    %7956 = vst.msk [vmem:[#allocation2 + $0x60] sm:$0xff] %vm672, %v7892
    %7957 = vst.msk [vmem:[#allocation2 + $0x68] sm:$0xff] %vm672, %v7893
    %7958 = vst.msk [vmem:[#allocation2 + $0x70] sm:$0xff] %vm672, %v7894
    %7959 = vst.msk [vmem:[#allocation2 + $0x78] sm:$0xff] %vm672, %v7895
    %7960 = vst.msk [vmem:[#allocation2 + $0x80] sm:$0xff] %vm672, %v7896
    %7961 = vst.msk [vmem:[#allocation2 + $0x88] sm:$0xff] %vm672, %v7897
    %7962 = vst.msk [vmem:[#allocation2 + $0x90] sm:$0xff] %vm672, %v7898
    %7963 = vst.msk [vmem:[#allocation2 + $0x98] sm:$0xff] %vm672, %v7899
    %7964 = vst.msk [vmem:[#allocation2 + $0xa0] sm:$0xff] %vm672, %v7900
    %7965 = vst.msk [vmem:[#allocation2 + $0xa8] sm:$0xff] %vm672, %v7901
    %7966 = vst.msk [vmem:[#allocation2 + $0xb0] sm:$0xff] %vm672, %v7902
    %7967 = vst.msk [vmem:[#allocation2 + $0xb8] sm:$0xff] %vm672, %v7903
    %7968 = vst.msk [vmem:[#allocation2 + $0xc0] sm:$0xff] %vm672, %v7904
    %7969 = vst.msk [vmem:[#allocation2 + $0xc8] sm:$0xff] %vm672, %v7905
    %7970 = vst.msk [vmem:[#allocation2 + $0xd0] sm:$0xff] %vm672, %v7906
    %7971 = vst.msk [vmem:[#allocation2 + $0xd8] sm:$0xff] %vm672, %v7907
    %7972 = vst.msk [vmem:[#allocation2 + $0xe0] sm:$0xff] %vm672, %v7908
    %7973 = vst.msk [vmem:[#allocation2 + $0xe8] sm:$0xff] %vm672, %v7909
    %7974 = vst.msk [vmem:[#allocation2 + $0xf0] sm:$0xff] %vm672, %v7910
    %7975 = vst.msk [vmem:[#allocation2 + $0xf8] sm:$0xff] %vm672, %v7911
    %7976 = vst.msk [vmem:[#allocation2 + $0x100] sm:$0xff] %vm672, %v7912
    %7977 = vst.msk [vmem:[#allocation2 + $0x108] sm:$0xff] %vm672, %v7913
    %7978 = vst.msk [vmem:[#allocation2 + $0x110] sm:$0xff] %vm672, %v7914
    %7979 = vst.msk [vmem:[#allocation2 + $0x118] sm:$0xff] %vm672, %v7915
    %7980 = vst.msk [vmem:[#allocation2 + $0x120] sm:$0xff] %vm672, %v7916
    %7981 = vst.msk [vmem:[#allocation2 + $0x128] sm:$0xff] %vm672, %v7917
    %7982 = vst.msk [vmem:[#allocation2 + $0x130] sm:$0xff] %vm672, %v7918
    %7983 = vst.msk [vmem:[#allocation2 + $0x138] sm:$0xff] %vm672, %v7919
    %7984 = vst.msk [vmem:[#allocation2 + $0x140] sm:$0xff] %vm672, %v7920
    %7985 = vst.msk [vmem:[#allocation2 + $0x148] sm:$0xff] %vm672, %v7921
    %7986 = vst.msk [vmem:[#allocation2 + $0x150] sm:$0xff] %vm672, %v7922
    %7987 = vst.msk [vmem:[#allocation2 + $0x158] sm:$0xff] %vm672, %v7923
    %7988 = vst.msk [vmem:[#allocation2 + $0x160] sm:$0xff] %vm672, %v7924
    %7989 = vst.msk [vmem:[#allocation2 + $0x168] sm:$0xff] %vm672, %v7925
    %7990 = vst.msk [vmem:[#allocation2 + $0x170] sm:$0xff] %vm672, %v7926
    %7991 = vst.msk [vmem:[#allocation2 + $0x178] sm:$0xff] %vm672, %v7927
    %7992 = vst.msk [vmem:[#allocation2 + $0x180] sm:$0xff] %vm672, %v7928
    %7993 = vst.msk [vmem:[#allocation2 + $0x188] sm:$0xff] %vm672, %v7929
    %7994 = vst.msk [vmem:[#allocation2 + $0x190] sm:$0xff] %vm672, %v7930
    %7995 = vst.msk [vmem:[#allocation2 + $0x198] sm:$0xff] %vm672, %v7931
    %7996 = vst.msk [vmem:[#allocation2 + $0x1a0] sm:$0xff] %vm672, %v7932
    %7997 = vst.msk [vmem:[#allocation2 + $0x1a8] sm:$0xff] %vm672, %v7933
    %7998 = vst.msk [vmem:[#allocation2 + $0x1b0] sm:$0xff] %vm672, %v7934
    %7999 = vst.msk [vmem:[#allocation2 + $0x1b8] sm:$0xff] %vm672, %v7935
    %8000 = vst.msk [vmem:[#allocation2 + $0x1c0] sm:$0xff] %vm672, %v7936
    %8001 = vst.msk [vmem:[#allocation2 + $0x1c8] sm:$0xff] %vm672, %v7937
    %8002 = vst.msk [vmem:[#allocation2 + $0x1d0] sm:$0xff] %vm672, %v7938
    %8003 = vst.msk [vmem:[#allocation2 + $0x1d8] sm:$0xff] %vm672, %v7939
    %8004 = vst.msk [vmem:[#allocation2 + $0x1e0] sm:$0xff] %vm672, %v7940
    %8005 = vst.msk [vmem:[#allocation2 + $0x1e8] sm:$0xff] %vm672, %v7941
    %8006 = vst.msk [vmem:[#allocation2 + $0x1f0] sm:$0xff] %vm672, %v7942
    %8007 = vst.msk [vmem:[#allocation2 + $0x1f8] sm:$0xff] %vm672, %v7943
    %v8008 = vld [vmem:[#allocation2] sm:$0xff]
    %v8009 = vld [vmem:[#allocation2 + $0x8] sm:$0xff]
    %v8010 = vld [vmem:[#allocation2 + $0x10] sm:$0xff]
    %v8011 = vld [vmem:[#allocation2 + $0x18] sm:$0xff]
    %v8012 = vld [vmem:[#allocation2 + $0x20] sm:$0xff]
    %v8013 = vld [vmem:[#allocation2 + $0x28] sm:$0xff]
    %v8014 = vld [vmem:[#allocation2 + $0x30] sm:$0xff]
    %v8015 = vld [vmem:[#allocation2 + $0x38] sm:$0xff]
    %v8016 = vld [vmem:[#allocation2 + $0x40] sm:$0xff]
    %v8017 = vld [vmem:[#allocation2 + $0x48] sm:$0xff]
    %v8018 = vld [vmem:[#allocation2 + $0x50] sm:$0xff]
    %v8019 = vld [vmem:[#allocation2 + $0x58] sm:$0xff]
    %v8020 = vld [vmem:[#allocation2 + $0x60] sm:$0xff]
    %v8021 = vld [vmem:[#allocation2 + $0x68] sm:$0xff]
    %v8022 = vld [vmem:[#allocation2 + $0x70] sm:$0xff]
    %v8023 = vld [vmem:[#allocation2 + $0x78] sm:$0xff]
    %v8024 = vld [vmem:[#allocation2 + $0x80] sm:$0xff]
    %v8025 = vld [vmem:[#allocation2 + $0x88] sm:$0xff]
    %v8026 = vld [vmem:[#allocation2 + $0x90] sm:$0xff]
    %v8027 = vld [vmem:[#allocation2 + $0x98] sm:$0xff]
    %v8028 = vld [vmem:[#allocation2 + $0xa0] sm:$0xff]
    %v8029 = vld [vmem:[#allocation2 + $0xa8] sm:$0xff]
    %v8030 = vld [vmem:[#allocation2 + $0xb0] sm:$0xff]
    %v8031 = vld [vmem:[#allocation2 + $0xb8] sm:$0xff]
    %v8032 = vld [vmem:[#allocation2 + $0xc0] sm:$0xff]
    %v8033 = vld [vmem:[#allocation2 + $0xc8] sm:$0xff]
    %v8034 = vld [vmem:[#allocation2 + $0xd0] sm:$0xff]
    %v8035 = vld [vmem:[#allocation2 + $0xd8] sm:$0xff]
    %v8036 = vld [vmem:[#allocation2 + $0xe0] sm:$0xff]
    %v8037 = vld [vmem:[#allocation2 + $0xe8] sm:$0xff]
    %v8038 = vld [vmem:[#allocation2 + $0xf0] sm:$0xff]
    %v8039 = vld [vmem:[#allocation2 + $0xf8] sm:$0xff]
    %v8040 = vld [vmem:[#allocation2 + $0x100] sm:$0xff]
    %v8041 = vld [vmem:[#allocation2 + $0x108] sm:$0xff]
    %v8042 = vld [vmem:[#allocation2 + $0x110] sm:$0xff]
    %v8043 = vld [vmem:[#allocation2 + $0x118] sm:$0xff]
    %v8044 = vld [vmem:[#allocation2 + $0x120] sm:$0xff]
    %v8045 = vld [vmem:[#allocation2 + $0x128] sm:$0xff]
    %v8046 = vld [vmem:[#allocation2 + $0x130] sm:$0xff]
    %v8047 = vld [vmem:[#allocation2 + $0x138] sm:$0xff]
    %v8048 = vld [vmem:[#allocation2 + $0x140] sm:$0xff]
    %v8049 = vld [vmem:[#allocation2 + $0x148] sm:$0xff]
    %v8050 = vld [vmem:[#allocation2 + $0x150] sm:$0xff]
    %v8051 = vld [vmem:[#allocation2 + $0x158] sm:$0xff]
    %v8052 = vld [vmem:[#allocation2 + $0x160] sm:$0xff]
    %v8053 = vld [vmem:[#allocation2 + $0x168] sm:$0xff]
    %v8054 = vld [vmem:[#allocation2 + $0x170] sm:$0xff]
    %v8055 = vld [vmem:[#allocation2 + $0x178] sm:$0xff]
    %v8056 = vld [vmem:[#allocation2 + $0x180] sm:$0xff]
    %v8057 = vld [vmem:[#allocation2 + $0x188] sm:$0xff]
    %v8058 = vld [vmem:[#allocation2 + $0x190] sm:$0xff]
    %v8059 = vld [vmem:[#allocation2 + $0x198] sm:$0xff]
    %v8060 = vld [vmem:[#allocation2 + $0x1a0] sm:$0xff]
    %v8061 = vld [vmem:[#allocation2 + $0x1a8] sm:$0xff]
    %v8062 = vld [vmem:[#allocation2 + $0x1b0] sm:$0xff]
    %v8063 = vld [vmem:[#allocation2 + $0x1b8] sm:$0xff]
    %v8064 = vld [vmem:[#allocation2 + $0x1c0] sm:$0xff]
    %v8065 = vld [vmem:[#allocation2 + $0x1c8] sm:$0xff]
    %v8066 = vld [vmem:[#allocation2 + $0x1d0] sm:$0xff]
    %v8067 = vld [vmem:[#allocation2 + $0x1d8] sm:$0xff]
    %v8068 = vld [vmem:[#allocation2 + $0x1e0] sm:$0xff]
    %v8069 = vld [vmem:[#allocation2 + $0x1e8] sm:$0xff]
    %v8070 = vld [vmem:[#allocation2 + $0x1f0] sm:$0xff]
    %v8071 = vld [vmem:[#allocation2 + $0x1f8] sm:$0xff]
    %v8072 = vsel %vm672, %v8008, 0.0
    %v8073 = vsel %vm672, %v8009, 0.0
    %v8074 = vadd.f32 %v8072, %v8073
    %v8075 = vsel %vm672, %v8010, 0.0
    %v8076 = vadd.f32 %v8074, %v8075
    %v8077 = vsel %vm672, %v8011, 0.0
    %v8078 = vadd.f32 %v8076, %v8077
    %v8079 = vsel %vm672, %v8012, 0.0
    %v8080 = vadd.f32 %v8078, %v8079
    %v8081 = vsel %vm672, %v8013, 0.0
    %v8082 = vadd.f32 %v8080, %v8081
    %v8083 = vsel %vm672, %v8014, 0.0
    %v8084 = vadd.f32 %v8082, %v8083
    %v8085 = vsel %vm672, %v8015, 0.0
    %v8086 = vadd.f32 %v8084, %v8085
    %v8087 = vsel %vm672, %v8016, 0.0
    %v8088 = vadd.f32 %v8086, %v8087
    %v8089 = vsel %vm672, %v8017, 0.0
    %v8090 = vadd.f32 %v8088, %v8089
    %v8091 = vsel %vm672, %v8018, 0.0
    %v8092 = vadd.f32 %v8090, %v8091
    %v8093 = vsel %vm672, %v8019, 0.0
    %v8094 = vadd.f32 %v8092, %v8093
    %v8095 = vsel %vm672, %v8020, 0.0
    %v8096 = vadd.f32 %v8094, %v8095
    %v8097 = vsel %vm672, %v8021, 0.0
    %v8098 = vadd.f32 %v8096, %v8097
    %v8099 = vsel %vm672, %v8022, 0.0
    %v8100 = vadd.f32 %v8098, %v8099
    %v8101 = vsel %vm672, %v8023, 0.0
    %v8102 = vadd.f32 %v8100, %v8101
    %v8103 = vsel %vm672, %v8024, 0.0
    %v8104 = vadd.f32 %v8102, %v8103
    %v8105 = vsel %vm672, %v8025, 0.0
    %v8106 = vadd.f32 %v8104, %v8105
    %v8107 = vsel %vm672, %v8026, 0.0
    %v8108 = vadd.f32 %v8106, %v8107
    %v8109 = vsel %vm672, %v8027, 0.0
    %v8110 = vadd.f32 %v8108, %v8109
    %v8111 = vsel %vm672, %v8028, 0.0
    %v8112 = vadd.f32 %v8110, %v8111
    %v8113 = vsel %vm672, %v8029, 0.0
    %v8114 = vadd.f32 %v8112, %v8113
    %v8115 = vsel %vm672, %v8030, 0.0
    %v8116 = vadd.f32 %v8114, %v8115
    %v8117 = vsel %vm672, %v8031, 0.0
    %v8118 = vadd.f32 %v8116, %v8117
    %v8119 = vsel %vm672, %v8032, 0.0
    %v8120 = vadd.f32 %v8118, %v8119
    %v8121 = vsel %vm672, %v8033, 0.0
    %v8122 = vadd.f32 %v8120, %v8121
    %v8123 = vsel %vm672, %v8034, 0.0
    %v8124 = vadd.f32 %v8122, %v8123
    %v8125 = vsel %vm672, %v8035, 0.0
    %v8126 = vadd.f32 %v8124, %v8125
    %v8127 = vsel %vm672, %v8036, 0.0
    %v8128 = vadd.f32 %v8126, %v8127
    %v8129 = vsel %vm672, %v8037, 0.0
    %v8130 = vadd.f32 %v8128, %v8129
    %v8131 = vsel %vm672, %v8038, 0.0
    %v8132 = vadd.f32 %v8130, %v8131
    %v8133 = vsel %vm672, %v8039, 0.0
    %v8134 = vadd.f32 %v8132, %v8133
    %v8135 = vrot.slane %v8134, 4
    %v8136 = vadd.f32 %v8134, %v8135
    %v8137 = vrot.slane %v8136, 2
    %v8138 = vadd.f32 %v8136, %v8137
    %v8139 = vrot.slane %v8138, 1
    %v8140 = vadd.f32 %v8138, %v8139
    %v8141 = vsel %vm672, %v8040, 0.0
    %v8142 = vsel %vm672, %v8041, 0.0
    %v8143 = vadd.f32 %v8141, %v8142
    %v8144 = vsel %vm672, %v8042, 0.0
    %v8145 = vadd.f32 %v8143, %v8144
    %v8146 = vsel %vm672, %v8043, 0.0
    %v8147 = vadd.f32 %v8145, %v8146
    %v8148 = vsel %vm672, %v8044, 0.0
    %v8149 = vadd.f32 %v8147, %v8148
    %v8150 = vsel %vm672, %v8045, 0.0
    %v8151 = vadd.f32 %v8149, %v8150
    %v8152 = vsel %vm672, %v8046, 0.0
    %v8153 = vadd.f32 %v8151, %v8152
    %v8154 = vsel %vm672, %v8047, 0.0
    %v8155 = vadd.f32 %v8153, %v8154
    %v8156 = vsel %vm672, %v8048, 0.0
    %v8157 = vadd.f32 %v8155, %v8156
    %v8158 = vsel %vm672, %v8049, 0.0
    %v8159 = vadd.f32 %v8157, %v8158
    %v8160 = vsel %vm672, %v8050, 0.0
    %v8161 = vadd.f32 %v8159, %v8160
    %v8162 = vsel %vm672, %v8051, 0.0
    %v8163 = vadd.f32 %v8161, %v8162
    %v8164 = vsel %vm672, %v8052, 0.0
    %v8165 = vadd.f32 %v8163, %v8164
    %v8166 = vsel %vm672, %v8053, 0.0
    %v8167 = vadd.f32 %v8165, %v8166
    %v8168 = vsel %vm672, %v8054, 0.0
    %v8169 = vadd.f32 %v8167, %v8168
    %v8170 = vsel %vm672, %v8055, 0.0
    %v8171 = vadd.f32 %v8169, %v8170
    %v8172 = vsel %vm672, %v8056, 0.0
    %v8173 = vadd.f32 %v8171, %v8172
    %v8174 = vsel %vm672, %v8057, 0.0
    %v8175 = vadd.f32 %v8173, %v8174
    %v8176 = vsel %vm672, %v8058, 0.0
    %v8177 = vadd.f32 %v8175, %v8176
    %v8178 = vsel %vm672, %v8059, 0.0
    %v8179 = vadd.f32 %v8177, %v8178
    %v8180 = vsel %vm672, %v8060, 0.0
    %v8181 = vadd.f32 %v8179, %v8180
    %v8182 = vsel %vm672, %v8061, 0.0
    %v8183 = vadd.f32 %v8181, %v8182
    %v8184 = vsel %vm672, %v8062, 0.0
    %v8185 = vadd.f32 %v8183, %v8184
    %v8186 = vsel %vm672, %v8063, 0.0
    %v8187 = vadd.f32 %v8185, %v8186
    %v8188 = vsel %vm672, %v8064, 0.0
    %v8189 = vadd.f32 %v8187, %v8188
    %v8190 = vsel %vm672, %v8065, 0.0
    %v8191 = vadd.f32 %v8189, %v8190
    %v8192 = vsel %vm672, %v8066, 0.0
    %v8193 = vadd.f32 %v8191, %v8192
    %v8194 = vsel %vm672, %v8067, 0.0
    %v8195 = vadd.f32 %v8193, %v8194
    %v8196 = vsel %vm672, %v8068, 0.0
    %v8197 = vadd.f32 %v8195, %v8196
    %v8198 = vsel %vm672, %v8069, 0.0
    %v8199 = vadd.f32 %v8197, %v8198
    %v8200 = vsel %vm672, %v8070, 0.0
    %v8201 = vadd.f32 %v8199, %v8200
    %v8202 = vsel %vm672, %v8071, 0.0
    %v8203 = vadd.f32 %v8201, %v8202
    %v8204 = vrot.slane %v8203, 4
    %v8205 = vadd.f32 %v8203, %v8204
    %v8206 = vrot.slane %v8205, 2
    %v8207 = vadd.f32 %v8205, %v8206
    %v8208 = vrot.slane %v8207, 1
    %v8209 = vadd.f32 %v8207, %v8208
    %v8210 = vrcp.pop 256.0
    %v8211 = vmul.f32 %v8140, %v8210
    %v8212 = vmul.f32 %v8209, %v8210
    %v8213 = vld [vmem:[%s7] sm:$0xff]
    %v8214 = vld [vmem:[%s8] sm:$0x1]
    %v8216 = vlaneseq
    %v8217 = vshrl.u32 %v8216, 7
    %v8218 = vsub.s32 0, %v8217
    %v8219 = vrot.slane %v8214, %v8218
    %vm8223 = vcmask 1041409
    %v8224 = vsel %vm8223, %v8212, %v8211
    %v8225 = vsel %vm672, %v8224, 0
    %8227 = vmatprep.subr.mxu0 0.0
    %8228 = vmatpush1.msra.mxu0 %v8213
    %8229 = vmatprep.subr.mxu0 0.0
    %8230 = vmatpush1.msra.mxu0 0.0
    %8231 = vmatprep.subr.mxu0 0.0
    %8232 = vmatpush1.msra.mxu0 0.0
    %8233 = vmatprep.subr.mxu0 0.0
    %8234 = vmatpush1.msra.mxu0 0.0
    %8235 = vmatprep.subr.mxu0 0.0
    %8236 = vmatpush1.msra.mxu0 0.0
    %8237 = vmatprep.subr.mxu0 0.0
    %8238 = vmatpush1.msra.mxu0 0.0
    %8239 = vmatprep.subr.mxu0 0.0
    %8240 = vmatpush1.msra.mxu0 0.0
    %8241 = vmatprep.subr.mxu0 0.0
    %8242 = vmatpush1.msra.mxu0 0.0
    %8243 = vmatprep.subr.mxu0 0.0
    %8244 = vmatpush1.msra.mxu0 0.0
    %8245 = vmatprep.subr.mxu0 0.0
    %8246 = vmatpush1.msra.mxu0 0.0
    %8247 = vmatprep.subr.mxu0 0.0
    %8248 = vmatpush1.msra.mxu0 0.0
    %8249 = vmatprep.subr.mxu0 0.0
    %8250 = vmatpush1.msra.mxu0 0.0
    %8251 = vmatprep.subr.mxu0 0.0
    %8252 = vmatpush1.msra.mxu0 0.0
    %8253 = vmatprep.subr.mxu0 0.0
    %8254 = vmatpush1.msra.mxu0 0.0
    %8255 = vmatprep.subr.mxu0 0.0
    %8256 = vmatpush1.msra.mxu0 0.0
    %8257 = vmatprep.subr.mxu0 0.0
    %8258 = vmatpush1.msra.mxu0 0.0
    %8259 = vmatprep.subr.mxu0 0.0
    %8260 = vmatpush1.msra.mxu0 0.0
    %8261 = vmatprep.subr.mxu0 0.0
    %8262 = vmatpush1.msra.mxu0 0.0
    %8263 = vmatprep.subr.mxu0 0.0
    %8264 = vmatpush1.msra.mxu0 0.0
    %8265 = vmatprep.subr.mxu0 0.0
    %8266 = vmatpush1.msra.mxu0 0.0
    %8267 = vmatprep.subr.mxu0 0.0
    %8268 = vmatpush1.msra.mxu0 0.0
    %8269 = vmatprep.subr.mxu0 0.0
    %8270 = vmatpush1.msra.mxu0 0.0
    %8271 = vmatprep.subr.mxu0 0.0
    %8272 = vmatpush1.msra.mxu0 0.0
    %8273 = vmatprep.subr.mxu0 0.0
    %8274 = vmatpush1.msra.mxu0 0.0
    %8275 = vmatprep.subr.mxu0 0.0
    %8276 = vmatpush1.msra.mxu0 0.0
    %8277 = vmatprep.subr.mxu0 0.0
    %8278 = vmatpush1.msra.mxu0 0.0
    %8279 = vmatprep.subr.mxu0 0.0
    %8280 = vmatpush1.msra.mxu0 0.0
    %8281 = vmatprep.subr.mxu0 0.0
    %8282 = vmatpush1.msra.mxu0 0.0
    %8283 = vmatprep.subr.mxu0 0.0
    %8284 = vmatpush1.msra.mxu0 0.0
    %8285 = vmatprep.subr.mxu0 0.0
    %8286 = vmatpush1.msra.mxu0 0.0
    %8287 = vmatprep.subr.mxu0 0.0
    %8288 = vmatpush1.msra.mxu0 0.0
    %8289 = vmatprep.subr.mxu0 0.0
    %8290 = vmatpush1.msra.mxu0 0.0
    %8291 = vmatprep.mubr.f32.mxu0 0.0
    %8292 = vmatmul.mubr.f32.gmra.mrb[0].mxu0 %v8225
    %v8293 = vpop.f32.mrb[0].mxu0
    %v8294 = vadd.f32 %v8219, %v8293
    %v8295 = vpop.f32.mrb[0].mxu0
    %8296 = vdwg.mxu0
    %v8297 = vld [vmem:[%s9] sm:$0x1]
    %v8298 = vld [vmem:[%s10] sm:$0x1]
    %vm8299 = vcmask 9216
    %v8300 = vsel %vm8299, %v8294, 0.0
    %v8301 = vrot.slane %v8300, 4
    %v8302 = vadd.f32 %v8300, %v8301
    %v8303 = vrot.slane %v8302, 2
    %v8304 = vadd.f32 %v8302, %v8303
    %v8305 = vrot.slane %v8304, 1
    %v8306 = vadd.f32 %v8304, %v8305
    %v8307 = vrcp.pop 2.0
    %v8308 = vmul.f32 %v8306, %v8307
    %v8309 = vsub.f32 %v8294, %v8308
    %v8310 = vmul.f32 %v8309, %v8309
    %v8311 = vsel %vm8299, %v8310, 0.0
    %v8312 = vrot.slane %v8311, 4
    %v8313 = vadd.f32 %v8311, %v8312
    %v8314 = vrot.slane %v8313, 2
    %v8315 = vadd.f32 %v8313, %v8314
    %v8316 = vrot.slane %v8315, 1
    %v8317 = vadd.f32 %v8315, %v8316
    %v8318 = vmul.f32 %v8317, %v8307
    %v8319 = vadd.f32 %v8318, 1e-05
    %v8320 = vrsqrt.pop %v8319
    %v8321 = vmul.f32 %v8309, %v8320
    %v8323 = vlaneseq
    %v8324 = vshrl.u32 %v8323, 7
    %v8325 = vsub.s32 0, %v8324
    %v8326 = vrot.slane %v8297, %v8325
    %v8328 = vmul.f32 %v8321, %v8326
    %v8330 = vlaneseq
    %v8331 = vshrl.u32 %v8330, 7
    %v8332 = vsub.s32 0, %v8331
    %v8333 = vrot.slane %v8298, %v8332
    %v8335 = vadd.f32 %v8328, %v8333
    %v8336 = vsub.f32 0.0, %v8335
    %v8337 = vmul.f32 %v8336, 1.442695
    %v8338 = vpow.pop %v8337
    %v8339 = vadd.f32 %v8338, 1.0
    %v8340 = vrcp.pop %v8339
    %v8341 = vmul.f32 1.0, %v8340
    %v8342 = vmul.f32 %v8335, %v8341
    %v8343 = vld [vmem:[%s11] sm:$0x3]
    %v8344 = vld [vmem:[%s12] sm:$0x1]
    %v8346 = vlaneseq
    %v8347 = vshrl.u32 %v8346, 7
    %v8348 = vsub.s32 0, %v8347
    %v8349 = vrot.slane %v8344, %v8348
    %vm8351 = vcmask 15360
    %v8353 = vsel %vm8351, %v8342, 0
    %v8356 = vsel %vm377, %v8343, 0
    %8358 = vmatprep.subr.mxu0 0.0
    %8359 = vmatpush1.msra.mxu0 %v8356
    %8360 = vmatprep.subr.mxu0 0.0
    %8361 = vmatpush1.msra.mxu0 0.0
    %8362 = vmatprep.subr.mxu0 0.0
    %8363 = vmatpush1.msra.mxu0 0.0
    %8364 = vmatprep.subr.mxu0 0.0
    %8365 = vmatpush1.msra.mxu0 0.0
    %8366 = vmatprep.subr.mxu0 0.0
    %8367 = vmatpush1.msra.mxu0 0.0
    %8368 = vmatprep.subr.mxu0 0.0
    %8369 = vmatpush1.msra.mxu0 0.0
    %8370 = vmatprep.subr.mxu0 0.0
    %8371 = vmatpush1.msra.mxu0 0.0
    %8372 = vmatprep.subr.mxu0 0.0
    %8373 = vmatpush1.msra.mxu0 0.0
    %8374 = vmatprep.subr.mxu0 0.0
    %8375 = vmatpush1.msra.mxu0 0.0
    %8376 = vmatprep.subr.mxu0 0.0
    %8377 = vmatpush1.msra.mxu0 0.0
    %8378 = vmatprep.subr.mxu0 0.0
    %8379 = vmatpush1.msra.mxu0 0.0
    %8380 = vmatprep.subr.mxu0 0.0
    %8381 = vmatpush1.msra.mxu0 0.0
    %8382 = vmatprep.subr.mxu0 0.0
    %8383 = vmatpush1.msra.mxu0 0.0
    %8384 = vmatprep.subr.mxu0 0.0
    %8385 = vmatpush1.msra.mxu0 0.0
    %8386 = vmatprep.subr.mxu0 0.0
    %8387 = vmatpush1.msra.mxu0 0.0
    %8388 = vmatprep.subr.mxu0 0.0
    %8389 = vmatpush1.msra.mxu0 0.0
    %8390 = vmatprep.subr.mxu0 0.0
    %8391 = vmatpush1.msra.mxu0 0.0
    %8392 = vmatprep.subr.mxu0 0.0
    %8393 = vmatpush1.msra.mxu0 0.0
    %8394 = vmatprep.subr.mxu0 0.0
    %8395 = vmatpush1.msra.mxu0 0.0
    %8396 = vmatprep.subr.mxu0 0.0
    %8397 = vmatpush1.msra.mxu0 0.0
    %8398 = vmatprep.subr.mxu0 0.0
    %8399 = vmatpush1.msra.mxu0 0.0
    %8400 = vmatprep.subr.mxu0 0.0
    %8401 = vmatpush1.msra.mxu0 0.0
    %8402 = vmatprep.subr.mxu0 0.0
    %8403 = vmatpush1.msra.mxu0 0.0
    %8404 = vmatprep.subr.mxu0 0.0
    %8405 = vmatpush1.msra.mxu0 0.0
    %8406 = vmatprep.subr.mxu0 0.0
    %8407 = vmatpush1.msra.mxu0 0.0
    %8408 = vmatprep.subr.mxu0 0.0
    %8409 = vmatpush1.msra.mxu0 0.0
    %8410 = vmatprep.subr.mxu0 0.0
    %8411 = vmatpush1.msra.mxu0 0.0
    %8412 = vmatprep.subr.mxu0 0.0
    %8413 = vmatpush1.msra.mxu0 0.0
    %8414 = vmatprep.subr.mxu0 0.0
    %8415 = vmatpush1.msra.mxu0 0.0
    %8416 = vmatprep.subr.mxu0 0.0
    %8417 = vmatpush1.msra.mxu0 0.0
    %8418 = vmatprep.subr.mxu0 0.0
    %8419 = vmatpush1.msra.mxu0 0.0
    %8420 = vmatprep.subr.mxu0 0.0
    %8421 = vmatpush1.msra.mxu0 0.0
    %8422 = vmatprep.mubr.f32.mxu0 0.0
    %8423 = vmatmul.mubr.f32.gmra.mrb[0].mxu0 %v8353
    %v8424 = vpop.f32.mrb[0].mxu0
    %v8425 = vadd.f32 %v8349, %v8424
    %v8426 = vpop.f32.mrb[0].mxu0
    %8427 = vdwg.mxu0
    %v8428 = vsub.f32 0.0, %v8425
    %v8429 = vmul.f32 %v8428, 1.442695
    %v8430 = vpow.pop %v8429
    %v8431 = vadd.f32 %v8430, 1.0
    %v8432 = vrcp.pop %v8431
    %v8433 = vmul.f32 1.0, %v8432
    %v8436 = vunpack.c.l.s4 1966171168
    %v8437 = vunpack.c.0.s8 %v8436
    %v8438 = vlaneseq
    %v8439 = vshrl.u32 %v8438, 7
    %v8440 = vsub.s32 %v8437, %v8439
    %v8441 = vrot.slane %v8433, %v8440
    %v8442 = vcombine.high %v8441, %v8441
    %v8444 = vunpack.c.l.s4 1966171168
    %v8445 = vunpack.c.0.s8 %v8444
    %v8446 = vlaneseq
    %v8447 = vshrl.u32 %v8446, 7
    %v8448 = vsub.s32 %v8445, %v8447
    %v8449 = vrot.slane %v8441, %v8448
    %v8451 = vunpack.c.l.s4 1966171168
    %v8452 = vunpack.c.0.s8 %v8451
    %v8453 = vlaneseq
    %v8454 = vshrl.u32 %v8453, 7
    %v8455 = vsub.s32 %v8452, %v8454
    %v8456 = vrot.slane %v8442, %v8455
    %v8457 = vlaneseq
    %v8458 = vshrl.u32 %v8457, 7
    %v8459 = vsub.s32 0, %v8458
    %v8460 = vrot.slane %v8449, %v8459
    %v8461 = vlaneseq
    %v8462 = vshrl.u32 %v8461, 7
    %v8463 = vsub.s32 0, %v8462
    %v8464 = vrot.slane %v8456, %v8463
    %v8467 = vmul.f32 %v8008, %v8460
    %v8468 = vmul.f32 %v8009, %v8460
    %v8469 = vmul.f32 %v8010, %v8460
    %v8470 = vmul.f32 %v8011, %v8460
    %v8471 = vmul.f32 %v8012, %v8460
    %v8472 = vmul.f32 %v8013, %v8460
    %v8473 = vmul.f32 %v8014, %v8460
    %v8474 = vmul.f32 %v8015, %v8460
    %v8475 = vmul.f32 %v8016, %v8460
    %v8476 = vmul.f32 %v8017, %v8460
    %v8477 = vmul.f32 %v8018, %v8460
    %v8478 = vmul.f32 %v8019, %v8460
    %v8479 = vmul.f32 %v8020, %v8460
    %v8480 = vmul.f32 %v8021, %v8460
    %v8481 = vmul.f32 %v8022, %v8460
    %v8482 = vmul.f32 %v8023, %v8460
    %v8483 = vmul.f32 %v8024, %v8460
    %v8484 = vmul.f32 %v8025, %v8460
    %v8485 = vmul.f32 %v8026, %v8460
    %v8486 = vmul.f32 %v8027, %v8460
    %v8487 = vmul.f32 %v8028, %v8460
    %v8488 = vmul.f32 %v8029, %v8460
    %v8489 = vmul.f32 %v8030, %v8460
    %v8490 = vmul.f32 %v8031, %v8460
    %v8491 = vmul.f32 %v8032, %v8460
    %v8492 = vmul.f32 %v8033, %v8460
    %v8493 = vmul.f32 %v8034, %v8460
    %v8494 = vmul.f32 %v8035, %v8460
    %v8495 = vmul.f32 %v8036, %v8460
    %v8496 = vmul.f32 %v8037, %v8460
    %v8497 = vmul.f32 %v8038, %v8460
    %v8498 = vmul.f32 %v8039, %v8460
    %v8499 = vmul.f32 %v8040, %v8464
    %v8500 = vmul.f32 %v8041, %v8464
    %v8501 = vmul.f32 %v8042, %v8464
    %v8502 = vmul.f32 %v8043, %v8464
    %v8503 = vmul.f32 %v8044, %v8464
    %v8504 = vmul.f32 %v8045, %v8464
    %v8505 = vmul.f32 %v8046, %v8464
    %v8506 = vmul.f32 %v8047, %v8464
    %v8507 = vmul.f32 %v8048, %v8464
    %v8508 = vmul.f32 %v8049, %v8464
    %v8509 = vmul.f32 %v8050, %v8464
    %v8510 = vmul.f32 %v8051, %v8464
    %v8511 = vmul.f32 %v8052, %v8464
    %v8512 = vmul.f32 %v8053, %v8464
    %v8513 = vmul.f32 %v8054, %v8464
    %v8514 = vmul.f32 %v8055, %v8464
    %v8515 = vmul.f32 %v8056, %v8464
    %v8516 = vmul.f32 %v8057, %v8464
    %v8517 = vmul.f32 %v8058, %v8464
    %v8518 = vmul.f32 %v8059, %v8464
    %v8519 = vmul.f32 %v8060, %v8464
    %v8520 = vmul.f32 %v8061, %v8464
    %v8521 = vmul.f32 %v8062, %v8464
    %v8522 = vmul.f32 %v8063, %v8464
    %v8523 = vmul.f32 %v8064, %v8464
    %v8524 = vmul.f32 %v8065, %v8464
    %v8525 = vmul.f32 %v8066, %v8464
    %v8526 = vmul.f32 %v8067, %v8464
    %v8527 = vmul.f32 %v8068, %v8464
    %v8528 = vmul.f32 %v8069, %v8464
    %v8529 = vmul.f32 %v8070, %v8464
    %v8530 = vmul.f32 %v8071, %v8464
    %v8531 = vpack.c.bf16 %v8468, %v8467
    %v8532 = vpack.c.bf16 %v8470, %v8469
    %v8533 = vpack.c.bf16 %v8472, %v8471
    %v8534 = vpack.c.bf16 %v8474, %v8473
    %v8535 = vpack.c.bf16 %v8476, %v8475
    %v8536 = vpack.c.bf16 %v8478, %v8477
    %v8537 = vpack.c.bf16 %v8480, %v8479
    %v8538 = vpack.c.bf16 %v8482, %v8481
    %v8539 = vpack.c.bf16 %v8484, %v8483
    %v8540 = vpack.c.bf16 %v8486, %v8485
    %v8541 = vpack.c.bf16 %v8488, %v8487
    %v8542 = vpack.c.bf16 %v8490, %v8489
    %v8543 = vpack.c.bf16 %v8492, %v8491
    %v8544 = vpack.c.bf16 %v8494, %v8493
    %v8545 = vpack.c.bf16 %v8496, %v8495
    %v8546 = vpack.c.bf16 %v8498, %v8497
    %v8547 = vpack.c.bf16 %v8500, %v8499
    %v8548 = vpack.c.bf16 %v8502, %v8501
    %v8549 = vpack.c.bf16 %v8504, %v8503
    %v8550 = vpack.c.bf16 %v8506, %v8505
    %v8551 = vpack.c.bf16 %v8508, %v8507
    %v8552 = vpack.c.bf16 %v8510, %v8509
    %v8553 = vpack.c.bf16 %v8512, %v8511
    %v8554 = vpack.c.bf16 %v8514, %v8513
    %v8555 = vpack.c.bf16 %v8516, %v8515
    %v8556 = vpack.c.bf16 %v8518, %v8517
    %v8557 = vpack.c.bf16 %v8520, %v8519
    %v8558 = vpack.c.bf16 %v8522, %v8521
    %v8559 = vpack.c.bf16 %v8524, %v8523
    %v8560 = vpack.c.bf16 %v8526, %v8525
    %v8561 = vpack.c.bf16 %v8528, %v8527
    %v8562 = vpack.c.bf16 %v8530, %v8529
    %v8563 = vld [vmem:[%s13] sm:$0xf]
    %v8565 = vsel %vm672, %v8531, 0
    %v8568 = vsel %vm672, %v8532, 0
    %v8571 = vsel %vm672, %v8533, 0
    %v8574 = vsel %vm672, %v8534, 0
    %v8577 = vsel %vm672, %v8535, 0
    %v8580 = vsel %vm672, %v8536, 0
    %v8583 = vsel %vm672, %v8537, 0
    %v8586 = vsel %vm672, %v8538, 0
    %v8589 = vsel %vm672, %v8539, 0
    %v8592 = vsel %vm672, %v8540, 0
    %v8595 = vsel %vm672, %v8541, 0
    %v8598 = vsel %vm672, %v8542, 0
    %v8601 = vsel %vm672, %v8543, 0
    %v8604 = vsel %vm672, %v8544, 0
    %v8607 = vsel %vm672, %v8545, 0
    %v8610 = vsel %vm672, %v8546, 0
    %v8613 = vsel %vm672, %v8547, 0
    %v8616 = vsel %vm672, %v8548, 0
    %v8619 = vsel %vm672, %v8549, 0
    %v8622 = vsel %vm672, %v8550, 0
    %v8625 = vsel %vm672, %v8551, 0
    %v8628 = vsel %vm672, %v8552, 0
    %v8631 = vsel %vm672, %v8553, 0
    %v8634 = vsel %vm672, %v8554, 0
    %v8637 = vsel %vm672, %v8555, 0
    %v8640 = vsel %vm672, %v8556, 0
    %v8643 = vsel %vm672, %v8557, 0
    %v8646 = vsel %vm672, %v8558, 0
    %v8649 = vsel %vm672, %v8559, 0
    %v8652 = vsel %vm672, %v8560, 0
    %v8655 = vsel %vm672, %v8561, 0
    %v8658 = vsel %vm672, %v8562, 0
    %vm8660 = vcmask 1043456
    %v8662 = vsel %vm8660, %v8563, 0
    %8664 = vmatprep.subr.bf16.mxu0 0
    %8665 = vmatpush1.bf16.msra.mxu0 %v8662
    %8666 = vmatprep.subr.bf16.mxu0 0
    %8667 = vmatpush1.bf16.msra.mxu0 0
    %8668 = vmatprep.subr.bf16.mxu0 0
    %8669 = vmatpush1.bf16.msra.mxu0 0
    %8670 = vmatprep.subr.bf16.mxu0 0
    %8671 = vmatpush1.bf16.msra.mxu0 0
    %8672 = vmatprep.subr.bf16.mxu0 0
    %8673 = vmatpush1.bf16.msra.mxu0 0
    %8674 = vmatprep.subr.bf16.mxu0 0
    %8675 = vmatpush1.bf16.msra.mxu0 0
    %8676 = vmatprep.subr.bf16.mxu0 0
    %8677 = vmatpush1.bf16.msra.mxu0 0
    %8678 = vmatprep.subr.bf16.mxu0 0
    %8679 = vmatpush1.bf16.msra.mxu0 0
    %8680 = vmatprep.subr.bf16.mxu0 0
    %8681 = vmatpush1.bf16.msra.mxu0 0
    %8682 = vmatprep.subr.bf16.mxu0 0
    %8683 = vmatpush1.bf16.msra.mxu0 0
    %8684 = vmatprep.subr.bf16.mxu0 0
    %8685 = vmatpush1.bf16.msra.mxu0 0
    %8686 = vmatprep.subr.bf16.mxu0 0
    %8687 = vmatpush1.bf16.msra.mxu0 0
    %8688 = vmatprep.subr.bf16.mxu0 0
    %8689 = vmatpush1.bf16.msra.mxu0 0
    %8690 = vmatprep.subr.bf16.mxu0 0
    %8691 = vmatpush1.bf16.msra.mxu0 0
    %8692 = vmatprep.subr.bf16.mxu0 0
    %8693 = vmatpush1.bf16.msra.mxu0 0
    %8694 = vmatprep.subr.bf16.mxu0 0
    %8695 = vmatpush1.bf16.msra.mxu0 0
    %8696 = vmatprep.mubr.bf16.mxu0 0
    %8697 = vmatmul.mubr.bf16.gmra.mrb[0].mxu0 %v8565
    %v8698 = vpop.f32.mrb[0].mxu0
    %v8699 = vadd.f32 0.0, %v8698
    %v8700 = vpop.f32.mrb[0].mxu0
    %v8701 = vpop.f32.mrb[0].mxu0
    %v8702 = vadd.f32 0.0, %v8701
    %v8703 = vpop.f32.mrb[0].mxu0
    %8704 = vmatprep.mubr.bf16.mxu0 0
    %8705 = vmatmul.mubr.bf16.gmra.mrb[0].mxu0 %v8568
    %v8706 = vpop.f32.mrb[0].mxu0
    %v8707 = vadd.f32 0.0, %v8706
    %v8708 = vpop.f32.mrb[0].mxu0
    %v8709 = vpop.f32.mrb[0].mxu0
    %v8710 = vadd.f32 0.0, %v8709
    %v8711 = vpop.f32.mrb[0].mxu0
    %8712 = vmatprep.mubr.bf16.mxu0 0
    %8713 = vmatmul.mubr.bf16.gmra.mrb[0].mxu0 %v8571
    %v8714 = vpop.f32.mrb[0].mxu0
    %v8715 = vadd.f32 0.0, %v8714
    %v8716 = vpop.f32.mrb[0].mxu0
    %v8717 = vpop.f32.mrb[0].mxu0
    %v8718 = vadd.f32 0.0, %v8717
    %v8719 = vpop.f32.mrb[0].mxu0
    %8720 = vmatprep.mubr.bf16.mxu0 0
    %8721 = vmatmul.mubr.bf16.gmra.mrb[0].mxu0 %v8574
    %v8722 = vpop.f32.mrb[0].mxu0
    %v8723 = vadd.f32 0.0, %v8722
    %v8724 = vpop.f32.mrb[0].mxu0
    %v8725 = vpop.f32.mrb[0].mxu0
    %v8726 = vadd.f32 0.0, %v8725
    %v8727 = vpop.f32.mrb[0].mxu0
    %8728 = vmatprep.mubr.bf16.mxu0 0
    %8729 = vmatmul.mubr.bf16.gmra.mrb[0].mxu0 %v8577
    %v8730 = vpop.f32.mrb[0].mxu0
    %v8731 = vadd.f32 0.0, %v8730
    %v8732 = vpop.f32.mrb[0].mxu0
    %v8733 = vpop.f32.mrb[0].mxu0
    %v8734 = vadd.f32 0.0, %v8733
    %v8735 = vpop.f32.mrb[0].mxu0
    %8736 = vmatprep.mubr.bf16.mxu0 0
    %8737 = vmatmul.mubr.bf16.gmra.mrb[0].mxu0 %v8580
    %v8738 = vpop.f32.mrb[0].mxu0
    %v8739 = vadd.f32 0.0, %v8738
    %v8740 = vpop.f32.mrb[0].mxu0
    %v8741 = vpop.f32.mrb[0].mxu0
    %v8742 = vadd.f32 0.0, %v8741
    %v8743 = vpop.f32.mrb[0].mxu0
    %8744 = vmatprep.mubr.bf16.mxu0 0
    %8745 = vmatmul.mubr.bf16.gmra.mrb[0].mxu0 %v8583
    %v8746 = vpop.f32.mrb[0].mxu0
    %v8747 = vadd.f32 0.0, %v8746
    %v8748 = vpop.f32.mrb[0].mxu0
    %v8749 = vpop.f32.mrb[0].mxu0
    %v8750 = vadd.f32 0.0, %v8749
    %v8751 = vpop.f32.mrb[0].mxu0
    %8752 = vmatprep.mubr.bf16.mxu0 0
    %8753 = vmatmul.mubr.bf16.gmra.mrb[0].mxu0 %v8586
    %v8754 = vpop.f32.mrb[0].mxu0
    %v8755 = vadd.f32 0.0, %v8754
    %v8756 = vpop.f32.mrb[0].mxu0
    %v8757 = vpop.f32.mrb[0].mxu0
    %v8758 = vadd.f32 0.0, %v8757
    %v8759 = vpop.f32.mrb[0].mxu0
    %8760 = vmatprep.mubr.bf16.mxu0 0
    %8761 = vmatmul.mubr.bf16.gmra.mrb[0].mxu0 %v8589
    %v8762 = vpop.f32.mrb[0].mxu0
    %v8763 = vadd.f32 0.0, %v8762
    %v8764 = vpop.f32.mrb[0].mxu0
    %v8765 = vpop.f32.mrb[0].mxu0
    %v8766 = vadd.f32 0.0, %v8765
    %v8767 = vpop.f32.mrb[0].mxu0
    %8768 = vmatprep.mubr.bf16.mxu0 0
    %8769 = vmatmul.mubr.bf16.gmra.mrb[0].mxu0 %v8592
    %v8770 = vpop.f32.mrb[0].mxu0
    %v8771 = vadd.f32 0.0, %v8770
    %v8772 = vpop.f32.mrb[0].mxu0
    %v8773 = vpop.f32.mrb[0].mxu0
    %v8774 = vadd.f32 0.0, %v8773
    %v8775 = vpop.f32.mrb[0].mxu0
    %8776 = vmatprep.mubr.bf16.mxu0 0
    %8777 = vmatmul.mubr.bf16.gmra.mrb[0].mxu0 %v8595
    %v8778 = vpop.f32.mrb[0].mxu0
    %v8779 = vadd.f32 0.0, %v8778
    %v8780 = vpop.f32.mrb[0].mxu0
    %v8781 = vpop.f32.mrb[0].mxu0
    %v8782 = vadd.f32 0.0, %v8781
    %v8783 = vpop.f32.mrb[0].mxu0
    %8784 = vmatprep.mubr.bf16.mxu0 0
    %8785 = vmatmul.mubr.bf16.gmra.mrb[0].mxu0 %v8598
    %v8786 = vpop.f32.mrb[0].mxu0
    %v8787 = vadd.f32 0.0, %v8786
    %v8788 = vpop.f32.mrb[0].mxu0
    %v8789 = vpop.f32.mrb[0].mxu0
    %v8790 = vadd.f32 0.0, %v8789
    %v8791 = vpop.f32.mrb[0].mxu0
    %8792 = vmatprep.mubr.bf16.mxu0 0
    %8793 = vmatmul.mubr.bf16.gmra.mrb[0].mxu0 %v8601
    %v8794 = vpop.f32.mrb[0].mxu0
    %v8795 = vadd.f32 0.0, %v8794
    %v8796 = vpop.f32.mrb[0].mxu0
    %v8797 = vpop.f32.mrb[0].mxu0
    %v8798 = vadd.f32 0.0, %v8797
    %v8799 = vpop.f32.mrb[0].mxu0
    %8800 = vmatprep.mubr.bf16.mxu0 0
    %8801 = vmatmul.mubr.bf16.gmra.mrb[0].mxu0 %v8604
    %v8802 = vpop.f32.mrb[0].mxu0
    %v8803 = vadd.f32 0.0, %v8802
    %v8804 = vpop.f32.mrb[0].mxu0
    %v8805 = vpop.f32.mrb[0].mxu0
    %v8806 = vadd.f32 0.0, %v8805
    %v8807 = vpop.f32.mrb[0].mxu0
    %8808 = vmatprep.mubr.bf16.mxu0 0
    %8809 = vmatmul.mubr.bf16.gmra.mrb[0].mxu0 %v8607
    %v8810 = vpop.f32.mrb[0].mxu0
    %v8811 = vadd.f32 0.0, %v8810
    %v8812 = vpop.f32.mrb[0].mxu0
    %v8813 = vpop.f32.mrb[0].mxu0
    %v8814 = vadd.f32 0.0, %v8813
    %v8815 = vpop.f32.mrb[0].mxu0
    %8816 = vmatprep.mubr.bf16.mxu0 0
    %8817 = vmatmul.mubr.bf16.gmra.mrb[0].mxu0 %v8610
    %v8818 = vpop.f32.mrb[0].mxu0
    %v8819 = vadd.f32 0.0, %v8818
    %v8820 = vpop.f32.mrb[0].mxu0
    %v8821 = vpop.f32.mrb[0].mxu0
    %v8822 = vadd.f32 0.0, %v8821
    %v8823 = vpop.f32.mrb[0].mxu0
    %8824 = vmatprep.mubr.bf16.mxu0 0
    %8825 = vmatmul.mubr.bf16.gmra.mrb[0].mxu0 %v8613
    %v8826 = vpop.f32.mrb[0].mxu0
    %v8827 = vadd.f32 0.0, %v8826
    %v8828 = vpop.f32.mrb[0].mxu0
    %v8829 = vpop.f32.mrb[0].mxu0
    %v8830 = vadd.f32 0.0, %v8829
    %v8831 = vpop.f32.mrb[0].mxu0
    %8832 = vmatprep.mubr.bf16.mxu0 0
    %8833 = vmatmul.mubr.bf16.gmra.mrb[0].mxu0 %v8616
    %v8834 = vpop.f32.mrb[0].mxu0
    %v8835 = vadd.f32 0.0, %v8834
    %v8836 = vpop.f32.mrb[0].mxu0
    %v8837 = vpop.f32.mrb[0].mxu0
    %v8838 = vadd.f32 0.0, %v8837
    %v8839 = vpop.f32.mrb[0].mxu0
    %8840 = vmatprep.mubr.bf16.mxu0 0
    %8841 = vmatmul.mubr.bf16.gmra.mrb[0].mxu0 %v8619
    %v8842 = vpop.f32.mrb[0].mxu0
    %v8843 = vadd.f32 0.0, %v8842
    %v8844 = vpop.f32.mrb[0].mxu0
    %v8845 = vpop.f32.mrb[0].mxu0
    %v8846 = vadd.f32 0.0, %v8845
    %v8847 = vpop.f32.mrb[0].mxu0
    %8848 = vmatprep.mubr.bf16.mxu0 0
    %8849 = vmatmul.mubr.bf16.gmra.mrb[0].mxu0 %v8622
    %v8850 = vpop.f32.mrb[0].mxu0
    %v8851 = vadd.f32 0.0, %v8850
    %v8852 = vpop.f32.mrb[0].mxu0
    %v8853 = vpop.f32.mrb[0].mxu0
    %v8854 = vadd.f32 0.0, %v8853
    %v8855 = vpop.f32.mrb[0].mxu0
    %8856 = vmatprep.mubr.bf16.mxu0 0
    %8857 = vmatmul.mubr.bf16.gmra.mrb[0].mxu0 %v8625
    %v8858 = vpop.f32.mrb[0].mxu0
    %v8859 = vadd.f32 0.0, %v8858
    %v8860 = vpop.f32.mrb[0].mxu0
    %v8861 = vpop.f32.mrb[0].mxu0
    %v8862 = vadd.f32 0.0, %v8861
    %v8863 = vpop.f32.mrb[0].mxu0
    %8864 = vmatprep.mubr.bf16.mxu0 0
    %8865 = vmatmul.mubr.bf16.gmra.mrb[0].mxu0 %v8628
    %v8866 = vpop.f32.mrb[0].mxu0
    %v8867 = vadd.f32 0.0, %v8866
    %v8868 = vpop.f32.mrb[0].mxu0
    %v8869 = vpop.f32.mrb[0].mxu0
    %v8870 = vadd.f32 0.0, %v8869
    %v8871 = vpop.f32.mrb[0].mxu0
    %8872 = vmatprep.mubr.bf16.mxu0 0
    %8873 = vmatmul.mubr.bf16.gmra.mrb[0].mxu0 %v8631
    %v8874 = vpop.f32.mrb[0].mxu0
    %v8875 = vadd.f32 0.0, %v8874
    %v8876 = vpop.f32.mrb[0].mxu0
    %v8877 = vpop.f32.mrb[0].mxu0
    %v8878 = vadd.f32 0.0, %v8877
    %v8879 = vpop.f32.mrb[0].mxu0
    %8880 = vmatprep.mubr.bf16.mxu0 0
    %8881 = vmatmul.mubr.bf16.gmra.mrb[0].mxu0 %v8634
    %v8882 = vpop.f32.mrb[0].mxu0
    %v8883 = vadd.f32 0.0, %v8882
    %v8884 = vpop.f32.mrb[0].mxu0
    %v8885 = vpop.f32.mrb[0].mxu0
    %v8886 = vadd.f32 0.0, %v8885
    %v8887 = vpop.f32.mrb[0].mxu0
    %8888 = vmatprep.mubr.bf16.mxu0 0
    %8889 = vmatmul.mubr.bf16.gmra.mrb[0].mxu0 %v8637
    %v8890 = vpop.f32.mrb[0].mxu0
    %v8891 = vadd.f32 0.0, %v8890
    %v8892 = vpop.f32.mrb[0].mxu0
    %v8893 = vpop.f32.mrb[0].mxu0
    %v8894 = vadd.f32 0.0, %v8893
    %v8895 = vpop.f32.mrb[0].mxu0
    %8896 = vmatprep.mubr.bf16.mxu0 0
    %8897 = vmatmul.mubr.bf16.gmra.mrb[0].mxu0 %v8640
    %v8898 = vpop.f32.mrb[0].mxu0
    %v8899 = vadd.f32 0.0, %v8898
    %v8900 = vpop.f32.mrb[0].mxu0
    %v8901 = vpop.f32.mrb[0].mxu0
    %v8902 = vadd.f32 0.0, %v8901
    %v8903 = vpop.f32.mrb[0].mxu0
    %8904 = vmatprep.mubr.bf16.mxu0 0
    %8905 = vmatmul.mubr.bf16.gmra.mrb[0].mxu0 %v8643
    %v8906 = vpop.f32.mrb[0].mxu0
    %v8907 = vadd.f32 0.0, %v8906
    %v8908 = vpop.f32.mrb[0].mxu0
    %v8909 = vpop.f32.mrb[0].mxu0
    %v8910 = vadd.f32 0.0, %v8909
    %v8911 = vpop.f32.mrb[0].mxu0
    %8912 = vmatprep.mubr.bf16.mxu0 0
    %8913 = vmatmul.mubr.bf16.gmra.mrb[0].mxu0 %v8646
    %v8914 = vpop.f32.mrb[0].mxu0
    %v8915 = vadd.f32 0.0, %v8914
    %v8916 = vpop.f32.mrb[0].mxu0
    %v8917 = vpop.f32.mrb[0].mxu0
    %v8918 = vadd.f32 0.0, %v8917
    %v8919 = vpop.f32.mrb[0].mxu0
    %8920 = vmatprep.mubr.bf16.mxu0 0
    %8921 = vmatmul.mubr.bf16.gmra.mrb[0].mxu0 %v8649
    %v8922 = vpop.f32.mrb[0].mxu0
    %v8923 = vadd.f32 0.0, %v8922
    %v8924 = vpop.f32.mrb[0].mxu0
    %v8925 = vpop.f32.mrb[0].mxu0
    %v8926 = vadd.f32 0.0, %v8925
    %v8927 = vpop.f32.mrb[0].mxu0
    %8928 = vmatprep.mubr.bf16.mxu0 0
    %8929 = vmatmul.mubr.bf16.gmra.mrb[0].mxu0 %v8652
    %v8930 = vpop.f32.mrb[0].mxu0
    %v8931 = vadd.f32 0.0, %v8930
    %v8932 = vpop.f32.mrb[0].mxu0
    %v8933 = vpop.f32.mrb[0].mxu0
    %v8934 = vadd.f32 0.0, %v8933
    %v8935 = vpop.f32.mrb[0].mxu0
    %8936 = vmatprep.mubr.bf16.mxu0 0
    %8937 = vmatmul.mubr.bf16.gmra.mrb[0].mxu0 %v8655
    %v8938 = vpop.f32.mrb[0].mxu0
    %v8939 = vadd.f32 0.0, %v8938
    %v8940 = vpop.f32.mrb[0].mxu0
    %v8941 = vpop.f32.mrb[0].mxu0
    %v8942 = vadd.f32 0.0, %v8941
    %v8943 = vpop.f32.mrb[0].mxu0
    %8944 = vmatprep.mubr.bf16.mxu0 0
    %8945 = vmatmul.mubr.bf16.gmra.mrb[0].mxu0 %v8658
    %v8946 = vpop.f32.mrb[0].mxu0
    %v8947 = vadd.f32 0.0, %v8946
    %v8948 = vpop.f32.mrb[0].mxu0
    %v8949 = vpop.f32.mrb[0].mxu0
    %v8950 = vadd.f32 0.0, %v8949
    %v8951 = vpop.f32.mrb[0].mxu0
    %8952 = vdwg.mxu0
    %v8953 = vld [vmem:[%s14] sm:$0x1]
    %v8954 = vld [vmem:[%s15] sm:$0x1]
    %v8955 = vsel %vm672, %v8699, 0.0
    %v8956 = vsel %vm672, %v8702, 0.0
    %v8957 = vadd.f32 %v8955, %v8956
    %v8958 = vsel %vm672, %v8707, 0.0
    %v8959 = vadd.f32 %v8957, %v8958
    %v8960 = vsel %vm672, %v8710, 0.0
    %v8961 = vadd.f32 %v8959, %v8960
    %v8962 = vsel %vm672, %v8715, 0.0
    %v8963 = vadd.f32 %v8961, %v8962
    %v8964 = vsel %vm672, %v8718, 0.0
    %v8965 = vadd.f32 %v8963, %v8964
    %v8966 = vsel %vm672, %v8723, 0.0
    %v8967 = vadd.f32 %v8965, %v8966
    %v8968 = vsel %vm672, %v8726, 0.0
    %v8969 = vadd.f32 %v8967, %v8968
    %v8970 = vsel %vm672, %v8731, 0.0
    %v8971 = vadd.f32 %v8969, %v8970
    %v8972 = vsel %vm672, %v8734, 0.0
    %v8973 = vadd.f32 %v8971, %v8972
    %v8974 = vsel %vm672, %v8739, 0.0
    %v8975 = vadd.f32 %v8973, %v8974
    %v8976 = vsel %vm672, %v8742, 0.0
    %v8977 = vadd.f32 %v8975, %v8976
    %v8978 = vsel %vm672, %v8747, 0.0
    %v8979 = vadd.f32 %v8977, %v8978
    %v8980 = vsel %vm672, %v8750, 0.0
    %v8981 = vadd.f32 %v8979, %v8980
    %v8982 = vsel %vm672, %v8755, 0.0
    %v8983 = vadd.f32 %v8981, %v8982
    %v8984 = vsel %vm672, %v8758, 0.0
    %v8985 = vadd.f32 %v8983, %v8984
    %v8986 = vsel %vm672, %v8763, 0.0
    %v8987 = vadd.f32 %v8985, %v8986
    %v8988 = vsel %vm672, %v8766, 0.0
    %v8989 = vadd.f32 %v8987, %v8988
    %v8990 = vsel %vm672, %v8771, 0.0
    %v8991 = vadd.f32 %v8989, %v8990
    %v8992 = vsel %vm672, %v8774, 0.0
    %v8993 = vadd.f32 %v8991, %v8992
    %v8994 = vsel %vm672, %v8779, 0.0
    %v8995 = vadd.f32 %v8993, %v8994
    %v8996 = vsel %vm672, %v8782, 0.0
    %v8997 = vadd.f32 %v8995, %v8996
    %v8998 = vsel %vm672, %v8787, 0.0
    %v8999 = vadd.f32 %v8997, %v8998
    %v9000 = vsel %vm672, %v8790, 0.0
    %v9001 = vadd.f32 %v8999, %v9000
    %v9002 = vsel %vm672, %v8795, 0.0
    %v9003 = vadd.f32 %v9001, %v9002
    %v9004 = vsel %vm672, %v8798, 0.0
    %v9005 = vadd.f32 %v9003, %v9004
    %v9006 = vsel %vm672, %v8803, 0.0
    %v9007 = vadd.f32 %v9005, %v9006
    %v9008 = vsel %vm672, %v8806, 0.0
    %v9009 = vadd.f32 %v9007, %v9008
    %v9010 = vsel %vm672, %v8811, 0.0
    %v9011 = vadd.f32 %v9009, %v9010
    %v9012 = vsel %vm672, %v8814, 0.0
    %v9013 = vadd.f32 %v9011, %v9012
    %v9014 = vsel %vm672, %v8819, 0.0
    %v9015 = vadd.f32 %v9013, %v9014
    %v9016 = vsel %vm672, %v8822, 0.0
    %v9017 = vadd.f32 %v9015, %v9016
    %v9018 = vsel %vm672, %v8827, 0.0
    %v9019 = vadd.f32 %v9017, %v9018
    %v9020 = vsel %vm672, %v8830, 0.0
    %v9021 = vadd.f32 %v9019, %v9020
    %v9022 = vsel %vm672, %v8835, 0.0
    %v9023 = vadd.f32 %v9021, %v9022
    %v9024 = vsel %vm672, %v8838, 0.0
    %v9025 = vadd.f32 %v9023, %v9024
    %v9026 = vsel %vm672, %v8843, 0.0
    %v9027 = vadd.f32 %v9025, %v9026
    %v9028 = vsel %vm672, %v8846, 0.0
    %v9029 = vadd.f32 %v9027, %v9028
    %v9030 = vsel %vm672, %v8851, 0.0
    %v9031 = vadd.f32 %v9029, %v9030
    %v9032 = vsel %vm672, %v8854, 0.0
    %v9033 = vadd.f32 %v9031, %v9032
    %v9034 = vsel %vm672, %v8859, 0.0
    %v9035 = vadd.f32 %v9033, %v9034
    %v9036 = vsel %vm672, %v8862, 0.0
    %v9037 = vadd.f32 %v9035, %v9036
    %v9038 = vsel %vm672, %v8867, 0.0
    %v9039 = vadd.f32 %v9037, %v9038
    %v9040 = vsel %vm672, %v8870, 0.0
    %v9041 = vadd.f32 %v9039, %v9040
    %v9042 = vsel %vm672, %v8875, 0.0
    %v9043 = vadd.f32 %v9041, %v9042
    %v9044 = vsel %vm672, %v8878, 0.0
    %v9045 = vadd.f32 %v9043, %v9044
    %v9046 = vsel %vm672, %v8883, 0.0
    %v9047 = vadd.f32 %v9045, %v9046
    %v9048 = vsel %vm672, %v8886, 0.0
    %v9049 = vadd.f32 %v9047, %v9048
    %v9050 = vsel %vm672, %v8891, 0.0
    %v9051 = vadd.f32 %v9049, %v9050
    %v9052 = vsel %vm672, %v8894, 0.0
    %v9053 = vadd.f32 %v9051, %v9052
    %v9054 = vsel %vm672, %v8899, 0.0
    %v9055 = vadd.f32 %v9053, %v9054
    %v9056 = vsel %vm672, %v8902, 0.0
    %v9057 = vadd.f32 %v9055, %v9056
    %v9058 = vsel %vm672, %v8907, 0.0
    %v9059 = vadd.f32 %v9057, %v9058
    %v9060 = vsel %vm672, %v8910, 0.0
    %v9061 = vadd.f32 %v9059, %v9060
    %v9062 = vsel %vm672, %v8915, 0.0
    %v9063 = vadd.f32 %v9061, %v9062
    %v9064 = vsel %vm672, %v8918, 0.0
    %v9065 = vadd.f32 %v9063, %v9064
    %v9066 = vsel %vm672, %v8923, 0.0
    %v9067 = vadd.f32 %v9065, %v9066
    %v9068 = vsel %vm672, %v8926, 0.0
    %v9069 = vadd.f32 %v9067, %v9068
    %v9070 = vsel %vm672, %v8931, 0.0
    %v9071 = vadd.f32 %v9069, %v9070
    %v9072 = vsel %vm672, %v8934, 0.0
    %v9073 = vadd.f32 %v9071, %v9072
    %v9074 = vsel %vm672, %v8939, 0.0
    %v9075 = vadd.f32 %v9073, %v9074
    %v9076 = vsel %vm672, %v8942, 0.0
    %v9077 = vadd.f32 %v9075, %v9076
    %v9078 = vsel %vm672, %v8947, 0.0
    %v9079 = vadd.f32 %v9077, %v9078
    %v9080 = vsel %vm672, %v8950, 0.0
    %v9081 = vadd.f32 %v9079, %v9080
    %v9082 = vrot.slane %v9081, 4
    %v9083 = vadd.f32 %v9081, %v9082
    %v9084 = vrot.slane %v9083, 2
    %v9085 = vadd.f32 %v9083, %v9084
    %v9086 = vrot.slane %v9085, 1
    %v9087 = vadd.f32 %v9085, %v9086
    %v9088 = vmul.f32 %v9087, %v806
    %v9089 = vsub.f32 %v8699, %v9088
    %v9090 = vsub.f32 %v8702, %v9088
    %v9091 = vsub.f32 %v8707, %v9088
    %v9092 = vsub.f32 %v8710, %v9088
    %v9093 = vsub.f32 %v8715, %v9088
    %v9094 = vsub.f32 %v8718, %v9088
    %v9095 = vsub.f32 %v8723, %v9088
    %v9096 = vsub.f32 %v8726, %v9088
    %v9097 = vsub.f32 %v8731, %v9088
    %v9098 = vsub.f32 %v8734, %v9088
    %v9099 = vsub.f32 %v8739, %v9088
    %v9100 = vsub.f32 %v8742, %v9088
    %v9101 = vsub.f32 %v8747, %v9088
    %v9102 = vsub.f32 %v8750, %v9088
    %v9103 = vsub.f32 %v8755, %v9088
    %v9104 = vsub.f32 %v8758, %v9088
    %v9105 = vsub.f32 %v8763, %v9088
    %v9106 = vsub.f32 %v8766, %v9088
    %v9107 = vsub.f32 %v8771, %v9088
    %v9108 = vsub.f32 %v8774, %v9088
    %v9109 = vsub.f32 %v8779, %v9088
    %v9110 = vsub.f32 %v8782, %v9088
    %v9111 = vsub.f32 %v8787, %v9088
    %v9112 = vsub.f32 %v8790, %v9088
    %v9113 = vsub.f32 %v8795, %v9088
    %v9114 = vsub.f32 %v8798, %v9088
    %v9115 = vsub.f32 %v8803, %v9088
    %v9116 = vsub.f32 %v8806, %v9088
    %v9117 = vsub.f32 %v8811, %v9088
    %v9118 = vsub.f32 %v8814, %v9088
    %v9119 = vsub.f32 %v8819, %v9088
    %v9120 = vsub.f32 %v8822, %v9088
    %v9121 = vsub.f32 %v8827, %v9088
    %v9122 = vsub.f32 %v8830, %v9088
    %v9123 = vsub.f32 %v8835, %v9088
    %v9124 = vsub.f32 %v8838, %v9088
    %v9125 = vsub.f32 %v8843, %v9088
    %v9126 = vsub.f32 %v8846, %v9088
    %v9127 = vsub.f32 %v8851, %v9088
    %v9128 = vsub.f32 %v8854, %v9088
    %v9129 = vsub.f32 %v8859, %v9088
    %v9130 = vsub.f32 %v8862, %v9088
    %v9131 = vsub.f32 %v8867, %v9088
    %v9132 = vsub.f32 %v8870, %v9088
    %v9133 = vsub.f32 %v8875, %v9088
    %v9134 = vsub.f32 %v8878, %v9088
    %v9135 = vsub.f32 %v8883, %v9088
    %v9136 = vsub.f32 %v8886, %v9088
    %v9137 = vsub.f32 %v8891, %v9088
    %v9138 = vsub.f32 %v8894, %v9088
    %v9139 = vsub.f32 %v8899, %v9088
    %v9140 = vsub.f32 %v8902, %v9088
    %v9141 = vsub.f32 %v8907, %v9088
    %v9142 = vsub.f32 %v8910, %v9088
    %v9143 = vsub.f32 %v8915, %v9088
    %v9144 = vsub.f32 %v8918, %v9088
    %v9145 = vsub.f32 %v8923, %v9088
    %v9146 = vsub.f32 %v8926, %v9088
    %v9147 = vsub.f32 %v8931, %v9088
    %v9148 = vsub.f32 %v8934, %v9088
    %v9149 = vsub.f32 %v8939, %v9088
    %v9150 = vsub.f32 %v8942, %v9088
    %v9151 = vsub.f32 %v8947, %v9088
    %v9152 = vsub.f32 %v8950, %v9088
    %v9153 = vmul.f32 %v9089, %v9089
    %v9154 = vmul.f32 %v9090, %v9090
    %v9155 = vmul.f32 %v9091, %v9091
    %v9156 = vmul.f32 %v9092, %v9092
    %v9157 = vmul.f32 %v9093, %v9093
    %v9158 = vmul.f32 %v9094, %v9094
    %v9159 = vmul.f32 %v9095, %v9095
    %v9160 = vmul.f32 %v9096, %v9096
    %v9161 = vmul.f32 %v9097, %v9097
    %v9162 = vmul.f32 %v9098, %v9098
    %v9163 = vmul.f32 %v9099, %v9099
    %v9164 = vmul.f32 %v9100, %v9100
    %v9165 = vmul.f32 %v9101, %v9101
    %v9166 = vmul.f32 %v9102, %v9102
    %v9167 = vmul.f32 %v9103, %v9103
    %v9168 = vmul.f32 %v9104, %v9104
    %v9169 = vmul.f32 %v9105, %v9105
    %v9170 = vmul.f32 %v9106, %v9106
    %v9171 = vmul.f32 %v9107, %v9107
    %v9172 = vmul.f32 %v9108, %v9108
    %v9173 = vmul.f32 %v9109, %v9109
    %v9174 = vmul.f32 %v9110, %v9110
    %v9175 = vmul.f32 %v9111, %v9111
    %v9176 = vmul.f32 %v9112, %v9112
    %v9177 = vmul.f32 %v9113, %v9113
    %v9178 = vmul.f32 %v9114, %v9114
    %v9179 = vmul.f32 %v9115, %v9115
    %v9180 = vmul.f32 %v9116, %v9116
    %v9181 = vmul.f32 %v9117, %v9117
    %v9182 = vmul.f32 %v9118, %v9118
    %v9183 = vmul.f32 %v9119, %v9119
    %v9184 = vmul.f32 %v9120, %v9120
    %v9185 = vmul.f32 %v9121, %v9121
    %v9186 = vmul.f32 %v9122, %v9122
    %v9187 = vmul.f32 %v9123, %v9123
    %v9188 = vmul.f32 %v9124, %v9124
    %v9189 = vmul.f32 %v9125, %v9125
    %v9190 = vmul.f32 %v9126, %v9126
    %v9191 = vmul.f32 %v9127, %v9127
    %v9192 = vmul.f32 %v9128, %v9128
    %v9193 = vmul.f32 %v9129, %v9129
    %v9194 = vmul.f32 %v9130, %v9130
    %v9195 = vmul.f32 %v9131, %v9131
    %v9196 = vmul.f32 %v9132, %v9132
    %v9197 = vmul.f32 %v9133, %v9133
    %v9198 = vmul.f32 %v9134, %v9134
    %v9199 = vmul.f32 %v9135, %v9135
    %v9200 = vmul.f32 %v9136, %v9136
    %v9201 = vmul.f32 %v9137, %v9137
    %v9202 = vmul.f32 %v9138, %v9138
    %v9203 = vmul.f32 %v9139, %v9139
    %v9204 = vmul.f32 %v9140, %v9140
    %v9205 = vmul.f32 %v9141, %v9141
    %v9206 = vmul.f32 %v9142, %v9142
    %v9207 = vmul.f32 %v9143, %v9143
    %v9208 = vmul.f32 %v9144, %v9144
    %v9209 = vmul.f32 %v9145, %v9145
    %v9210 = vmul.f32 %v9146, %v9146
    %v9211 = vmul.f32 %v9147, %v9147
    %v9212 = vmul.f32 %v9148, %v9148
    %v9213 = vmul.f32 %v9149, %v9149
    %v9214 = vmul.f32 %v9150, %v9150
    %v9215 = vmul.f32 %v9151, %v9151
    %v9216 = vmul.f32 %v9152, %v9152
    %v9217 = vsel %vm672, %v9153, 0.0
    %v9218 = vsel %vm672, %v9154, 0.0
    %v9219 = vadd.f32 %v9217, %v9218
    %v9220 = vsel %vm672, %v9155, 0.0
    %v9221 = vadd.f32 %v9219, %v9220
    %v9222 = vsel %vm672, %v9156, 0.0
    %v9223 = vadd.f32 %v9221, %v9222
    %v9224 = vsel %vm672, %v9157, 0.0
    %v9225 = vadd.f32 %v9223, %v9224
    %v9226 = vsel %vm672, %v9158, 0.0
    %v9227 = vadd.f32 %v9225, %v9226
    %v9228 = vsel %vm672, %v9159, 0.0
    %v9229 = vadd.f32 %v9227, %v9228
    %v9230 = vsel %vm672, %v9160, 0.0
    %v9231 = vadd.f32 %v9229, %v9230
    %v9232 = vsel %vm672, %v9161, 0.0
    %v9233 = vadd.f32 %v9231, %v9232
    %v9234 = vsel %vm672, %v9162, 0.0
    %v9235 = vadd.f32 %v9233, %v9234
    %v9236 = vsel %vm672, %v9163, 0.0
    %v9237 = vadd.f32 %v9235, %v9236
    %v9238 = vsel %vm672, %v9164, 0.0
    %v9239 = vadd.f32 %v9237, %v9238
    %v9240 = vsel %vm672, %v9165, 0.0
    %v9241 = vadd.f32 %v9239, %v9240
    %v9242 = vsel %vm672, %v9166, 0.0
    %v9243 = vadd.f32 %v9241, %v9242
    %v9244 = vsel %vm672, %v9167, 0.0
    %v9245 = vadd.f32 %v9243, %v9244
    %v9246 = vsel %vm672, %v9168, 0.0
    %v9247 = vadd.f32 %v9245, %v9246
    %v9248 = vsel %vm672, %v9169, 0.0
    %v9249 = vadd.f32 %v9247, %v9248
    %v9250 = vsel %vm672, %v9170, 0.0
    %v9251 = vadd.f32 %v9249, %v9250
    %v9252 = vsel %vm672, %v9171, 0.0
    %v9253 = vadd.f32 %v9251, %v9252
    %v9254 = vsel %vm672, %v9172, 0.0
    %v9255 = vadd.f32 %v9253, %v9254
    %v9256 = vsel %vm672, %v9173, 0.0
    %v9257 = vadd.f32 %v9255, %v9256
    %v9258 = vsel %vm672, %v9174, 0.0
    %v9259 = vadd.f32 %v9257, %v9258
    %v9260 = vsel %vm672, %v9175, 0.0
    %v9261 = vadd.f32 %v9259, %v9260
    %v9262 = vsel %vm672, %v9176, 0.0
    %v9263 = vadd.f32 %v9261, %v9262
    %v9264 = vsel %vm672, %v9177, 0.0
    %v9265 = vadd.f32 %v9263, %v9264
    %v9266 = vsel %vm672, %v9178, 0.0
    %v9267 = vadd.f32 %v9265, %v9266
    %v9268 = vsel %vm672, %v9179, 0.0
    %v9269 = vadd.f32 %v9267, %v9268
    %v9270 = vsel %vm672, %v9180, 0.0
    %v9271 = vadd.f32 %v9269, %v9270
    %v9272 = vsel %vm672, %v9181, 0.0
    %v9273 = vadd.f32 %v9271, %v9272
    %v9274 = vsel %vm672, %v9182, 0.0
    %v9275 = vadd.f32 %v9273, %v9274
    %v9276 = vsel %vm672, %v9183, 0.0
    %v9277 = vadd.f32 %v9275, %v9276
    %v9278 = vsel %vm672, %v9184, 0.0
    %v9279 = vadd.f32 %v9277, %v9278
    %v9280 = vsel %vm672, %v9185, 0.0
    %v9281 = vadd.f32 %v9279, %v9280
    %v9282 = vsel %vm672, %v9186, 0.0
    %v9283 = vadd.f32 %v9281, %v9282
    %v9284 = vsel %vm672, %v9187, 0.0
    %v9285 = vadd.f32 %v9283, %v9284
    %v9286 = vsel %vm672, %v9188, 0.0
    %v9287 = vadd.f32 %v9285, %v9286
    %v9288 = vsel %vm672, %v9189, 0.0
    %v9289 = vadd.f32 %v9287, %v9288
    %v9290 = vsel %vm672, %v9190, 0.0
    %v9291 = vadd.f32 %v9289, %v9290
    %v9292 = vsel %vm672, %v9191, 0.0
    %v9293 = vadd.f32 %v9291, %v9292
    %v9294 = vsel %vm672, %v9192, 0.0
    %v9295 = vadd.f32 %v9293, %v9294
    %v9296 = vsel %vm672, %v9193, 0.0
    %v9297 = vadd.f32 %v9295, %v9296
    %v9298 = vsel %vm672, %v9194, 0.0
    %v9299 = vadd.f32 %v9297, %v9298
    %v9300 = vsel %vm672, %v9195, 0.0
    %v9301 = vadd.f32 %v9299, %v9300
    %v9302 = vsel %vm672, %v9196, 0.0
    %v9303 = vadd.f32 %v9301, %v9302
    %v9304 = vsel %vm672, %v9197, 0.0
    %v9305 = vadd.f32 %v9303, %v9304
    %v9306 = vsel %vm672, %v9198, 0.0
    %v9307 = vadd.f32 %v9305, %v9306
    %v9308 = vsel %vm672, %v9199, 0.0
    %v9309 = vadd.f32 %v9307, %v9308
    %v9310 = vsel %vm672, %v9200, 0.0
    %v9311 = vadd.f32 %v9309, %v9310
    %v9312 = vsel %vm672, %v9201, 0.0
    %v9313 = vadd.f32 %v9311, %v9312
    %v9314 = vsel %vm672, %v9202, 0.0
    %v9315 = vadd.f32 %v9313, %v9314
    %v9316 = vsel %vm672, %v9203, 0.0
    %v9317 = vadd.f32 %v9315, %v9316
    %v9318 = vsel %vm672, %v9204, 0.0
    %v9319 = vadd.f32 %v9317, %v9318
    %v9320 = vsel %vm672, %v9205, 0.0
    %v9321 = vadd.f32 %v9319, %v9320
    %v9322 = vsel %vm672, %v9206, 0.0
    %v9323 = vadd.f32 %v9321, %v9322
    %v9324 = vsel %vm672, %v9207, 0.0
    %v9325 = vadd.f32 %v9323, %v9324
    %v9326 = vsel %vm672, %v9208, 0.0
    %v9327 = vadd.f32 %v9325, %v9326
    %v9328 = vsel %vm672, %v9209, 0.0
    %v9329 = vadd.f32 %v9327, %v9328
    %v9330 = vsel %vm672, %v9210, 0.0
    %v9331 = vadd.f32 %v9329, %v9330
    %v9332 = vsel %vm672, %v9211, 0.0
    %v9333 = vadd.f32 %v9331, %v9332
    %v9334 = vsel %vm672, %v9212, 0.0
    %v9335 = vadd.f32 %v9333, %v9334
    %v9336 = vsel %vm672, %v9213, 0.0
    %v9337 = vadd.f32 %v9335, %v9336
    %v9338 = vsel %vm672, %v9214, 0.0
    %v9339 = vadd.f32 %v9337, %v9338
    %v9340 = vsel %vm672, %v9215, 0.0
    %v9341 = vadd.f32 %v9339, %v9340
    %v9342 = vsel %vm672, %v9216, 0.0
    %v9343 = vadd.f32 %v9341, %v9342
    %v9344 = vrot.slane %v9343, 4
    %v9345 = vadd.f32 %v9343, %v9344
    %v9346 = vrot.slane %v9345, 2
    %v9347 = vadd.f32 %v9345, %v9346
    %v9348 = vrot.slane %v9347, 1
    %v9349 = vadd.f32 %v9347, %v9348
    %v9350 = vmul.f32 %v9349, %v806
    %v9351 = vadd.f32 %v9350, 1e-05
    %v9352 = vrsqrt.pop %v9351
    %v9353 = vmul.f32 %v9089, %v9352
    %v9354 = vmul.f32 %v9090, %v9352
    %v9355 = vmul.f32 %v9091, %v9352
    %v9356 = vmul.f32 %v9092, %v9352
    %v9357 = vmul.f32 %v9093, %v9352
    %v9358 = vmul.f32 %v9094, %v9352
    %v9359 = vmul.f32 %v9095, %v9352
    %v9360 = vmul.f32 %v9096, %v9352
    %v9361 = vmul.f32 %v9097, %v9352
    %v9362 = vmul.f32 %v9098, %v9352
    %v9363 = vmul.f32 %v9099, %v9352
    %v9364 = vmul.f32 %v9100, %v9352
    %v9365 = vmul.f32 %v9101, %v9352
    %v9366 = vmul.f32 %v9102, %v9352
    %v9367 = vmul.f32 %v9103, %v9352
    %v9368 = vmul.f32 %v9104, %v9352
    %v9369 = vmul.f32 %v9105, %v9352
    %v9370 = vmul.f32 %v9106, %v9352
    %v9371 = vmul.f32 %v9107, %v9352
    %v9372 = vmul.f32 %v9108, %v9352
    %v9373 = vmul.f32 %v9109, %v9352
    %v9374 = vmul.f32 %v9110, %v9352
    %v9375 = vmul.f32 %v9111, %v9352
    %v9376 = vmul.f32 %v9112, %v9352
    %v9377 = vmul.f32 %v9113, %v9352
    %v9378 = vmul.f32 %v9114, %v9352
    %v9379 = vmul.f32 %v9115, %v9352
    %v9380 = vmul.f32 %v9116, %v9352
    %v9381 = vmul.f32 %v9117, %v9352
    %v9382 = vmul.f32 %v9118, %v9352
    %v9383 = vmul.f32 %v9119, %v9352
    %v9384 = vmul.f32 %v9120, %v9352
    %v9385 = vmul.f32 %v9121, %v9352
    %v9386 = vmul.f32 %v9122, %v9352
    %v9387 = vmul.f32 %v9123, %v9352
    %v9388 = vmul.f32 %v9124, %v9352
    %v9389 = vmul.f32 %v9125, %v9352
    %v9390 = vmul.f32 %v9126, %v9352
    %v9391 = vmul.f32 %v9127, %v9352
    %v9392 = vmul.f32 %v9128, %v9352
    %v9393 = vmul.f32 %v9129, %v9352
    %v9394 = vmul.f32 %v9130, %v9352
    %v9395 = vmul.f32 %v9131, %v9352
    %v9396 = vmul.f32 %v9132, %v9352
    %v9397 = vmul.f32 %v9133, %v9352
    %v9398 = vmul.f32 %v9134, %v9352
    %v9399 = vmul.f32 %v9135, %v9352
    %v9400 = vmul.f32 %v9136, %v9352
    %v9401 = vmul.f32 %v9137, %v9352
    %v9402 = vmul.f32 %v9138, %v9352
    %v9403 = vmul.f32 %v9139, %v9352
    %v9404 = vmul.f32 %v9140, %v9352
    %v9405 = vmul.f32 %v9141, %v9352
    %v9406 = vmul.f32 %v9142, %v9352
    %v9407 = vmul.f32 %v9143, %v9352
    %v9408 = vmul.f32 %v9144, %v9352
    %v9409 = vmul.f32 %v9145, %v9352
    %v9410 = vmul.f32 %v9146, %v9352
    %v9411 = vmul.f32 %v9147, %v9352
    %v9412 = vmul.f32 %v9148, %v9352
    %v9413 = vmul.f32 %v9149, %v9352
    %v9414 = vmul.f32 %v9150, %v9352
    %v9415 = vmul.f32 %v9151, %v9352
    %v9416 = vmul.f32 %v9152, %v9352
    %v9418 = vlaneseq
    %v9419 = vshrl.u32 %v9418, 7
    %v9420 = vsub.s32 0, %v9419
    %v9421 = vrot.slane %v8953, %v9420
    %v9423 = vmul.f32 %v9353, %v9421
    %v9424 = vmul.f32 %v9354, %v9421
    %v9425 = vmul.f32 %v9355, %v9421
    %v9426 = vmul.f32 %v9356, %v9421
    %v9427 = vmul.f32 %v9357, %v9421
    %v9428 = vmul.f32 %v9358, %v9421
    %v9429 = vmul.f32 %v9359, %v9421
    %v9430 = vmul.f32 %v9360, %v9421
    %v9431 = vmul.f32 %v9361, %v9421
    %v9432 = vmul.f32 %v9362, %v9421
    %v9433 = vmul.f32 %v9363, %v9421
    %v9434 = vmul.f32 %v9364, %v9421
    %v9435 = vmul.f32 %v9365, %v9421
    %v9436 = vmul.f32 %v9366, %v9421
    %v9437 = vmul.f32 %v9367, %v9421
    %v9438 = vmul.f32 %v9368, %v9421
    %v9439 = vmul.f32 %v9369, %v9421
    %v9440 = vmul.f32 %v9370, %v9421
    %v9441 = vmul.f32 %v9371, %v9421
    %v9442 = vmul.f32 %v9372, %v9421
    %v9443 = vmul.f32 %v9373, %v9421
    %v9444 = vmul.f32 %v9374, %v9421
    %v9445 = vmul.f32 %v9375, %v9421
    %v9446 = vmul.f32 %v9376, %v9421
    %v9447 = vmul.f32 %v9377, %v9421
    %v9448 = vmul.f32 %v9378, %v9421
    %v9449 = vmul.f32 %v9379, %v9421
    %v9450 = vmul.f32 %v9380, %v9421
    %v9451 = vmul.f32 %v9381, %v9421
    %v9452 = vmul.f32 %v9382, %v9421
    %v9453 = vmul.f32 %v9383, %v9421
    %v9454 = vmul.f32 %v9384, %v9421
    %v9455 = vmul.f32 %v9385, %v9421
    %v9456 = vmul.f32 %v9386, %v9421
    %v9457 = vmul.f32 %v9387, %v9421
    %v9458 = vmul.f32 %v9388, %v9421
    %v9459 = vmul.f32 %v9389, %v9421
    %v9460 = vmul.f32 %v9390, %v9421
    %v9461 = vmul.f32 %v9391, %v9421
    %v9462 = vmul.f32 %v9392, %v9421
    %v9463 = vmul.f32 %v9393, %v9421
    %v9464 = vmul.f32 %v9394, %v9421
    %v9465 = vmul.f32 %v9395, %v9421
    %v9466 = vmul.f32 %v9396, %v9421
    %v9467 = vmul.f32 %v9397, %v9421
    %v9468 = vmul.f32 %v9398, %v9421
    %v9469 = vmul.f32 %v9399, %v9421
    %v9470 = vmul.f32 %v9400, %v9421
    %v9471 = vmul.f32 %v9401, %v9421
    %v9472 = vmul.f32 %v9402, %v9421
    %v9473 = vmul.f32 %v9403, %v9421
    %v9474 = vmul.f32 %v9404, %v9421
    %v9475 = vmul.f32 %v9405, %v9421
    %v9476 = vmul.f32 %v9406, %v9421
    %v9477 = vmul.f32 %v9407, %v9421
    %v9478 = vmul.f32 %v9408, %v9421
    %v9479 = vmul.f32 %v9409, %v9421
    %v9480 = vmul.f32 %v9410, %v9421
    %v9481 = vmul.f32 %v9411, %v9421
    %v9482 = vmul.f32 %v9412, %v9421
    %v9483 = vmul.f32 %v9413, %v9421
    %v9484 = vmul.f32 %v9414, %v9421
    %v9485 = vmul.f32 %v9415, %v9421
    %v9486 = vmul.f32 %v9416, %v9421
    %v9488 = vlaneseq
    %v9489 = vshrl.u32 %v9488, 7
    %v9490 = vsub.s32 0, %v9489
    %v9491 = vrot.slane %v8954, %v9490
    %v9493 = vadd.f32 %v9423, %v9491
    %v9494 = vadd.f32 %v9424, %v9491
    %v9495 = vadd.f32 %v9425, %v9491
    %v9496 = vadd.f32 %v9426, %v9491
    %v9497 = vadd.f32 %v9427, %v9491
    %v9498 = vadd.f32 %v9428, %v9491
    %v9499 = vadd.f32 %v9429, %v9491
    %v9500 = vadd.f32 %v9430, %v9491
    %v9501 = vadd.f32 %v9431, %v9491
    %v9502 = vadd.f32 %v9432, %v9491
    %v9503 = vadd.f32 %v9433, %v9491
    %v9504 = vadd.f32 %v9434, %v9491
    %v9505 = vadd.f32 %v9435, %v9491
    %v9506 = vadd.f32 %v9436, %v9491
    %v9507 = vadd.f32 %v9437, %v9491
    %v9508 = vadd.f32 %v9438, %v9491
    %v9509 = vadd.f32 %v9439, %v9491
    %v9510 = vadd.f32 %v9440, %v9491
    %v9511 = vadd.f32 %v9441, %v9491
    %v9512 = vadd.f32 %v9442, %v9491
    %v9513 = vadd.f32 %v9443, %v9491
    %v9514 = vadd.f32 %v9444, %v9491
    %v9515 = vadd.f32 %v9445, %v9491
    %v9516 = vadd.f32 %v9446, %v9491
    %v9517 = vadd.f32 %v9447, %v9491
    %v9518 = vadd.f32 %v9448, %v9491
    %v9519 = vadd.f32 %v9449, %v9491
    %v9520 = vadd.f32 %v9450, %v9491
    %v9521 = vadd.f32 %v9451, %v9491
    %v9522 = vadd.f32 %v9452, %v9491
    %v9523 = vadd.f32 %v9453, %v9491
    %v9524 = vadd.f32 %v9454, %v9491
    %v9525 = vadd.f32 %v9455, %v9491
    %v9526 = vadd.f32 %v9456, %v9491
    %v9527 = vadd.f32 %v9457, %v9491
    %v9528 = vadd.f32 %v9458, %v9491
    %v9529 = vadd.f32 %v9459, %v9491
    %v9530 = vadd.f32 %v9460, %v9491
    %v9531 = vadd.f32 %v9461, %v9491
    %v9532 = vadd.f32 %v9462, %v9491
    %v9533 = vadd.f32 %v9463, %v9491
    %v9534 = vadd.f32 %v9464, %v9491
    %v9535 = vadd.f32 %v9465, %v9491
    %v9536 = vadd.f32 %v9466, %v9491
    %v9537 = vadd.f32 %v9467, %v9491
    %v9538 = vadd.f32 %v9468, %v9491
    %v9539 = vadd.f32 %v9469, %v9491
    %v9540 = vadd.f32 %v9470, %v9491
    %v9541 = vadd.f32 %v9471, %v9491
    %v9542 = vadd.f32 %v9472, %v9491
    %v9543 = vadd.f32 %v9473, %v9491
    %v9544 = vadd.f32 %v9474, %v9491
    %v9545 = vadd.f32 %v9475, %v9491
    %v9546 = vadd.f32 %v9476, %v9491
    %v9547 = vadd.f32 %v9477, %v9491
    %v9548 = vadd.f32 %v9478, %v9491
    %v9549 = vadd.f32 %v9479, %v9491
    %v9550 = vadd.f32 %v9480, %v9491
    %v9551 = vadd.f32 %v9481, %v9491
    %v9552 = vadd.f32 %v9482, %v9491
    %v9553 = vadd.f32 %v9483, %v9491
    %v9554 = vadd.f32 %v9484, %v9491
    %v9555 = vadd.f32 %v9485, %v9491
    %v9556 = vadd.f32 %v9486, %v9491
    %9557 = vxpose.xlu0.b32.start [1/16] %v9493, 128
    %9558 = vxpose.xlu0.b32.cont [2/16] %v9494, 128
    %9559 = vxpose.xlu0.b32.cont [3/16] %v9495, 128
    %9560 = vxpose.xlu0.b32.cont [4/16] %v9496, 128
    %9561 = vxpose.xlu0.b32.cont [5/16] %v9497, 128
    %9562 = vxpose.xlu0.b32.cont [6/16] %v9498, 128
    %9563 = vxpose.xlu0.b32.cont [7/16] %v9499, 128
    %9564 = vxpose.xlu0.b32.cont [8/16] %v9500, 128
    %9565 = vxpose.xlu0.b32.cont [9/16] %v9501, 128
    %9566 = vxpose.xlu0.b32.cont [10/16] %v9502, 128
    %9567 = vxpose.xlu0.b32.cont [11/16] %v9503, 128
    %9568 = vxpose.xlu0.b32.cont [12/16] %v9504, 128
    %9569 = vxpose.xlu0.b32.cont [13/16] %v9505, 128
    %9570 = vxpose.xlu0.b32.cont [14/16] %v9506, 128
    %9571 = vxpose.xlu0.b32.cont [15/16] %v9507, 128
    %9572 = vxpose.xlu0.b32.end [16/16] %v9508, 128
    %v9573 = vpop.trf.xlu0
    %v9574 = vpop.trf.xlu0
    %v9575 = vpop.trf.xlu0
    %v9576 = vpop.trf.xlu0
    %v9577 = vpop.trf.xlu0
    %v9578 = vpop.trf.xlu0
    %v9579 = vpop.trf.xlu0
    %v9580 = vpop.trf.xlu0
    %v9581 = vpop.trf.xlu0
    %v9582 = vpop.trf.xlu0
    %v9583 = vpop.trf.xlu0
    %v9584 = vpop.trf.xlu0
    %v9585 = vpop.trf.xlu0
    %v9586 = vpop.trf.xlu0
    %v9587 = vpop.trf.xlu0
    %v9588 = vpop.trf.xlu0
    %9589 = vxpose.xlu0.b32.start [1/16] %v9509, 128
    %9590 = vxpose.xlu0.b32.cont [2/16] %v9510, 128
    %9591 = vxpose.xlu0.b32.cont [3/16] %v9511, 128
    %9592 = vxpose.xlu0.b32.cont [4/16] %v9512, 128
    %9593 = vxpose.xlu0.b32.cont [5/16] %v9513, 128
    %9594 = vxpose.xlu0.b32.cont [6/16] %v9514, 128
    %9595 = vxpose.xlu0.b32.cont [7/16] %v9515, 128
    %9596 = vxpose.xlu0.b32.cont [8/16] %v9516, 128
    %9597 = vxpose.xlu0.b32.cont [9/16] %v9517, 128
    %9598 = vxpose.xlu0.b32.cont [10/16] %v9518, 128
    %9599 = vxpose.xlu0.b32.cont [11/16] %v9519, 128
    %9600 = vxpose.xlu0.b32.cont [12/16] %v9520, 128
    %9601 = vxpose.xlu0.b32.cont [13/16] %v9521, 128
    %9602 = vxpose.xlu0.b32.cont [14/16] %v9522, 128
    %9603 = vxpose.xlu0.b32.cont [15/16] %v9523, 128
    %9604 = vxpose.xlu0.b32.end [16/16] %v9524, 128
    %v9605 = vpop.trf.xlu0
    %v9606 = vpop.trf.xlu0
    %v9607 = vpop.trf.xlu0
    %v9608 = vpop.trf.xlu0
    %v9609 = vpop.trf.xlu0
    %v9610 = vpop.trf.xlu0
    %v9611 = vpop.trf.xlu0
    %v9612 = vpop.trf.xlu0
    %v9613 = vpop.trf.xlu0
    %v9614 = vpop.trf.xlu0
    %v9615 = vpop.trf.xlu0
    %v9616 = vpop.trf.xlu0
    %v9617 = vpop.trf.xlu0
    %v9618 = vpop.trf.xlu0
    %v9619 = vpop.trf.xlu0
    %v9620 = vpop.trf.xlu0
    %9621 = vxpose.xlu0.b32.start [1/16] %v9525, 128
    %9622 = vxpose.xlu0.b32.cont [2/16] %v9526, 128
    %9623 = vxpose.xlu0.b32.cont [3/16] %v9527, 128
    %9624 = vxpose.xlu0.b32.cont [4/16] %v9528, 128
    %9625 = vxpose.xlu0.b32.cont [5/16] %v9529, 128
    %9626 = vxpose.xlu0.b32.cont [6/16] %v9530, 128
    %9627 = vxpose.xlu0.b32.cont [7/16] %v9531, 128
    %9628 = vxpose.xlu0.b32.cont [8/16] %v9532, 128
    %9629 = vxpose.xlu0.b32.cont [9/16] %v9533, 128
    %9630 = vxpose.xlu0.b32.cont [10/16] %v9534, 128
    %9631 = vxpose.xlu0.b32.cont [11/16] %v9535, 128
    %9632 = vxpose.xlu0.b32.cont [12/16] %v9536, 128
    %9633 = vxpose.xlu0.b32.cont [13/16] %v9537, 128
    %9634 = vxpose.xlu0.b32.cont [14/16] %v9538, 128
    %9635 = vxpose.xlu0.b32.cont [15/16] %v9539, 128
    %9636 = vxpose.xlu0.b32.end [16/16] %v9540, 128
    %v9637 = vpop.trf.xlu0
    %v9638 = vpop.trf.xlu0
    %v9639 = vpop.trf.xlu0
    %v9640 = vpop.trf.xlu0
    %v9641 = vpop.trf.xlu0
    %v9642 = vpop.trf.xlu0
    %v9643 = vpop.trf.xlu0
    %v9644 = vpop.trf.xlu0
    %v9645 = vpop.trf.xlu0
    %v9646 = vpop.trf.xlu0
    %v9647 = vpop.trf.xlu0
    %v9648 = vpop.trf.xlu0
    %v9649 = vpop.trf.xlu0
    %v9650 = vpop.trf.xlu0
    %v9651 = vpop.trf.xlu0
    %v9652 = vpop.trf.xlu0
    %9653 = vxpose.xlu0.b32.start [1/16] %v9541, 128
    %9654 = vxpose.xlu0.b32.cont [2/16] %v9542, 128
    %9655 = vxpose.xlu0.b32.cont [3/16] %v9543, 128
    %9656 = vxpose.xlu0.b32.cont [4/16] %v9544, 128
    %9657 = vxpose.xlu0.b32.cont [5/16] %v9545, 128
    %9658 = vxpose.xlu0.b32.cont [6/16] %v9546, 128
    %9659 = vxpose.xlu0.b32.cont [7/16] %v9547, 128
    %9660 = vxpose.xlu0.b32.cont [8/16] %v9548, 128
    %9661 = vxpose.xlu0.b32.cont [9/16] %v9549, 128
    %9662 = vxpose.xlu0.b32.cont [10/16] %v9550, 128
    %9663 = vxpose.xlu0.b32.cont [11/16] %v9551, 128
    %9664 = vxpose.xlu0.b32.cont [12/16] %v9552, 128
    %9665 = vxpose.xlu0.b32.cont [13/16] %v9553, 128
    %9666 = vxpose.xlu0.b32.cont [14/16] %v9554, 128
    %9667 = vxpose.xlu0.b32.cont [15/16] %v9555, 128
    %9668 = vxpose.xlu0.b32.end [16/16] %v9556, 128
    %v9669 = vpop.trf.xlu0
    %v9670 = vpop.trf.xlu0
    %v9671 = vpop.trf.xlu0
    %v9672 = vpop.trf.xlu0
    %v9673 = vpop.trf.xlu0
    %v9674 = vpop.trf.xlu0
    %v9675 = vpop.trf.xlu0
    %v9676 = vpop.trf.xlu0
    %v9677 = vpop.trf.xlu0
    %v9678 = vpop.trf.xlu0
    %v9679 = vpop.trf.xlu0
    %v9680 = vpop.trf.xlu0
    %v9681 = vpop.trf.xlu0
    %v9682 = vpop.trf.xlu0
    %v9683 = vpop.trf.xlu0
    %v9684 = vpop.trf.xlu0
    %9685 = vst [vmem:[#allocation3] sm:$0xff] %v9573
    %9686 = vst [vmem:[#allocation3 + $0x8] sm:$0xff] %v9605
    %9687 = vst [vmem:[#allocation3 + $0x10] sm:$0xff] %v9637
    %9688 = vst [vmem:[#allocation3 + $0x18] sm:$0xff] %v9669
    // Predicated region
    $region67: #{tpu_custom_call.1} parent=1 // pred_check
      _
    $region68: #{tpu_custom_call.1} parent=1 // pred_check_branch
      %9690 = sbr.rel (0) target = $region70
    $region69: #{tpu_custom_call.1} parent=1 // pred_region
      %s9692 = ssub.s32 512, 512
      %9693 = vsyncadd [#allocation4], %s9692
      %s9695 = sshll.u32 [#allocation3], 4
      %s9696 = int_to_ptr.vmem [resolvable:$true] %s9695
      %9698 = dma.vmem_to_hbm [thread:$0]  %s9696, 512, %s16, [#allocation4]
    $region70: #{tpu_custom_call.1} parent=1 // pred_fallthru
      _
    // Predicated region
    $region71: #{tpu_custom_call.1} parent=1 // pred_check
      _
    $region72: #{tpu_custom_call.1} parent=1 // pred_check_branch
      %9700 = sbr.rel (0) target = $region74
    $region73: #{tpu_custom_call.1} parent=1 // pred_region
      %9701 = dma.done [#allocation4], 512
    $region74: #{tpu_custom_call.1} parent=1 // pred_fallthru
      _
    %9702 = vsyncpa [#allocation4], 1

</llo_original>
